<compile_context>
chip_gen: v7x
topology: tpu7x:2x2x1
jax: 0.10.0
libtpu: 0.0.40
codegen_flags: <defaults>
</compile_context>

<pallas_src>
import functools

import jax
import jax.numpy as jnp
import numpy as np
from jax import lax
from jax.experimental import pallas as pl
from jax.experimental.pallas import tpu as pltpu

KS = 3  # tap-grid size of the packed weights (the 1x1 branch sits on the centre tap)


def _round_up(x, m):
    return (x + m - 1) // m * m


def _pick_cin_tile(cin_p):
    for t in (512, 256, 128):
        if cin_p % t == 0:
            return t
    return cin_p


# ----------------------------------------------------------------------------
# Fused kernel: all conv branches, {dilated conv + folded BN + ReLU}
# ----------------------------------------------------------------------------
def _fused_aspp_kernel(x_ref, w_ref, s_ref, b_ref, o_ref, acc_ref, xcat_ref, *,
                       H, Ww, maxpad, dils):
    # grid = (batch, branch, cout-tile, cin-tile); cin-tile is the reduction.
    br = pl.program_id(1)
    ci = pl.program_id(3)
    TC = x_ref.shape[-1]
    TN = acc_ref.shape[-1]

    @pl.when(ci == 0)
    def _():
        acc_ref[...] = jnp.zeros_like(acc_ref)

    # ---- branch 0: 1x1 conv == single centre-tap matmul (K = TC) -----------
    @pl.when(br == 0)
    def _():
        a = x_ref[0, maxpad:maxpad + H, maxpad:maxpad + Ww, :]
        acc_ref[...] += jnp.dot(a.reshape(H * Ww, TC), w_ref[1, 1],
                                preferred_element_type=jnp.float32)

    # ---- branches 1..: 3x3 dilated convs (statically specialized bodies) ---
    for i, d in enumerate(dils):
        @pl.when(br == i + 1)
        def _(d=d):
            # Stage the 3 kj (W-direction) shifted windows once per grid step
            # (3 relayouting loads instead of 9) laid out along the lane axis
            # -> taps folded into the matmul K dimension.
            for kj in range(KS):
                w0 = maxpad + (kj - 1) * d
                xcat_ref[:, :, kj * TC:(kj + 1) * TC] = \
                    x_ref[0, :, w0:w0 + Ww, :]
            # One K = 3*TC MXU pass per ki row; the H slice of xcat is along a
            # leading (untiled) dim, hence layout-free.  Accumulate straight
            # into the VMEM accumulator (no register-resident partial chain).
            for ki in range(KS):
                r0 = maxpad + (ki - 1) * d
                a = xcat_ref[r0:r0 + H].reshape(H * Ww, KS * TC)
                acc_ref[...] += jnp.dot(a, w_ref[ki].reshape(KS * TC, TN),
                                        preferred_element_type=jnp.float32)

    @pl.when(ci == pl.num_programs(3) - 1)
    def _():
        y = acc_ref[...] * s_ref[0] + b_ref[0]
        y = jnp.maximum(y, 0.0)                       # ASPP branches use ReLU
        o_ref[0] = y.reshape(H, Ww, TN).astype(o_ref.dtype)


def _derive_vmem_limit(Hp, Wp, TC, TN, H, Ww):
    in_blk = Hp * Wp * TC * 2                 # bf16 input block
    w_blk = KS * KS * TC * TN * 2             # bf16 weight block
    out_blk = H * Ww * TN * 2                 # bf16 output block
    sb_blk = 2 * TN * 4                       # scale + bias
    acc = H * Ww * TN * 4                     # f32 accumulator scratch
    xcat = Hp * Ww * KS * TC * 2              # kj-shift staging scratch
    est = 2 * (in_blk + w_blk + out_blk + sb_blk) + acc + xcat  # double-buffered
    # Cap at v7x's 64 MiB physical VMEM (v5e/v6e could go higher).
    return int(min(max(2 * est, 32 << 20), 64 << 20))


@functools.partial(jax.jit, static_argnames=("H", "Ww", "maxpad", "dils"))
def fused_aspp_convs(xp, w_pack, scales, biases, *, H, Ww, maxpad, dils):
    """All conv branches of ASPP in one pallas_call.

    xp:      (N, H+2*maxpad, Ww+2*maxpad, cin_p) bf16  shared max-padded input
    w_pack:  (nb*3, 3, cin_p, cout_p)            bf16  branch-major ki rows
                                                       (1x1 weights at tap (1,1))
    scales:  (nb, 1, cout_p) f32, biases same          folded BatchNorm
    returns  (N, H, Ww, nb*cout_p) bf16, branch outputs pre-concatenated.
    """
    N, Hp, Wp, cin_p = xp.shape
    nb = scales.shape[0]
    cout_p = w_pack.shape[-1]
    assert nb == 1 + len(dils)

    TC = _pick_cin_tile(cin_p)
    TN = 256 if cout_p % 256 == 0 else 128
    n_co = cout_p // TN
    n_ci = cin_p // TC

    grid = (N, nb, n_co, n_ci)
    return pl.pallas_call(
        functools.partial(_fused_aspp_kernel,
                          H=H, Ww=Ww, maxpad=maxpad, dils=dils),
        out_shape=jax.ShapeDtypeStruct((N, H, Ww, nb * cout_p), jnp.bfloat16),
        grid_spec=pltpu.PrefetchScalarGridSpec(
            num_scalar_prefetch=0,
            grid=grid,
            in_specs=[
                # Whole max-padded image per (batch, cin-tile); branch / cout
                # axes reuse the same resident block (no re-fetch).
                pl.BlockSpec((1, Hp, Wp, TC),
                             lambda b, br, co, ci: (b, 0, 0, ci)),
                # All 3x3 taps of this branch's (cin-tile, cout-tile).
                pl.BlockSpec((KS, KS, TC, TN),
                             lambda b, br, co, ci: (br, 0, ci, co)),
                pl.BlockSpec((1, 1, TN), lambda b, br, co, ci: (br, 0, co)),
                pl.BlockSpec((1, 1, TN), lambda b, br, co, ci: (br, 0, co)),
            ],
            out_specs=pl.BlockSpec(
                (1, H, Ww, TN),
                lambda b, br, co, ci: (b, 0, 0, br * n_co + co)),
            scratch_shapes=[
                pltpu.VMEM((H * Ww, TN), jnp.float32),        # f32 accumulator
                pltpu.VMEM((Hp, Ww, KS * TC), jnp.bfloat16),  # kj-shift staging
            ],
        ),
        compiler_params=pltpu.CompilerParams(
            dimension_semantics=("parallel", "parallel", "parallel",
                                 "arbitrary"),
            vmem_limit_bytes=_derive_vmem_limit(Hp, Wp, TC, TN, H, Ww)),
    )(xp, w_pack, scales, biases)


# ----------------------------------------------------------------------------
# Parameter construction (deterministic, synthetic); weights pre-packed once.
# ----------------------------------------------------------------------------
def _make_cbr_raw(key, cin, cout, ksize):
    kw, kg, kb, km, kv = jax.random.split(key, 5)
    fan_in = cin * ksize * ksize
    w = jax.random.normal(kw, (ksize, ksize, cin, cout),
                          jnp.float32) / np.sqrt(fan_in)
    gamma = 1.0 + 0.1 * jax.random.normal(kg, (cout,), jnp.float32)
    beta = 0.1 * jax.random.normal(kb, (cout,), jnp.float32)
    mean = 0.05 * jax.random.normal(km, (cout,), jnp.float32)
    var = 0.9 + 0.2 * jax.random.uniform(kv, (cout,), jnp.float32)
    scale = gamma / jnp.sqrt(var + 1e-5)      # BatchNorm2d(eps=1e-5), folded
    bias = beta - mean * scale
    return dict(w=w, scale=scale, bias=bias, k=ksize)


def make_aspp_params(key, in_ch, out_ch, rates):
    keys = jax.random.split(key, len(rates) + 2)
    branches = [_make_cbr_raw(keys[0], in_ch, out_ch, 1)]          # c0: 1x1
    for i in range(len(rates)):                                    # ci: 3x3 dil
        branches.append(_make_cbr_raw(keys[i + 1], in_ch, out_ch, 3))
    imagepool = _make_cbr_raw(keys[-1], in_ch, out_ch, 1)

    cin_p, cout_p = _round_up(in_ch, 128), _round_up(out_ch, 128)
    nb = len(branches)
    wp = np.zeros((nb * KS, KS, cin_p, cout_p), np.float32)
    sp = np.zeros((nb, 1, cout_p), np.float32)
    bp = np.zeros((nb, 1, cout_p), np.float32)
    for i, br in enumerate(branches):
        k = br["k"]
        off = (KS - k) // 2                     # 1x1 -> centre tap (1, 1)
        wp[i * KS + off:i * KS + off + k, off:off + k, :in_ch, :out_ch] = \
            np.asarray(br["w"])
        sp[i, 0, :out_ch] = np.asarray(br["scale"])
        bp[i, 0, :out_ch] = np.asarray(br["bias"])

    packed = dict(w=jnp.asarray(wp).astype(jnp.bfloat16),
                  scale=jnp.asarray(sp), bias=jnp.asarray(bp))
    ip = dict(w=jnp.asarray(np.asarray(imagepool["w"]).reshape(in_ch, out_ch)
                            ).astype(jnp.bfloat16),
              scale=imagepool["scale"], bias=imagepool["bias"])
    return dict(branches=branches, packed=packed, imagepool=ip,
                rates=tuple(int(r) for r in rates),
                cin=in_ch, cout=out_ch, cin_p=cin_p, cout_p=cout_p)


# ----------------------------------------------------------------------------
# Forward pass
# ----------------------------------------------------------------------------
def aspp_forward(params, x_nchw):
    x = jnp.transpose(x_nchw, (0, 2, 3, 1)).astype(jnp.float32)  # NCHW -> NHWC
    N, H, W, Cin = x.shape
    rates = params["rates"]
    cin_p, cout_p, cout = params["cin_p"], params["cout_p"], params["cout"]
    nb = 1 + len(rates)
    maxpad = max(rates) if rates else 0
    Ww = _round_up(W, 16)   # bf16 sublane tile -> layout-free in-kernel flatten

    # Single bf16 cast + max-rate "same" padding, shared by every conv branch.
    xq = x.astype(jnp.bfloat16)
    xp = jnp.pad(xq, ((0, 0), (maxpad, maxpad),
                      (maxpad, maxpad + (Ww - W)), (0, cin_p - Cin)))

    pk = params["packed"]
    y = fused_aspp_convs(xp, pk["w"], pk["scale"], pk["bias"],
                         H=H, Ww=Ww, maxpad=maxpad, dils=rates)
    y = y[:, :, :W, :].reshape(N, H, W, nb, cout_p)[..., :cout]
    y = y.reshape(N, H, W, nb * cout)

    # _ImagePool: AdaptiveAvgPool2d(1) -> 1x1 conv + BN + ReLU -> bilinear.
    # TODO(synk): plain JAX (not Pallas): at 1x1 spatial extent a Pallas launch
    # is pure overhead, and bilinear(align_corners=False) from a 1x1 source is
    # an exact broadcast.
    ip = params["imagepool"]
    g = jnp.mean(x, axis=(1, 2)).astype(jnp.bfloat16)              # (N, Cin)
    h = jnp.dot(g, ip["w"], preferred_element_type=jnp.float32)
    h = jnp.maximum(h * ip["scale"] + ip["bias"], 0.0).astype(jnp.bfloat16)
    g_out = jnp.broadcast_to(h[:, None, None, :], (N, H, W, cout))

    out = jnp.concatenate([y, g_out], axis=-1)
    return jnp.transpose(out, (0, 3, 1, 2)).astype(jnp.float32)    # -> NCHW


# ----------------------------------------------------------------------------
# Pure-JAX reference (same bf16 quantization of operands, f32 accumulation)
# ----------------------------------------------------------------------------
def _ref_cbr(w, scale, bias, x, *, dil, pad):
    wq = w.astype(jnp.bfloat16).astype(jnp.float32)
    xq = x.astype(jnp.bfloat16).astype(jnp.float32)
    y = lax.conv_general_dilated(
        xq, wq, window_strides=(1, 1), padding=[(pad, pad), (pad, pad)],
        rhs_dilation=(dil, dil), dimension_numbers=("NHWC", "HWIO", "NHWC"),
        precision=lax.Precision.HIGHEST)
    return jnp.maximum(y * scale + bias, 0.0)


def ref_aspp_forward(params, x_nchw):
    x = jnp.transpose(x_nchw, (0, 2, 3, 1)).astype(jnp.float32)
    N, H, W, _ = x.shape
    brs, rates = params["branches"], params["rates"]
    outs = [_ref_cbr(brs[0]["w"], brs[0]["scale"], brs[0]["bias"], x,
                     dil=1, pad=0)]
    for i, r in enumerate(rates):
        b = brs[i + 1]
        outs.append(_ref_cbr(b["w"], b["scale"], b["bias"], x, dil=r, pad=r))
    ip = params["imagepool"]
    g = jnp.mean(x, axis=(1, 2), keepdims=True)
    w_ip = ip["w"].astype(jnp.float32).reshape(1, 1, params["cin"],
                                               params["cout"])
    g = _ref_cbr(w_ip, ip["scale"], ip["bias"], g, dil=1, pad=0)
    g = jnp.broadcast_to(g, (N, H, W, params["cout"]))
    y = jnp.concatenate(outs + [g], axis=-1)
    return jnp.transpose(y, (0, 3, 1, 2))


if __name__ == "__main__":
    in_ch, out_ch = 64, 64
    rates = (2, 4, 6)

    root = jax.random.PRNGKey(0)
    k_in, k_par = jax.random.split(root)
    x = jax.random.normal(k_in, (2, in_ch, 16, 16), jnp.float32)   # NCHW input

    params = make_aspp_params(k_par, in_ch, out_ch, rates)

    out = jax.block_until_ready(aspp_forward(params, x))

    n_branches = len(rates) + 2                    # c0 + c1..c3 + imagepool
    assert out.shape == (2, out_ch * n_branches, 16, 16), out.shape
    assert bool(jnp.all(jnp.isfinite(out)))

    ref = jax.block_until_ready(ref_aspp_forward(params, x))
    np.testing.assert_allclose(np.asarray(out), np.asarray(ref),
                               rtol=2e-2, atol=2e-2)

    print("KERNEL_OK")
</pallas_src>

<mosaic_0001>
module attributes {stable_mosaic.version = 11 : i64} {
  func.func @_fused_aspp_kernel(%arg0: i32, %arg1: i32, %arg2: i32, %arg3: i32, %arg4: memref<1x28x28x128xbf16, #tpu.memory_space<vmem>>, %arg5: memref<3x3x128x128xbf16, #tpu.memory_space<vmem>>, %arg6: memref<1x1x128xf32, #tpu.memory_space<vmem>>, %arg7: memref<1x1x128xf32, #tpu.memory_space<vmem>>, %arg8: memref<1x16x16x128xbf16, #tpu.memory_space<vmem>>, %arg9: memref<256x128xf32, #tpu.memory_space<vmem>>, %arg10: memref<28x16x384xbf16, #tpu.memory_space<vmem>>) attributes {dimension_semantics = [#tpu.dimension_semantics<parallel>, #tpu.dimension_semantics<parallel>, #tpu.dimension_semantics<parallel>, #tpu.dimension_semantics<arbitrary>], iteration_bounds = array<i64: 2, 4, 1, 1>, scalar_prefetch = 0 : i64, scratch_operands = 2 : i64, tpu.core_type = #tpu.core_type<tc>, window_params = [{transform_indices = @transform_0, window_bounds = array<i64: 1, 28, 28, 128>}, {transform_indices = @transform_1, window_bounds = array<i64: 3, 3, 128, 128>}, {transform_indices = @transform_2, window_bounds = array<i64: 1, 1, 128>}, {transform_indices = @transform_3, window_bounds = array<i64: 1, 1, 128>}, {transform_indices = @transform_4, window_bounds = array<i64: 1, 16, 16, 128>}]} {
    %c0_i32 = arith.constant 0 : i32
    %0 = arith.cmpi eq, %arg3, %c0_i32 : i32
    %1 = arith.extui %0 : i1 to i32
    %c0_i32_0 = arith.constant 0 : i32
    %2 = arith.cmpi ne, %1, %c0_i32_0 : i32
    scf.if %2 {
      %cst = arith.constant 0.000000e+00 : f32
      %18 = vector.broadcast %cst : f32 to vector<256x128xf32>
      %c0 = arith.constant 0 : index
      %c0_8 = arith.constant 0 : index
      %19 = vector.load %arg9[%c0, %c0_8] : memref<256x128xf32, #tpu.memory_space<vmem>>, vector<256x128xf32>
      tpu.vector_store %arg9[%c0, %c0_8], %18 {strides = array<i32>} : memref<256x128xf32, #tpu.memory_space<vmem>>, vector<256x128xf32>,
    } else {
    }
    %c0_i32_1 = arith.constant 0 : i32
    %3 = arith.cmpi eq, %arg1, %c0_i32_1 : i32
    %4 = arith.extui %3 : i1 to i32
    %c0_i32_2 = arith.constant 0 : i32
    %5 = arith.cmpi ne, %4, %c0_i32_2 : i32
    scf.if %5 {
      %c0 = arith.constant 0 : index
      %c6 = arith.constant 6 : index
      %c6_8 = arith.constant 6 : index
      %c0_9 = arith.constant 0 : index
      %18 = vector.load %arg4[%c0, %c6, %c6_8, %c0_9] : memref<1x28x28x128xbf16, #tpu.memory_space<vmem>>, vector<1x16x16x128xbf16>
      %19 = vector.shape_cast %18 : vector<1x16x16x128xbf16> to vector<16x16x128xbf16>
      %c0_10 = arith.constant 0 : index
      %c0_11 = arith.constant 0 : index
      %20 = vector.load %arg9[%c0_10, %c0_11] : memref<256x128xf32, #tpu.memory_space<vmem>>, vector<256x128xf32>
      %21 = vector.shape_cast %19 : vector<16x16x128xbf16> to vector<256x128xbf16>
      %c1 = arith.constant 1 : index
      %c1_12 = arith.constant 1 : index
      %c0_13 = arith.constant 0 : index
      %c0_14 = arith.constant 0 : index
      %22 = vector.load %arg5[%c1, %c1_12, %c0_13, %c0_14] : memref<3x3x128x128xbf16, #tpu.memory_space<vmem>>, vector<1x1x128x128xbf16>
      %23 = vector.shape_cast %22 : vector<1x1x128x128xbf16> to vector<128x128xbf16>
      %cst = arith.constant dense<0.000000e+00> : vector<256x128xf32>
      %24 = tpu.matmul %21, %23, %cst {dimension_numbers = #tpu.dot_dimension_numbers<[1], [0], [0], [1], [0, 0, 1, 1], [], []>} : vector<256x128xbf16>, vector<128x128xbf16>, vector<256x128xf32> -> vector<256x128xf32>
      %25 = arith.addf %20, %24 : vector<256x128xf32>
      %c0_15 = arith.constant 0 : index
      %c0_16 = arith.constant 0 : index
      %26 = vector.load %arg9[%c0_15, %c0_16] : memref<256x128xf32, #tpu.memory_space<vmem>>, vector<256x128xf32>
      tpu.vector_store %arg9[%c0_15, %c0_16], %25 {strides = array<i32>} : memref<256x128xf32, #tpu.memory_space<vmem>>, vector<256x128xf32>,
    } else {
    }
    %c1_i32 = arith.constant 1 : i32
    %6 = arith.cmpi eq, %arg1, %c1_i32 : i32
    %7 = arith.extui %6 : i1 to i32
    %c0_i32_3 = arith.constant 0 : i32
    %8 = arith.cmpi ne, %7, %c0_i32_3 : i32
    scf.if %8 {
      %c0 = arith.constant 0 : index
      %c0_8 = arith.constant 0 : index
      %c4 = arith.constant 4 : index
      %c0_9 = arith.constant 0 : index
      %18 = vector.load %arg4[%c0, %c0_8, %c4, %c0_9] : memref<1x28x28x128xbf16, #tpu.memory_space<vmem>>, vector<1x28x16x128xbf16>
      %19 = vector.shape_cast %18 : vector<1x28x16x128xbf16> to vector<28x16x128xbf16>
      %c0_10 = arith.constant 0 : index
      %c0_11 = arith.constant 0 : index
      %c0_12 = arith.constant 0 : index
      %20 = vector.load %arg10[%c0_10, %c0_11, %c0_12] : memref<28x16x384xbf16, #tpu.memory_space<vmem>>, vector<28x16x128xbf16>
      tpu.vector_store %arg10[%c0_10, %c0_11, %c0_12], %19 {strides = array<i32>} : memref<28x16x384xbf16, #tpu.memory_space<vmem>>, vector<28x16x128xbf16>,
      %c0_13 = arith.constant 0 : index
      %c0_14 = arith.constant 0 : index
      %c6 = arith.constant 6 : index
      %c0_15 = arith.constant 0 : index
      %21 = vector.load %arg4[%c0_13, %c0_14, %c6, %c0_15] : memref<1x28x28x128xbf16, #tpu.memory_space<vmem>>, vector<1x28x16x128xbf16>
      %22 = vector.shape_cast %21 : vector<1x28x16x128xbf16> to vector<28x16x128xbf16>
      %c0_16 = arith.constant 0 : index
      %c0_17 = arith.constant 0 : index
      %c128 = arith.constant 128 : index
      %23 = vector.load %arg10[%c0_16, %c0_17, %c128] : memref<28x16x384xbf16, #tpu.memory_space<vmem>>, vector<28x16x128xbf16>
      tpu.vector_store %arg10[%c0_16, %c0_17, %c128], %22 {strides = array<i32>} : memref<28x16x384xbf16, #tpu.memory_space<vmem>>, vector<28x16x128xbf16>,
      %c0_18 = arith.constant 0 : index
      %c0_19 = arith.constant 0 : index
      %c8 = arith.constant 8 : index
      %c0_20 = arith.constant 0 : index
      %24 = vector.load %arg4[%c0_18, %c0_19, %c8, %c0_20] : memref<1x28x28x128xbf16, #tpu.memory_space<vmem>>, vector<1x28x16x128xbf16>
      %25 = vector.shape_cast %24 : vector<1x28x16x128xbf16> to vector<28x16x128xbf16>
      %c0_21 = arith.constant 0 : index
      %c0_22 = arith.constant 0 : index
      %c256 = arith.constant 256 : index
      %26 = vector.load %arg10[%c0_21, %c0_22, %c256] : memref<28x16x384xbf16, #tpu.memory_space<vmem>>, vector<28x16x128xbf16>
      tpu.vector_store %arg10[%c0_21, %c0_22, %c256], %25 {strides = array<i32>} : memref<28x16x384xbf16, #tpu.memory_space<vmem>>, vector<28x16x128xbf16>,
      %c4_23 = arith.constant 4 : index
      %c0_24 = arith.constant 0 : index
      %c0_25 = arith.constant 0 : index
      %27 = vector.load %arg10[%c4_23, %c0_24, %c0_25] : memref<28x16x384xbf16, #tpu.memory_space<vmem>>, vector<16x16x384xbf16>
      %28 = vector.shape_cast %27 : vector<16x16x384xbf16> to vector<256x384xbf16>
      %c0_26 = arith.constant 0 : index
      %c0_27 = arith.constant 0 : index
      %29 = vector.load %arg9[%c0_26, %c0_27] : memref<256x128xf32, #tpu.memory_space<vmem>>, vector<256x128xf32>
      %c0_28 = arith.constant 0 : index
      %c0_29 = arith.constant 0 : index
      %c0_30 = arith.constant 0 : index
      %c0_31 = arith.constant 0 : index
      %30 = vector.load %arg5[%c0_28, %c0_29, %c0_30, %c0_31] : memref<3x3x128x128xbf16, #tpu.memory_space<vmem>>, vector<1x3x128x128xbf16>
      %31 = vector.shape_cast %30 : vector<1x3x128x128xbf16> to vector<3x128x128xbf16>
      %32 = vector.shape_cast %31 : vector<3x128x128xbf16> to vector<384x128xbf16>
      %cst = arith.constant dense<0.000000e+00> : vector<256x128xf32>
      %33 = tpu.matmul %28, %32, %cst {dimension_numbers = #tpu.dot_dimension_numbers<[1], [0], [0], [1], [0, 0, 1, 1], [], []>} : vector<256x384xbf16>, vector<384x128xbf16>, vector<256x128xf32> -> vector<256x128xf32>
      %34 = arith.addf %29, %33 : vector<256x128xf32>
      %c0_32 = arith.constant 0 : index
      %c0_33 = arith.constant 0 : index
      %35 = vector.load %arg9[%c0_32, %c0_33] : memref<256x128xf32, #tpu.memory_space<vmem>>, vector<256x128xf32>
      tpu.vector_store %arg9[%c0_32, %c0_33], %34 {strides = array<i32>} : memref<256x128xf32, #tpu.memory_space<vmem>>, vector<256x128xf32>,
      %c6_34 = arith.constant 6 : index
      %c0_35 = arith.constant 0 : index
      %c0_36 = arith.constant 0 : index
      %36 = vector.load %arg10[%c6_34, %c0_35, %c0_36] : memref<28x16x384xbf16, #tpu.memory_space<vmem>>, vector<16x16x384xbf16>
      %37 = vector.shape_cast %36 : vector<16x16x384xbf16> to vector<256x384xbf16>
      %c0_37 = arith.constant 0 : index
      %c0_38 = arith.constant 0 : index
      %38 = vector.load %arg9[%c0_37, %c0_38] : memref<256x128xf32, #tpu.memory_space<vmem>>, vector<256x128xf32>
      %c1 = arith.constant 1 : index
      %c0_39 = arith.constant 0 : index
      %c0_40 = arith.constant 0 : index
      %c0_41 = arith.constant 0 : index
      %39 = vector.load %arg5[%c1, %c0_39, %c0_40, %c0_41] : memref<3x3x128x128xbf16, #tpu.memory_space<vmem>>, vector<1x3x128x128xbf16>
      %40 = vector.shape_cast %39 : vector<1x3x128x128xbf16> to vector<3x128x128xbf16>
      %41 = vector.shape_cast %40 : vector<3x128x128xbf16> to vector<384x128xbf16>
      %cst_42 = arith.constant dense<0.000000e+00> : vector<256x128xf32>
      %42 = tpu.matmul %37, %41, %cst_42 {dimension_numbers = #tpu.dot_dimension_numbers<[1], [0], [0], [1], [0, 0, 1, 1], [], []>} : vector<256x384xbf16>, vector<384x128xbf16>, vector<256x128xf32> -> vector<256x128xf32>
      %43 = arith.addf %38, %42 : vector<256x128xf32>
      %c0_43 = arith.constant 0 : index
      %c0_44 = arith.constant 0 : index
      %44 = vector.load %arg9[%c0_43, %c0_44] : memref<256x128xf32, #tpu.memory_space<vmem>>, vector<256x128xf32>
      tpu.vector_store %arg9[%c0_43, %c0_44], %43 {strides = array<i32>} : memref<256x128xf32, #tpu.memory_space<vmem>>, vector<256x128xf32>,
      %c8_45 = arith.constant 8 : index
      %c0_46 = arith.constant 0 : index
      %c0_47 = arith.constant 0 : index
      %45 = vector.load %arg10[%c8_45, %c0_46, %c0_47] : memref<28x16x384xbf16, #tpu.memory_space<vmem>>, vector<16x16x384xbf16>
      %46 = vector.shape_cast %45 : vector<16x16x384xbf16> to vector<256x384xbf16>
      %c0_48 = arith.constant 0 : index
      %c0_49 = arith.constant 0 : index
      %47 = vector.load %arg9[%c0_48, %c0_49] : memref<256x128xf32, #tpu.memory_space<vmem>>, vector<256x128xf32>
      %c2 = arith.constant 2 : index
      %c0_50 = arith.constant 0 : index
      %c0_51 = arith.constant 0 : index
      %c0_52 = arith.constant 0 : index
      %48 = vector.load %arg5[%c2, %c0_50, %c0_51, %c0_52] : memref<3x3x128x128xbf16, #tpu.memory_space<vmem>>, vector<1x3x128x128xbf16>
      %49 = vector.shape_cast %48 : vector<1x3x128x128xbf16> to vector<3x128x128xbf16>
      %50 = vector.shape_cast %49 : vector<3x128x128xbf16> to vector<384x128xbf16>
      %cst_53 = arith.constant dense<0.000000e+00> : vector<256x128xf32>
      %51 = tpu.matmul %46, %50, %cst_53 {dimension_numbers = #tpu.dot_dimension_numbers<[1], [0], [0], [1], [0, 0, 1, 1], [], []>} : vector<256x384xbf16>, vector<384x128xbf16>, vector<256x128xf32> -> vector<256x128xf32>
      %52 = arith.addf %47, %51 : vector<256x128xf32>
      %c0_54 = arith.constant 0 : index
      %c0_55 = arith.constant 0 : index
      %53 = vector.load %arg9[%c0_54, %c0_55] : memref<256x128xf32, #tpu.memory_space<vmem>>, vector<256x128xf32>
      tpu.vector_store %arg9[%c0_54, %c0_55], %52 {strides = array<i32>} : memref<256x128xf32, #tpu.memory_space<vmem>>, vector<256x128xf32>,
    } else {
    }
    %c2_i32 = arith.constant 2 : i32
    %9 = arith.cmpi eq, %arg1, %c2_i32 : i32
    %10 = arith.extui %9 : i1 to i32
    %c0_i32_4 = arith.constant 0 : i32
    %11 = arith.cmpi ne, %10, %c0_i32_4 : i32
    scf.if %11 {
      %c0 = arith.constant 0 : index
      %c0_8 = arith.constant 0 : index
      %c2 = arith.constant 2 : index
      %c0_9 = arith.constant 0 : index
      %18 = vector.load %arg4[%c0, %c0_8, %c2, %c0_9] : memref<1x28x28x128xbf16, #tpu.memory_space<vmem>>, vector<1x28x16x128xbf16>
      %19 = vector.shape_cast %18 : vector<1x28x16x128xbf16> to vector<28x16x128xbf16>
      %c0_10 = arith.constant 0 : index
      %c0_11 = arith.constant 0 : index
      %c0_12 = arith.constant 0 : index
      %20 = vector.load %arg10[%c0_10, %c0_11, %c0_12] : memref<28x16x384xbf16, #tpu.memory_space<vmem>>, vector<28x16x128xbf16>
      tpu.vector_store %arg10[%c0_10, %c0_11, %c0_12], %19 {strides = array<i32>} : memref<28x16x384xbf16, #tpu.memory_space<vmem>>, vector<28x16x128xbf16>,
      %c0_13 = arith.constant 0 : index
      %c0_14 = arith.constant 0 : index
      %c6 = arith.constant 6 : index
      %c0_15 = arith.constant 0 : index
      %21 = vector.load %arg4[%c0_13, %c0_14, %c6, %c0_15] : memref<1x28x28x128xbf16, #tpu.memory_space<vmem>>, vector<1x28x16x128xbf16>
      %22 = vector.shape_cast %21 : vector<1x28x16x128xbf16> to vector<28x16x128xbf16>
      %c0_16 = arith.constant 0 : index
      %c0_17 = arith.constant 0 : index
      %c128 = arith.constant 128 : index
      %23 = vector.load %arg10[%c0_16, %c0_17, %c128] : memref<28x16x384xbf16, #tpu.memory_space<vmem>>, vector<28x16x128xbf16>
      tpu.vector_store %arg10[%c0_16, %c0_17, %c128], %22 {strides = array<i32>} : memref<28x16x384xbf16, #tpu.memory_space<vmem>>, vector<28x16x128xbf16>,
      %c0_18 = arith.constant 0 : index
      %c0_19 = arith.constant 0 : index
      %c10 = arith.constant 10 : index
      %c0_20 = arith.constant 0 : index
      %24 = vector.load %arg4[%c0_18, %c0_19, %c10, %c0_20] : memref<1x28x28x128xbf16, #tpu.memory_space<vmem>>, vector<1x28x16x128xbf16>
      %25 = vector.shape_cast %24 : vector<1x28x16x128xbf16> to vector<28x16x128xbf16>
      %c0_21 = arith.constant 0 : index
      %c0_22 = arith.constant 0 : index
      %c256 = arith.constant 256 : index
      %26 = vector.load %arg10[%c0_21, %c0_22, %c256] : memref<28x16x384xbf16, #tpu.memory_space<vmem>>, vector<28x16x128xbf16>
      tpu.vector_store %arg10[%c0_21, %c0_22, %c256], %25 {strides = array<i32>} : memref<28x16x384xbf16, #tpu.memory_space<vmem>>, vector<28x16x128xbf16>,
      %c2_23 = arith.constant 2 : index
      %c0_24 = arith.constant 0 : index
      %c0_25 = arith.constant 0 : index
      %27 = vector.load %arg10[%c2_23, %c0_24, %c0_25] : memref<28x16x384xbf16, #tpu.memory_space<vmem>>, vector<16x16x384xbf16>
      %28 = vector.shape_cast %27 : vector<16x16x384xbf16> to vector<256x384xbf16>
      %c0_26 = arith.constant 0 : index
      %c0_27 = arith.constant 0 : index
      %29 = vector.load %arg9[%c0_26, %c0_27] : memref<256x128xf32, #tpu.memory_space<vmem>>, vector<256x128xf32>
      %c0_28 = arith.constant 0 : index
      %c0_29 = arith.constant 0 : index
      %c0_30 = arith.constant 0 : index
      %c0_31 = arith.constant 0 : index
      %30 = vector.load %arg5[%c0_28, %c0_29, %c0_30, %c0_31] : memref<3x3x128x128xbf16, #tpu.memory_space<vmem>>, vector<1x3x128x128xbf16>
      %31 = vector.shape_cast %30 : vector<1x3x128x128xbf16> to vector<3x128x128xbf16>
      %32 = vector.shape_cast %31 : vector<3x128x128xbf16> to vector<384x128xbf16>
      %cst = arith.constant dense<0.000000e+00> : vector<256x128xf32>
      %33 = tpu.matmul %28, %32, %cst {dimension_numbers = #tpu.dot_dimension_numbers<[1], [0], [0], [1], [0, 0, 1, 1], [], []>} : vector<256x384xbf16>, vector<384x128xbf16>, vector<256x128xf32> -> vector<256x128xf32>
      %34 = arith.addf %29, %33 : vector<256x128xf32>
      %c0_32 = arith.constant 0 : index
      %c0_33 = arith.constant 0 : index
      %35 = vector.load %arg9[%c0_32, %c0_33] : memref<256x128xf32, #tpu.memory_space<vmem>>, vector<256x128xf32>
      tpu.vector_store %arg9[%c0_32, %c0_33], %34 {strides = array<i32>} : memref<256x128xf32, #tpu.memory_space<vmem>>, vector<256x128xf32>,
      %c6_34 = arith.constant 6 : index
      %c0_35 = arith.constant 0 : index
      %c0_36 = arith.constant 0 : index
      %36 = vector.load %arg10[%c6_34, %c0_35, %c0_36] : memref<28x16x384xbf16, #tpu.memory_space<vmem>>, vector<16x16x384xbf16>
      %37 = vector.shape_cast %36 : vector<16x16x384xbf16> to vector<256x384xbf16>
      %c0_37 = arith.constant 0 : index
      %c0_38 = arith.constant 0 : index
      %38 = vector.load %arg9[%c0_37, %c0_38] : memref<256x128xf32, #tpu.memory_space<vmem>>, vector<256x128xf32>
      %c1 = arith.constant 1 : index
      %c0_39 = arith.constant 0 : index
      %c0_40 = arith.constant 0 : index
      %c0_41 = arith.constant 0 : index
      %39 = vector.load %arg5[%c1, %c0_39, %c0_40, %c0_41] : memref<3x3x128x128xbf16, #tpu.memory_space<vmem>>, vector<1x3x128x128xbf16>
      %40 = vector.shape_cast %39 : vector<1x3x128x128xbf16> to vector<3x128x128xbf16>
      %41 = vector.shape_cast %40 : vector<3x128x128xbf16> to vector<384x128xbf16>
      %cst_42 = arith.constant dense<0.000000e+00> : vector<256x128xf32>
      %42 = tpu.matmul %37, %41, %cst_42 {dimension_numbers = #tpu.dot_dimension_numbers<[1], [0], [0], [1], [0, 0, 1, 1], [], []>} : vector<256x384xbf16>, vector<384x128xbf16>, vector<256x128xf32> -> vector<256x128xf32>
      %43 = arith.addf %38, %42 : vector<256x128xf32>
      %c0_43 = arith.constant 0 : index
      %c0_44 = arith.constant 0 : index
      %44 = vector.load %arg9[%c0_43, %c0_44] : memref<256x128xf32, #tpu.memory_space<vmem>>, vector<256x128xf32>
      tpu.vector_store %arg9[%c0_43, %c0_44], %43 {strides = array<i32>} : memref<256x128xf32, #tpu.memory_space<vmem>>, vector<256x128xf32>,
      %c10_45 = arith.constant 10 : index
      %c0_46 = arith.constant 0 : index
      %c0_47 = arith.constant 0 : index
      %45 = vector.load %arg10[%c10_45, %c0_46, %c0_47] : memref<28x16x384xbf16, #tpu.memory_space<vmem>>, vector<16x16x384xbf16>
      %46 = vector.shape_cast %45 : vector<16x16x384xbf16> to vector<256x384xbf16>
      %c0_48 = arith.constant 0 : index
      %c0_49 = arith.constant 0 : index
      %47 = vector.load %arg9[%c0_48, %c0_49] : memref<256x128xf32, #tpu.memory_space<vmem>>, vector<256x128xf32>
      %c2_50 = arith.constant 2 : index
      %c0_51 = arith.constant 0 : index
      %c0_52 = arith.constant 0 : index
      %c0_53 = arith.constant 0 : index
      %48 = vector.load %arg5[%c2_50, %c0_51, %c0_52, %c0_53] : memref<3x3x128x128xbf16, #tpu.memory_space<vmem>>, vector<1x3x128x128xbf16>
      %49 = vector.shape_cast %48 : vector<1x3x128x128xbf16> to vector<3x128x128xbf16>
      %50 = vector.shape_cast %49 : vector<3x128x128xbf16> to vector<384x128xbf16>
      %cst_54 = arith.constant dense<0.000000e+00> : vector<256x128xf32>
      %51 = tpu.matmul %46, %50, %cst_54 {dimension_numbers = #tpu.dot_dimension_numbers<[1], [0], [0], [1], [0, 0, 1, 1], [], []>} : vector<256x384xbf16>, vector<384x128xbf16>, vector<256x128xf32> -> vector<256x128xf32>
      %52 = arith.addf %47, %51 : vector<256x128xf32>
      %c0_55 = arith.constant 0 : index
      %c0_56 = arith.constant 0 : index
      %53 = vector.load %arg9[%c0_55, %c0_56] : memref<256x128xf32, #tpu.memory_space<vmem>>, vector<256x128xf32>
      tpu.vector_store %arg9[%c0_55, %c0_56], %52 {strides = array<i32>} : memref<256x128xf32, #tpu.memory_space<vmem>>, vector<256x128xf32>,
    } else {
    }
    %c3_i32 = arith.constant 3 : i32
    %12 = arith.cmpi eq, %arg1, %c3_i32 : i32
    %13 = arith.extui %12 : i1 to i32
    %c0_i32_5 = arith.constant 0 : i32
    %14 = arith.cmpi ne, %13, %c0_i32_5 : i32
    scf.if %14 {
      %c0 = arith.constant 0 : index
      %c0_8 = arith.constant 0 : index
      %c0_9 = arith.constant 0 : index
      %c0_10 = arith.constant 0 : index
      %18 = vector.load %arg4[%c0, %c0_8, %c0_9, %c0_10] : memref<1x28x28x128xbf16, #tpu.memory_space<vmem>>, vector<1x28x16x128xbf16>
      %19 = vector.shape_cast %18 : vector<1x28x16x128xbf16> to vector<28x16x128xbf16>
      %c0_11 = arith.constant 0 : index
      %c0_12 = arith.constant 0 : index
      %c0_13 = arith.constant 0 : index
      %20 = vector.load %arg10[%c0_11, %c0_12, %c0_13] : memref<28x16x384xbf16, #tpu.memory_space<vmem>>, vector<28x16x128xbf16>
      tpu.vector_store %arg10[%c0_11, %c0_12, %c0_13], %19 {strides = array<i32>} : memref<28x16x384xbf16, #tpu.memory_space<vmem>>, vector<28x16x128xbf16>,
      %c0_14 = arith.constant 0 : index
      %c0_15 = arith.constant 0 : index
      %c6 = arith.constant 6 : index
      %c0_16 = arith.constant 0 : index
      %21 = vector.load %arg4[%c0_14, %c0_15, %c6, %c0_16] : memref<1x28x28x128xbf16, #tpu.memory_space<vmem>>, vector<1x28x16x128xbf16>
      %22 = vector.shape_cast %21 : vector<1x28x16x128xbf16> to vector<28x16x128xbf16>
      %c0_17 = arith.constant 0 : index
      %c0_18 = arith.constant 0 : index
      %c128 = arith.constant 128 : index
      %23 = vector.load %arg10[%c0_17, %c0_18, %c128] : memref<28x16x384xbf16, #tpu.memory_space<vmem>>, vector<28x16x128xbf16>
      tpu.vector_store %arg10[%c0_17, %c0_18, %c128], %22 {strides = array<i32>} : memref<28x16x384xbf16, #tpu.memory_space<vmem>>, vector<28x16x128xbf16>,
      %c0_19 = arith.constant 0 : index
      %c0_20 = arith.constant 0 : index
      %c12 = arith.constant 12 : index
      %c0_21 = arith.constant 0 : index
      %24 = vector.load %arg4[%c0_19, %c0_20, %c12, %c0_21] : memref<1x28x28x128xbf16, #tpu.memory_space<vmem>>, vector<1x28x16x128xbf16>
      %25 = vector.shape_cast %24 : vector<1x28x16x128xbf16> to vector<28x16x128xbf16>
      %c0_22 = arith.constant 0 : index
      %c0_23 = arith.constant 0 : index
      %c256 = arith.constant 256 : index
      %26 = vector.load %arg10[%c0_22, %c0_23, %c256] : memref<28x16x384xbf16, #tpu.memory_space<vmem>>, vector<28x16x128xbf16>
      tpu.vector_store %arg10[%c0_22, %c0_23, %c256], %25 {strides = array<i32>} : memref<28x16x384xbf16, #tpu.memory_space<vmem>>, vector<28x16x128xbf16>,
      %c0_24 = arith.constant 0 : index
      %c0_25 = arith.constant 0 : index
      %c0_26 = arith.constant 0 : index
      %27 = vector.load %arg10[%c0_24, %c0_25, %c0_26] : memref<28x16x384xbf16, #tpu.memory_space<vmem>>, vector<16x16x384xbf16>
      %28 = vector.shape_cast %27 : vector<16x16x384xbf16> to vector<256x384xbf16>
      %c0_27 = arith.constant 0 : index
      %c0_28 = arith.constant 0 : index
      %29 = vector.load %arg9[%c0_27, %c0_28] : memref<256x128xf32, #tpu.memory_space<vmem>>, vector<256x128xf32>
      %c0_29 = arith.constant 0 : index
      %c0_30 = arith.constant 0 : index
      %c0_31 = arith.constant 0 : index
      %c0_32 = arith.constant 0 : index
      %30 = vector.load %arg5[%c0_29, %c0_30, %c0_31, %c0_32] : memref<3x3x128x128xbf16, #tpu.memory_space<vmem>>, vector<1x3x128x128xbf16>
      %31 = vector.shape_cast %30 : vector<1x3x128x128xbf16> to vector<3x128x128xbf16>
      %32 = vector.shape_cast %31 : vector<3x128x128xbf16> to vector<384x128xbf16>
      %cst = arith.constant dense<0.000000e+00> : vector<256x128xf32>
      %33 = tpu.matmul %28, %32, %cst {dimension_numbers = #tpu.dot_dimension_numbers<[1], [0], [0], [1], [0, 0, 1, 1], [], []>} : vector<256x384xbf16>, vector<384x128xbf16>, vector<256x128xf32> -> vector<256x128xf32>
      %34 = arith.addf %29, %33 : vector<256x128xf32>
      %c0_33 = arith.constant 0 : index
      %c0_34 = arith.constant 0 : index
      %35 = vector.load %arg9[%c0_33, %c0_34] : memref<256x128xf32, #tpu.memory_space<vmem>>, vector<256x128xf32>
      tpu.vector_store %arg9[%c0_33, %c0_34], %34 {strides = array<i32>} : memref<256x128xf32, #tpu.memory_space<vmem>>, vector<256x128xf32>,
      %c6_35 = arith.constant 6 : index
      %c0_36 = arith.constant 0 : index
      %c0_37 = arith.constant 0 : index
      %36 = vector.load %arg10[%c6_35, %c0_36, %c0_37] : memref<28x16x384xbf16, #tpu.memory_space<vmem>>, vector<16x16x384xbf16>
      %37 = vector.shape_cast %36 : vector<16x16x384xbf16> to vector<256x384xbf16>
      %c0_38 = arith.constant 0 : index
      %c0_39 = arith.constant 0 : index
      %38 = vector.load %arg9[%c0_38, %c0_39] : memref<256x128xf32, #tpu.memory_space<vmem>>, vector<256x128xf32>
      %c1 = arith.constant 1 : index
      %c0_40 = arith.constant 0 : index
      %c0_41 = arith.constant 0 : index
      %c0_42 = arith.constant 0 : index
      %39 = vector.load %arg5[%c1, %c0_40, %c0_41, %c0_42] : memref<3x3x128x128xbf16, #tpu.memory_space<vmem>>, vector<1x3x128x128xbf16>
      %40 = vector.shape_cast %39 : vector<1x3x128x128xbf16> to vector<3x128x128xbf16>
      %41 = vector.shape_cast %40 : vector<3x128x128xbf16> to vector<384x128xbf16>
      %cst_43 = arith.constant dense<0.000000e+00> : vector<256x128xf32>
      %42 = tpu.matmul %37, %41, %cst_43 {dimension_numbers = #tpu.dot_dimension_numbers<[1], [0], [0], [1], [0, 0, 1, 1], [], []>} : vector<256x384xbf16>, vector<384x128xbf16>, vector<256x128xf32> -> vector<256x128xf32>
      %43 = arith.addf %38, %42 : vector<256x128xf32>
      %c0_44 = arith.constant 0 : index
      %c0_45 = arith.constant 0 : index
      %44 = vector.load %arg9[%c0_44, %c0_45] : memref<256x128xf32, #tpu.memory_space<vmem>>, vector<256x128xf32>
      tpu.vector_store %arg9[%c0_44, %c0_45], %43 {strides = array<i32>} : memref<256x128xf32, #tpu.memory_space<vmem>>, vector<256x128xf32>,
      %c12_46 = arith.constant 12 : index
      %c0_47 = arith.constant 0 : index
      %c0_48 = arith.constant 0 : index
      %45 = vector.load %arg10[%c12_46, %c0_47, %c0_48] : memref<28x16x384xbf16, #tpu.memory_space<vmem>>, vector<16x16x384xbf16>
      %46 = vector.shape_cast %45 : vector<16x16x384xbf16> to vector<256x384xbf16>
      %c0_49 = arith.constant 0 : index
      %c0_50 = arith.constant 0 : index
      %47 = vector.load %arg9[%c0_49, %c0_50] : memref<256x128xf32, #tpu.memory_space<vmem>>, vector<256x128xf32>
      %c2 = arith.constant 2 : index
      %c0_51 = arith.constant 0 : index
      %c0_52 = arith.constant 0 : index
      %c0_53 = arith.constant 0 : index
      %48 = vector.load %arg5[%c2, %c0_51, %c0_52, %c0_53] : memref<3x3x128x128xbf16, #tpu.memory_space<vmem>>, vector<1x3x128x128xbf16>
      %49 = vector.shape_cast %48 : vector<1x3x128x128xbf16> to vector<3x128x128xbf16>
      %50 = vector.shape_cast %49 : vector<3x128x128xbf16> to vector<384x128xbf16>
      %cst_54 = arith.constant dense<0.000000e+00> : vector<256x128xf32>
      %51 = tpu.matmul %46, %50, %cst_54 {dimension_numbers = #tpu.dot_dimension_numbers<[1], [0], [0], [1], [0, 0, 1, 1], [], []>} : vector<256x384xbf16>, vector<384x128xbf16>, vector<256x128xf32> -> vector<256x128xf32>
      %52 = arith.addf %47, %51 : vector<256x128xf32>
      %c0_55 = arith.constant 0 : index
      %c0_56 = arith.constant 0 : index
      %53 = vector.load %arg9[%c0_55, %c0_56] : memref<256x128xf32, #tpu.memory_space<vmem>>, vector<256x128xf32>
      tpu.vector_store %arg9[%c0_55, %c0_56], %52 {strides = array<i32>} : memref<256x128xf32, #tpu.memory_space<vmem>>, vector<256x128xf32>,
    } else {
    }
    %c0_i32_6 = arith.constant 0 : i32
    %15 = arith.cmpi eq, %arg3, %c0_i32_6 : i32
    %16 = arith.extui %15 : i1 to i32
    %c0_i32_7 = arith.constant 0 : i32
    %17 = arith.cmpi ne, %16, %c0_i32_7 : i32
    scf.if %17 {
      %c0 = arith.constant 0 : index
      %c0_8 = arith.constant 0 : index
      %18 = vector.load %arg9[%c0, %c0_8] : memref<256x128xf32, #tpu.memory_space<vmem>>, vector<256x128xf32>
      %c0_9 = arith.constant 0 : index
      %c0_10 = arith.constant 0 : index
      %c0_11 = arith.constant 0 : index
      %19 = vector.load %arg6[%c0_9, %c0_10, %c0_11] : memref<1x1x128xf32, #tpu.memory_space<vmem>>, vector<1x1x128xf32>
      %20 = vector.shape_cast %19 : vector<1x1x128xf32> to vector<1x128xf32>
      %21 = vector.broadcast %20 : vector<1x128xf32> to vector<256x128xf32>
      %22 = arith.mulf %18, %21 : vector<256x128xf32>
      %c0_12 = arith.constant 0 : index
      %c0_13 = arith.constant 0 : index
      %c0_14 = arith.constant 0 : index
      %23 = vector.load %arg7[%c0_12, %c0_13, %c0_14] : memref<1x1x128xf32, #tpu.memory_space<vmem>>, vector<1x1x128xf32>
      %24 = vector.shape_cast %23 : vector<1x1x128xf32> to vector<1x128xf32>
      %25 = vector.broadcast %24 : vector<1x128xf32> to vector<256x128xf32>
      %26 = arith.addf %22, %25 : vector<256x128xf32>
      %cst = arith.constant 0.000000e+00 : f32
      %27 = vector.broadcast %cst : f32 to vector<256x128xf32>
      %28 = arith.maximumf %26, %27 : vector<256x128xf32>
      %29 = vector.shape_cast %28 : vector<256x128xf32> to vector<16x16x128xf32>
      %30 = arith.truncf %29 : vector<16x16x128xf32> to vector<16x16x128xbf16>
      %c0_15 = arith.constant 0 : index
      %c0_16 = arith.constant 0 : index
      %c0_17 = arith.constant 0 : index
      %c0_18 = arith.constant 0 : index
      %31 = vector.load %arg8[%c0_15, %c0_16, %c0_17, %c0_18] : memref<1x16x16x128xbf16, #tpu.memory_space<vmem>>, vector<1x16x16x128xbf16>
      %32 = vector.shape_cast %31 : vector<1x16x16x128xbf16> to vector<16x16x128xbf16>
      %33 = vector.shape_cast %30 : vector<16x16x128xbf16> to vector<1x16x16x128xbf16>
      tpu.vector_store %arg8[%c0_15, %c0_16, %c0_17, %c0_18], %33 {strides = array<i32>} : memref<1x16x16x128xbf16, #tpu.memory_space<vmem>>, vector<1x16x16x128xbf16>,
    } else {
    }
    return
  }
  func.func @transform_0(%arg0: i32, %arg1: i32, %arg2: i32, %arg3: i32) -> (i32, i32, i32, i32) {
    %c0_i32 = arith.constant 0 : i32
    %c0_i32_0 = arith.constant 0 : i32
    %c0_i32_1 = arith.constant 0 : i32
    return %arg0, %c0_i32, %c0_i32_0, %arg3 : i32, i32, i32, i32
  }
  func.func @transform_1(%arg0: i32, %arg1: i32, %arg2: i32, %arg3: i32) -> (i32, i32, i32, i32) {
    %c0_i32 = arith.constant 0 : i32
    %c0_i32_0 = arith.constant 0 : i32
    return %arg1, %c0_i32, %arg3, %arg2 : i32, i32, i32, i32
  }
  func.func @transform_2(%arg0: i32, %arg1: i32, %arg2: i32, %arg3: i32) -> (i32, i32, i32) {
    %c0_i32 = arith.constant 0 : i32
    %c0_i32_0 = arith.constant 0 : i32
    return %arg1, %c0_i32, %arg2 : i32, i32, i32
  }
  func.func @transform_3(%arg0: i32, %arg1: i32, %arg2: i32, %arg3: i32) -> (i32, i32, i32) {
    %c0_i32 = arith.constant 0 : i32
    %c0_i32_0 = arith.constant 0 : i32
    return %arg1, %c0_i32, %arg2 : i32, i32, i32
  }
  func.func @transform_4(%arg0: i32, %arg1: i32, %arg2: i32, %arg3: i32) -> (i32, i32, i32, i32) {
    %c1_i32 = arith.constant 1 : i32
    %0 = arith.muli %arg1, %c1_i32 : i32
    %1 = arith.addi %0, %arg2 : i32
    %c0_i32 = arith.constant 0 : i32
    %c0_i32_0 = arith.constant 0 : i32
    %c0_i32_1 = arith.constant 0 : i32
    return %arg0, %c0_i32, %c0_i32_0, %1 : i32, i32, i32, i32
  }
}

</mosaic_0001>

<llo_original>
// kernel: fused_aspp_convs.1
$region0: #{fused_aspp_convs.1}
  #allocation0 [shape = 'u32[]', space=smem, size = 0x4, offset = 0x4, fixed_abs, tag = 'smem constant byte address 0x4 - core index']
  #allocation1 [shape = 'u32[144,128]{1,0:T(1,128)}', space=vmem, size = 0x12000, scoped, tag = 'internal scratch']
  #allocation2 [shape = 'f32[256,128]{1,0:T(8,128)}', space=vmem, size = 0x20000, scoped, tag = 'scratch operand']
  #allocation3 [shape = 'bf16[28,16,384]{2,1,0:T(16,128)(2,1)}', space=vmem, size = 0x54000, scoped, tag = 'scratch operand']
  %s0 = inlined_call_operand.vmem [shape: bf16[2,28,28,128], index: 0, kind: input, shape index: {}]
  %s1 = inlined_call_operand.hbm [shape: bf16[12,3,128,128], index: 1, kind: input, shape index: {}]
  %s2 = inlined_call_operand.hbm [shape: f32[4,1,128], index: 2, kind: input, shape index: {}]
  %s3 = inlined_call_operand.hbm [shape: f32[4,1,128], index: 3, kind: input, shape index: {}]
  %s4 = inlined_call_operand.hbm [shape: bf16[2,16,16,512], index: 4, kind: output, shape index: {}]
  %s5 = sld [smem:[#allocation0]]
  $region85: #{fused_aspp_convs.1} parent=0
    _
  %s7 = ssub.s32 1, %s5
  %s8 = scalar_select 0, %s7, %s5
  $region1: #{fused_aspp_convs.1} parent=0
    #allocation4 [shape = 'u8[589824]{0}', space=vmem, size = 0x90000, scoped, tag = 'input window, operand 1']
    #allocation5 [shape = 's32[2]{0}', space=sflag, size = 0x8, scoped, tag = 'scoped memory for fused_aspp_convs.1']
    #allocation6 [shape = 's32[2]{0}', space=sflag, size = 0x8, scoped, tag = 'scoped memory for fused_aspp_convs.1']
    #allocation7 [shape = 'u8[1024]{0}', space=vmem, size = 0x400, scoped, tag = 'input window, operand 2']
    #allocation8 [shape = 's32[2]{0}', space=sflag, size = 0x8, scoped, tag = 'scoped memory for fused_aspp_convs.1']
    #allocation9 [shape = 'u8[1024]{0}', space=vmem, size = 0x400, scoped, tag = 'input window, operand 3']
    #allocation10 [shape = 'u8[131072]{0}', space=vmem, size = 0x20000, scoped, tag = 'output window, operand 0']
    %9 = vsyncpa [#allocation5], 0
    %s10 = scalar_lea.sflag [#allocation5], 1
    %11 = vsyncpa %s10, 0
    %12 = vsyncpa [#allocation8], 0
    %s13 = scalar_lea.sflag [#allocation8], 1
    %14 = vsyncpa %s13, 0
    %15 = vsyncpa [#allocation6], 0
    %s16 = scalar_lea.sflag [#allocation6], 1
    %17 = vsyncpa %s16, 0
    loop: start=0, step=1, limit=10
    $region2: #{fused_aspp_convs.1} parent=1 // loop_pre_header
      _
    $region3: #{fused_aspp_convs.1} parent=1 // loop_header
      %s19 = sphi 0, %s23
      %p20 = scmp.ge.s32.totalorder %s19, 10
      %s26 = sphi 0, %s52
      %s27 = sphi 0, %s48
      %s28 = sphi 0, %s44
      %s29 = sphi 0, %s40
      %s30 = sphi 0, %s26
      %s31 = sphi 0, %s27
      %s32 = sphi 0, %s28
      %s33 = sphi 0, %s29
      %s34 = sphi 0, %s30
      %s35 = sphi 0, %s31
      %s36 = sphi 0, %s32
      %s37 = sphi 0, %s33
      %s57 = sphi 0, %s59
      %s60 = sphi 0, %s57
      %s61 = sphi 0, %s60
      %s77 = sphi 0, %s61
      %s87 = sphi 0, %s89
      %s90 = sphi 0, %s87
      %s91 = sphi 0, %s90
      %s107 = sphi 0, %s91
      %s115 = sphi 0, %s117
      %s118 = sphi 0, %s115
      %s119 = sphi 0, %s118
      %s135 = sphi 0, %s119
      %s143 = sphi 0, %s145
      %s146 = sphi 0, %s143
      %s147 = sphi 0, %s146
      %s163 = sphi 0, %s147
      %s173 = sphi 0, %s175
      %s176 = sphi 0, %s173
      %s177 = sphi 0, %s176
      %s193 = sphi 0, %s177
    $region4: #{fused_aspp_convs.1} parent=1 // loop_header_branch
      %22 = sbr.rel (%p20) target = $region8
    $region5: #{fused_aspp_convs.1} parent=1 // loop_body
      %s24 = ssub.s32 %s19, 1
      %s25 = ssub.s32 %s19, 2
      %s38 = sadd.s32 1, %s29
      %p39 = scmp.ge.s32.totalorder %s38, 1
      %s40 = scalar_select %p39, 0, %s38
      %s41 = sadd.s32 1, %s28
      %s42 = scalar_select %p39, %s41, %s28
      %p43 = scmp.ge.s32.totalorder %s42, 1
      %s44 = scalar_select %p43, 0, %s42
      %s45 = sadd.s32 1, %s27
      %s46 = scalar_select %p43, %s45, %s27
      %p47 = scmp.ge.s32.totalorder %s46, 4
      %s48 = scalar_select %p47, 0, %s46
      %s49 = sadd.s32 1, %s26
      %s50 = scalar_select %p47, %s49, %s26
      %p51 = scmp.ge.s32.totalorder %s50, 2
      %s52 = scalar_select %p51, 0, %s50
      %s53 = ssub.s32 %s26, %s52
      %s54 = ssub.s32 %s29, %s40
      %s55 = sor.u32 %s53, %s54
      %p56 = scmp.eq.s32.totalorder %s55, 0
      %s58 = sadd.s32 %s57, 1
      %s59 = scalar_select %p56, %s57, %s58
      %p62 = pneg %p56
      %p63 = scmp.eq.s32.totalorder %s19, 7
      %p64 = por %p62, %p63
      %p65 = scmp.ne.s32.totalorder %s57, %s60
      %p66 = scmp.eq.s32.totalorder %s19, 0
      %p67 = por %p65, %p66
      %p68 = scmp.ne.s32.totalorder %s57, %s60
      %p69 = scmp.eq.s32.totalorder %s24, 7
      %p70 = por %p68, %p69
      %p71 = scmp.ne.s32.totalorder %s60, %s61
      %p72 = scmp.eq.s32.totalorder %s24, 0
      %p73 = por %p71, %p72
      %p74 = scmp.ne.s32.totalorder %s60, %s61
      %p75 = scmp.eq.s32.totalorder %s25, 7
      %p76 = por %p74, %p75
      %p78 = scmp.ne.s32.totalorder %s61, %s77
      %p79 = scmp.eq.s32.totalorder %s25, 0
      %p80 = por %p78, %p79
      %s81 = ssub.s32 %s27, %s48
      %s82 = ssub.s32 %s29, %s40
      %s83 = sor.u32 %s81, %s82
      %s84 = ssub.s32 %s28, %s44
      %s85 = sor.u32 %s83, %s84
      %p86 = scmp.eq.s32.totalorder %s85, 0
      %s88 = sadd.s32 %s87, 1
      %s89 = scalar_select %p86, %s87, %s88
      %p92 = pneg %p86
      %p93 = scmp.eq.s32.totalorder %s19, 7
      %p94 = por %p92, %p93
      %p95 = scmp.ne.s32.totalorder %s87, %s90
      %p96 = scmp.eq.s32.totalorder %s19, 0
      %p97 = por %p95, %p96
      %p98 = scmp.ne.s32.totalorder %s87, %s90
      %p99 = scmp.eq.s32.totalorder %s24, 7
      %p100 = por %p98, %p99
      %p101 = scmp.ne.s32.totalorder %s90, %s91
      %p102 = scmp.eq.s32.totalorder %s24, 0
      %p103 = por %p101, %p102
      %p104 = scmp.ne.s32.totalorder %s90, %s91
      %p105 = scmp.eq.s32.totalorder %s25, 7
      %p106 = por %p104, %p105
      %p108 = scmp.ne.s32.totalorder %s91, %s107
      %p109 = scmp.eq.s32.totalorder %s25, 0
      %p110 = por %p108, %p109
      %s111 = ssub.s32 %s27, %s48
      %s112 = ssub.s32 %s28, %s44
      %s113 = sor.u32 %s111, %s112
      %p114 = scmp.eq.s32.totalorder %s113, 0
      %s116 = sadd.s32 %s115, 1
      %s117 = scalar_select %p114, %s115, %s116
      %p120 = pneg %p114
      %p121 = scmp.eq.s32.totalorder %s19, 7
      %p122 = por %p120, %p121
      %p123 = scmp.ne.s32.totalorder %s115, %s118
      %p124 = scmp.eq.s32.totalorder %s19, 0
      %p125 = por %p123, %p124
      %p126 = scmp.ne.s32.totalorder %s115, %s118
      %p127 = scmp.eq.s32.totalorder %s24, 7
      %p128 = por %p126, %p127
      %p129 = scmp.ne.s32.totalorder %s118, %s119
      %p130 = scmp.eq.s32.totalorder %s24, 0
      %p131 = por %p129, %p130
      %p132 = scmp.ne.s32.totalorder %s118, %s119
      %p133 = scmp.eq.s32.totalorder %s25, 7
      %p134 = por %p132, %p133
      %p136 = scmp.ne.s32.totalorder %s119, %s135
      %p137 = scmp.eq.s32.totalorder %s25, 0
      %p138 = por %p136, %p137
      %s139 = ssub.s32 %s27, %s48
      %s140 = ssub.s32 %s28, %s44
      %s141 = sor.u32 %s139, %s140
      %p142 = scmp.eq.s32.totalorder %s141, 0
      %s144 = sadd.s32 %s143, 1
      %s145 = scalar_select %p142, %s143, %s144
      %p148 = pneg %p142
      %p149 = scmp.eq.s32.totalorder %s19, 7
      %p150 = por %p148, %p149
      %p151 = scmp.ne.s32.totalorder %s143, %s146
      %p152 = scmp.eq.s32.totalorder %s19, 0
      %p153 = por %p151, %p152
      %p154 = scmp.ne.s32.totalorder %s143, %s146
      %p155 = scmp.eq.s32.totalorder %s24, 7
      %p156 = por %p154, %p155
      %p157 = scmp.ne.s32.totalorder %s146, %s147
      %p158 = scmp.eq.s32.totalorder %s24, 0
      %p159 = por %p157, %p158
      %p160 = scmp.ne.s32.totalorder %s146, %s147
      %p161 = scmp.eq.s32.totalorder %s25, 7
      %p162 = por %p160, %p161
      %p164 = scmp.ne.s32.totalorder %s147, %s163
      %p165 = scmp.eq.s32.totalorder %s25, 0
      %p166 = por %p164, %p165
      %s167 = sadd.s32 %s27, %s28
      %s168 = sadd.s32 %s48, %s44
      %s169 = ssub.s32 %s26, %s52
      %s170 = ssub.s32 %s167, %s168
      %s171 = sor.u32 %s169, %s170
      %p172 = scmp.eq.s32.totalorder %s171, 0
      %s174 = sadd.s32 %s173, 1
      %s175 = scalar_select %p172, %s173, %s174
      %p178 = pneg %p172
      %p179 = scmp.eq.s32.totalorder %s19, 7
      %p180 = por %p178, %p179
      %p181 = scmp.ne.s32.totalorder %s173, %s176
      %p182 = scmp.eq.s32.totalorder %s19, 0
      %p183 = por %p181, %p182
      %p184 = scmp.ne.s32.totalorder %s173, %s176
      %p185 = scmp.eq.s32.totalorder %s24, 7
      %p186 = por %p184, %p185
      %p187 = scmp.ne.s32.totalorder %s176, %s177
      %p188 = scmp.eq.s32.totalorder %s24, 0
      %p189 = por %p187, %p188
      %p190 = scmp.ne.s32.totalorder %s176, %s177
      %p191 = scmp.eq.s32.totalorder %s25, 7
      %p192 = por %p190, %p191
      %p194 = scmp.ne.s32.totalorder %s177, %s193
      %p195 = scmp.eq.s32.totalorder %s25, 0
      %p196 = por %p194, %p195
      %p197 = scmp.le.s32.totalorder 1, %s19
      %p198 = scmp.lt.s32.totalorder %s19, 9
      %p199 = pnand %p197, %p198
      %p200 = pneg %p199
      // Predicated region
      $region9: #{fused_aspp_convs.1} parent=5 // pred_check
        _
      $region10: #{fused_aspp_convs.1} parent=5 // pred_check_branch
        %202 = sbr.rel (%p199) target = $region12
      $region11: #{fused_aspp_convs.1} parent=5 // pred_region
        %s203 = ssub.s32 %s19, 1
      $region12: #{fused_aspp_convs.1} parent=5 // pred_fallthru
        _
      %p204 = scmp.lt.s32.totalorder %s19, 8
      // Predicated region
      $region13: #{fused_aspp_convs.1} parent=5 // pred_check
        %p205 = pneg %p204
      $region14: #{fused_aspp_convs.1} parent=5 // pred_check_branch
        %207 = sbr.rel (%p205) target = $region16
      $region15: #{fused_aspp_convs.1} parent=5 // pred_region
        // Predicated region
        $region17: #{fused_aspp_convs.1} parent=15 // pred_check
          %p208 = pneg %p67
        $region18: #{fused_aspp_convs.1} parent=15 // pred_check_branch
          %210 = sbr.rel (%p208) target = $region20
        $region19: #{fused_aspp_convs.1} parent=15 // pred_region
          %p211 = scmp.lt.s32.totalorder %s26, 1
          %s212 = scalar_select %p211, %s26, 1
          %p213 = scmp.lt.s32.totalorder %s29, 0
          %s214 = scalar_select %p213, %s29, 0
          %s215 = smul.addr %s212, 112
          %s216 = sadd.s32 %s214, %s215
          %s217 = smul.addr %s216, 4
          %s218 = scalar_lea.vmem %s0, %s217
        $region20: #{fused_aspp_convs.1} parent=15 // pred_fallthru
          _
        // Predicated region
        $region21: #{fused_aspp_convs.1} parent=15 // pred_check
          %p219 = pneg %p97
        $region22: #{fused_aspp_convs.1} parent=15 // pred_check_branch
          %221 = sbr.rel (%p219) target = $region24
        $region23: #{fused_aspp_convs.1} parent=15 // pred_region
          %s222 = sand.u32 %s87, 1
          %s223 = scalar_lea.sflag [#allocation5], %s222
          %s224 = sand.u32 %s87, 1
          %s225 = smul.addr %s224, 576
          %s226 = scalar_lea.vmem [#allocation4], %s225
          %s227 = smul.u32 3, %s27
          %s228 = smul.u32 16, %s29
          %s230 = ssub.s32 9216, 9216
          %231 = vsyncadd %s223, %s230
          %s232 = sadd.s32 %s28, %s228
          %s233 = smul.addr %s227, 48
          %s234 = sadd.s32 %s232, %s233
          %s235 = smul.addr %s234, 64
          %s236 = scalar_lea.hbm %s1, %s235
          %s237 = sshll.u32 %s226, 4
          %s238 = int_to_ptr.vmem [resolvable:$true] %s237
          %243 = dma.hbm_to_vmem [thread:$0]  %s236, 9216, %s238, %s223, 64, 64, 4
        $region24: #{fused_aspp_convs.1} parent=15 // pred_fallthru
          _
        // Predicated region
        $region25: #{fused_aspp_convs.1} parent=15 // pred_check
          %p244 = pneg %p125
        $region26: #{fused_aspp_convs.1} parent=15 // pred_check_branch
          %246 = sbr.rel (%p244) target = $region28
        $region27: #{fused_aspp_convs.1} parent=15 // pred_region
          %s247 = sand.u32 %s19, 1
          %s248 = scalar_lea.sflag [#allocation8], %s247
          %s249 = sand.u32 %s115, 1
          %s250 = scalar_lea.vmem [#allocation7], %s249
          %s252 = ssub.s32 16, 16
          %253 = vsyncadd %s248, %s252
          %s254 = sadd.s32 %s28, %s27
          %s255 = smul.addr %s254, 16
          %s256 = scalar_lea.hbm %s2, %s255
          %s258 = sshll.u32 %s250, 4
          %s259 = int_to_ptr.vmem [resolvable:$true] %s258
          %261 = dma.hbm_to_vmem [thread:$0]  %s256, 16, %s259, %s248
        $region28: #{fused_aspp_convs.1} parent=15 // pred_fallthru
          _
        // Predicated region
        $region29: #{fused_aspp_convs.1} parent=15 // pred_check
          %p262 = pneg %p153
        $region30: #{fused_aspp_convs.1} parent=15 // pred_check_branch
          %264 = sbr.rel (%p262) target = $region32
        $region31: #{fused_aspp_convs.1} parent=15 // pred_region
          %s265 = sand.u32 %s19, 1
          %s266 = scalar_lea.sflag [#allocation8], %s265
          %s267 = sand.u32 %s143, 1
          %s268 = scalar_lea.vmem [#allocation9], %s267
          %s270 = ssub.s32 16, 16
          %271 = vsyncadd %s266, %s270
          %s272 = sadd.s32 %s28, %s27
          %s273 = smul.addr %s272, 16
          %s274 = scalar_lea.hbm %s3, %s273
          %s276 = sshll.u32 %s268, 4
          %s277 = int_to_ptr.vmem [resolvable:$true] %s276
          %279 = dma.hbm_to_vmem [thread:$0]  %s274, 16, %s277, %s266
        $region32: #{fused_aspp_convs.1} parent=15 // pred_fallthru
          _
      $region16: #{fused_aspp_convs.1} parent=5 // pred_fallthru
        _
      %p280 = scmp.le.s32.totalorder 1, %s19
      %p281 = scmp.lt.s32.totalorder %s19, 9
      %p282 = pnand %p280, %p281
      %p283 = pneg %p282
      // Predicated region
      $region33: #{fused_aspp_convs.1} parent=5 // pred_check
        _
      $region34: #{fused_aspp_convs.1} parent=5 // pred_check_branch
        %285 = sbr.rel (%p282) target = $region36
      $region35: #{fused_aspp_convs.1} parent=5 // pred_region
        %s286 = ssub.s32 %s19, 1
        %s287 = sand.u32 %s90, 1
        %s288 = scalar_lea.sflag [#allocation5], %s287
        %s289 = sand.u32 %s90, 1
        %s290 = smul.addr %s289, 576
        %s291 = scalar_lea.vmem [#allocation4], %s290
        // Predicated region
        $region37: #{fused_aspp_convs.1} parent=35 // pred_check
          %p292 = pneg %p103
        $region38: #{fused_aspp_convs.1} parent=35 // pred_check_branch
          %294 = sbr.rel (%p292) target = $region40
        $region39: #{fused_aspp_convs.1} parent=35 // pred_region
          %295 = dma.done %s288, 9216
        $region40: #{fused_aspp_convs.1} parent=35 // pred_fallthru
          _
        %s296 = sand.u32 %s24, 1
        %s297 = scalar_lea.sflag [#allocation8], %s296
        %s298 = sand.u32 %s118, 1
        %s299 = scalar_lea.vmem [#allocation7], %s298
        // Predicated region
        $region41: #{fused_aspp_convs.1} parent=35 // pred_check
          %p300 = pneg %p131
        $region42: #{fused_aspp_convs.1} parent=35 // pred_check_branch
          %302 = sbr.rel (%p300) target = $region44
        $region43: #{fused_aspp_convs.1} parent=35 // pred_region
          %303 = dma.done %s297, 16
        $region44: #{fused_aspp_convs.1} parent=35 // pred_fallthru
          _
        %s304 = sand.u32 %s24, 1
        %s305 = scalar_lea.sflag [#allocation8], %s304
        %s306 = sand.u32 %s146, 1
        %s307 = scalar_lea.vmem [#allocation9], %s306
        // Predicated region
        $region45: #{fused_aspp_convs.1} parent=35 // pred_check
          %p308 = pneg %p159
        $region46: #{fused_aspp_convs.1} parent=35 // pred_check_branch
          %310 = sbr.rel (%p308) target = $region48
        $region47: #{fused_aspp_convs.1} parent=35 // pred_region
          %311 = dma.done %s305, 16
        $region48: #{fused_aspp_convs.1} parent=35 // pred_fallthru
          _
        %p312 = scmp.lt.s32.totalorder %s30, 1
        %s313 = scalar_select %p312, %s30, 1
        %p314 = scmp.lt.s32.totalorder %s33, 0
        %s315 = scalar_select %p314, %s33, 0
        %s316 = smul.addr %s313, 112
        %s317 = sadd.s32 %s315, %s316
        %s318 = smul.addr %s317, 4
        %s319 = scalar_lea.vmem %s0, %s318
        %p320 = pneg %p73
        %p321 = pneg %p70
        %s322 = sand.u32 %s90, 1
        %s323 = scalar_lea.sflag [#allocation5], %s322
        %s324 = sand.u32 %s90, 1
        %s325 = smul.addr %s324, 576
        %s326 = scalar_lea.vmem [#allocation4], %s325
        %p327 = pneg %p103
        %p328 = pneg %p100
        %s329 = sand.u32 %s24, 1
        %s330 = scalar_lea.sflag [#allocation8], %s329
        %s331 = sand.u32 %s118, 1
        %s332 = scalar_lea.vmem [#allocation7], %s331
        %p333 = pneg %p131
        %p334 = pneg %p128
        %s335 = sand.u32 %s24, 1
        %s336 = scalar_lea.sflag [#allocation8], %s335
        %s337 = sand.u32 %s146, 1
        %s338 = scalar_lea.vmem [#allocation9], %s337
        %p339 = pneg %p159
        %p340 = pneg %p156
        %p341 = pneg %p189
        %p342 = pneg %p186
        %s343 = sand.u32 %s176, 1
        %s344 = scalar_lea.sflag [#allocation6], %s343
        %s345 = sand.u32 %s176, 1
        %s346 = smul.addr %s345, 128
        %s347 = scalar_lea.vmem [#allocation10], %s346
        %p348 = scmp.lt.s32.totalorder %s30, 1
        %s349 = scalar_select %p348, %s30, 1
        %p350 = scmp.lt.s32.totalorder %s33, 0
        %s351 = scalar_select %p350, %s33, 0
        %s352 = smul.addr %s349, 112
        %s353 = sadd.s32 %s351, %s352
        %s354 = smul.addr %s353, 4
        %s355 = scalar_lea.vmem %s0, %s354
        %s356 = smul.u32 3, %s31
        %s357 = smul.u32 16, %s33
        %s358 = sadd.s32 %s31, %s32
        %p360 = scmp.eq.s32.totalorder %s33, 0
        // Predicated region
        $region49: #{fused_aspp_convs.1} parent=35 // pred_check
          %p361 = pneg %p360
        $region50: #{fused_aspp_convs.1} parent=35 // pred_check_branch
          %363 = sbr.rel (%p361) target = $region52
        $region51: #{fused_aspp_convs.1} parent=35 // pred_region
          %364 = vst [vmem:[#allocation2] sm:$0xff] 0.0
          %365 = vst [vmem:[#allocation2 + $0x8] sm:$0xff] 0.0
          %366 = vst [vmem:[#allocation2 + $0x10] sm:$0xff] 0.0
          %367 = vst [vmem:[#allocation2 + $0x18] sm:$0xff] 0.0
          %368 = vst [vmem:[#allocation2 + $0x20] sm:$0xff] 0.0
          %369 = vst [vmem:[#allocation2 + $0x28] sm:$0xff] 0.0
          %370 = vst [vmem:[#allocation2 + $0x30] sm:$0xff] 0.0
          %371 = vst [vmem:[#allocation2 + $0x38] sm:$0xff] 0.0
          %372 = vst [vmem:[#allocation2 + $0x40] sm:$0xff] 0.0
          %373 = vst [vmem:[#allocation2 + $0x48] sm:$0xff] 0.0
          %374 = vst [vmem:[#allocation2 + $0x50] sm:$0xff] 0.0
          %375 = vst [vmem:[#allocation2 + $0x58] sm:$0xff] 0.0
          %376 = vst [vmem:[#allocation2 + $0x60] sm:$0xff] 0.0
          %377 = vst [vmem:[#allocation2 + $0x68] sm:$0xff] 0.0
          %378 = vst [vmem:[#allocation2 + $0x70] sm:$0xff] 0.0
          %379 = vst [vmem:[#allocation2 + $0x78] sm:$0xff] 0.0
          %380 = vst [vmem:[#allocation2 + $0x80] sm:$0xff] 0.0
          %381 = vst [vmem:[#allocation2 + $0x88] sm:$0xff] 0.0
          %382 = vst [vmem:[#allocation2 + $0x90] sm:$0xff] 0.0
          %383 = vst [vmem:[#allocation2 + $0x98] sm:$0xff] 0.0
          %384 = vst [vmem:[#allocation2 + $0xa0] sm:$0xff] 0.0
          %385 = vst [vmem:[#allocation2 + $0xa8] sm:$0xff] 0.0
          %386 = vst [vmem:[#allocation2 + $0xb0] sm:$0xff] 0.0
          %387 = vst [vmem:[#allocation2 + $0xb8] sm:$0xff] 0.0
          %388 = vst [vmem:[#allocation2 + $0xc0] sm:$0xff] 0.0
          %389 = vst [vmem:[#allocation2 + $0xc8] sm:$0xff] 0.0
          %390 = vst [vmem:[#allocation2 + $0xd0] sm:$0xff] 0.0
          %391 = vst [vmem:[#allocation2 + $0xd8] sm:$0xff] 0.0
          %392 = vst [vmem:[#allocation2 + $0xe0] sm:$0xff] 0.0
          %393 = vst [vmem:[#allocation2 + $0xe8] sm:$0xff] 0.0
          %394 = vst [vmem:[#allocation2 + $0xf0] sm:$0xff] 0.0
          %395 = vst [vmem:[#allocation2 + $0xf8] sm:$0xff] 0.0
        $region52: #{fused_aspp_convs.1} parent=35 // pred_fallthru
          _
        %p396 = scmp.eq.s32.totalorder %s31, 0
        // Predicated region
        $region53: #{fused_aspp_convs.1} parent=35 // pred_check
          %p397 = pneg %p396
        $region54: #{fused_aspp_convs.1} parent=35 // pred_check_branch
          %399 = sbr.rel (%p397) target = $region56
        $region55: #{fused_aspp_convs.1} parent=35 // pred_region
          %s400 = scalar_lea.vmem %s355, 96
          %v401 = vld [vmem:[%s400] sm:$0x8]
          %v402 = vld [vmem:[%s400 + $0x4] sm:$0xf]
          %v403 = vld [vmem:[%s400 + $0x8] sm:$0x7]
          %v404 = vld [vmem:[%s400 + $0x10] sm:$0x8]
          %v405 = vld [vmem:[%s400 + $0x14] sm:$0xf]
          %v406 = vld [vmem:[%s400 + $0x18] sm:$0x7]
          %v407 = vld [vmem:[%s400 + $0x20] sm:$0x8]
          %v408 = vld [vmem:[%s400 + $0x24] sm:$0xf]
          %v409 = vld [vmem:[%s400 + $0x28] sm:$0x7]
          %v410 = vld [vmem:[%s400 + $0x30] sm:$0x8]
          %v411 = vld [vmem:[%s400 + $0x34] sm:$0xf]
          %v412 = vld [vmem:[%s400 + $0x38] sm:$0x7]
          %v413 = vld [vmem:[%s400 + $0x40] sm:$0x8]
          %v414 = vld [vmem:[%s400 + $0x44] sm:$0xf]
          %v415 = vld [vmem:[%s400 + $0x48] sm:$0x7]
          %v416 = vld [vmem:[%s400 + $0x50] sm:$0x8]
          %v417 = vld [vmem:[%s400 + $0x54] sm:$0xf]
          %v418 = vld [vmem:[%s400 + $0x58] sm:$0x7]
          %v419 = vld [vmem:[%s400 + $0x60] sm:$0x8]
          %v420 = vld [vmem:[%s400 + $0x64] sm:$0xf]
          %v421 = vld [vmem:[%s400 + $0x68] sm:$0x7]
          %v422 = vld [vmem:[%s400 + $0x70] sm:$0x8]
          %v423 = vld [vmem:[%s400 + $0x74] sm:$0xf]
          %v424 = vld [vmem:[%s400 + $0x78] sm:$0x7]
          %v425 = vld [vmem:[%s400 + $0x80] sm:$0x8]
          %v426 = vld [vmem:[%s400 + $0x84] sm:$0xf]
          %v427 = vld [vmem:[%s400 + $0x88] sm:$0x7]
          %v428 = vld [vmem:[%s400 + $0x90] sm:$0x8]
          %v429 = vld [vmem:[%s400 + $0x94] sm:$0xf]
          %v430 = vld [vmem:[%s400 + $0x98] sm:$0x7]
          %v431 = vld [vmem:[%s400 + $0xa0] sm:$0x8]
          %v432 = vld [vmem:[%s400 + $0xa4] sm:$0xf]
          %v433 = vld [vmem:[%s400 + $0xa8] sm:$0x7]
          %v434 = vld [vmem:[%s400 + $0xb0] sm:$0x8]
          %v435 = vld [vmem:[%s400 + $0xb4] sm:$0xf]
          %v436 = vld [vmem:[%s400 + $0xb8] sm:$0x7]
          %v437 = vld [vmem:[%s400 + $0xc0] sm:$0x8]
          %v438 = vld [vmem:[%s400 + $0xc4] sm:$0xf]
          %v439 = vld [vmem:[%s400 + $0xc8] sm:$0x7]
          %v440 = vld [vmem:[%s400 + $0xd0] sm:$0x8]
          %v441 = vld [vmem:[%s400 + $0xd4] sm:$0xf]
          %v442 = vld [vmem:[%s400 + $0xd8] sm:$0x7]
          %v443 = vld [vmem:[%s400 + $0xe0] sm:$0x8]
          %v444 = vld [vmem:[%s400 + $0xe4] sm:$0xf]
          %v445 = vld [vmem:[%s400 + $0xe8] sm:$0x7]
          %v446 = vld [vmem:[%s400 + $0xf0] sm:$0x8]
          %v447 = vld [vmem:[%s400 + $0xf4] sm:$0xf]
          %v448 = vld [vmem:[%s400 + $0xf8] sm:$0x7]
          %v449 = vld [vmem:[#allocation2] sm:$0xff]
          %v450 = vld [vmem:[#allocation2 + $0x8] sm:$0xff]
          %v451 = vld [vmem:[#allocation2 + $0x10] sm:$0xff]
          %v452 = vld [vmem:[#allocation2 + $0x18] sm:$0xff]
          %v453 = vld [vmem:[#allocation2 + $0x20] sm:$0xff]
          %v454 = vld [vmem:[#allocation2 + $0x28] sm:$0xff]
          %v455 = vld [vmem:[#allocation2 + $0x30] sm:$0xff]
          %v456 = vld [vmem:[#allocation2 + $0x38] sm:$0xff]
          %v457 = vld [vmem:[#allocation2 + $0x40] sm:$0xff]
          %v458 = vld [vmem:[#allocation2 + $0x48] sm:$0xff]
          %v459 = vld [vmem:[#allocation2 + $0x50] sm:$0xff]
          %v460 = vld [vmem:[#allocation2 + $0x58] sm:$0xff]
          %v461 = vld [vmem:[#allocation2 + $0x60] sm:$0xff]
          %v462 = vld [vmem:[#allocation2 + $0x68] sm:$0xff]
          %v463 = vld [vmem:[#allocation2 + $0x70] sm:$0xff]
          %v464 = vld [vmem:[#allocation2 + $0x78] sm:$0xff]
          %v465 = vld [vmem:[#allocation2 + $0x80] sm:$0xff]
          %v466 = vld [vmem:[#allocation2 + $0x88] sm:$0xff]
          %v467 = vld [vmem:[#allocation2 + $0x90] sm:$0xff]
          %v468 = vld [vmem:[#allocation2 + $0x98] sm:$0xff]
          %v469 = vld [vmem:[#allocation2 + $0xa0] sm:$0xff]
          %v470 = vld [vmem:[#allocation2 + $0xa8] sm:$0xff]
          %v471 = vld [vmem:[#allocation2 + $0xb0] sm:$0xff]
          %v472 = vld [vmem:[#allocation2 + $0xb8] sm:$0xff]
          %v473 = vld [vmem:[#allocation2 + $0xc0] sm:$0xff]
          %v474 = vld [vmem:[#allocation2 + $0xc8] sm:$0xff]
          %v475 = vld [vmem:[#allocation2 + $0xd0] sm:$0xff]
          %v476 = vld [vmem:[#allocation2 + $0xd8] sm:$0xff]
          %v477 = vld [vmem:[#allocation2 + $0xe0] sm:$0xff]
          %v478 = vld [vmem:[#allocation2 + $0xe8] sm:$0xff]
          %v479 = vld [vmem:[#allocation2 + $0xf0] sm:$0xff]
          %v480 = vld [vmem:[#allocation2 + $0xf8] sm:$0xff]
          %vm529 = vcmask 1040384
          %vm530 = vcmask 1044484
          %vm531 = vmor %vm529, %vm530
          %v532 = vrot.slane %v401, 7
          %v533 = vrot.slane %v532, 4
          %v534 = vrot.slane %v402, 7
          %v535 = vsel %vm531, %v533, %v534
          %v536 = vrot.slane %v534, 4
          %v537 = vrot.slane %v403, 7
          %v538 = vsel %vm531, %v536, %v537
          %v539 = vrot.slane %v404, 7
          %v540 = vrot.slane %v539, 4
          %v541 = vrot.slane %v405, 7
          %v542 = vsel %vm531, %v540, %v541
          %v543 = vrot.slane %v541, 4
          %v544 = vrot.slane %v406, 7
          %v545 = vsel %vm531, %v543, %v544
          %v546 = vrot.slane %v407, 7
          %v547 = vrot.slane %v546, 4
          %v548 = vrot.slane %v408, 7
          %v549 = vsel %vm531, %v547, %v548
          %v550 = vrot.slane %v548, 4
          %v551 = vrot.slane %v409, 7
          %v552 = vsel %vm531, %v550, %v551
          %v553 = vrot.slane %v410, 7
          %v554 = vrot.slane %v553, 4
          %v555 = vrot.slane %v411, 7
          %v556 = vsel %vm531, %v554, %v555
          %v557 = vrot.slane %v555, 4
          %v558 = vrot.slane %v412, 7
          %v559 = vsel %vm531, %v557, %v558
          %v560 = vrot.slane %v413, 7
          %v561 = vrot.slane %v560, 4
          %v562 = vrot.slane %v414, 7
          %v563 = vsel %vm531, %v561, %v562
          %v564 = vrot.slane %v562, 4
          %v565 = vrot.slane %v415, 7
          %v566 = vsel %vm531, %v564, %v565
          %v567 = vrot.slane %v416, 7
          %v568 = vrot.slane %v567, 4
          %v569 = vrot.slane %v417, 7
          %v570 = vsel %vm531, %v568, %v569
          %v571 = vrot.slane %v569, 4
          %v572 = vrot.slane %v418, 7
          %v573 = vsel %vm531, %v571, %v572
          %v574 = vrot.slane %v419, 7
          %v575 = vrot.slane %v574, 4
          %v576 = vrot.slane %v420, 7
          %v577 = vsel %vm531, %v575, %v576
          %v578 = vrot.slane %v576, 4
          %v579 = vrot.slane %v421, 7
          %v580 = vsel %vm531, %v578, %v579
          %v581 = vrot.slane %v422, 7
          %v582 = vrot.slane %v581, 4
          %v583 = vrot.slane %v423, 7
          %v584 = vsel %vm531, %v582, %v583
          %v585 = vrot.slane %v583, 4
          %v586 = vrot.slane %v424, 7
          %v587 = vsel %vm531, %v585, %v586
          %v588 = vrot.slane %v425, 7
          %v589 = vrot.slane %v588, 4
          %v590 = vrot.slane %v426, 7
          %v591 = vsel %vm531, %v589, %v590
          %v592 = vrot.slane %v590, 4
          %v593 = vrot.slane %v427, 7
          %v594 = vsel %vm531, %v592, %v593
          %v595 = vrot.slane %v428, 7
          %v596 = vrot.slane %v595, 4
          %v597 = vrot.slane %v429, 7
          %v598 = vsel %vm531, %v596, %v597
          %v599 = vrot.slane %v597, 4
          %v600 = vrot.slane %v430, 7
          %v601 = vsel %vm531, %v599, %v600
          %v602 = vrot.slane %v431, 7
          %v603 = vrot.slane %v602, 4
          %v604 = vrot.slane %v432, 7
          %v605 = vsel %vm531, %v603, %v604
          %v606 = vrot.slane %v604, 4
          %v607 = vrot.slane %v433, 7
          %v608 = vsel %vm531, %v606, %v607
          %v609 = vrot.slane %v434, 7
          %v610 = vrot.slane %v609, 4
          %v611 = vrot.slane %v435, 7
          %v612 = vsel %vm531, %v610, %v611
          %v613 = vrot.slane %v611, 4
          %v614 = vrot.slane %v436, 7
          %v615 = vsel %vm531, %v613, %v614
          %v616 = vrot.slane %v437, 7
          %v617 = vrot.slane %v616, 4
          %v618 = vrot.slane %v438, 7
          %v619 = vsel %vm531, %v617, %v618
          %v620 = vrot.slane %v618, 4
          %v621 = vrot.slane %v439, 7
          %v622 = vsel %vm531, %v620, %v621
          %v623 = vrot.slane %v440, 7
          %v624 = vrot.slane %v623, 4
          %v625 = vrot.slane %v441, 7
          %v626 = vsel %vm531, %v624, %v625
          %v627 = vrot.slane %v625, 4
          %v628 = vrot.slane %v442, 7
          %v629 = vsel %vm531, %v627, %v628
          %v630 = vrot.slane %v443, 7
          %v631 = vrot.slane %v630, 4
          %v632 = vrot.slane %v444, 7
          %v633 = vsel %vm531, %v631, %v632
          %v634 = vrot.slane %v632, 4
          %v635 = vrot.slane %v445, 7
          %v636 = vsel %vm531, %v634, %v635
          %v637 = vrot.slane %v446, 7
          %v638 = vrot.slane %v637, 4
          %v639 = vrot.slane %v447, 7
          %v640 = vsel %vm531, %v638, %v639
          %v641 = vrot.slane %v639, 4
          %v642 = vrot.slane %v448, 7
          %v643 = vsel %vm531, %v641, %v642
          %s644 = scalar_lea.vmem %s291, 256 [#allocation4]
          %v645 = vld [vmem:[%s644] sm:$0xf]
          %v646 = vld [vmem:[%s644 + $0x4] sm:$0xf]
          %v647 = vld [vmem:[%s644 + $0x8] sm:$0xf]
          %v648 = vld [vmem:[%s644 + $0xc] sm:$0xf]
          %v649 = vld [vmem:[%s644 + $0x10] sm:$0xf]
          %v650 = vld [vmem:[%s644 + $0x14] sm:$0xf]
          %v651 = vld [vmem:[%s644 + $0x18] sm:$0xf]
          %v652 = vld [vmem:[%s644 + $0x1c] sm:$0xf]
          %v653 = vld [vmem:[%s644 + $0x20] sm:$0xf]
          %v654 = vld [vmem:[%s644 + $0x24] sm:$0xf]
          %v655 = vld [vmem:[%s644 + $0x28] sm:$0xf]
          %v656 = vld [vmem:[%s644 + $0x2c] sm:$0xf]
          %v657 = vld [vmem:[%s644 + $0x30] sm:$0xf]
          %v658 = vld [vmem:[%s644 + $0x34] sm:$0xf]
          %v659 = vld [vmem:[%s644 + $0x38] sm:$0xf]
          %v660 = vld [vmem:[%s644 + $0x3c] sm:$0xf]
          %v661 = vunpack.c.l.b16 %v535
          %v662 = vunpack.c.l.b16 %v538
          %v663 = vunpack.c.l.b16 %v542
          %v664 = vunpack.c.l.b16 %v545
          %v665 = vunpack.c.l.b16 %v549
          %v666 = vunpack.c.l.b16 %v552
          %v667 = vunpack.c.l.b16 %v556
          %v668 = vunpack.c.l.b16 %v559
          %v669 = vunpack.c.l.b16 %v563
          %v670 = vunpack.c.l.b16 %v566
          %v671 = vunpack.c.l.b16 %v570
          %v672 = vunpack.c.l.b16 %v573
          %v673 = vunpack.c.l.b16 %v577
          %v674 = vunpack.c.l.b16 %v580
          %v675 = vunpack.c.l.b16 %v584
          %v676 = vunpack.c.l.b16 %v587
          %v677 = vunpack.c.l.b16 %v591
          %v678 = vunpack.c.l.b16 %v594
          %v679 = vunpack.c.l.b16 %v598
          %v680 = vunpack.c.l.b16 %v601
          %v681 = vunpack.c.l.b16 %v605
          %v682 = vunpack.c.l.b16 %v608
          %v683 = vunpack.c.l.b16 %v612
          %v684 = vunpack.c.l.b16 %v615
          %v685 = vunpack.c.l.b16 %v619
          %v686 = vunpack.c.l.b16 %v622
          %v687 = vunpack.c.l.b16 %v626
          %v688 = vunpack.c.l.b16 %v629
          %v689 = vunpack.c.l.b16 %v633
          %v690 = vunpack.c.l.b16 %v636
          %v691 = vunpack.c.l.b16 %v640
          %v692 = vunpack.c.l.b16 %v643
          %v693 = vpack.c.b16 %v662, %v661
          %v694 = vpack.c.b16 %v664, %v663
          %v695 = vpack.c.b16 %v666, %v665
          %v696 = vpack.c.b16 %v668, %v667
          %v697 = vpack.c.b16 %v670, %v669
          %v698 = vpack.c.b16 %v672, %v671
          %v699 = vpack.c.b16 %v674, %v673
          %v700 = vpack.c.b16 %v676, %v675
          %v701 = vpack.c.b16 %v678, %v677
          %v702 = vpack.c.b16 %v680, %v679
          %v703 = vpack.c.b16 %v682, %v681
          %v704 = vpack.c.b16 %v684, %v683
          %v705 = vpack.c.b16 %v686, %v685
          %v706 = vpack.c.b16 %v688, %v687
          %v707 = vpack.c.b16 %v690, %v689
          %v708 = vpack.c.b16 %v692, %v691
          %v741 = vunpack.c.l.b16 %v645
          %v742 = vunpack.c.l.b16 %v646
          %v743 = vunpack.c.l.b16 %v647
          %v744 = vunpack.c.l.b16 %v648
          %v745 = vunpack.c.l.b16 %v649
          %v746 = vunpack.c.l.b16 %v650
          %v747 = vunpack.c.l.b16 %v651
          %v748 = vunpack.c.l.b16 %v652
          %v749 = vunpack.c.l.b16 %v653
          %v750 = vunpack.c.l.b16 %v654
          %v751 = vunpack.c.l.b16 %v655
          %v752 = vunpack.c.l.b16 %v656
          %v753 = vunpack.c.l.b16 %v657
          %v754 = vunpack.c.l.b16 %v658
          %v755 = vunpack.c.l.b16 %v659
          %v756 = vunpack.c.l.b16 %v660
          %v757 = vpack.c.b16 %v742, %v741
          %v758 = vpack.c.b16 %v744, %v743
          %v759 = vpack.c.b16 %v746, %v745
          %v760 = vpack.c.b16 %v748, %v747
          %v761 = vpack.c.b16 %v750, %v749
          %v762 = vpack.c.b16 %v752, %v751
          %v763 = vpack.c.b16 %v754, %v753
          %v764 = vpack.c.b16 %v756, %v755
          %773 = vmatprep.subr.bf16.mxu0 0
          %774 = vmatpush1.bf16.msra.mxu0 %v757
          %775 = vmatprep.subr.bf16.mxu0 0
          %776 = vmatpush1.bf16.msra.mxu0 %v758
          %777 = vmatprep.subr.bf16.mxu0 0
          %778 = vmatpush1.bf16.msra.mxu0 %v759
          %779 = vmatprep.subr.bf16.mxu0 0
          %780 = vmatpush1.bf16.msra.mxu0 %v760
          %781 = vmatprep.subr.bf16.mxu0 0
          %782 = vmatpush1.bf16.msra.mxu0 %v761
          %783 = vmatprep.subr.bf16.mxu0 0
          %784 = vmatpush1.bf16.msra.mxu0 %v762
          %785 = vmatprep.subr.bf16.mxu0 0
          %786 = vmatpush1.bf16.msra.mxu0 %v763
          %787 = vmatprep.subr.bf16.mxu0 0
          %788 = vmatpush1.bf16.msra.mxu0 %v764
          %789 = vmatprep.subr.bf16.mxu0 0
          %790 = vmatpush1.bf16.msra.mxu0 0
          %791 = vmatprep.subr.bf16.mxu0 0
          %792 = vmatpush1.bf16.msra.mxu0 0
          %793 = vmatprep.subr.bf16.mxu0 0
          %794 = vmatpush1.bf16.msra.mxu0 0
          %795 = vmatprep.subr.bf16.mxu0 0
          %796 = vmatpush1.bf16.msra.mxu0 0
          %797 = vmatprep.subr.bf16.mxu0 0
          %798 = vmatpush1.bf16.msra.mxu0 0
          %799 = vmatprep.subr.bf16.mxu0 0
          %800 = vmatpush1.bf16.msra.mxu0 0
          %801 = vmatprep.subr.bf16.mxu0 0
          %802 = vmatpush1.bf16.msra.mxu0 0
          %803 = vmatprep.subr.bf16.mxu0 0
          %804 = vmatpush1.bf16.msra.mxu0 0
          %805 = vmatprep.mubr.bf16.mxu0 0
          %806 = vmatmul.mubr.bf16.gmra.mrb[0].mxu0 %v693
          %v807 = vpop.f32.mrb[0].mxu0
          %v808 = vadd.f32 0.0, %v807
          %v809 = vpop.f32.mrb[0].mxu0
          %v810 = vpop.f32.mrb[0].mxu0
          %v811 = vadd.f32 0.0, %v810
          %v812 = vpop.f32.mrb[0].mxu0
          %813 = vmatprep.mubr.bf16.mxu0 0
          %814 = vmatmul.mubr.bf16.gmra.mrb[0].mxu0 %v694
          %v815 = vpop.f32.mrb[0].mxu0
          %v816 = vadd.f32 0.0, %v815
          %v817 = vpop.f32.mrb[0].mxu0
          %v818 = vpop.f32.mrb[0].mxu0
          %v819 = vadd.f32 0.0, %v818
          %v820 = vpop.f32.mrb[0].mxu0
          %821 = vmatprep.mubr.bf16.mxu0 0
          %822 = vmatmul.mubr.bf16.gmra.mrb[0].mxu0 %v695
          %v823 = vpop.f32.mrb[0].mxu0
          %v824 = vadd.f32 0.0, %v823
          %v825 = vpop.f32.mrb[0].mxu0
          %v826 = vpop.f32.mrb[0].mxu0
          %v827 = vadd.f32 0.0, %v826
          %v828 = vpop.f32.mrb[0].mxu0
          %829 = vmatprep.mubr.bf16.mxu0 0
          %830 = vmatmul.mubr.bf16.gmra.mrb[0].mxu0 %v696
          %v831 = vpop.f32.mrb[0].mxu0
          %v832 = vadd.f32 0.0, %v831
          %v833 = vpop.f32.mrb[0].mxu0
          %v834 = vpop.f32.mrb[0].mxu0
          %v835 = vadd.f32 0.0, %v834
          %v836 = vpop.f32.mrb[0].mxu0
          %837 = vmatprep.mubr.bf16.mxu0 0
          %838 = vmatmul.mubr.bf16.gmra.mrb[0].mxu0 %v697
          %v839 = vpop.f32.mrb[0].mxu0
          %v840 = vadd.f32 0.0, %v839
          %v841 = vpop.f32.mrb[0].mxu0
          %v842 = vpop.f32.mrb[0].mxu0
          %v843 = vadd.f32 0.0, %v842
          %v844 = vpop.f32.mrb[0].mxu0
          %845 = vmatprep.mubr.bf16.mxu0 0
          %846 = vmatmul.mubr.bf16.gmra.mrb[0].mxu0 %v698
          %v847 = vpop.f32.mrb[0].mxu0
          %v848 = vadd.f32 0.0, %v847
          %v849 = vpop.f32.mrb[0].mxu0
          %v850 = vpop.f32.mrb[0].mxu0
          %v851 = vadd.f32 0.0, %v850
          %v852 = vpop.f32.mrb[0].mxu0
          %853 = vmatprep.mubr.bf16.mxu0 0
          %854 = vmatmul.mubr.bf16.gmra.mrb[0].mxu0 %v699
          %v855 = vpop.f32.mrb[0].mxu0
          %v856 = vadd.f32 0.0, %v855
          %v857 = vpop.f32.mrb[0].mxu0
          %v858 = vpop.f32.mrb[0].mxu0
          %v859 = vadd.f32 0.0, %v858
          %v860 = vpop.f32.mrb[0].mxu0
          %861 = vmatprep.mubr.bf16.mxu0 0
          %862 = vmatmul.mubr.bf16.gmra.mrb[0].mxu0 %v700
          %v863 = vpop.f32.mrb[0].mxu0
          %v864 = vadd.f32 0.0, %v863
          %v865 = vpop.f32.mrb[0].mxu0
          %v866 = vpop.f32.mrb[0].mxu0
          %v867 = vadd.f32 0.0, %v866
          %v868 = vpop.f32.mrb[0].mxu0
          %869 = vmatprep.mubr.bf16.mxu0 0
          %870 = vmatmul.mubr.bf16.gmra.mrb[0].mxu0 %v701
          %v871 = vpop.f32.mrb[0].mxu0
          %v872 = vadd.f32 0.0, %v871
          %v873 = vpop.f32.mrb[0].mxu0
          %v874 = vpop.f32.mrb[0].mxu0
          %v875 = vadd.f32 0.0, %v874
          %v876 = vpop.f32.mrb[0].mxu0
          %877 = vmatprep.mubr.bf16.mxu0 0
          %878 = vmatmul.mubr.bf16.gmra.mrb[0].mxu0 %v702
          %v879 = vpop.f32.mrb[0].mxu0
          %v880 = vadd.f32 0.0, %v879
          %v881 = vpop.f32.mrb[0].mxu0
          %v882 = vpop.f32.mrb[0].mxu0
          %v883 = vadd.f32 0.0, %v882
          %v884 = vpop.f32.mrb[0].mxu0
          %885 = vmatprep.mubr.bf16.mxu0 0
          %886 = vmatmul.mubr.bf16.gmra.mrb[0].mxu0 %v703
          %v887 = vpop.f32.mrb[0].mxu0
          %v888 = vadd.f32 0.0, %v887
          %v889 = vpop.f32.mrb[0].mxu0
          %v890 = vpop.f32.mrb[0].mxu0
          %v891 = vadd.f32 0.0, %v890
          %v892 = vpop.f32.mrb[0].mxu0
          %893 = vmatprep.mubr.bf16.mxu0 0
          %894 = vmatmul.mubr.bf16.gmra.mrb[0].mxu0 %v704
          %v895 = vpop.f32.mrb[0].mxu0
          %v896 = vadd.f32 0.0, %v895
          %v897 = vpop.f32.mrb[0].mxu0
          %v898 = vpop.f32.mrb[0].mxu0
          %v899 = vadd.f32 0.0, %v898
          %v900 = vpop.f32.mrb[0].mxu0
          %901 = vmatprep.mubr.bf16.mxu0 0
          %902 = vmatmul.mubr.bf16.gmra.mrb[0].mxu0 %v705
          %v903 = vpop.f32.mrb[0].mxu0
          %v904 = vadd.f32 0.0, %v903
          %v905 = vpop.f32.mrb[0].mxu0
          %v906 = vpop.f32.mrb[0].mxu0
          %v907 = vadd.f32 0.0, %v906
          %v908 = vpop.f32.mrb[0].mxu0
          %909 = vmatprep.mubr.bf16.mxu0 0
          %910 = vmatmul.mubr.bf16.gmra.mrb[0].mxu0 %v706
          %v911 = vpop.f32.mrb[0].mxu0
          %v912 = vadd.f32 0.0, %v911
          %v913 = vpop.f32.mrb[0].mxu0
          %v914 = vpop.f32.mrb[0].mxu0
          %v915 = vadd.f32 0.0, %v914
          %v916 = vpop.f32.mrb[0].mxu0
          %917 = vmatprep.mubr.bf16.mxu0 0
          %918 = vmatmul.mubr.bf16.gmra.mrb[0].mxu0 %v707
          %v919 = vpop.f32.mrb[0].mxu0
          %v920 = vadd.f32 0.0, %v919
          %v921 = vpop.f32.mrb[0].mxu0
          %v922 = vpop.f32.mrb[0].mxu0
          %v923 = vadd.f32 0.0, %v922
          %v924 = vpop.f32.mrb[0].mxu0
          %925 = vmatprep.mubr.bf16.mxu0 0
          %926 = vmatmul.mubr.bf16.gmra.mrb[0].mxu0 %v708
          %v927 = vpop.f32.mrb[0].mxu0
          %v928 = vadd.f32 0.0, %v927
          %v929 = vpop.f32.mrb[0].mxu0
          %v930 = vpop.f32.mrb[0].mxu0
          %v931 = vadd.f32 0.0, %v930
          %v932 = vpop.f32.mrb[0].mxu0
          %933 = vdwg.mxu0
          %v934 = vadd.f32 %v449, %v808
          %v935 = vadd.f32 %v450, %v811
          %v936 = vadd.f32 %v451, %v816
          %v937 = vadd.f32 %v452, %v819
          %v938 = vadd.f32 %v453, %v824
          %v939 = vadd.f32 %v454, %v827
          %v940 = vadd.f32 %v455, %v832
          %v941 = vadd.f32 %v456, %v835
          %v942 = vadd.f32 %v457, %v840
          %v943 = vadd.f32 %v458, %v843
          %v944 = vadd.f32 %v459, %v848
          %v945 = vadd.f32 %v460, %v851
          %v946 = vadd.f32 %v461, %v856
          %v947 = vadd.f32 %v462, %v859
          %v948 = vadd.f32 %v463, %v864
          %v949 = vadd.f32 %v464, %v867
          %v950 = vadd.f32 %v465, %v872
          %v951 = vadd.f32 %v466, %v875
          %v952 = vadd.f32 %v467, %v880
          %v953 = vadd.f32 %v468, %v883
          %v954 = vadd.f32 %v469, %v888
          %v955 = vadd.f32 %v470, %v891
          %v956 = vadd.f32 %v471, %v896
          %v957 = vadd.f32 %v472, %v899
          %v958 = vadd.f32 %v473, %v904
          %v959 = vadd.f32 %v474, %v907
          %v960 = vadd.f32 %v475, %v912
          %v961 = vadd.f32 %v476, %v915
          %v962 = vadd.f32 %v477, %v920
          %v963 = vadd.f32 %v478, %v923
          %v964 = vadd.f32 %v479, %v928
          %v965 = vadd.f32 %v480, %v931
          %966 = vst [vmem:[#allocation2] sm:$0xff] %v934
          %967 = vst [vmem:[#allocation2 + $0x8] sm:$0xff] %v935
          %968 = vst [vmem:[#allocation2 + $0x10] sm:$0xff] %v936
          %969 = vst [vmem:[#allocation2 + $0x18] sm:$0xff] %v937
          %970 = vst [vmem:[#allocation2 + $0x20] sm:$0xff] %v938
          %971 = vst [vmem:[#allocation2 + $0x28] sm:$0xff] %v939
          %972 = vst [vmem:[#allocation2 + $0x30] sm:$0xff] %v940
          %973 = vst [vmem:[#allocation2 + $0x38] sm:$0xff] %v941
          %974 = vst [vmem:[#allocation2 + $0x40] sm:$0xff] %v942
          %975 = vst [vmem:[#allocation2 + $0x48] sm:$0xff] %v943
          %976 = vst [vmem:[#allocation2 + $0x50] sm:$0xff] %v944
          %977 = vst [vmem:[#allocation2 + $0x58] sm:$0xff] %v945
          %978 = vst [vmem:[#allocation2 + $0x60] sm:$0xff] %v946
          %979 = vst [vmem:[#allocation2 + $0x68] sm:$0xff] %v947
          %980 = vst [vmem:[#allocation2 + $0x70] sm:$0xff] %v948
          %981 = vst [vmem:[#allocation2 + $0x78] sm:$0xff] %v949
          %982 = vst [vmem:[#allocation2 + $0x80] sm:$0xff] %v950
          %983 = vst [vmem:[#allocation2 + $0x88] sm:$0xff] %v951
          %984 = vst [vmem:[#allocation2 + $0x90] sm:$0xff] %v952
          %985 = vst [vmem:[#allocation2 + $0x98] sm:$0xff] %v953
          %986 = vst [vmem:[#allocation2 + $0xa0] sm:$0xff] %v954
          %987 = vst [vmem:[#allocation2 + $0xa8] sm:$0xff] %v955
          %988 = vst [vmem:[#allocation2 + $0xb0] sm:$0xff] %v956
          %989 = vst [vmem:[#allocation2 + $0xb8] sm:$0xff] %v957
          %990 = vst [vmem:[#allocation2 + $0xc0] sm:$0xff] %v958
          %991 = vst [vmem:[#allocation2 + $0xc8] sm:$0xff] %v959
          %992 = vst [vmem:[#allocation2 + $0xd0] sm:$0xff] %v960
          %993 = vst [vmem:[#allocation2 + $0xd8] sm:$0xff] %v961
          %994 = vst [vmem:[#allocation2 + $0xe0] sm:$0xff] %v962
          %995 = vst [vmem:[#allocation2 + $0xe8] sm:$0xff] %v963
          %996 = vst [vmem:[#allocation2 + $0xf0] sm:$0xff] %v964
          %997 = vst [vmem:[#allocation2 + $0xf8] sm:$0xff] %v965
        $region56: #{fused_aspp_convs.1} parent=35 // pred_fallthru
          _
        %p998 = scmp.eq.s32.totalorder %s31, 1
        // Predicated region
        $region57: #{fused_aspp_convs.1} parent=35 // pred_check
          %p999 = pneg %p998
        $region58: #{fused_aspp_convs.1} parent=35 // pred_check_branch
          %1001 = sbr.rel (%p999) target = $region60
        $region59: #{fused_aspp_convs.1} parent=35 // pred_region
          %v1002 = vld [vmem:[%s355] sm:$0xc]
          %v1003 = vld [vmem:[%s355 + $0x4] sm:$0xf]
          %v1004 = vld [vmem:[%s355 + $0x8] sm:$0x3]
          %v1005 = vld [vmem:[%s355 + $0x10] sm:$0xc]
          %v1006 = vld [vmem:[%s355 + $0x14] sm:$0xf]
          %v1007 = vld [vmem:[%s355 + $0x18] sm:$0x3]
          %v1008 = vld [vmem:[%s355 + $0x20] sm:$0xc]
          %v1009 = vld [vmem:[%s355 + $0x24] sm:$0xf]
          %v1010 = vld [vmem:[%s355 + $0x28] sm:$0x3]
          %v1011 = vld [vmem:[%s355 + $0x30] sm:$0xc]
          %v1012 = vld [vmem:[%s355 + $0x34] sm:$0xf]
          %v1013 = vld [vmem:[%s355 + $0x38] sm:$0x3]
          %v1014 = vld [vmem:[%s355 + $0x40] sm:$0xc]
          %v1015 = vld [vmem:[%s355 + $0x44] sm:$0xf]
          %v1016 = vld [vmem:[%s355 + $0x48] sm:$0x3]
          %v1017 = vld [vmem:[%s355 + $0x50] sm:$0xc]
          %v1018 = vld [vmem:[%s355 + $0x54] sm:$0xf]
          %v1019 = vld [vmem:[%s355 + $0x58] sm:$0x3]
          %v1020 = vld [vmem:[%s355 + $0x60] sm:$0xc]
          %v1021 = vld [vmem:[%s355 + $0x64] sm:$0xf]
          %v1022 = vld [vmem:[%s355 + $0x68] sm:$0x3]
          %v1023 = vld [vmem:[%s355 + $0x70] sm:$0xc]
          %v1024 = vld [vmem:[%s355 + $0x74] sm:$0xf]
          %v1025 = vld [vmem:[%s355 + $0x78] sm:$0x3]
          %v1026 = vld [vmem:[%s355 + $0x80] sm:$0xc]
          %v1027 = vld [vmem:[%s355 + $0x84] sm:$0xf]
          %v1028 = vld [vmem:[%s355 + $0x88] sm:$0x3]
          %v1029 = vld [vmem:[%s355 + $0x90] sm:$0xc]
          %v1030 = vld [vmem:[%s355 + $0x94] sm:$0xf]
          %v1031 = vld [vmem:[%s355 + $0x98] sm:$0x3]
          %v1032 = vld [vmem:[%s355 + $0xa0] sm:$0xc]
          %v1033 = vld [vmem:[%s355 + $0xa4] sm:$0xf]
          %v1034 = vld [vmem:[%s355 + $0xa8] sm:$0x3]
          %v1035 = vld [vmem:[%s355 + $0xb0] sm:$0xc]
          %v1036 = vld [vmem:[%s355 + $0xb4] sm:$0xf]
          %v1037 = vld [vmem:[%s355 + $0xb8] sm:$0x3]
          %v1038 = vld [vmem:[%s355 + $0xc0] sm:$0xc]
          %v1039 = vld [vmem:[%s355 + $0xc4] sm:$0xf]
          %v1040 = vld [vmem:[%s355 + $0xc8] sm:$0x3]
          %v1041 = vld [vmem:[%s355 + $0xd0] sm:$0xc]
          %v1042 = vld [vmem:[%s355 + $0xd4] sm:$0xf]
          %v1043 = vld [vmem:[%s355 + $0xd8] sm:$0x3]
          %v1044 = vld [vmem:[%s355 + $0xe0] sm:$0xc]
          %v1045 = vld [vmem:[%s355 + $0xe4] sm:$0xf]
          %v1046 = vld [vmem:[%s355 + $0xe8] sm:$0x3]
          %v1047 = vld [vmem:[%s355 + $0xf0] sm:$0xc]
          %v1048 = vld [vmem:[%s355 + $0xf4] sm:$0xf]
          %v1049 = vld [vmem:[%s355 + $0xf8] sm:$0x3]
          %v1050 = vld [vmem:[%s355 + $0x100] sm:$0xc]
          %v1051 = vld [vmem:[%s355 + $0x104] sm:$0xf]
          %v1052 = vld [vmem:[%s355 + $0x108] sm:$0x3]
          %v1053 = vld [vmem:[%s355 + $0x110] sm:$0xc]
          %v1054 = vld [vmem:[%s355 + $0x114] sm:$0xf]
          %v1055 = vld [vmem:[%s355 + $0x118] sm:$0x3]
          %v1056 = vld [vmem:[%s355 + $0x120] sm:$0xc]
          %v1057 = vld [vmem:[%s355 + $0x124] sm:$0xf]
          %v1058 = vld [vmem:[%s355 + $0x128] sm:$0x3]
          %v1059 = vld [vmem:[%s355 + $0x130] sm:$0xc]
          %v1060 = vld [vmem:[%s355 + $0x134] sm:$0xf]
          %v1061 = vld [vmem:[%s355 + $0x138] sm:$0x3]
          %v1062 = vld [vmem:[%s355 + $0x140] sm:$0xc]
          %v1063 = vld [vmem:[%s355 + $0x144] sm:$0xf]
          %v1064 = vld [vmem:[%s355 + $0x148] sm:$0x3]
          %v1065 = vld [vmem:[%s355 + $0x150] sm:$0xc]
          %v1066 = vld [vmem:[%s355 + $0x154] sm:$0xf]
          %v1067 = vld [vmem:[%s355 + $0x158] sm:$0x3]
          %v1068 = vld [vmem:[%s355 + $0x160] sm:$0xc]
          %v1069 = vld [vmem:[%s355 + $0x164] sm:$0xf]
          %v1070 = vld [vmem:[%s355 + $0x168] sm:$0x3]
          %v1071 = vld [vmem:[%s355 + $0x170] sm:$0xc]
          %v1072 = vld [vmem:[%s355 + $0x174] sm:$0xf]
          %v1073 = vld [vmem:[%s355 + $0x178] sm:$0x3]
          %v1074 = vld [vmem:[%s355 + $0x180] sm:$0xc]
          %v1075 = vld [vmem:[%s355 + $0x184] sm:$0xf]
          %v1076 = vld [vmem:[%s355 + $0x188] sm:$0x3]
          %v1077 = vld [vmem:[%s355 + $0x190] sm:$0xc]
          %v1078 = vld [vmem:[%s355 + $0x194] sm:$0xf]
          %v1079 = vld [vmem:[%s355 + $0x198] sm:$0x3]
          %v1080 = vld [vmem:[%s355 + $0x1a0] sm:$0xc]
          %v1081 = vld [vmem:[%s355 + $0x1a4] sm:$0xf]
          %v1082 = vld [vmem:[%s355 + $0x1a8] sm:$0x3]
          %v1083 = vld [vmem:[%s355 + $0x1b0] sm:$0xc]
          %v1084 = vld [vmem:[%s355 + $0x1b4] sm:$0xf]
          %v1085 = vld [vmem:[%s355 + $0x1b8] sm:$0x3]
          %v1170 = vunpack.c.l.b16 %v1002
          %v1171 = vunpack.c.l.b16 %v1003
          %v1172 = vunpack.c.l.b16 %v1004
          %v1173 = vunpack.c.l.b16 %v1005
          %v1174 = vunpack.c.l.b16 %v1006
          %v1175 = vunpack.c.l.b16 %v1007
          %v1176 = vunpack.c.l.b16 %v1008
          %v1177 = vunpack.c.l.b16 %v1009
          %v1178 = vunpack.c.l.b16 %v1010
          %v1179 = vunpack.c.l.b16 %v1011
          %v1180 = vunpack.c.l.b16 %v1012
          %v1181 = vunpack.c.l.b16 %v1013
          %v1182 = vunpack.c.l.b16 %v1014
          %v1183 = vunpack.c.l.b16 %v1015
          %v1184 = vunpack.c.l.b16 %v1016
          %v1185 = vunpack.c.l.b16 %v1017
          %v1186 = vunpack.c.l.b16 %v1018
          %v1187 = vunpack.c.l.b16 %v1019
          %v1188 = vunpack.c.l.b16 %v1020
          %v1189 = vunpack.c.l.b16 %v1021
          %v1190 = vunpack.c.l.b16 %v1022
          %v1191 = vunpack.c.l.b16 %v1023
          %v1192 = vunpack.c.l.b16 %v1024
          %v1193 = vunpack.c.l.b16 %v1025
          %v1194 = vunpack.c.l.b16 %v1026
          %v1195 = vunpack.c.l.b16 %v1027
          %v1196 = vunpack.c.l.b16 %v1028
          %v1197 = vunpack.c.l.b16 %v1029
          %v1198 = vunpack.c.l.b16 %v1030
          %v1199 = vunpack.c.l.b16 %v1031
          %v1200 = vunpack.c.l.b16 %v1032
          %v1201 = vunpack.c.l.b16 %v1033
          %v1202 = vunpack.c.l.b16 %v1034
          %v1203 = vunpack.c.l.b16 %v1035
          %v1204 = vunpack.c.l.b16 %v1036
          %v1205 = vunpack.c.l.b16 %v1037
          %v1206 = vunpack.c.l.b16 %v1038
          %v1207 = vunpack.c.l.b16 %v1039
          %v1208 = vunpack.c.l.b16 %v1040
          %v1209 = vunpack.c.l.b16 %v1041
          %v1210 = vunpack.c.l.b16 %v1042
          %v1211 = vunpack.c.l.b16 %v1043
          %v1212 = vunpack.c.l.b16 %v1044
          %v1213 = vunpack.c.l.b16 %v1045
          %v1214 = vunpack.c.l.b16 %v1046
          %v1215 = vunpack.c.l.b16 %v1047
          %v1216 = vunpack.c.l.b16 %v1048
          %v1217 = vunpack.c.l.b16 %v1049
          %v1218 = vunpack.c.l.b16 %v1050
          %v1219 = vunpack.c.l.b16 %v1051
          %v1220 = vunpack.c.l.b16 %v1052
          %v1221 = vunpack.c.l.b16 %v1053
          %v1222 = vunpack.c.l.b16 %v1054
          %v1223 = vunpack.c.l.b16 %v1055
          %v1224 = vunpack.c.l.b16 %v1056
          %v1225 = vunpack.c.l.b16 %v1057
          %v1226 = vunpack.c.l.b16 %v1058
          %v1227 = vunpack.c.l.b16 %v1059
          %v1228 = vunpack.c.l.b16 %v1060
          %v1229 = vunpack.c.l.b16 %v1061
          %v1230 = vunpack.c.l.b16 %v1062
          %v1231 = vunpack.c.l.b16 %v1063
          %v1232 = vunpack.c.l.b16 %v1064
          %v1233 = vunpack.c.l.b16 %v1065
          %v1234 = vunpack.c.l.b16 %v1066
          %v1235 = vunpack.c.l.b16 %v1067
          %v1236 = vunpack.c.l.b16 %v1068
          %v1237 = vunpack.c.l.b16 %v1069
          %v1238 = vunpack.c.l.b16 %v1070
          %v1239 = vunpack.c.l.b16 %v1071
          %v1240 = vunpack.c.l.b16 %v1072
          %v1241 = vunpack.c.l.b16 %v1073
          %v1242 = vunpack.c.l.b16 %v1074
          %v1243 = vunpack.c.l.b16 %v1075
          %v1244 = vunpack.c.l.b16 %v1076
          %v1245 = vunpack.c.l.b16 %v1077
          %v1246 = vunpack.c.l.b16 %v1078
          %v1247 = vunpack.c.l.b16 %v1079
          %v1248 = vunpack.c.l.b16 %v1080
          %v1249 = vunpack.c.l.b16 %v1081
          %v1250 = vunpack.c.l.b16 %v1082
          %v1251 = vunpack.c.l.b16 %v1083
          %v1252 = vunpack.c.l.b16 %v1084
          %v1253 = vunpack.c.l.b16 %v1085
          %v1254 = vpack.c.b16 %v1171, %v1170
          %v1255 = vpack.c.b16 %v1172, %v1172
          %v1256 = vpack.c.b16 %v1174, %v1173
          %v1257 = vpack.c.b16 %v1175, %v1175
          %v1258 = vpack.c.b16 %v1177, %v1176
          %v1259 = vpack.c.b16 %v1178, %v1178
          %v1260 = vpack.c.b16 %v1180, %v1179
          %v1261 = vpack.c.b16 %v1181, %v1181
          %v1262 = vpack.c.b16 %v1183, %v1182
          %v1263 = vpack.c.b16 %v1184, %v1184
          %v1264 = vpack.c.b16 %v1186, %v1185
          %v1265 = vpack.c.b16 %v1187, %v1187
          %v1266 = vpack.c.b16 %v1189, %v1188
          %v1267 = vpack.c.b16 %v1190, %v1190
          %v1268 = vpack.c.b16 %v1192, %v1191
          %v1269 = vpack.c.b16 %v1193, %v1193
          %v1270 = vpack.c.b16 %v1195, %v1194
          %v1271 = vpack.c.b16 %v1196, %v1196
          %v1272 = vpack.c.b16 %v1198, %v1197
          %v1273 = vpack.c.b16 %v1199, %v1199
          %v1274 = vpack.c.b16 %v1201, %v1200
          %v1275 = vpack.c.b16 %v1202, %v1202
          %v1276 = vpack.c.b16 %v1204, %v1203
          %v1277 = vpack.c.b16 %v1205, %v1205
          %v1278 = vpack.c.b16 %v1207, %v1206
          %v1279 = vpack.c.b16 %v1208, %v1208
          %v1280 = vpack.c.b16 %v1210, %v1209
          %v1281 = vpack.c.b16 %v1211, %v1211
          %v1282 = vpack.c.b16 %v1213, %v1212
          %v1283 = vpack.c.b16 %v1214, %v1214
          %v1284 = vpack.c.b16 %v1216, %v1215
          %v1285 = vpack.c.b16 %v1217, %v1217
          %v1286 = vpack.c.b16 %v1219, %v1218
          %v1287 = vpack.c.b16 %v1220, %v1220
          %v1288 = vpack.c.b16 %v1222, %v1221
          %v1289 = vpack.c.b16 %v1223, %v1223
          %v1290 = vpack.c.b16 %v1225, %v1224
          %v1291 = vpack.c.b16 %v1226, %v1226
          %v1292 = vpack.c.b16 %v1228, %v1227
          %v1293 = vpack.c.b16 %v1229, %v1229
          %v1294 = vpack.c.b16 %v1231, %v1230
          %v1295 = vpack.c.b16 %v1232, %v1232
          %v1296 = vpack.c.b16 %v1234, %v1233
          %v1297 = vpack.c.b16 %v1235, %v1235
          %v1298 = vpack.c.b16 %v1237, %v1236
          %v1299 = vpack.c.b16 %v1238, %v1238
          %v1300 = vpack.c.b16 %v1240, %v1239
          %v1301 = vpack.c.b16 %v1241, %v1241
          %v1302 = vpack.c.b16 %v1243, %v1242
          %v1303 = vpack.c.b16 %v1244, %v1244
          %v1304 = vpack.c.b16 %v1246, %v1245
          %v1305 = vpack.c.b16 %v1247, %v1247
          %v1306 = vpack.c.b16 %v1249, %v1248
          %v1307 = vpack.c.b16 %v1250, %v1250
          %v1308 = vpack.c.b16 %v1252, %v1251
          %v1309 = vpack.c.b16 %v1253, %v1253
          %vm1310 = vcmask 1045504
          %v1311 = vrot.slane %v1254, 2
          %v1312 = vrot.slane %v1255, 2
          %v1313 = vsel %vm1310, %v1311, %v1312
          %v1314 = vrot.slane %v1256, 2
          %v1315 = vrot.slane %v1257, 2
          %v1316 = vsel %vm1310, %v1314, %v1315
          %v1317 = vrot.slane %v1258, 2
          %v1318 = vrot.slane %v1259, 2
          %v1319 = vsel %vm1310, %v1317, %v1318
          %v1320 = vrot.slane %v1260, 2
          %v1321 = vrot.slane %v1261, 2
          %v1322 = vsel %vm1310, %v1320, %v1321
          %v1323 = vrot.slane %v1262, 2
          %v1324 = vrot.slane %v1263, 2
          %v1325 = vsel %vm1310, %v1323, %v1324
          %v1326 = vrot.slane %v1264, 2
          %v1327 = vrot.slane %v1265, 2
          %v1328 = vsel %vm1310, %v1326, %v1327
          %v1329 = vrot.slane %v1266, 2
          %v1330 = vrot.slane %v1267, 2
          %v1331 = vsel %vm1310, %v1329, %v1330
          %v1332 = vrot.slane %v1268, 2
          %v1333 = vrot.slane %v1269, 2
          %v1334 = vsel %vm1310, %v1332, %v1333
          %v1335 = vrot.slane %v1270, 2
          %v1336 = vrot.slane %v1271, 2
          %v1337 = vsel %vm1310, %v1335, %v1336
          %v1338 = vrot.slane %v1272, 2
          %v1339 = vrot.slane %v1273, 2
          %v1340 = vsel %vm1310, %v1338, %v1339
          %v1341 = vrot.slane %v1274, 2
          %v1342 = vrot.slane %v1275, 2
          %v1343 = vsel %vm1310, %v1341, %v1342
          %v1344 = vrot.slane %v1276, 2
          %v1345 = vrot.slane %v1277, 2
          %v1346 = vsel %vm1310, %v1344, %v1345
          %v1347 = vrot.slane %v1278, 2
          %v1348 = vrot.slane %v1279, 2
          %v1349 = vsel %vm1310, %v1347, %v1348
          %v1350 = vrot.slane %v1280, 2
          %v1351 = vrot.slane %v1281, 2
          %v1352 = vsel %vm1310, %v1350, %v1351
          %v1353 = vrot.slane %v1282, 2
          %v1354 = vrot.slane %v1283, 2
          %v1355 = vsel %vm1310, %v1353, %v1354
          %v1356 = vrot.slane %v1284, 2
          %v1357 = vrot.slane %v1285, 2
          %v1358 = vsel %vm1310, %v1356, %v1357
          %v1359 = vrot.slane %v1286, 2
          %v1360 = vrot.slane %v1287, 2
          %v1361 = vsel %vm1310, %v1359, %v1360
          %v1362 = vrot.slane %v1288, 2
          %v1363 = vrot.slane %v1289, 2
          %v1364 = vsel %vm1310, %v1362, %v1363
          %v1365 = vrot.slane %v1290, 2
          %v1366 = vrot.slane %v1291, 2
          %v1367 = vsel %vm1310, %v1365, %v1366
          %v1368 = vrot.slane %v1292, 2
          %v1369 = vrot.slane %v1293, 2
          %v1370 = vsel %vm1310, %v1368, %v1369
          %v1371 = vrot.slane %v1294, 2
          %v1372 = vrot.slane %v1295, 2
          %v1373 = vsel %vm1310, %v1371, %v1372
          %v1374 = vrot.slane %v1296, 2
          %v1375 = vrot.slane %v1297, 2
          %v1376 = vsel %vm1310, %v1374, %v1375
          %v1377 = vrot.slane %v1298, 2
          %v1378 = vrot.slane %v1299, 2
          %v1379 = vsel %vm1310, %v1377, %v1378
          %v1380 = vrot.slane %v1300, 2
          %v1381 = vrot.slane %v1301, 2
          %v1382 = vsel %vm1310, %v1380, %v1381
          %v1383 = vrot.slane %v1302, 2
          %v1384 = vrot.slane %v1303, 2
          %v1385 = vsel %vm1310, %v1383, %v1384
          %v1386 = vrot.slane %v1304, 2
          %v1387 = vrot.slane %v1305, 2
          %v1388 = vsel %vm1310, %v1386, %v1387
          %v1389 = vrot.slane %v1306, 2
          %v1390 = vrot.slane %v1307, 2
          %v1391 = vsel %vm1310, %v1389, %v1390
          %v1392 = vrot.slane %v1308, 2
          %v1393 = vrot.slane %v1309, 2
          %v1394 = vsel %vm1310, %v1392, %v1393
          %1423 = vst [vmem:[#allocation3] sm:$0xff] %v1313
          %1424 = vst [vmem:[#allocation3 + $0x18] sm:$0xff] %v1316
          %1425 = vst [vmem:[#allocation3 + $0x30] sm:$0xff] %v1319
          %1426 = vst [vmem:[#allocation3 + $0x48] sm:$0xff] %v1322
          %1427 = vst [vmem:[#allocation3 + $0x60] sm:$0xff] %v1325
          %1428 = vst [vmem:[#allocation3 + $0x78] sm:$0xff] %v1328
          %1429 = vst [vmem:[#allocation3 + $0x90] sm:$0xff] %v1331
          %1430 = vst [vmem:[#allocation3 + $0xa8] sm:$0xff] %v1334
          %1431 = vst [vmem:[#allocation3 + $0xc0] sm:$0xff] %v1337
          %1432 = vst [vmem:[#allocation3 + $0xd8] sm:$0xff] %v1340
          %1433 = vst [vmem:[#allocation3 + $0xf0] sm:$0xff] %v1343
          %1434 = vst [vmem:[#allocation3 + $0x108] sm:$0xff] %v1346
          %1435 = vst [vmem:[#allocation3 + $0x120] sm:$0xff] %v1349
          %1436 = vst [vmem:[#allocation3 + $0x138] sm:$0xff] %v1352
          %1437 = vst [vmem:[#allocation3 + $0x150] sm:$0xff] %v1355
          %1438 = vst [vmem:[#allocation3 + $0x168] sm:$0xff] %v1358
          %1439 = vst [vmem:[#allocation3 + $0x180] sm:$0xff] %v1361
          %1440 = vst [vmem:[#allocation3 + $0x198] sm:$0xff] %v1364
          %1441 = vst [vmem:[#allocation3 + $0x1b0] sm:$0xff] %v1367
          %1442 = vst [vmem:[#allocation3 + $0x1c8] sm:$0xff] %v1370
          %1443 = vst [vmem:[#allocation3 + $0x1e0] sm:$0xff] %v1373
          %1444 = vst [vmem:[#allocation3 + $0x1f8] sm:$0xff] %v1376
          %1445 = vst [vmem:[#allocation3 + $0x210] sm:$0xff] %v1379
          %1446 = vst [vmem:[#allocation3 + $0x228] sm:$0xff] %v1382
          %1447 = vst [vmem:[#allocation3 + $0x240] sm:$0xff] %v1385
          %1448 = vst [vmem:[#allocation3 + $0x258] sm:$0xff] %v1388
          %1449 = vst [vmem:[#allocation3 + $0x270] sm:$0xff] %v1391
          %1450 = vst [vmem:[#allocation3 + $0x288] sm:$0xff] %v1394
          %v1451 = vld [vmem:[%s355] sm:$0x8]
          %v1452 = vld [vmem:[%s355 + $0x4] sm:$0xf]
          %v1453 = vld [vmem:[%s355 + $0x8] sm:$0x7]
          %v1454 = vld [vmem:[%s355 + $0x10] sm:$0x8]
          %v1455 = vld [vmem:[%s355 + $0x14] sm:$0xf]
          %v1456 = vld [vmem:[%s355 + $0x18] sm:$0x7]
          %v1457 = vld [vmem:[%s355 + $0x20] sm:$0x8]
          %v1458 = vld [vmem:[%s355 + $0x24] sm:$0xf]
          %v1459 = vld [vmem:[%s355 + $0x28] sm:$0x7]
          %v1460 = vld [vmem:[%s355 + $0x30] sm:$0x8]
          %v1461 = vld [vmem:[%s355 + $0x34] sm:$0xf]
          %v1462 = vld [vmem:[%s355 + $0x38] sm:$0x7]
          %v1463 = vld [vmem:[%s355 + $0x40] sm:$0x8]
          %v1464 = vld [vmem:[%s355 + $0x44] sm:$0xf]
          %v1465 = vld [vmem:[%s355 + $0x48] sm:$0x7]
          %v1466 = vld [vmem:[%s355 + $0x50] sm:$0x8]
          %v1467 = vld [vmem:[%s355 + $0x54] sm:$0xf]
          %v1468 = vld [vmem:[%s355 + $0x58] sm:$0x7]
          %v1469 = vld [vmem:[%s355 + $0x60] sm:$0x8]
          %v1470 = vld [vmem:[%s355 + $0x64] sm:$0xf]
          %v1471 = vld [vmem:[%s355 + $0x68] sm:$0x7]
          %v1472 = vld [vmem:[%s355 + $0x70] sm:$0x8]
          %v1473 = vld [vmem:[%s355 + $0x74] sm:$0xf]
          %v1474 = vld [vmem:[%s355 + $0x78] sm:$0x7]
          %v1475 = vld [vmem:[%s355 + $0x80] sm:$0x8]
          %v1476 = vld [vmem:[%s355 + $0x84] sm:$0xf]
          %v1477 = vld [vmem:[%s355 + $0x88] sm:$0x7]
          %v1478 = vld [vmem:[%s355 + $0x90] sm:$0x8]
          %v1479 = vld [vmem:[%s355 + $0x94] sm:$0xf]
          %v1480 = vld [vmem:[%s355 + $0x98] sm:$0x7]
          %v1481 = vld [vmem:[%s355 + $0xa0] sm:$0x8]
          %v1482 = vld [vmem:[%s355 + $0xa4] sm:$0xf]
          %v1483 = vld [vmem:[%s355 + $0xa8] sm:$0x7]
          %v1484 = vld [vmem:[%s355 + $0xb0] sm:$0x8]
          %v1485 = vld [vmem:[%s355 + $0xb4] sm:$0xf]
          %v1486 = vld [vmem:[%s355 + $0xb8] sm:$0x7]
          %v1487 = vld [vmem:[%s355 + $0xc0] sm:$0x8]
          %v1488 = vld [vmem:[%s355 + $0xc4] sm:$0xf]
          %v1489 = vld [vmem:[%s355 + $0xc8] sm:$0x7]
          %v1490 = vld [vmem:[%s355 + $0xd0] sm:$0x8]
          %v1491 = vld [vmem:[%s355 + $0xd4] sm:$0xf]
          %v1492 = vld [vmem:[%s355 + $0xd8] sm:$0x7]
          %v1493 = vld [vmem:[%s355 + $0xe0] sm:$0x8]
          %v1494 = vld [vmem:[%s355 + $0xe4] sm:$0xf]
          %v1495 = vld [vmem:[%s355 + $0xe8] sm:$0x7]
          %v1496 = vld [vmem:[%s355 + $0xf0] sm:$0x8]
          %v1497 = vld [vmem:[%s355 + $0xf4] sm:$0xf]
          %v1498 = vld [vmem:[%s355 + $0xf8] sm:$0x7]
          %v1499 = vld [vmem:[%s355 + $0x100] sm:$0x8]
          %v1500 = vld [vmem:[%s355 + $0x104] sm:$0xf]
          %v1501 = vld [vmem:[%s355 + $0x108] sm:$0x7]
          %v1502 = vld [vmem:[%s355 + $0x110] sm:$0x8]
          %v1503 = vld [vmem:[%s355 + $0x114] sm:$0xf]
          %v1504 = vld [vmem:[%s355 + $0x118] sm:$0x7]
          %v1505 = vld [vmem:[%s355 + $0x120] sm:$0x8]
          %v1506 = vld [vmem:[%s355 + $0x124] sm:$0xf]
          %v1507 = vld [vmem:[%s355 + $0x128] sm:$0x7]
          %v1508 = vld [vmem:[%s355 + $0x130] sm:$0x8]
          %v1509 = vld [vmem:[%s355 + $0x134] sm:$0xf]
          %v1510 = vld [vmem:[%s355 + $0x138] sm:$0x7]
          %v1511 = vld [vmem:[%s355 + $0x140] sm:$0x8]
          %v1512 = vld [vmem:[%s355 + $0x144] sm:$0xf]
          %v1513 = vld [vmem:[%s355 + $0x148] sm:$0x7]
          %v1514 = vld [vmem:[%s355 + $0x150] sm:$0x8]
          %v1515 = vld [vmem:[%s355 + $0x154] sm:$0xf]
          %v1516 = vld [vmem:[%s355 + $0x158] sm:$0x7]
          %v1517 = vld [vmem:[%s355 + $0x160] sm:$0x8]
          %v1518 = vld [vmem:[%s355 + $0x164] sm:$0xf]
          %v1519 = vld [vmem:[%s355 + $0x168] sm:$0x7]
          %v1520 = vld [vmem:[%s355 + $0x170] sm:$0x8]
          %v1521 = vld [vmem:[%s355 + $0x174] sm:$0xf]
          %v1522 = vld [vmem:[%s355 + $0x178] sm:$0x7]
          %v1523 = vld [vmem:[%s355 + $0x180] sm:$0x8]
          %v1524 = vld [vmem:[%s355 + $0x184] sm:$0xf]
          %v1525 = vld [vmem:[%s355 + $0x188] sm:$0x7]
          %v1526 = vld [vmem:[%s355 + $0x190] sm:$0x8]
          %v1527 = vld [vmem:[%s355 + $0x194] sm:$0xf]
          %v1528 = vld [vmem:[%s355 + $0x198] sm:$0x7]
          %v1529 = vld [vmem:[%s355 + $0x1a0] sm:$0x8]
          %v1530 = vld [vmem:[%s355 + $0x1a4] sm:$0xf]
          %v1531 = vld [vmem:[%s355 + $0x1a8] sm:$0x7]
          %v1532 = vld [vmem:[%s355 + $0x1b0] sm:$0x8]
          %v1533 = vld [vmem:[%s355 + $0x1b4] sm:$0xf]
          %v1534 = vld [vmem:[%s355 + $0x1b8] sm:$0x7]
          %v1619 = vunpack.c.l.b16 %v1451
          %v1620 = vunpack.c.l.b16 %v1452
          %v1621 = vunpack.c.l.b16 %v1453
          %v1622 = vunpack.c.l.b16 %v1454
          %v1623 = vunpack.c.l.b16 %v1455
          %v1624 = vunpack.c.l.b16 %v1456
          %v1625 = vunpack.c.l.b16 %v1457
          %v1626 = vunpack.c.l.b16 %v1458
          %v1627 = vunpack.c.l.b16 %v1459
          %v1628 = vunpack.c.l.b16 %v1460
          %v1629 = vunpack.c.l.b16 %v1461
          %v1630 = vunpack.c.l.b16 %v1462
          %v1631 = vunpack.c.l.b16 %v1463
          %v1632 = vunpack.c.l.b16 %v1464
          %v1633 = vunpack.c.l.b16 %v1465
          %v1634 = vunpack.c.l.b16 %v1466
          %v1635 = vunpack.c.l.b16 %v1467
          %v1636 = vunpack.c.l.b16 %v1468
          %v1637 = vunpack.c.l.b16 %v1469
          %v1638 = vunpack.c.l.b16 %v1470
          %v1639 = vunpack.c.l.b16 %v1471
          %v1640 = vunpack.c.l.b16 %v1472
          %v1641 = vunpack.c.l.b16 %v1473
          %v1642 = vunpack.c.l.b16 %v1474
          %v1643 = vunpack.c.l.b16 %v1475
          %v1644 = vunpack.c.l.b16 %v1476
          %v1645 = vunpack.c.l.b16 %v1477
          %v1646 = vunpack.c.l.b16 %v1478
          %v1647 = vunpack.c.l.b16 %v1479
          %v1648 = vunpack.c.l.b16 %v1480
          %v1649 = vunpack.c.l.b16 %v1481
          %v1650 = vunpack.c.l.b16 %v1482
          %v1651 = vunpack.c.l.b16 %v1483
          %v1652 = vunpack.c.l.b16 %v1484
          %v1653 = vunpack.c.l.b16 %v1485
          %v1654 = vunpack.c.l.b16 %v1486
          %v1655 = vunpack.c.l.b16 %v1487
          %v1656 = vunpack.c.l.b16 %v1488
          %v1657 = vunpack.c.l.b16 %v1489
          %v1658 = vunpack.c.l.b16 %v1490
          %v1659 = vunpack.c.l.b16 %v1491
          %v1660 = vunpack.c.l.b16 %v1492
          %v1661 = vunpack.c.l.b16 %v1493
          %v1662 = vunpack.c.l.b16 %v1494
          %v1663 = vunpack.c.l.b16 %v1495
          %v1664 = vunpack.c.l.b16 %v1496
          %v1665 = vunpack.c.l.b16 %v1497
          %v1666 = vunpack.c.l.b16 %v1498
          %v1667 = vunpack.c.l.b16 %v1499
          %v1668 = vunpack.c.l.b16 %v1500
          %v1669 = vunpack.c.l.b16 %v1501
          %v1670 = vunpack.c.l.b16 %v1502
          %v1671 = vunpack.c.l.b16 %v1503
          %v1672 = vunpack.c.l.b16 %v1504
          %v1673 = vunpack.c.l.b16 %v1505
          %v1674 = vunpack.c.l.b16 %v1506
          %v1675 = vunpack.c.l.b16 %v1507
          %v1676 = vunpack.c.l.b16 %v1508
          %v1677 = vunpack.c.l.b16 %v1509
          %v1678 = vunpack.c.l.b16 %v1510
          %v1679 = vunpack.c.l.b16 %v1511
          %v1680 = vunpack.c.l.b16 %v1512
          %v1681 = vunpack.c.l.b16 %v1513
          %v1682 = vunpack.c.l.b16 %v1514
          %v1683 = vunpack.c.l.b16 %v1515
          %v1684 = vunpack.c.l.b16 %v1516
          %v1685 = vunpack.c.l.b16 %v1517
          %v1686 = vunpack.c.l.b16 %v1518
          %v1687 = vunpack.c.l.b16 %v1519
          %v1688 = vunpack.c.l.b16 %v1520
          %v1689 = vunpack.c.l.b16 %v1521
          %v1690 = vunpack.c.l.b16 %v1522
          %v1691 = vunpack.c.l.b16 %v1523
          %v1692 = vunpack.c.l.b16 %v1524
          %v1693 = vunpack.c.l.b16 %v1525
          %v1694 = vunpack.c.l.b16 %v1526
          %v1695 = vunpack.c.l.b16 %v1527
          %v1696 = vunpack.c.l.b16 %v1528
          %v1697 = vunpack.c.l.b16 %v1529
          %v1698 = vunpack.c.l.b16 %v1530
          %v1699 = vunpack.c.l.b16 %v1531
          %v1700 = vunpack.c.l.b16 %v1532
          %v1701 = vunpack.c.l.b16 %v1533
          %v1702 = vunpack.c.l.b16 %v1534
          %v1703 = vpack.c.b16 %v1620, %v1619
          %v1704 = vpack.c.b16 %v1621, %v1621
          %v1705 = vpack.c.b16 %v1623, %v1622
          %v1706 = vpack.c.b16 %v1624, %v1624
          %v1707 = vpack.c.b16 %v1626, %v1625
          %v1708 = vpack.c.b16 %v1627, %v1627
          %v1709 = vpack.c.b16 %v1629, %v1628
          %v1710 = vpack.c.b16 %v1630, %v1630
          %v1711 = vpack.c.b16 %v1632, %v1631
          %v1712 = vpack.c.b16 %v1633, %v1633
          %v1713 = vpack.c.b16 %v1635, %v1634
          %v1714 = vpack.c.b16 %v1636, %v1636
          %v1715 = vpack.c.b16 %v1638, %v1637
          %v1716 = vpack.c.b16 %v1639, %v1639
          %v1717 = vpack.c.b16 %v1641, %v1640
          %v1718 = vpack.c.b16 %v1642, %v1642
          %v1719 = vpack.c.b16 %v1644, %v1643
          %v1720 = vpack.c.b16 %v1645, %v1645
          %v1721 = vpack.c.b16 %v1647, %v1646
          %v1722 = vpack.c.b16 %v1648, %v1648
          %v1723 = vpack.c.b16 %v1650, %v1649
          %v1724 = vpack.c.b16 %v1651, %v1651
          %v1725 = vpack.c.b16 %v1653, %v1652
          %v1726 = vpack.c.b16 %v1654, %v1654
          %v1727 = vpack.c.b16 %v1656, %v1655
          %v1728 = vpack.c.b16 %v1657, %v1657
          %v1729 = vpack.c.b16 %v1659, %v1658
          %v1730 = vpack.c.b16 %v1660, %v1660
          %v1731 = vpack.c.b16 %v1662, %v1661
          %v1732 = vpack.c.b16 %v1663, %v1663
          %v1733 = vpack.c.b16 %v1665, %v1664
          %v1734 = vpack.c.b16 %v1666, %v1666
          %v1735 = vpack.c.b16 %v1668, %v1667
          %v1736 = vpack.c.b16 %v1669, %v1669
          %v1737 = vpack.c.b16 %v1671, %v1670
          %v1738 = vpack.c.b16 %v1672, %v1672
          %v1739 = vpack.c.b16 %v1674, %v1673
          %v1740 = vpack.c.b16 %v1675, %v1675
          %v1741 = vpack.c.b16 %v1677, %v1676
          %v1742 = vpack.c.b16 %v1678, %v1678
          %v1743 = vpack.c.b16 %v1680, %v1679
          %v1744 = vpack.c.b16 %v1681, %v1681
          %v1745 = vpack.c.b16 %v1683, %v1682
          %v1746 = vpack.c.b16 %v1684, %v1684
          %v1747 = vpack.c.b16 %v1686, %v1685
          %v1748 = vpack.c.b16 %v1687, %v1687
          %v1749 = vpack.c.b16 %v1689, %v1688
          %v1750 = vpack.c.b16 %v1690, %v1690
          %v1751 = vpack.c.b16 %v1692, %v1691
          %v1752 = vpack.c.b16 %v1693, %v1693
          %v1753 = vpack.c.b16 %v1695, %v1694
          %v1754 = vpack.c.b16 %v1696, %v1696
          %v1755 = vpack.c.b16 %v1698, %v1697
          %v1756 = vpack.c.b16 %v1699, %v1699
          %v1757 = vpack.c.b16 %v1701, %v1700
          %v1758 = vpack.c.b16 %v1702, %v1702
          %vm1759 = vcmask 1044480
          %v1760 = vrot.slane %v1703, 3
          %v1761 = vrot.slane %v1704, 3
          %v1762 = vsel %vm1759, %v1760, %v1761
          %v1763 = vrot.slane %v1705, 3
          %v1764 = vrot.slane %v1706, 3
          %v1765 = vsel %vm1759, %v1763, %v1764
          %v1766 = vrot.slane %v1707, 3
          %v1767 = vrot.slane %v1708, 3
          %v1768 = vsel %vm1759, %v1766, %v1767
          %v1769 = vrot.slane %v1709, 3
          %v1770 = vrot.slane %v1710, 3
          %v1771 = vsel %vm1759, %v1769, %v1770
          %v1772 = vrot.slane %v1711, 3
          %v1773 = vrot.slane %v1712, 3
          %v1774 = vsel %vm1759, %v1772, %v1773
          %v1775 = vrot.slane %v1713, 3
          %v1776 = vrot.slane %v1714, 3
          %v1777 = vsel %vm1759, %v1775, %v1776
          %v1778 = vrot.slane %v1715, 3
          %v1779 = vrot.slane %v1716, 3
          %v1780 = vsel %vm1759, %v1778, %v1779
          %v1781 = vrot.slane %v1717, 3
          %v1782 = vrot.slane %v1718, 3
          %v1783 = vsel %vm1759, %v1781, %v1782
          %v1784 = vrot.slane %v1719, 3
          %v1785 = vrot.slane %v1720, 3
          %v1786 = vsel %vm1759, %v1784, %v1785
          %v1787 = vrot.slane %v1721, 3
          %v1788 = vrot.slane %v1722, 3
          %v1789 = vsel %vm1759, %v1787, %v1788
          %v1790 = vrot.slane %v1723, 3
          %v1791 = vrot.slane %v1724, 3
          %v1792 = vsel %vm1759, %v1790, %v1791
          %v1793 = vrot.slane %v1725, 3
          %v1794 = vrot.slane %v1726, 3
          %v1795 = vsel %vm1759, %v1793, %v1794
          %v1796 = vrot.slane %v1727, 3
          %v1797 = vrot.slane %v1728, 3
          %v1798 = vsel %vm1759, %v1796, %v1797
          %v1799 = vrot.slane %v1729, 3
          %v1800 = vrot.slane %v1730, 3
          %v1801 = vsel %vm1759, %v1799, %v1800
          %v1802 = vrot.slane %v1731, 3
          %v1803 = vrot.slane %v1732, 3
          %v1804 = vsel %vm1759, %v1802, %v1803
          %v1805 = vrot.slane %v1733, 3
          %v1806 = vrot.slane %v1734, 3
          %v1807 = vsel %vm1759, %v1805, %v1806
          %v1808 = vrot.slane %v1735, 3
          %v1809 = vrot.slane %v1736, 3
          %v1810 = vsel %vm1759, %v1808, %v1809
          %v1811 = vrot.slane %v1737, 3
          %v1812 = vrot.slane %v1738, 3
          %v1813 = vsel %vm1759, %v1811, %v1812
          %v1814 = vrot.slane %v1739, 3
          %v1815 = vrot.slane %v1740, 3
          %v1816 = vsel %vm1759, %v1814, %v1815
          %v1817 = vrot.slane %v1741, 3
          %v1818 = vrot.slane %v1742, 3
          %v1819 = vsel %vm1759, %v1817, %v1818
          %v1820 = vrot.slane %v1743, 3
          %v1821 = vrot.slane %v1744, 3
          %v1822 = vsel %vm1759, %v1820, %v1821
          %v1823 = vrot.slane %v1745, 3
          %v1824 = vrot.slane %v1746, 3
          %v1825 = vsel %vm1759, %v1823, %v1824
          %v1826 = vrot.slane %v1747, 3
          %v1827 = vrot.slane %v1748, 3
          %v1828 = vsel %vm1759, %v1826, %v1827
          %v1829 = vrot.slane %v1749, 3
          %v1830 = vrot.slane %v1750, 3
          %v1831 = vsel %vm1759, %v1829, %v1830
          %v1832 = vrot.slane %v1751, 3
          %v1833 = vrot.slane %v1752, 3
          %v1834 = vsel %vm1759, %v1832, %v1833
          %v1835 = vrot.slane %v1753, 3
          %v1836 = vrot.slane %v1754, 3
          %v1837 = vsel %vm1759, %v1835, %v1836
          %v1838 = vrot.slane %v1755, 3
          %v1839 = vrot.slane %v1756, 3
          %v1840 = vsel %vm1759, %v1838, %v1839
          %v1841 = vrot.slane %v1757, 3
          %v1842 = vrot.slane %v1758, 3
          %v1843 = vsel %vm1759, %v1841, %v1842
          %1872 = vst [vmem:[#allocation3 + $0x8] sm:$0xff] %v1762
          %1873 = vst [vmem:[#allocation3 + $0x20] sm:$0xff] %v1765
          %1874 = vst [vmem:[#allocation3 + $0x38] sm:$0xff] %v1768
          %1875 = vst [vmem:[#allocation3 + $0x50] sm:$0xff] %v1771
          %1876 = vst [vmem:[#allocation3 + $0x68] sm:$0xff] %v1774
          %1877 = vst [vmem:[#allocation3 + $0x80] sm:$0xff] %v1777
          %1878 = vst [vmem:[#allocation3 + $0x98] sm:$0xff] %v1780
          %1879 = vst [vmem:[#allocation3 + $0xb0] sm:$0xff] %v1783
          %1880 = vst [vmem:[#allocation3 + $0xc8] sm:$0xff] %v1786
          %1881 = vst [vmem:[#allocation3 + $0xe0] sm:$0xff] %v1789
          %1882 = vst [vmem:[#allocation3 + $0xf8] sm:$0xff] %v1792
          %1883 = vst [vmem:[#allocation3 + $0x110] sm:$0xff] %v1795
          %1884 = vst [vmem:[#allocation3 + $0x128] sm:$0xff] %v1798
          %1885 = vst [vmem:[#allocation3 + $0x140] sm:$0xff] %v1801
          %1886 = vst [vmem:[#allocation3 + $0x158] sm:$0xff] %v1804
          %1887 = vst [vmem:[#allocation3 + $0x170] sm:$0xff] %v1807
          %1888 = vst [vmem:[#allocation3 + $0x188] sm:$0xff] %v1810
          %1889 = vst [vmem:[#allocation3 + $0x1a0] sm:$0xff] %v1813
          %1890 = vst [vmem:[#allocation3 + $0x1b8] sm:$0xff] %v1816
          %1891 = vst [vmem:[#allocation3 + $0x1d0] sm:$0xff] %v1819
          %1892 = vst [vmem:[#allocation3 + $0x1e8] sm:$0xff] %v1822
          %1893 = vst [vmem:[#allocation3 + $0x200] sm:$0xff] %v1825
          %1894 = vst [vmem:[#allocation3 + $0x218] sm:$0xff] %v1828
          %1895 = vst [vmem:[#allocation3 + $0x230] sm:$0xff] %v1831
          %1896 = vst [vmem:[#allocation3 + $0x248] sm:$0xff] %v1834
          %1897 = vst [vmem:[#allocation3 + $0x260] sm:$0xff] %v1837
          %1898 = vst [vmem:[#allocation3 + $0x278] sm:$0xff] %v1840
          %1899 = vst [vmem:[#allocation3 + $0x290] sm:$0xff] %v1843
          %v1900 = vld [vmem:[%s355 + $0x4] sm:$0xf]
          %v1901 = vld [vmem:[%s355 + $0x8] sm:$0xf]
          %v1902 = vld [vmem:[%s355 + $0x14] sm:$0xf]
          %v1903 = vld [vmem:[%s355 + $0x18] sm:$0xf]
          %v1904 = vld [vmem:[%s355 + $0x24] sm:$0xf]
          %v1905 = vld [vmem:[%s355 + $0x28] sm:$0xf]
          %v1906 = vld [vmem:[%s355 + $0x34] sm:$0xf]
          %v1907 = vld [vmem:[%s355 + $0x38] sm:$0xf]
          %v1908 = vld [vmem:[%s355 + $0x44] sm:$0xf]
          %v1909 = vld [vmem:[%s355 + $0x48] sm:$0xf]
          %v1910 = vld [vmem:[%s355 + $0x54] sm:$0xf]
          %v1911 = vld [vmem:[%s355 + $0x58] sm:$0xf]
          %v1912 = vld [vmem:[%s355 + $0x64] sm:$0xf]
          %v1913 = vld [vmem:[%s355 + $0x68] sm:$0xf]
          %v1914 = vld [vmem:[%s355 + $0x74] sm:$0xf]
          %v1915 = vld [vmem:[%s355 + $0x78] sm:$0xf]
          %v1916 = vld [vmem:[%s355 + $0x84] sm:$0xf]
          %v1917 = vld [vmem:[%s355 + $0x88] sm:$0xf]
          %v1918 = vld [vmem:[%s355 + $0x94] sm:$0xf]
          %v1919 = vld [vmem:[%s355 + $0x98] sm:$0xf]
          %v1920 = vld [vmem:[%s355 + $0xa4] sm:$0xf]
          %v1921 = vld [vmem:[%s355 + $0xa8] sm:$0xf]
          %v1922 = vld [vmem:[%s355 + $0xb4] sm:$0xf]
          %v1923 = vld [vmem:[%s355 + $0xb8] sm:$0xf]
          %v1924 = vld [vmem:[%s355 + $0xc4] sm:$0xf]
          %v1925 = vld [vmem:[%s355 + $0xc8] sm:$0xf]
          %v1926 = vld [vmem:[%s355 + $0xd4] sm:$0xf]
          %v1927 = vld [vmem:[%s355 + $0xd8] sm:$0xf]
          %v1928 = vld [vmem:[%s355 + $0xe4] sm:$0xf]
          %v1929 = vld [vmem:[%s355 + $0xe8] sm:$0xf]
          %v1930 = vld [vmem:[%s355 + $0xf4] sm:$0xf]
          %v1931 = vld [vmem:[%s355 + $0xf8] sm:$0xf]
          %v1932 = vld [vmem:[%s355 + $0x104] sm:$0xf]
          %v1933 = vld [vmem:[%s355 + $0x108] sm:$0xf]
          %v1934 = vld [vmem:[%s355 + $0x114] sm:$0xf]
          %v1935 = vld [vmem:[%s355 + $0x118] sm:$0xf]
          %v1936 = vld [vmem:[%s355 + $0x124] sm:$0xf]
          %v1937 = vld [vmem:[%s355 + $0x128] sm:$0xf]
          %v1938 = vld [vmem:[%s355 + $0x134] sm:$0xf]
          %v1939 = vld [vmem:[%s355 + $0x138] sm:$0xf]
          %v1940 = vld [vmem:[%s355 + $0x144] sm:$0xf]
          %v1941 = vld [vmem:[%s355 + $0x148] sm:$0xf]
          %v1942 = vld [vmem:[%s355 + $0x154] sm:$0xf]
          %v1943 = vld [vmem:[%s355 + $0x158] sm:$0xf]
          %v1944 = vld [vmem:[%s355 + $0x164] sm:$0xf]
          %v1945 = vld [vmem:[%s355 + $0x168] sm:$0xf]
          %v1946 = vld [vmem:[%s355 + $0x174] sm:$0xf]
          %v1947 = vld [vmem:[%s355 + $0x178] sm:$0xf]
          %v1948 = vld [vmem:[%s355 + $0x184] sm:$0xf]
          %v1949 = vld [vmem:[%s355 + $0x188] sm:$0xf]
          %v1950 = vld [vmem:[%s355 + $0x194] sm:$0xf]
          %v1951 = vld [vmem:[%s355 + $0x198] sm:$0xf]
          %v1952 = vld [vmem:[%s355 + $0x1a4] sm:$0xf]
          %v1953 = vld [vmem:[%s355 + $0x1a8] sm:$0xf]
          %v1954 = vld [vmem:[%s355 + $0x1b4] sm:$0xf]
          %v1955 = vld [vmem:[%s355 + $0x1b8] sm:$0xf]
          %v2012 = vunpack.c.l.b16 %v1900
          %v2013 = vunpack.c.l.b16 %v1901
          %v2014 = vunpack.c.l.b16 %v1902
          %v2015 = vunpack.c.l.b16 %v1903
          %v2016 = vunpack.c.l.b16 %v1904
          %v2017 = vunpack.c.l.b16 %v1905
          %v2018 = vunpack.c.l.b16 %v1906
          %v2019 = vunpack.c.l.b16 %v1907
          %v2020 = vunpack.c.l.b16 %v1908
          %v2021 = vunpack.c.l.b16 %v1909
          %v2022 = vunpack.c.l.b16 %v1910
          %v2023 = vunpack.c.l.b16 %v1911
          %v2024 = vunpack.c.l.b16 %v1912
          %v2025 = vunpack.c.l.b16 %v1913
          %v2026 = vunpack.c.l.b16 %v1914
          %v2027 = vunpack.c.l.b16 %v1915
          %v2028 = vunpack.c.l.b16 %v1916
          %v2029 = vunpack.c.l.b16 %v1917
          %v2030 = vunpack.c.l.b16 %v1918
          %v2031 = vunpack.c.l.b16 %v1919
          %v2032 = vunpack.c.l.b16 %v1920
          %v2033 = vunpack.c.l.b16 %v1921
          %v2034 = vunpack.c.l.b16 %v1922
          %v2035 = vunpack.c.l.b16 %v1923
          %v2036 = vunpack.c.l.b16 %v1924
          %v2037 = vunpack.c.l.b16 %v1925
          %v2038 = vunpack.c.l.b16 %v1926
          %v2039 = vunpack.c.l.b16 %v1927
          %v2040 = vunpack.c.l.b16 %v1928
          %v2041 = vunpack.c.l.b16 %v1929
          %v2042 = vunpack.c.l.b16 %v1930
          %v2043 = vunpack.c.l.b16 %v1931
          %v2044 = vunpack.c.l.b16 %v1932
          %v2045 = vunpack.c.l.b16 %v1933
          %v2046 = vunpack.c.l.b16 %v1934
          %v2047 = vunpack.c.l.b16 %v1935
          %v2048 = vunpack.c.l.b16 %v1936
          %v2049 = vunpack.c.l.b16 %v1937
          %v2050 = vunpack.c.l.b16 %v1938
          %v2051 = vunpack.c.l.b16 %v1939
          %v2052 = vunpack.c.l.b16 %v1940
          %v2053 = vunpack.c.l.b16 %v1941
          %v2054 = vunpack.c.l.b16 %v1942
          %v2055 = vunpack.c.l.b16 %v1943
          %v2056 = vunpack.c.l.b16 %v1944
          %v2057 = vunpack.c.l.b16 %v1945
          %v2058 = vunpack.c.l.b16 %v1946
          %v2059 = vunpack.c.l.b16 %v1947
          %v2060 = vunpack.c.l.b16 %v1948
          %v2061 = vunpack.c.l.b16 %v1949
          %v2062 = vunpack.c.l.b16 %v1950
          %v2063 = vunpack.c.l.b16 %v1951
          %v2064 = vunpack.c.l.b16 %v1952
          %v2065 = vunpack.c.l.b16 %v1953
          %v2066 = vunpack.c.l.b16 %v1954
          %v2067 = vunpack.c.l.b16 %v1955
          %v2068 = vpack.c.b16 %v2013, %v2012
          %v2069 = vpack.c.b16 %v2015, %v2014
          %v2070 = vpack.c.b16 %v2017, %v2016
          %v2071 = vpack.c.b16 %v2019, %v2018
          %v2072 = vpack.c.b16 %v2021, %v2020
          %v2073 = vpack.c.b16 %v2023, %v2022
          %v2074 = vpack.c.b16 %v2025, %v2024
          %v2075 = vpack.c.b16 %v2027, %v2026
          %v2076 = vpack.c.b16 %v2029, %v2028
          %v2077 = vpack.c.b16 %v2031, %v2030
          %v2078 = vpack.c.b16 %v2033, %v2032
          %v2079 = vpack.c.b16 %v2035, %v2034
          %v2080 = vpack.c.b16 %v2037, %v2036
          %v2081 = vpack.c.b16 %v2039, %v2038
          %v2082 = vpack.c.b16 %v2041, %v2040
          %v2083 = vpack.c.b16 %v2043, %v2042
          %v2084 = vpack.c.b16 %v2045, %v2044
          %v2085 = vpack.c.b16 %v2047, %v2046
          %v2086 = vpack.c.b16 %v2049, %v2048
          %v2087 = vpack.c.b16 %v2051, %v2050
          %v2088 = vpack.c.b16 %v2053, %v2052
          %v2089 = vpack.c.b16 %v2055, %v2054
          %v2090 = vpack.c.b16 %v2057, %v2056
          %v2091 = vpack.c.b16 %v2059, %v2058
          %v2092 = vpack.c.b16 %v2061, %v2060
          %v2093 = vpack.c.b16 %v2063, %v2062
          %v2094 = vpack.c.b16 %v2065, %v2064
          %v2095 = vpack.c.b16 %v2067, %v2066
          %2124 = vst [vmem:[#allocation3 + $0x10] sm:$0xff] %v2068
          %2125 = vst [vmem:[#allocation3 + $0x28] sm:$0xff] %v2069
          %2126 = vst [vmem:[#allocation3 + $0x40] sm:$0xff] %v2070
          %2127 = vst [vmem:[#allocation3 + $0x58] sm:$0xff] %v2071
          %2128 = vst [vmem:[#allocation3 + $0x70] sm:$0xff] %v2072
          %2129 = vst [vmem:[#allocation3 + $0x88] sm:$0xff] %v2073
          %2130 = vst [vmem:[#allocation3 + $0xa0] sm:$0xff] %v2074
          %2131 = vst [vmem:[#allocation3 + $0xb8] sm:$0xff] %v2075
          %2132 = vst [vmem:[#allocation3 + $0xd0] sm:$0xff] %v2076
          %2133 = vst [vmem:[#allocation3 + $0xe8] sm:$0xff] %v2077
          %2134 = vst [vmem:[#allocation3 + $0x100] sm:$0xff] %v2078
          %2135 = vst [vmem:[#allocation3 + $0x118] sm:$0xff] %v2079
          %2136 = vst [vmem:[#allocation3 + $0x130] sm:$0xff] %v2080
          %2137 = vst [vmem:[#allocation3 + $0x148] sm:$0xff] %v2081
          %2138 = vst [vmem:[#allocation3 + $0x160] sm:$0xff] %v2082
          %2139 = vst [vmem:[#allocation3 + $0x178] sm:$0xff] %v2083
          %2140 = vst [vmem:[#allocation3 + $0x190] sm:$0xff] %v2084
          %2141 = vst [vmem:[#allocation3 + $0x1a8] sm:$0xff] %v2085
          %2142 = vst [vmem:[#allocation3 + $0x1c0] sm:$0xff] %v2086
          %2143 = vst [vmem:[#allocation3 + $0x1d8] sm:$0xff] %v2087
          %2144 = vst [vmem:[#allocation3 + $0x1f0] sm:$0xff] %v2088
          %2145 = vst [vmem:[#allocation3 + $0x208] sm:$0xff] %v2089
          %2146 = vst [vmem:[#allocation3 + $0x220] sm:$0xff] %v2090
          %2147 = vst [vmem:[#allocation3 + $0x238] sm:$0xff] %v2091
          %2148 = vst [vmem:[#allocation3 + $0x250] sm:$0xff] %v2092
          %2149 = vst [vmem:[#allocation3 + $0x268] sm:$0xff] %v2093
          %2150 = vst [vmem:[#allocation3 + $0x280] sm:$0xff] %v2094
          %2151 = vst [vmem:[#allocation3 + $0x298] sm:$0xff] %v2095
          %s2152 = scalar_lea.vmem [#allocation3], 96
          %v2153 = vld [vmem:[%s2152] sm:$0xff]
          %v2154 = vld [vmem:[%s2152 + $0x8] sm:$0xff]
          %v2155 = vld [vmem:[%s2152 + $0x10] sm:$0xff]
          %v2156 = vld [vmem:[%s2152 + $0x18] sm:$0xff]
          %v2157 = vld [vmem:[%s2152 + $0x20] sm:$0xff]
          %v2158 = vld [vmem:[%s2152 + $0x28] sm:$0xff]
          %v2159 = vld [vmem:[%s2152 + $0x30] sm:$0xff]
          %v2160 = vld [vmem:[%s2152 + $0x38] sm:$0xff]
          %v2161 = vld [vmem:[%s2152 + $0x40] sm:$0xff]
          %v2162 = vld [vmem:[%s2152 + $0x48] sm:$0xff]
          %v2163 = vld [vmem:[%s2152 + $0x50] sm:$0xff]
          %v2164 = vld [vmem:[%s2152 + $0x58] sm:$0xff]
          %v2165 = vld [vmem:[%s2152 + $0x60] sm:$0xff]
          %v2166 = vld [vmem:[%s2152 + $0x68] sm:$0xff]
          %v2167 = vld [vmem:[%s2152 + $0x70] sm:$0xff]
          %v2168 = vld [vmem:[%s2152 + $0x78] sm:$0xff]
          %v2169 = vld [vmem:[%s2152 + $0x80] sm:$0xff]
          %v2170 = vld [vmem:[%s2152 + $0x88] sm:$0xff]
          %v2171 = vld [vmem:[%s2152 + $0x90] sm:$0xff]
          %v2172 = vld [vmem:[%s2152 + $0x98] sm:$0xff]
          %v2173 = vld [vmem:[%s2152 + $0xa0] sm:$0xff]
          %v2174 = vld [vmem:[%s2152 + $0xa8] sm:$0xff]
          %v2175 = vld [vmem:[%s2152 + $0xb0] sm:$0xff]
          %v2176 = vld [vmem:[%s2152 + $0xb8] sm:$0xff]
          %v2177 = vld [vmem:[%s2152 + $0xc0] sm:$0xff]
          %v2178 = vld [vmem:[%s2152 + $0xc8] sm:$0xff]
          %v2179 = vld [vmem:[%s2152 + $0xd0] sm:$0xff]
          %v2180 = vld [vmem:[%s2152 + $0xd8] sm:$0xff]
          %v2181 = vld [vmem:[%s2152 + $0xe0] sm:$0xff]
          %v2182 = vld [vmem:[%s2152 + $0xe8] sm:$0xff]
          %v2183 = vld [vmem:[%s2152 + $0xf0] sm:$0xff]
          %v2184 = vld [vmem:[%s2152 + $0xf8] sm:$0xff]
          %v2185 = vld [vmem:[%s2152 + $0x100] sm:$0xff]
          %v2186 = vld [vmem:[%s2152 + $0x108] sm:$0xff]
          %v2187 = vld [vmem:[%s2152 + $0x110] sm:$0xff]
          %v2188 = vld [vmem:[%s2152 + $0x118] sm:$0xff]
          %v2189 = vld [vmem:[%s2152 + $0x120] sm:$0xff]
          %v2190 = vld [vmem:[%s2152 + $0x128] sm:$0xff]
          %v2191 = vld [vmem:[%s2152 + $0x130] sm:$0xff]
          %v2192 = vld [vmem:[%s2152 + $0x138] sm:$0xff]
          %v2193 = vld [vmem:[%s2152 + $0x140] sm:$0xff]
          %v2194 = vld [vmem:[%s2152 + $0x148] sm:$0xff]
          %v2195 = vld [vmem:[%s2152 + $0x150] sm:$0xff]
          %v2196 = vld [vmem:[%s2152 + $0x158] sm:$0xff]
          %v2197 = vld [vmem:[%s2152 + $0x160] sm:$0xff]
          %v2198 = vld [vmem:[%s2152 + $0x168] sm:$0xff]
          %v2199 = vld [vmem:[%s2152 + $0x170] sm:$0xff]
          %v2200 = vld [vmem:[%s2152 + $0x178] sm:$0xff]
          %v2201 = vld [vmem:[#allocation2] sm:$0xff]
          %v2202 = vld [vmem:[#allocation2 + $0x8] sm:$0xff]
          %v2203 = vld [vmem:[#allocation2 + $0x10] sm:$0xff]
          %v2204 = vld [vmem:[#allocation2 + $0x18] sm:$0xff]
          %v2205 = vld [vmem:[#allocation2 + $0x20] sm:$0xff]
          %v2206 = vld [vmem:[#allocation2 + $0x28] sm:$0xff]
          %v2207 = vld [vmem:[#allocation2 + $0x30] sm:$0xff]
          %v2208 = vld [vmem:[#allocation2 + $0x38] sm:$0xff]
          %v2209 = vld [vmem:[#allocation2 + $0x40] sm:$0xff]
          %v2210 = vld [vmem:[#allocation2 + $0x48] sm:$0xff]
          %v2211 = vld [vmem:[#allocation2 + $0x50] sm:$0xff]
          %v2212 = vld [vmem:[#allocation2 + $0x58] sm:$0xff]
          %v2213 = vld [vmem:[#allocation2 + $0x60] sm:$0xff]
          %v2214 = vld [vmem:[#allocation2 + $0x68] sm:$0xff]
          %v2215 = vld [vmem:[#allocation2 + $0x70] sm:$0xff]
          %v2216 = vld [vmem:[#allocation2 + $0x78] sm:$0xff]
          %v2217 = vld [vmem:[#allocation2 + $0x80] sm:$0xff]
          %v2218 = vld [vmem:[#allocation2 + $0x88] sm:$0xff]
          %v2219 = vld [vmem:[#allocation2 + $0x90] sm:$0xff]
          %v2220 = vld [vmem:[#allocation2 + $0x98] sm:$0xff]
          %v2221 = vld [vmem:[#allocation2 + $0xa0] sm:$0xff]
          %v2222 = vld [vmem:[#allocation2 + $0xa8] sm:$0xff]
          %v2223 = vld [vmem:[#allocation2 + $0xb0] sm:$0xff]
          %v2224 = vld [vmem:[#allocation2 + $0xb8] sm:$0xff]
          %v2225 = vld [vmem:[#allocation2 + $0xc0] sm:$0xff]
          %v2226 = vld [vmem:[#allocation2 + $0xc8] sm:$0xff]
          %v2227 = vld [vmem:[#allocation2 + $0xd0] sm:$0xff]
          %v2228 = vld [vmem:[#allocation2 + $0xd8] sm:$0xff]
          %v2229 = vld [vmem:[#allocation2 + $0xe0] sm:$0xff]
          %v2230 = vld [vmem:[#allocation2 + $0xe8] sm:$0xff]
          %v2231 = vld [vmem:[#allocation2 + $0xf0] sm:$0xff]
          %v2232 = vld [vmem:[#allocation2 + $0xf8] sm:$0xff]
          %v2233 = vld [vmem:[%s291] sm:$0xf]
          %v2234 = vld [vmem:[%s291 + $0x4] sm:$0xf]
          %v2235 = vld [vmem:[%s291 + $0x8] sm:$0xf]
          %v2236 = vld [vmem:[%s291 + $0xc] sm:$0xf]
          %v2237 = vld [vmem:[%s291 + $0x10] sm:$0xf]
          %v2238 = vld [vmem:[%s291 + $0x14] sm:$0xf]
          %v2239 = vld [vmem:[%s291 + $0x18] sm:$0xf]
          %v2240 = vld [vmem:[%s291 + $0x1c] sm:$0xf]
          %v2241 = vld [vmem:[%s291 + $0x20] sm:$0xf]
          %v2242 = vld [vmem:[%s291 + $0x24] sm:$0xf]
          %v2243 = vld [vmem:[%s291 + $0x28] sm:$0xf]
          %v2244 = vld [vmem:[%s291 + $0x2c] sm:$0xf]
          %v2245 = vld [vmem:[%s291 + $0x30] sm:$0xf]
          %v2246 = vld [vmem:[%s291 + $0x34] sm:$0xf]
          %v2247 = vld [vmem:[%s291 + $0x38] sm:$0xf]
          %v2248 = vld [vmem:[%s291 + $0x3c] sm:$0xf]
          %v2249 = vld [vmem:[%s291 + $0x40] sm:$0xf]
          %v2250 = vld [vmem:[%s291 + $0x44] sm:$0xf]
          %v2251 = vld [vmem:[%s291 + $0x48] sm:$0xf]
          %v2252 = vld [vmem:[%s291 + $0x4c] sm:$0xf]
          %v2253 = vld [vmem:[%s291 + $0x50] sm:$0xf]
          %v2254 = vld [vmem:[%s291 + $0x54] sm:$0xf]
          %v2255 = vld [vmem:[%s291 + $0x58] sm:$0xf]
          %v2256 = vld [vmem:[%s291 + $0x5c] sm:$0xf]
          %v2257 = vld [vmem:[%s291 + $0x60] sm:$0xf]
          %v2258 = vld [vmem:[%s291 + $0x64] sm:$0xf]
          %v2259 = vld [vmem:[%s291 + $0x68] sm:$0xf]
          %v2260 = vld [vmem:[%s291 + $0x6c] sm:$0xf]
          %v2261 = vld [vmem:[%s291 + $0x70] sm:$0xf]
          %v2262 = vld [vmem:[%s291 + $0x74] sm:$0xf]
          %v2263 = vld [vmem:[%s291 + $0x78] sm:$0xf]
          %v2264 = vld [vmem:[%s291 + $0x7c] sm:$0xf]
          %v2265 = vld [vmem:[%s291 + $0x80] sm:$0xf]
          %v2266 = vld [vmem:[%s291 + $0x84] sm:$0xf]
          %v2267 = vld [vmem:[%s291 + $0x88] sm:$0xf]
          %v2268 = vld [vmem:[%s291 + $0x8c] sm:$0xf]
          %v2269 = vld [vmem:[%s291 + $0x90] sm:$0xf]
          %v2270 = vld [vmem:[%s291 + $0x94] sm:$0xf]
          %v2271 = vld [vmem:[%s291 + $0x98] sm:$0xf]
          %v2272 = vld [vmem:[%s291 + $0x9c] sm:$0xf]
          %v2273 = vld [vmem:[%s291 + $0xa0] sm:$0xf]
          %v2274 = vld [vmem:[%s291 + $0xa4] sm:$0xf]
          %v2275 = vld [vmem:[%s291 + $0xa8] sm:$0xf]
          %v2276 = vld [vmem:[%s291 + $0xac] sm:$0xf]
          %v2277 = vld [vmem:[%s291 + $0xb0] sm:$0xf]
          %v2278 = vld [vmem:[%s291 + $0xb4] sm:$0xf]
          %v2279 = vld [vmem:[%s291 + $0xb8] sm:$0xf]
          %v2280 = vld [vmem:[%s291 + $0xbc] sm:$0xf]
          %v2329 = vunpack.c.l.b16 %v2233
          %v2330 = vunpack.c.l.b16 %v2234
          %v2331 = vunpack.c.l.b16 %v2235
          %v2332 = vunpack.c.l.b16 %v2236
          %v2333 = vunpack.c.l.b16 %v2237
          %v2334 = vunpack.c.l.b16 %v2238
          %v2335 = vunpack.c.l.b16 %v2239
          %v2336 = vunpack.c.l.b16 %v2240
          %v2337 = vunpack.c.l.b16 %v2241
          %v2338 = vunpack.c.l.b16 %v2242
          %v2339 = vunpack.c.l.b16 %v2243
          %v2340 = vunpack.c.l.b16 %v2244
          %v2341 = vunpack.c.l.b16 %v2245
          %v2342 = vunpack.c.l.b16 %v2246
          %v2343 = vunpack.c.l.b16 %v2247
          %v2344 = vunpack.c.l.b16 %v2248
          %v2345 = vunpack.c.l.b16 %v2249
          %v2346 = vunpack.c.l.b16 %v2250
          %v2347 = vunpack.c.l.b16 %v2251
          %v2348 = vunpack.c.l.b16 %v2252
          %v2349 = vunpack.c.l.b16 %v2253
          %v2350 = vunpack.c.l.b16 %v2254
          %v2351 = vunpack.c.l.b16 %v2255
          %v2352 = vunpack.c.l.b16 %v2256
          %v2353 = vunpack.c.l.b16 %v2257
          %v2354 = vunpack.c.l.b16 %v2258
          %v2355 = vunpack.c.l.b16 %v2259
          %v2356 = vunpack.c.l.b16 %v2260
          %v2357 = vunpack.c.l.b16 %v2261
          %v2358 = vunpack.c.l.b16 %v2262
          %v2359 = vunpack.c.l.b16 %v2263
          %v2360 = vunpack.c.l.b16 %v2264
          %v2361 = vunpack.c.l.b16 %v2265
          %v2362 = vunpack.c.l.b16 %v2266
          %v2363 = vunpack.c.l.b16 %v2267
          %v2364 = vunpack.c.l.b16 %v2268
          %v2365 = vunpack.c.l.b16 %v2269
          %v2366 = vunpack.c.l.b16 %v2270
          %v2367 = vunpack.c.l.b16 %v2271
          %v2368 = vunpack.c.l.b16 %v2272
          %v2369 = vunpack.c.l.b16 %v2273
          %v2370 = vunpack.c.l.b16 %v2274
          %v2371 = vunpack.c.l.b16 %v2275
          %v2372 = vunpack.c.l.b16 %v2276
          %v2373 = vunpack.c.l.b16 %v2277
          %v2374 = vunpack.c.l.b16 %v2278
          %v2375 = vunpack.c.l.b16 %v2279
          %v2376 = vunpack.c.l.b16 %v2280
          %v2377 = vpack.c.b16 %v2330, %v2329
          %v2378 = vpack.c.b16 %v2332, %v2331
          %v2379 = vpack.c.b16 %v2334, %v2333
          %v2380 = vpack.c.b16 %v2336, %v2335
          %v2381 = vpack.c.b16 %v2338, %v2337
          %v2382 = vpack.c.b16 %v2340, %v2339
          %v2383 = vpack.c.b16 %v2342, %v2341
          %v2384 = vpack.c.b16 %v2344, %v2343
          %v2385 = vpack.c.b16 %v2346, %v2345
          %v2386 = vpack.c.b16 %v2348, %v2347
          %v2387 = vpack.c.b16 %v2350, %v2349
          %v2388 = vpack.c.b16 %v2352, %v2351
          %v2389 = vpack.c.b16 %v2354, %v2353
          %v2390 = vpack.c.b16 %v2356, %v2355
          %v2391 = vpack.c.b16 %v2358, %v2357
          %v2392 = vpack.c.b16 %v2360, %v2359
          %v2393 = vpack.c.b16 %v2362, %v2361
          %v2394 = vpack.c.b16 %v2364, %v2363
          %v2395 = vpack.c.b16 %v2366, %v2365
          %v2396 = vpack.c.b16 %v2368, %v2367
          %v2397 = vpack.c.b16 %v2370, %v2369
          %v2398 = vpack.c.b16 %v2372, %v2371
          %v2399 = vpack.c.b16 %v2374, %v2373
          %v2400 = vpack.c.b16 %v2376, %v2375
          %2425 = vmatprep.subr.bf16.mxu0 0
          %2426 = vmatpush1.bf16.msra.mxu0 %v2377
          %2427 = vmatprep.subr.bf16.mxu0 0
          %2428 = vmatpush1.bf16.msra.mxu0 %v2378
          %2429 = vmatprep.subr.bf16.mxu0 0
          %2430 = vmatpush1.bf16.msra.mxu0 %v2379
          %2431 = vmatprep.subr.bf16.mxu0 0
          %2432 = vmatpush1.bf16.msra.mxu0 %v2380
          %2433 = vmatprep.subr.bf16.mxu0 0
          %2434 = vmatpush1.bf16.msra.mxu0 %v2381
          %2435 = vmatprep.subr.bf16.mxu0 0
          %2436 = vmatpush1.bf16.msra.mxu0 %v2382
          %2437 = vmatprep.subr.bf16.mxu0 0
          %2438 = vmatpush1.bf16.msra.mxu0 %v2383
          %2439 = vmatprep.subr.bf16.mxu0 0
          %2440 = vmatpush1.bf16.msra.mxu0 %v2384
          %2441 = vmatprep.subr.bf16.mxu0 0
          %2442 = vmatpush1.bf16.msra.mxu0 %v2385
          %2443 = vmatprep.subr.bf16.mxu0 0
          %2444 = vmatpush1.bf16.msra.mxu0 %v2386
          %2445 = vmatprep.subr.bf16.mxu0 0
          %2446 = vmatpush1.bf16.msra.mxu0 %v2387
          %2447 = vmatprep.subr.bf16.mxu0 0
          %2448 = vmatpush1.bf16.msra.mxu0 %v2388
          %2449 = vmatprep.subr.bf16.mxu0 0
          %2450 = vmatpush1.bf16.msra.mxu0 %v2389
          %2451 = vmatprep.subr.bf16.mxu0 0
          %2452 = vmatpush1.bf16.msra.mxu0 %v2390
          %2453 = vmatprep.subr.bf16.mxu0 0
          %2454 = vmatpush1.bf16.msra.mxu0 %v2391
          %2455 = vmatprep.subr.bf16.mxu0 0
          %2456 = vmatpush1.bf16.msra.mxu0 %v2392
          %2457 = vmatprep.mubr.bf16.mxu0 %v2154
          %2458 = vmatmul.mubr.bf16.gmra.mrb[0].mxu0 %v2153
          %v2459 = vpop.f32.mrb[0].mxu0
          %v2460 = vadd.f32 0.0, %v2459
          %v2461 = vpop.f32.mrb[0].mxu0
          %v2462 = vpop.f32.mrb[0].mxu0
          %v2463 = vadd.f32 0.0, %v2462
          %v2464 = vpop.f32.mrb[0].mxu0
          %2465 = vmatprep.mubr.bf16.mxu0 %v2157
          %2466 = vmatmul.mubr.bf16.gmra.mrb[0].mxu0 %v2156
          %v2467 = vpop.f32.mrb[0].mxu0
          %v2468 = vadd.f32 0.0, %v2467
          %v2469 = vpop.f32.mrb[0].mxu0
          %v2470 = vpop.f32.mrb[0].mxu0
          %v2471 = vadd.f32 0.0, %v2470
          %v2472 = vpop.f32.mrb[0].mxu0
          %2473 = vmatprep.mubr.bf16.mxu0 %v2160
          %2474 = vmatmul.mubr.bf16.gmra.mrb[0].mxu0 %v2159
          %v2475 = vpop.f32.mrb[0].mxu0
          %v2476 = vadd.f32 0.0, %v2475
          %v2477 = vpop.f32.mrb[0].mxu0
          %v2478 = vpop.f32.mrb[0].mxu0
          %v2479 = vadd.f32 0.0, %v2478
          %v2480 = vpop.f32.mrb[0].mxu0
          %2481 = vmatprep.mubr.bf16.mxu0 %v2163
          %2482 = vmatmul.mubr.bf16.gmra.mrb[0].mxu0 %v2162
          %v2483 = vpop.f32.mrb[0].mxu0
          %v2484 = vadd.f32 0.0, %v2483
          %v2485 = vpop.f32.mrb[0].mxu0
          %v2486 = vpop.f32.mrb[0].mxu0
          %v2487 = vadd.f32 0.0, %v2486
          %v2488 = vpop.f32.mrb[0].mxu0
          %2489 = vmatprep.mubr.bf16.mxu0 %v2166
          %2490 = vmatmul.mubr.bf16.gmra.mrb[0].mxu0 %v2165
          %v2491 = vpop.f32.mrb[0].mxu0
          %v2492 = vadd.f32 0.0, %v2491
          %v2493 = vpop.f32.mrb[0].mxu0
          %v2494 = vpop.f32.mrb[0].mxu0
          %v2495 = vadd.f32 0.0, %v2494
          %v2496 = vpop.f32.mrb[0].mxu0
          %2497 = vmatprep.mubr.bf16.mxu0 %v2169
          %2498 = vmatmul.mubr.bf16.gmra.mrb[0].mxu0 %v2168
          %v2499 = vpop.f32.mrb[0].mxu0
          %v2500 = vadd.f32 0.0, %v2499
          %v2501 = vpop.f32.mrb[0].mxu0
          %v2502 = vpop.f32.mrb[0].mxu0
          %v2503 = vadd.f32 0.0, %v2502
          %v2504 = vpop.f32.mrb[0].mxu0
          %2505 = vmatprep.mubr.bf16.mxu0 %v2172
          %2506 = vmatmul.mubr.bf16.gmra.mrb[0].mxu0 %v2171
          %v2507 = vpop.f32.mrb[0].mxu0
          %v2508 = vadd.f32 0.0, %v2507
          %v2509 = vpop.f32.mrb[0].mxu0
          %v2510 = vpop.f32.mrb[0].mxu0
          %v2511 = vadd.f32 0.0, %v2510
          %v2512 = vpop.f32.mrb[0].mxu0
          %2513 = vmatprep.mubr.bf16.mxu0 %v2175
          %2514 = vmatmul.mubr.bf16.gmra.mrb[0].mxu0 %v2174
          %v2515 = vpop.f32.mrb[0].mxu0
          %v2516 = vadd.f32 0.0, %v2515
          %v2517 = vpop.f32.mrb[0].mxu0
          %v2518 = vpop.f32.mrb[0].mxu0
          %v2519 = vadd.f32 0.0, %v2518
          %v2520 = vpop.f32.mrb[0].mxu0
          %2521 = vmatprep.mubr.bf16.mxu0 %v2178
          %2522 = vmatmul.mubr.bf16.gmra.mrb[0].mxu0 %v2177
          %v2523 = vpop.f32.mrb[0].mxu0
          %v2524 = vadd.f32 0.0, %v2523
          %v2525 = vpop.f32.mrb[0].mxu0
          %v2526 = vpop.f32.mrb[0].mxu0
          %v2527 = vadd.f32 0.0, %v2526
          %v2528 = vpop.f32.mrb[0].mxu0
          %2529 = vmatprep.mubr.bf16.mxu0 %v2181
          %2530 = vmatmul.mubr.bf16.gmra.mrb[0].mxu0 %v2180
          %v2531 = vpop.f32.mrb[0].mxu0
          %v2532 = vadd.f32 0.0, %v2531
          %v2533 = vpop.f32.mrb[0].mxu0
          %v2534 = vpop.f32.mrb[0].mxu0
          %v2535 = vadd.f32 0.0, %v2534
          %v2536 = vpop.f32.mrb[0].mxu0
          %2537 = vmatprep.mubr.bf16.mxu0 %v2184
          %2538 = vmatmul.mubr.bf16.gmra.mrb[0].mxu0 %v2183
          %v2539 = vpop.f32.mrb[0].mxu0
          %v2540 = vadd.f32 0.0, %v2539
          %v2541 = vpop.f32.mrb[0].mxu0
          %v2542 = vpop.f32.mrb[0].mxu0
          %v2543 = vadd.f32 0.0, %v2542
          %v2544 = vpop.f32.mrb[0].mxu0
          %2545 = vmatprep.mubr.bf16.mxu0 %v2187
          %2546 = vmatmul.mubr.bf16.gmra.mrb[0].mxu0 %v2186
          %v2547 = vpop.f32.mrb[0].mxu0
          %v2548 = vadd.f32 0.0, %v2547
          %v2549 = vpop.f32.mrb[0].mxu0
          %v2550 = vpop.f32.mrb[0].mxu0
          %v2551 = vadd.f32 0.0, %v2550
          %v2552 = vpop.f32.mrb[0].mxu0
          %2553 = vmatprep.mubr.bf16.mxu0 %v2190
          %2554 = vmatmul.mubr.bf16.gmra.mrb[0].mxu0 %v2189
          %v2555 = vpop.f32.mrb[0].mxu0
          %v2556 = vadd.f32 0.0, %v2555
          %v2557 = vpop.f32.mrb[0].mxu0
          %v2558 = vpop.f32.mrb[0].mxu0
          %v2559 = vadd.f32 0.0, %v2558
          %v2560 = vpop.f32.mrb[0].mxu0
          %2561 = vmatprep.mubr.bf16.mxu0 %v2193
          %2562 = vmatmul.mubr.bf16.gmra.mrb[0].mxu0 %v2192
          %v2563 = vpop.f32.mrb[0].mxu0
          %v2564 = vadd.f32 0.0, %v2563
          %v2565 = vpop.f32.mrb[0].mxu0
          %v2566 = vpop.f32.mrb[0].mxu0
          %v2567 = vadd.f32 0.0, %v2566
          %v2568 = vpop.f32.mrb[0].mxu0
          %2569 = vmatprep.mubr.bf16.mxu0 %v2196
          %2570 = vmatmul.mubr.bf16.gmra.mrb[0].mxu0 %v2195
          %v2571 = vpop.f32.mrb[0].mxu0
          %v2572 = vadd.f32 0.0, %v2571
          %v2573 = vpop.f32.mrb[0].mxu0
          %v2574 = vpop.f32.mrb[0].mxu0
          %v2575 = vadd.f32 0.0, %v2574
          %v2576 = vpop.f32.mrb[0].mxu0
          %2577 = vmatprep.mubr.bf16.mxu0 %v2199
          %2578 = vmatmul.mubr.bf16.gmra.mrb[0].mxu0 %v2198
          %v2579 = vpop.f32.mrb[0].mxu0
          %v2580 = vadd.f32 0.0, %v2579
          %v2581 = vpop.f32.mrb[0].mxu0
          %v2582 = vpop.f32.mrb[0].mxu0
          %v2583 = vadd.f32 0.0, %v2582
          %v2584 = vpop.f32.mrb[0].mxu0
          %2585 = vdwg.mxu0
          %2586 = vmatprep.subr.bf16.mxu0 0
          %2587 = vmatpush1.bf16.msra.mxu0 %v2393
          %2588 = vmatprep.subr.bf16.mxu0 0
          %2589 = vmatpush1.bf16.msra.mxu0 %v2394
          %2590 = vmatprep.subr.bf16.mxu0 0
          %2591 = vmatpush1.bf16.msra.mxu0 %v2395
          %2592 = vmatprep.subr.bf16.mxu0 0
          %2593 = vmatpush1.bf16.msra.mxu0 %v2396
          %2594 = vmatprep.subr.bf16.mxu0 0
          %2595 = vmatpush1.bf16.msra.mxu0 %v2397
          %2596 = vmatprep.subr.bf16.mxu0 0
          %2597 = vmatpush1.bf16.msra.mxu0 %v2398
          %2598 = vmatprep.subr.bf16.mxu0 0
          %2599 = vmatpush1.bf16.msra.mxu0 %v2399
          %2600 = vmatprep.subr.bf16.mxu0 0
          %2601 = vmatpush1.bf16.msra.mxu0 %v2400
          %2602 = vmatprep.subr.bf16.mxu0 0
          %2603 = vmatpush1.bf16.msra.mxu0 0
          %2604 = vmatprep.subr.bf16.mxu0 0
          %2605 = vmatpush1.bf16.msra.mxu0 0
          %2606 = vmatprep.subr.bf16.mxu0 0
          %2607 = vmatpush1.bf16.msra.mxu0 0
          %2608 = vmatprep.subr.bf16.mxu0 0
          %2609 = vmatpush1.bf16.msra.mxu0 0
          %2610 = vmatprep.subr.bf16.mxu0 0
          %2611 = vmatpush1.bf16.msra.mxu0 0
          %2612 = vmatprep.subr.bf16.mxu0 0
          %2613 = vmatpush1.bf16.msra.mxu0 0
          %2614 = vmatprep.subr.bf16.mxu0 0
          %2615 = vmatpush1.bf16.msra.mxu0 0
          %2616 = vmatprep.subr.bf16.mxu0 0
          %2617 = vmatpush1.bf16.msra.mxu0 0
          %2618 = vmatprep.mubr.bf16.mxu0 0
          %2619 = vmatmul.mubr.bf16.gmra.mrb[0].mxu0 %v2155
          %v2620 = vpop.f32.mrb[0].mxu0
          %v2621 = vadd.f32 %v2460, %v2620
          %v2622 = vpop.f32.mrb[0].mxu0
          %v2623 = vpop.f32.mrb[0].mxu0
          %v2624 = vadd.f32 %v2463, %v2623
          %v2625 = vpop.f32.mrb[0].mxu0
          %2626 = vmatprep.mubr.bf16.mxu0 0
          %2627 = vmatmul.mubr.bf16.gmra.mrb[0].mxu0 %v2158
          %v2628 = vpop.f32.mrb[0].mxu0
          %v2629 = vadd.f32 %v2468, %v2628
          %v2630 = vpop.f32.mrb[0].mxu0
          %v2631 = vpop.f32.mrb[0].mxu0
          %v2632 = vadd.f32 %v2471, %v2631
          %v2633 = vpop.f32.mrb[0].mxu0
          %2634 = vmatprep.mubr.bf16.mxu0 0
          %2635 = vmatmul.mubr.bf16.gmra.mrb[0].mxu0 %v2161
          %v2636 = vpop.f32.mrb[0].mxu0
          %v2637 = vadd.f32 %v2476, %v2636
          %v2638 = vpop.f32.mrb[0].mxu0
          %v2639 = vpop.f32.mrb[0].mxu0
          %v2640 = vadd.f32 %v2479, %v2639
          %v2641 = vpop.f32.mrb[0].mxu0
          %2642 = vmatprep.mubr.bf16.mxu0 0
          %2643 = vmatmul.mubr.bf16.gmra.mrb[0].mxu0 %v2164
          %v2644 = vpop.f32.mrb[0].mxu0
          %v2645 = vadd.f32 %v2484, %v2644
          %v2646 = vpop.f32.mrb[0].mxu0
          %v2647 = vpop.f32.mrb[0].mxu0
          %v2648 = vadd.f32 %v2487, %v2647
          %v2649 = vpop.f32.mrb[0].mxu0
          %2650 = vmatprep.mubr.bf16.mxu0 0
          %2651 = vmatmul.mubr.bf16.gmra.mrb[0].mxu0 %v2167
          %v2652 = vpop.f32.mrb[0].mxu0
          %v2653 = vadd.f32 %v2492, %v2652
          %v2654 = vpop.f32.mrb[0].mxu0
          %v2655 = vpop.f32.mrb[0].mxu0
          %v2656 = vadd.f32 %v2495, %v2655
          %v2657 = vpop.f32.mrb[0].mxu0
          %2658 = vmatprep.mubr.bf16.mxu0 0
          %2659 = vmatmul.mubr.bf16.gmra.mrb[0].mxu0 %v2170
          %v2660 = vpop.f32.mrb[0].mxu0
          %v2661 = vadd.f32 %v2500, %v2660
          %v2662 = vpop.f32.mrb[0].mxu0
          %v2663 = vpop.f32.mrb[0].mxu0
          %v2664 = vadd.f32 %v2503, %v2663
          %v2665 = vpop.f32.mrb[0].mxu0
          %2666 = vmatprep.mubr.bf16.mxu0 0
          %2667 = vmatmul.mubr.bf16.gmra.mrb[0].mxu0 %v2173
          %v2668 = vpop.f32.mrb[0].mxu0
          %v2669 = vadd.f32 %v2508, %v2668
          %v2670 = vpop.f32.mrb[0].mxu0
          %v2671 = vpop.f32.mrb[0].mxu0
          %v2672 = vadd.f32 %v2511, %v2671
          %v2673 = vpop.f32.mrb[0].mxu0
          %2674 = vmatprep.mubr.bf16.mxu0 0
          %2675 = vmatmul.mubr.bf16.gmra.mrb[0].mxu0 %v2176
          %v2676 = vpop.f32.mrb[0].mxu0
          %v2677 = vadd.f32 %v2516, %v2676
          %v2678 = vpop.f32.mrb[0].mxu0
          %v2679 = vpop.f32.mrb[0].mxu0
          %v2680 = vadd.f32 %v2519, %v2679
          %v2681 = vpop.f32.mrb[0].mxu0
          %2682 = vmatprep.mubr.bf16.mxu0 0
          %2683 = vmatmul.mubr.bf16.gmra.mrb[0].mxu0 %v2179
          %v2684 = vpop.f32.mrb[0].mxu0
          %v2685 = vadd.f32 %v2524, %v2684
          %v2686 = vpop.f32.mrb[0].mxu0
          %v2687 = vpop.f32.mrb[0].mxu0
          %v2688 = vadd.f32 %v2527, %v2687
          %v2689 = vpop.f32.mrb[0].mxu0
          %2690 = vmatprep.mubr.bf16.mxu0 0
          %2691 = vmatmul.mubr.bf16.gmra.mrb[0].mxu0 %v2182
          %v2692 = vpop.f32.mrb[0].mxu0
          %v2693 = vadd.f32 %v2532, %v2692
          %v2694 = vpop.f32.mrb[0].mxu0
          %v2695 = vpop.f32.mrb[0].mxu0
          %v2696 = vadd.f32 %v2535, %v2695
          %v2697 = vpop.f32.mrb[0].mxu0
          %2698 = vmatprep.mubr.bf16.mxu0 0
          %2699 = vmatmul.mubr.bf16.gmra.mrb[0].mxu0 %v2185
          %v2700 = vpop.f32.mrb[0].mxu0
          %v2701 = vadd.f32 %v2540, %v2700
          %v2702 = vpop.f32.mrb[0].mxu0
          %v2703 = vpop.f32.mrb[0].mxu0
          %v2704 = vadd.f32 %v2543, %v2703
          %v2705 = vpop.f32.mrb[0].mxu0
          %2706 = vmatprep.mubr.bf16.mxu0 0
          %2707 = vmatmul.mubr.bf16.gmra.mrb[0].mxu0 %v2188
          %v2708 = vpop.f32.mrb[0].mxu0
          %v2709 = vadd.f32 %v2548, %v2708
          %v2710 = vpop.f32.mrb[0].mxu0
          %v2711 = vpop.f32.mrb[0].mxu0
          %v2712 = vadd.f32 %v2551, %v2711
          %v2713 = vpop.f32.mrb[0].mxu0
          %2714 = vmatprep.mubr.bf16.mxu0 0
          %2715 = vmatmul.mubr.bf16.gmra.mrb[0].mxu0 %v2191
          %v2716 = vpop.f32.mrb[0].mxu0
          %v2717 = vadd.f32 %v2556, %v2716
          %v2718 = vpop.f32.mrb[0].mxu0
          %v2719 = vpop.f32.mrb[0].mxu0
          %v2720 = vadd.f32 %v2559, %v2719
          %v2721 = vpop.f32.mrb[0].mxu0
          %2722 = vmatprep.mubr.bf16.mxu0 0
          %2723 = vmatmul.mubr.bf16.gmra.mrb[0].mxu0 %v2194
          %v2724 = vpop.f32.mrb[0].mxu0
          %v2725 = vadd.f32 %v2564, %v2724
          %v2726 = vpop.f32.mrb[0].mxu0
          %v2727 = vpop.f32.mrb[0].mxu0
          %v2728 = vadd.f32 %v2567, %v2727
          %v2729 = vpop.f32.mrb[0].mxu0
          %2730 = vmatprep.mubr.bf16.mxu0 0
          %2731 = vmatmul.mubr.bf16.gmra.mrb[0].mxu0 %v2197
          %v2732 = vpop.f32.mrb[0].mxu0
          %v2733 = vadd.f32 %v2572, %v2732
          %v2734 = vpop.f32.mrb[0].mxu0
          %v2735 = vpop.f32.mrb[0].mxu0
          %v2736 = vadd.f32 %v2575, %v2735
          %v2737 = vpop.f32.mrb[0].mxu0
          %2738 = vmatprep.mubr.bf16.mxu0 0
          %2739 = vmatmul.mubr.bf16.gmra.mrb[0].mxu0 %v2200
          %v2740 = vpop.f32.mrb[0].mxu0
          %v2741 = vadd.f32 %v2580, %v2740
          %v2742 = vpop.f32.mrb[0].mxu0
          %v2743 = vpop.f32.mrb[0].mxu0
          %v2744 = vadd.f32 %v2583, %v2743
          %v2745 = vpop.f32.mrb[0].mxu0
          %2746 = vdwg.mxu0
          %v2747 = vadd.f32 %v2201, %v2621
          %v2748 = vadd.f32 %v2202, %v2624
          %v2749 = vadd.f32 %v2203, %v2629
          %v2750 = vadd.f32 %v2204, %v2632
          %v2751 = vadd.f32 %v2205, %v2637
          %v2752 = vadd.f32 %v2206, %v2640
          %v2753 = vadd.f32 %v2207, %v2645
          %v2754 = vadd.f32 %v2208, %v2648
          %v2755 = vadd.f32 %v2209, %v2653
          %v2756 = vadd.f32 %v2210, %v2656
          %v2757 = vadd.f32 %v2211, %v2661
          %v2758 = vadd.f32 %v2212, %v2664
          %v2759 = vadd.f32 %v2213, %v2669
          %v2760 = vadd.f32 %v2214, %v2672
          %v2761 = vadd.f32 %v2215, %v2677
          %v2762 = vadd.f32 %v2216, %v2680
          %v2763 = vadd.f32 %v2217, %v2685
          %v2764 = vadd.f32 %v2218, %v2688
          %v2765 = vadd.f32 %v2219, %v2693
          %v2766 = vadd.f32 %v2220, %v2696
          %v2767 = vadd.f32 %v2221, %v2701
          %v2768 = vadd.f32 %v2222, %v2704
          %v2769 = vadd.f32 %v2223, %v2709
          %v2770 = vadd.f32 %v2224, %v2712
          %v2771 = vadd.f32 %v2225, %v2717
          %v2772 = vadd.f32 %v2226, %v2720
          %v2773 = vadd.f32 %v2227, %v2725
          %v2774 = vadd.f32 %v2228, %v2728
          %v2775 = vadd.f32 %v2229, %v2733
          %v2776 = vadd.f32 %v2230, %v2736
          %v2777 = vadd.f32 %v2231, %v2741
          %v2778 = vadd.f32 %v2232, %v2744
          %2779 = vst [vmem:[#allocation2] sm:$0xff] %v2747
          %2780 = vst [vmem:[#allocation2 + $0x8] sm:$0xff] %v2748
          %2781 = vst [vmem:[#allocation2 + $0x10] sm:$0xff] %v2749
          %2782 = vst [vmem:[#allocation2 + $0x18] sm:$0xff] %v2750
          %2783 = vst [vmem:[#allocation2 + $0x20] sm:$0xff] %v2751
          %2784 = vst [vmem:[#allocation2 + $0x28] sm:$0xff] %v2752
          %2785 = vst [vmem:[#allocation2 + $0x30] sm:$0xff] %v2753
          %2786 = vst [vmem:[#allocation2 + $0x38] sm:$0xff] %v2754
          %2787 = vst [vmem:[#allocation2 + $0x40] sm:$0xff] %v2755
          %2788 = vst [vmem:[#allocation2 + $0x48] sm:$0xff] %v2756
          %2789 = vst [vmem:[#allocation2 + $0x50] sm:$0xff] %v2757
          %2790 = vst [vmem:[#allocation2 + $0x58] sm:$0xff] %v2758
          %2791 = vst [vmem:[#allocation2 + $0x60] sm:$0xff] %v2759
          %2792 = vst [vmem:[#allocation2 + $0x68] sm:$0xff] %v2760
          %2793 = vst [vmem:[#allocation2 + $0x70] sm:$0xff] %v2761
          %2794 = vst [vmem:[#allocation2 + $0x78] sm:$0xff] %v2762
          %2795 = vst [vmem:[#allocation2 + $0x80] sm:$0xff] %v2763
          %2796 = vst [vmem:[#allocation2 + $0x88] sm:$0xff] %v2764
          %2797 = vst [vmem:[#allocation2 + $0x90] sm:$0xff] %v2765
          %2798 = vst [vmem:[#allocation2 + $0x98] sm:$0xff] %v2766
          %2799 = vst [vmem:[#allocation2 + $0xa0] sm:$0xff] %v2767
          %2800 = vst [vmem:[#allocation2 + $0xa8] sm:$0xff] %v2768
          %2801 = vst [vmem:[#allocation2 + $0xb0] sm:$0xff] %v2769
          %2802 = vst [vmem:[#allocation2 + $0xb8] sm:$0xff] %v2770
          %2803 = vst [vmem:[#allocation2 + $0xc0] sm:$0xff] %v2771
          %2804 = vst [vmem:[#allocation2 + $0xc8] sm:$0xff] %v2772
          %2805 = vst [vmem:[#allocation2 + $0xd0] sm:$0xff] %v2773
          %2806 = vst [vmem:[#allocation2 + $0xd8] sm:$0xff] %v2774
          %2807 = vst [vmem:[#allocation2 + $0xe0] sm:$0xff] %v2775
          %2808 = vst [vmem:[#allocation2 + $0xe8] sm:$0xff] %v2776
          %2809 = vst [vmem:[#allocation2 + $0xf0] sm:$0xff] %v2777
          %2810 = vst [vmem:[#allocation2 + $0xf8] sm:$0xff] %v2778
          %s2811 = scalar_lea.vmem [#allocation3], 144
          %v2812 = vld [vmem:[%s2811] sm:$0xff]
          %v2813 = vld [vmem:[%s2811 + $0x8] sm:$0xff]
          %v2814 = vld [vmem:[%s2811 + $0x10] sm:$0xff]
          %v2815 = vld [vmem:[%s2811 + $0x18] sm:$0xff]
          %v2816 = vld [vmem:[%s2811 + $0x20] sm:$0xff]
          %v2817 = vld [vmem:[%s2811 + $0x28] sm:$0xff]
          %v2818 = vld [vmem:[%s2811 + $0x30] sm:$0xff]
          %v2819 = vld [vmem:[%s2811 + $0x38] sm:$0xff]
          %v2820 = vld [vmem:[%s2811 + $0x40] sm:$0xff]
          %v2821 = vld [vmem:[%s2811 + $0x48] sm:$0xff]
          %v2822 = vld [vmem:[%s2811 + $0x50] sm:$0xff]
          %v2823 = vld [vmem:[%s2811 + $0x58] sm:$0xff]
          %v2824 = vld [vmem:[%s2811 + $0x60] sm:$0xff]
          %v2825 = vld [vmem:[%s2811 + $0x68] sm:$0xff]
          %v2826 = vld [vmem:[%s2811 + $0x70] sm:$0xff]
          %v2827 = vld [vmem:[%s2811 + $0x78] sm:$0xff]
          %v2828 = vld [vmem:[%s2811 + $0x80] sm:$0xff]
          %v2829 = vld [vmem:[%s2811 + $0x88] sm:$0xff]
          %v2830 = vld [vmem:[%s2811 + $0x90] sm:$0xff]
          %v2831 = vld [vmem:[%s2811 + $0x98] sm:$0xff]
          %v2832 = vld [vmem:[%s2811 + $0xa0] sm:$0xff]
          %v2833 = vld [vmem:[%s2811 + $0xa8] sm:$0xff]
          %v2834 = vld [vmem:[%s2811 + $0xb0] sm:$0xff]
          %v2835 = vld [vmem:[%s2811 + $0xb8] sm:$0xff]
          %v2836 = vld [vmem:[%s2811 + $0xc0] sm:$0xff]
          %v2837 = vld [vmem:[%s2811 + $0xc8] sm:$0xff]
          %v2838 = vld [vmem:[%s2811 + $0xd0] sm:$0xff]
          %v2839 = vld [vmem:[%s2811 + $0xd8] sm:$0xff]
          %v2840 = vld [vmem:[%s2811 + $0xe0] sm:$0xff]
          %v2841 = vld [vmem:[%s2811 + $0xe8] sm:$0xff]
          %v2842 = vld [vmem:[%s2811 + $0xf0] sm:$0xff]
          %v2843 = vld [vmem:[%s2811 + $0xf8] sm:$0xff]
          %v2844 = vld [vmem:[%s2811 + $0x100] sm:$0xff]
          %v2845 = vld [vmem:[%s2811 + $0x108] sm:$0xff]
          %v2846 = vld [vmem:[%s2811 + $0x110] sm:$0xff]
          %v2847 = vld [vmem:[%s2811 + $0x118] sm:$0xff]
          %v2848 = vld [vmem:[%s2811 + $0x120] sm:$0xff]
          %v2849 = vld [vmem:[%s2811 + $0x128] sm:$0xff]
          %v2850 = vld [vmem:[%s2811 + $0x130] sm:$0xff]
          %v2851 = vld [vmem:[%s2811 + $0x138] sm:$0xff]
          %v2852 = vld [vmem:[%s2811 + $0x140] sm:$0xff]
          %v2853 = vld [vmem:[%s2811 + $0x148] sm:$0xff]
          %v2854 = vld [vmem:[%s2811 + $0x150] sm:$0xff]
          %v2855 = vld [vmem:[%s2811 + $0x158] sm:$0xff]
          %v2856 = vld [vmem:[%s2811 + $0x160] sm:$0xff]
          %v2857 = vld [vmem:[%s2811 + $0x168] sm:$0xff]
          %v2858 = vld [vmem:[%s2811 + $0x170] sm:$0xff]
          %v2859 = vld [vmem:[%s2811 + $0x178] sm:$0xff]
          %v2860 = vld [vmem:[#allocation2] sm:$0xff]
          %v2861 = vld [vmem:[#allocation2 + $0x8] sm:$0xff]
          %v2862 = vld [vmem:[#allocation2 + $0x10] sm:$0xff]
          %v2863 = vld [vmem:[#allocation2 + $0x18] sm:$0xff]
          %v2864 = vld [vmem:[#allocation2 + $0x20] sm:$0xff]
          %v2865 = vld [vmem:[#allocation2 + $0x28] sm:$0xff]
          %v2866 = vld [vmem:[#allocation2 + $0x30] sm:$0xff]
          %v2867 = vld [vmem:[#allocation2 + $0x38] sm:$0xff]
          %v2868 = vld [vmem:[#allocation2 + $0x40] sm:$0xff]
          %v2869 = vld [vmem:[#allocation2 + $0x48] sm:$0xff]
          %v2870 = vld [vmem:[#allocation2 + $0x50] sm:$0xff]
          %v2871 = vld [vmem:[#allocation2 + $0x58] sm:$0xff]
          %v2872 = vld [vmem:[#allocation2 + $0x60] sm:$0xff]
          %v2873 = vld [vmem:[#allocation2 + $0x68] sm:$0xff]
          %v2874 = vld [vmem:[#allocation2 + $0x70] sm:$0xff]
          %v2875 = vld [vmem:[#allocation2 + $0x78] sm:$0xff]
          %v2876 = vld [vmem:[#allocation2 + $0x80] sm:$0xff]
          %v2877 = vld [vmem:[#allocation2 + $0x88] sm:$0xff]
          %v2878 = vld [vmem:[#allocation2 + $0x90] sm:$0xff]
          %v2879 = vld [vmem:[#allocation2 + $0x98] sm:$0xff]
          %v2880 = vld [vmem:[#allocation2 + $0xa0] sm:$0xff]
          %v2881 = vld [vmem:[#allocation2 + $0xa8] sm:$0xff]
          %v2882 = vld [vmem:[#allocation2 + $0xb0] sm:$0xff]
          %v2883 = vld [vmem:[#allocation2 + $0xb8] sm:$0xff]
          %v2884 = vld [vmem:[#allocation2 + $0xc0] sm:$0xff]
          %v2885 = vld [vmem:[#allocation2 + $0xc8] sm:$0xff]
          %v2886 = vld [vmem:[#allocation2 + $0xd0] sm:$0xff]
          %v2887 = vld [vmem:[#allocation2 + $0xd8] sm:$0xff]
          %v2888 = vld [vmem:[#allocation2 + $0xe0] sm:$0xff]
          %v2889 = vld [vmem:[#allocation2 + $0xe8] sm:$0xff]
          %v2890 = vld [vmem:[#allocation2 + $0xf0] sm:$0xff]
          %v2891 = vld [vmem:[#allocation2 + $0xf8] sm:$0xff]
          %s2892 = scalar_lea.vmem %s291, 192 [#allocation4]
          %v2893 = vld [vmem:[%s2892] sm:$0xf]
          %v2894 = vld [vmem:[%s2892 + $0x4] sm:$0xf]
          %v2895 = vld [vmem:[%s2892 + $0x8] sm:$0xf]
          %v2896 = vld [vmem:[%s2892 + $0xc] sm:$0xf]
          %v2897 = vld [vmem:[%s2892 + $0x10] sm:$0xf]
          %v2898 = vld [vmem:[%s2892 + $0x14] sm:$0xf]
          %v2899 = vld [vmem:[%s2892 + $0x18] sm:$0xf]
          %v2900 = vld [vmem:[%s2892 + $0x1c] sm:$0xf]
          %v2901 = vld [vmem:[%s2892 + $0x20] sm:$0xf]
          %v2902 = vld [vmem:[%s2892 + $0x24] sm:$0xf]
          %v2903 = vld [vmem:[%s2892 + $0x28] sm:$0xf]
          %v2904 = vld [vmem:[%s2892 + $0x2c] sm:$0xf]
          %v2905 = vld [vmem:[%s2892 + $0x30] sm:$0xf]
          %v2906 = vld [vmem:[%s2892 + $0x34] sm:$0xf]
          %v2907 = vld [vmem:[%s2892 + $0x38] sm:$0xf]
          %v2908 = vld [vmem:[%s2892 + $0x3c] sm:$0xf]
          %v2909 = vld [vmem:[%s2892 + $0x40] sm:$0xf]
          %v2910 = vld [vmem:[%s2892 + $0x44] sm:$0xf]
          %v2911 = vld [vmem:[%s2892 + $0x48] sm:$0xf]
          %v2912 = vld [vmem:[%s2892 + $0x4c] sm:$0xf]
          %v2913 = vld [vmem:[%s2892 + $0x50] sm:$0xf]
          %v2914 = vld [vmem:[%s2892 + $0x54] sm:$0xf]
          %v2915 = vld [vmem:[%s2892 + $0x58] sm:$0xf]
          %v2916 = vld [vmem:[%s2892 + $0x5c] sm:$0xf]
          %v2917 = vld [vmem:[%s2892 + $0x60] sm:$0xf]
          %v2918 = vld [vmem:[%s2892 + $0x64] sm:$0xf]
          %v2919 = vld [vmem:[%s2892 + $0x68] sm:$0xf]
          %v2920 = vld [vmem:[%s2892 + $0x6c] sm:$0xf]
          %v2921 = vld [vmem:[%s2892 + $0x70] sm:$0xf]
          %v2922 = vld [vmem:[%s2892 + $0x74] sm:$0xf]
          %v2923 = vld [vmem:[%s2892 + $0x78] sm:$0xf]
          %v2924 = vld [vmem:[%s2892 + $0x7c] sm:$0xf]
          %v2925 = vld [vmem:[%s2892 + $0x80] sm:$0xf]
          %v2926 = vld [vmem:[%s2892 + $0x84] sm:$0xf]
          %v2927 = vld [vmem:[%s2892 + $0x88] sm:$0xf]
          %v2928 = vld [vmem:[%s2892 + $0x8c] sm:$0xf]
          %v2929 = vld [vmem:[%s2892 + $0x90] sm:$0xf]
          %v2930 = vld [vmem:[%s2892 + $0x94] sm:$0xf]
          %v2931 = vld [vmem:[%s2892 + $0x98] sm:$0xf]
          %v2932 = vld [vmem:[%s2892 + $0x9c] sm:$0xf]
          %v2933 = vld [vmem:[%s2892 + $0xa0] sm:$0xf]
          %v2934 = vld [vmem:[%s2892 + $0xa4] sm:$0xf]
          %v2935 = vld [vmem:[%s2892 + $0xa8] sm:$0xf]
          %v2936 = vld [vmem:[%s2892 + $0xac] sm:$0xf]
          %v2937 = vld [vmem:[%s2892 + $0xb0] sm:$0xf]
          %v2938 = vld [vmem:[%s2892 + $0xb4] sm:$0xf]
          %v2939 = vld [vmem:[%s2892 + $0xb8] sm:$0xf]
          %v2940 = vld [vmem:[%s2892 + $0xbc] sm:$0xf]
          %v2989 = vunpack.c.l.b16 %v2893
          %v2990 = vunpack.c.l.b16 %v2894
          %v2991 = vunpack.c.l.b16 %v2895
          %v2992 = vunpack.c.l.b16 %v2896
          %v2993 = vunpack.c.l.b16 %v2897
          %v2994 = vunpack.c.l.b16 %v2898
          %v2995 = vunpack.c.l.b16 %v2899
          %v2996 = vunpack.c.l.b16 %v2900
          %v2997 = vunpack.c.l.b16 %v2901
          %v2998 = vunpack.c.l.b16 %v2902
          %v2999 = vunpack.c.l.b16 %v2903
          %v3000 = vunpack.c.l.b16 %v2904
          %v3001 = vunpack.c.l.b16 %v2905
          %v3002 = vunpack.c.l.b16 %v2906
          %v3003 = vunpack.c.l.b16 %v2907
          %v3004 = vunpack.c.l.b16 %v2908
          %v3005 = vunpack.c.l.b16 %v2909
          %v3006 = vunpack.c.l.b16 %v2910
          %v3007 = vunpack.c.l.b16 %v2911
          %v3008 = vunpack.c.l.b16 %v2912
          %v3009 = vunpack.c.l.b16 %v2913
          %v3010 = vunpack.c.l.b16 %v2914
          %v3011 = vunpack.c.l.b16 %v2915
          %v3012 = vunpack.c.l.b16 %v2916
          %v3013 = vunpack.c.l.b16 %v2917
          %v3014 = vunpack.c.l.b16 %v2918
          %v3015 = vunpack.c.l.b16 %v2919
          %v3016 = vunpack.c.l.b16 %v2920
          %v3017 = vunpack.c.l.b16 %v2921
          %v3018 = vunpack.c.l.b16 %v2922
          %v3019 = vunpack.c.l.b16 %v2923
          %v3020 = vunpack.c.l.b16 %v2924
          %v3021 = vunpack.c.l.b16 %v2925
          %v3022 = vunpack.c.l.b16 %v2926
          %v3023 = vunpack.c.l.b16 %v2927
          %v3024 = vunpack.c.l.b16 %v2928
          %v3025 = vunpack.c.l.b16 %v2929
          %v3026 = vunpack.c.l.b16 %v2930
          %v3027 = vunpack.c.l.b16 %v2931
          %v3028 = vunpack.c.l.b16 %v2932
          %v3029 = vunpack.c.l.b16 %v2933
          %v3030 = vunpack.c.l.b16 %v2934
          %v3031 = vunpack.c.l.b16 %v2935
          %v3032 = vunpack.c.l.b16 %v2936
          %v3033 = vunpack.c.l.b16 %v2937
          %v3034 = vunpack.c.l.b16 %v2938
          %v3035 = vunpack.c.l.b16 %v2939
          %v3036 = vunpack.c.l.b16 %v2940
          %v3037 = vpack.c.b16 %v2990, %v2989
          %v3038 = vpack.c.b16 %v2992, %v2991
          %v3039 = vpack.c.b16 %v2994, %v2993
          %v3040 = vpack.c.b16 %v2996, %v2995
          %v3041 = vpack.c.b16 %v2998, %v2997
          %v3042 = vpack.c.b16 %v3000, %v2999
          %v3043 = vpack.c.b16 %v3002, %v3001
          %v3044 = vpack.c.b16 %v3004, %v3003
          %v3045 = vpack.c.b16 %v3006, %v3005
          %v3046 = vpack.c.b16 %v3008, %v3007
          %v3047 = vpack.c.b16 %v3010, %v3009
          %v3048 = vpack.c.b16 %v3012, %v3011
          %v3049 = vpack.c.b16 %v3014, %v3013
          %v3050 = vpack.c.b16 %v3016, %v3015
          %v3051 = vpack.c.b16 %v3018, %v3017
          %v3052 = vpack.c.b16 %v3020, %v3019
          %v3053 = vpack.c.b16 %v3022, %v3021
          %v3054 = vpack.c.b16 %v3024, %v3023
          %v3055 = vpack.c.b16 %v3026, %v3025
          %v3056 = vpack.c.b16 %v3028, %v3027
          %v3057 = vpack.c.b16 %v3030, %v3029
          %v3058 = vpack.c.b16 %v3032, %v3031
          %v3059 = vpack.c.b16 %v3034, %v3033
          %v3060 = vpack.c.b16 %v3036, %v3035
          %3085 = vmatprep.subr.bf16.mxu0 0
          %3086 = vmatpush1.bf16.msra.mxu0 %v3037
          %3087 = vmatprep.subr.bf16.mxu0 0
          %3088 = vmatpush1.bf16.msra.mxu0 %v3038
          %3089 = vmatprep.subr.bf16.mxu0 0
          %3090 = vmatpush1.bf16.msra.mxu0 %v3039
          %3091 = vmatprep.subr.bf16.mxu0 0
          %3092 = vmatpush1.bf16.msra.mxu0 %v3040
          %3093 = vmatprep.subr.bf16.mxu0 0
          %3094 = vmatpush1.bf16.msra.mxu0 %v3041
          %3095 = vmatprep.subr.bf16.mxu0 0
          %3096 = vmatpush1.bf16.msra.mxu0 %v3042
          %3097 = vmatprep.subr.bf16.mxu0 0
          %3098 = vmatpush1.bf16.msra.mxu0 %v3043
          %3099 = vmatprep.subr.bf16.mxu0 0
          %3100 = vmatpush1.bf16.msra.mxu0 %v3044
          %3101 = vmatprep.subr.bf16.mxu0 0
          %3102 = vmatpush1.bf16.msra.mxu0 %v3045
          %3103 = vmatprep.subr.bf16.mxu0 0
          %3104 = vmatpush1.bf16.msra.mxu0 %v3046
          %3105 = vmatprep.subr.bf16.mxu0 0
          %3106 = vmatpush1.bf16.msra.mxu0 %v3047
          %3107 = vmatprep.subr.bf16.mxu0 0
          %3108 = vmatpush1.bf16.msra.mxu0 %v3048
          %3109 = vmatprep.subr.bf16.mxu0 0
          %3110 = vmatpush1.bf16.msra.mxu0 %v3049
          %3111 = vmatprep.subr.bf16.mxu0 0
          %3112 = vmatpush1.bf16.msra.mxu0 %v3050
          %3113 = vmatprep.subr.bf16.mxu0 0
          %3114 = vmatpush1.bf16.msra.mxu0 %v3051
          %3115 = vmatprep.subr.bf16.mxu0 0
          %3116 = vmatpush1.bf16.msra.mxu0 %v3052
          %3117 = vmatprep.mubr.bf16.mxu0 %v2813
          %3118 = vmatmul.mubr.bf16.gmra.mrb[0].mxu0 %v2812
          %v3119 = vpop.f32.mrb[0].mxu0
          %v3120 = vadd.f32 0.0, %v3119
          %v3121 = vpop.f32.mrb[0].mxu0
          %v3122 = vpop.f32.mrb[0].mxu0
          %v3123 = vadd.f32 0.0, %v3122
          %v3124 = vpop.f32.mrb[0].mxu0
          %3125 = vmatprep.mubr.bf16.mxu0 %v2816
          %3126 = vmatmul.mubr.bf16.gmra.mrb[0].mxu0 %v2815
          %v3127 = vpop.f32.mrb[0].mxu0
          %v3128 = vadd.f32 0.0, %v3127
          %v3129 = vpop.f32.mrb[0].mxu0
          %v3130 = vpop.f32.mrb[0].mxu0
          %v3131 = vadd.f32 0.0, %v3130
          %v3132 = vpop.f32.mrb[0].mxu0
          %3133 = vmatprep.mubr.bf16.mxu0 %v2819
          %3134 = vmatmul.mubr.bf16.gmra.mrb[0].mxu0 %v2818
          %v3135 = vpop.f32.mrb[0].mxu0
          %v3136 = vadd.f32 0.0, %v3135
          %v3137 = vpop.f32.mrb[0].mxu0
          %v3138 = vpop.f32.mrb[0].mxu0
          %v3139 = vadd.f32 0.0, %v3138
          %v3140 = vpop.f32.mrb[0].mxu0
          %3141 = vmatprep.mubr.bf16.mxu0 %v2822
          %3142 = vmatmul.mubr.bf16.gmra.mrb[0].mxu0 %v2821
          %v3143 = vpop.f32.mrb[0].mxu0
          %v3144 = vadd.f32 0.0, %v3143
          %v3145 = vpop.f32.mrb[0].mxu0
          %v3146 = vpop.f32.mrb[0].mxu0
          %v3147 = vadd.f32 0.0, %v3146
          %v3148 = vpop.f32.mrb[0].mxu0
          %3149 = vmatprep.mubr.bf16.mxu0 %v2825
          %3150 = vmatmul.mubr.bf16.gmra.mrb[0].mxu0 %v2824
          %v3151 = vpop.f32.mrb[0].mxu0
          %v3152 = vadd.f32 0.0, %v3151
          %v3153 = vpop.f32.mrb[0].mxu0
          %v3154 = vpop.f32.mrb[0].mxu0
          %v3155 = vadd.f32 0.0, %v3154
          %v3156 = vpop.f32.mrb[0].mxu0
          %3157 = vmatprep.mubr.bf16.mxu0 %v2828
          %3158 = vmatmul.mubr.bf16.gmra.mrb[0].mxu0 %v2827
          %v3159 = vpop.f32.mrb[0].mxu0
          %v3160 = vadd.f32 0.0, %v3159
          %v3161 = vpop.f32.mrb[0].mxu0
          %v3162 = vpop.f32.mrb[0].mxu0
          %v3163 = vadd.f32 0.0, %v3162
          %v3164 = vpop.f32.mrb[0].mxu0
          %3165 = vmatprep.mubr.bf16.mxu0 %v2831
          %3166 = vmatmul.mubr.bf16.gmra.mrb[0].mxu0 %v2830
          %v3167 = vpop.f32.mrb[0].mxu0
          %v3168 = vadd.f32 0.0, %v3167
          %v3169 = vpop.f32.mrb[0].mxu0
          %v3170 = vpop.f32.mrb[0].mxu0
          %v3171 = vadd.f32 0.0, %v3170
          %v3172 = vpop.f32.mrb[0].mxu0
          %3173 = vmatprep.mubr.bf16.mxu0 %v2834
          %3174 = vmatmul.mubr.bf16.gmra.mrb[0].mxu0 %v2833
          %v3175 = vpop.f32.mrb[0].mxu0
          %v3176 = vadd.f32 0.0, %v3175
          %v3177 = vpop.f32.mrb[0].mxu0
          %v3178 = vpop.f32.mrb[0].mxu0
          %v3179 = vadd.f32 0.0, %v3178
          %v3180 = vpop.f32.mrb[0].mxu0
          %3181 = vmatprep.mubr.bf16.mxu0 %v2837
          %3182 = vmatmul.mubr.bf16.gmra.mrb[0].mxu0 %v2836
          %v3183 = vpop.f32.mrb[0].mxu0
          %v3184 = vadd.f32 0.0, %v3183
          %v3185 = vpop.f32.mrb[0].mxu0
          %v3186 = vpop.f32.mrb[0].mxu0
          %v3187 = vadd.f32 0.0, %v3186
          %v3188 = vpop.f32.mrb[0].mxu0
          %3189 = vmatprep.mubr.bf16.mxu0 %v2840
          %3190 = vmatmul.mubr.bf16.gmra.mrb[0].mxu0 %v2839
          %v3191 = vpop.f32.mrb[0].mxu0
          %v3192 = vadd.f32 0.0, %v3191
          %v3193 = vpop.f32.mrb[0].mxu0
          %v3194 = vpop.f32.mrb[0].mxu0
          %v3195 = vadd.f32 0.0, %v3194
          %v3196 = vpop.f32.mrb[0].mxu0
          %3197 = vmatprep.mubr.bf16.mxu0 %v2843
          %3198 = vmatmul.mubr.bf16.gmra.mrb[0].mxu0 %v2842
          %v3199 = vpop.f32.mrb[0].mxu0
          %v3200 = vadd.f32 0.0, %v3199
          %v3201 = vpop.f32.mrb[0].mxu0
          %v3202 = vpop.f32.mrb[0].mxu0
          %v3203 = vadd.f32 0.0, %v3202
          %v3204 = vpop.f32.mrb[0].mxu0
          %3205 = vmatprep.mubr.bf16.mxu0 %v2846
          %3206 = vmatmul.mubr.bf16.gmra.mrb[0].mxu0 %v2845
          %v3207 = vpop.f32.mrb[0].mxu0
          %v3208 = vadd.f32 0.0, %v3207
          %v3209 = vpop.f32.mrb[0].mxu0
          %v3210 = vpop.f32.mrb[0].mxu0
          %v3211 = vadd.f32 0.0, %v3210
          %v3212 = vpop.f32.mrb[0].mxu0
          %3213 = vmatprep.mubr.bf16.mxu0 %v2849
          %3214 = vmatmul.mubr.bf16.gmra.mrb[0].mxu0 %v2848
          %v3215 = vpop.f32.mrb[0].mxu0
          %v3216 = vadd.f32 0.0, %v3215
          %v3217 = vpop.f32.mrb[0].mxu0
          %v3218 = vpop.f32.mrb[0].mxu0
          %v3219 = vadd.f32 0.0, %v3218
          %v3220 = vpop.f32.mrb[0].mxu0
          %3221 = vmatprep.mubr.bf16.mxu0 %v2852
          %3222 = vmatmul.mubr.bf16.gmra.mrb[0].mxu0 %v2851
          %v3223 = vpop.f32.mrb[0].mxu0
          %v3224 = vadd.f32 0.0, %v3223
          %v3225 = vpop.f32.mrb[0].mxu0
          %v3226 = vpop.f32.mrb[0].mxu0
          %v3227 = vadd.f32 0.0, %v3226
          %v3228 = vpop.f32.mrb[0].mxu0
          %3229 = vmatprep.mubr.bf16.mxu0 %v2855
          %3230 = vmatmul.mubr.bf16.gmra.mrb[0].mxu0 %v2854
          %v3231 = vpop.f32.mrb[0].mxu0
          %v3232 = vadd.f32 0.0, %v3231
          %v3233 = vpop.f32.mrb[0].mxu0
          %v3234 = vpop.f32.mrb[0].mxu0
          %v3235 = vadd.f32 0.0, %v3234
          %v3236 = vpop.f32.mrb[0].mxu0
          %3237 = vmatprep.mubr.bf16.mxu0 %v2858
          %3238 = vmatmul.mubr.bf16.gmra.mrb[0].mxu0 %v2857
          %v3239 = vpop.f32.mrb[0].mxu0
          %v3240 = vadd.f32 0.0, %v3239
          %v3241 = vpop.f32.mrb[0].mxu0
          %v3242 = vpop.f32.mrb[0].mxu0
          %v3243 = vadd.f32 0.0, %v3242
          %v3244 = vpop.f32.mrb[0].mxu0
          %3245 = vdwg.mxu0
          %3246 = vmatprep.subr.bf16.mxu0 0
          %3247 = vmatpush1.bf16.msra.mxu0 %v3053
          %3248 = vmatprep.subr.bf16.mxu0 0
          %3249 = vmatpush1.bf16.msra.mxu0 %v3054
          %3250 = vmatprep.subr.bf16.mxu0 0
          %3251 = vmatpush1.bf16.msra.mxu0 %v3055
          %3252 = vmatprep.subr.bf16.mxu0 0
          %3253 = vmatpush1.bf16.msra.mxu0 %v3056
          %3254 = vmatprep.subr.bf16.mxu0 0
          %3255 = vmatpush1.bf16.msra.mxu0 %v3057
          %3256 = vmatprep.subr.bf16.mxu0 0
          %3257 = vmatpush1.bf16.msra.mxu0 %v3058
          %3258 = vmatprep.subr.bf16.mxu0 0
          %3259 = vmatpush1.bf16.msra.mxu0 %v3059
          %3260 = vmatprep.subr.bf16.mxu0 0
          %3261 = vmatpush1.bf16.msra.mxu0 %v3060
          %3262 = vmatprep.subr.bf16.mxu0 0
          %3263 = vmatpush1.bf16.msra.mxu0 0
          %3264 = vmatprep.subr.bf16.mxu0 0
          %3265 = vmatpush1.bf16.msra.mxu0 0
          %3266 = vmatprep.subr.bf16.mxu0 0
          %3267 = vmatpush1.bf16.msra.mxu0 0
          %3268 = vmatprep.subr.bf16.mxu0 0
          %3269 = vmatpush1.bf16.msra.mxu0 0
          %3270 = vmatprep.subr.bf16.mxu0 0
          %3271 = vmatpush1.bf16.msra.mxu0 0
          %3272 = vmatprep.subr.bf16.mxu0 0
          %3273 = vmatpush1.bf16.msra.mxu0 0
          %3274 = vmatprep.subr.bf16.mxu0 0
          %3275 = vmatpush1.bf16.msra.mxu0 0
          %3276 = vmatprep.subr.bf16.mxu0 0
          %3277 = vmatpush1.bf16.msra.mxu0 0
          %3278 = vmatprep.mubr.bf16.mxu0 0
          %3279 = vmatmul.mubr.bf16.gmra.mrb[0].mxu0 %v2814
          %v3280 = vpop.f32.mrb[0].mxu0
          %v3281 = vadd.f32 %v3120, %v3280
          %v3282 = vpop.f32.mrb[0].mxu0
          %v3283 = vpop.f32.mrb[0].mxu0
          %v3284 = vadd.f32 %v3123, %v3283
          %v3285 = vpop.f32.mrb[0].mxu0
          %3286 = vmatprep.mubr.bf16.mxu0 0
          %3287 = vmatmul.mubr.bf16.gmra.mrb[0].mxu0 %v2817
          %v3288 = vpop.f32.mrb[0].mxu0
          %v3289 = vadd.f32 %v3128, %v3288
          %v3290 = vpop.f32.mrb[0].mxu0
          %v3291 = vpop.f32.mrb[0].mxu0
          %v3292 = vadd.f32 %v3131, %v3291
          %v3293 = vpop.f32.mrb[0].mxu0
          %3294 = vmatprep.mubr.bf16.mxu0 0
          %3295 = vmatmul.mubr.bf16.gmra.mrb[0].mxu0 %v2820
          %v3296 = vpop.f32.mrb[0].mxu0
          %v3297 = vadd.f32 %v3136, %v3296
          %v3298 = vpop.f32.mrb[0].mxu0
          %v3299 = vpop.f32.mrb[0].mxu0
          %v3300 = vadd.f32 %v3139, %v3299
          %v3301 = vpop.f32.mrb[0].mxu0
          %3302 = vmatprep.mubr.bf16.mxu0 0
          %3303 = vmatmul.mubr.bf16.gmra.mrb[0].mxu0 %v2823
          %v3304 = vpop.f32.mrb[0].mxu0
          %v3305 = vadd.f32 %v3144, %v3304
          %v3306 = vpop.f32.mrb[0].mxu0
          %v3307 = vpop.f32.mrb[0].mxu0
          %v3308 = vadd.f32 %v3147, %v3307
          %v3309 = vpop.f32.mrb[0].mxu0
          %3310 = vmatprep.mubr.bf16.mxu0 0
          %3311 = vmatmul.mubr.bf16.gmra.mrb[0].mxu0 %v2826
          %v3312 = vpop.f32.mrb[0].mxu0
          %v3313 = vadd.f32 %v3152, %v3312
          %v3314 = vpop.f32.mrb[0].mxu0
          %v3315 = vpop.f32.mrb[0].mxu0
          %v3316 = vadd.f32 %v3155, %v3315
          %v3317 = vpop.f32.mrb[0].mxu0
          %3318 = vmatprep.mubr.bf16.mxu0 0
          %3319 = vmatmul.mubr.bf16.gmra.mrb[0].mxu0 %v2829
          %v3320 = vpop.f32.mrb[0].mxu0
          %v3321 = vadd.f32 %v3160, %v3320
          %v3322 = vpop.f32.mrb[0].mxu0
          %v3323 = vpop.f32.mrb[0].mxu0
          %v3324 = vadd.f32 %v3163, %v3323
          %v3325 = vpop.f32.mrb[0].mxu0
          %3326 = vmatprep.mubr.bf16.mxu0 0
          %3327 = vmatmul.mubr.bf16.gmra.mrb[0].mxu0 %v2832
          %v3328 = vpop.f32.mrb[0].mxu0
          %v3329 = vadd.f32 %v3168, %v3328
          %v3330 = vpop.f32.mrb[0].mxu0
          %v3331 = vpop.f32.mrb[0].mxu0
          %v3332 = vadd.f32 %v3171, %v3331
          %v3333 = vpop.f32.mrb[0].mxu0
          %3334 = vmatprep.mubr.bf16.mxu0 0
          %3335 = vmatmul.mubr.bf16.gmra.mrb[0].mxu0 %v2835
          %v3336 = vpop.f32.mrb[0].mxu0
          %v3337 = vadd.f32 %v3176, %v3336
          %v3338 = vpop.f32.mrb[0].mxu0
          %v3339 = vpop.f32.mrb[0].mxu0
          %v3340 = vadd.f32 %v3179, %v3339
          %v3341 = vpop.f32.mrb[0].mxu0
          %3342 = vmatprep.mubr.bf16.mxu0 0
          %3343 = vmatmul.mubr.bf16.gmra.mrb[0].mxu0 %v2838
          %v3344 = vpop.f32.mrb[0].mxu0
          %v3345 = vadd.f32 %v3184, %v3344
          %v3346 = vpop.f32.mrb[0].mxu0
          %v3347 = vpop.f32.mrb[0].mxu0
          %v3348 = vadd.f32 %v3187, %v3347
          %v3349 = vpop.f32.mrb[0].mxu0
          %3350 = vmatprep.mubr.bf16.mxu0 0
          %3351 = vmatmul.mubr.bf16.gmra.mrb[0].mxu0 %v2841
          %v3352 = vpop.f32.mrb[0].mxu0
          %v3353 = vadd.f32 %v3192, %v3352
          %v3354 = vpop.f32.mrb[0].mxu0
          %v3355 = vpop.f32.mrb[0].mxu0
          %v3356 = vadd.f32 %v3195, %v3355
          %v3357 = vpop.f32.mrb[0].mxu0
          %3358 = vmatprep.mubr.bf16.mxu0 0
          %3359 = vmatmul.mubr.bf16.gmra.mrb[0].mxu0 %v2844
          %v3360 = vpop.f32.mrb[0].mxu0
          %v3361 = vadd.f32 %v3200, %v3360
          %v3362 = vpop.f32.mrb[0].mxu0
          %v3363 = vpop.f32.mrb[0].mxu0
          %v3364 = vadd.f32 %v3203, %v3363
          %v3365 = vpop.f32.mrb[0].mxu0
          %3366 = vmatprep.mubr.bf16.mxu0 0
          %3367 = vmatmul.mubr.bf16.gmra.mrb[0].mxu0 %v2847
          %v3368 = vpop.f32.mrb[0].mxu0
          %v3369 = vadd.f32 %v3208, %v3368
          %v3370 = vpop.f32.mrb[0].mxu0
          %v3371 = vpop.f32.mrb[0].mxu0
          %v3372 = vadd.f32 %v3211, %v3371
          %v3373 = vpop.f32.mrb[0].mxu0
          %3374 = vmatprep.mubr.bf16.mxu0 0
          %3375 = vmatmul.mubr.bf16.gmra.mrb[0].mxu0 %v2850
          %v3376 = vpop.f32.mrb[0].mxu0
          %v3377 = vadd.f32 %v3216, %v3376
          %v3378 = vpop.f32.mrb[0].mxu0
          %v3379 = vpop.f32.mrb[0].mxu0
          %v3380 = vadd.f32 %v3219, %v3379
          %v3381 = vpop.f32.mrb[0].mxu0
          %3382 = vmatprep.mubr.bf16.mxu0 0
          %3383 = vmatmul.mubr.bf16.gmra.mrb[0].mxu0 %v2853
          %v3384 = vpop.f32.mrb[0].mxu0
          %v3385 = vadd.f32 %v3224, %v3384
          %v3386 = vpop.f32.mrb[0].mxu0
          %v3387 = vpop.f32.mrb[0].mxu0
          %v3388 = vadd.f32 %v3227, %v3387
          %v3389 = vpop.f32.mrb[0].mxu0
          %3390 = vmatprep.mubr.bf16.mxu0 0
          %3391 = vmatmul.mubr.bf16.gmra.mrb[0].mxu0 %v2856
          %v3392 = vpop.f32.mrb[0].mxu0
          %v3393 = vadd.f32 %v3232, %v3392
          %v3394 = vpop.f32.mrb[0].mxu0
          %v3395 = vpop.f32.mrb[0].mxu0
          %v3396 = vadd.f32 %v3235, %v3395
          %v3397 = vpop.f32.mrb[0].mxu0
          %3398 = vmatprep.mubr.bf16.mxu0 0
          %3399 = vmatmul.mubr.bf16.gmra.mrb[0].mxu0 %v2859
          %v3400 = vpop.f32.mrb[0].mxu0
          %v3401 = vadd.f32 %v3240, %v3400
          %v3402 = vpop.f32.mrb[0].mxu0
          %v3403 = vpop.f32.mrb[0].mxu0
          %v3404 = vadd.f32 %v3243, %v3403
          %v3405 = vpop.f32.mrb[0].mxu0
          %3406 = vdwg.mxu0
          %v3407 = vadd.f32 %v2860, %v3281
          %v3408 = vadd.f32 %v2861, %v3284
          %v3409 = vadd.f32 %v2862, %v3289
          %v3410 = vadd.f32 %v2863, %v3292
          %v3411 = vadd.f32 %v2864, %v3297
          %v3412 = vadd.f32 %v2865, %v3300
          %v3413 = vadd.f32 %v2866, %v3305
          %v3414 = vadd.f32 %v2867, %v3308
          %v3415 = vadd.f32 %v2868, %v3313
          %v3416 = vadd.f32 %v2869, %v3316
          %v3417 = vadd.f32 %v2870, %v3321
          %v3418 = vadd.f32 %v2871, %v3324
          %v3419 = vadd.f32 %v2872, %v3329
          %v3420 = vadd.f32 %v2873, %v3332
          %v3421 = vadd.f32 %v2874, %v3337
          %v3422 = vadd.f32 %v2875, %v3340
          %v3423 = vadd.f32 %v2876, %v3345
          %v3424 = vadd.f32 %v2877, %v3348
          %v3425 = vadd.f32 %v2878, %v3353
          %v3426 = vadd.f32 %v2879, %v3356
          %v3427 = vadd.f32 %v2880, %v3361
          %v3428 = vadd.f32 %v2881, %v3364
          %v3429 = vadd.f32 %v2882, %v3369
          %v3430 = vadd.f32 %v2883, %v3372
          %v3431 = vadd.f32 %v2884, %v3377
          %v3432 = vadd.f32 %v2885, %v3380
          %v3433 = vadd.f32 %v2886, %v3385
          %v3434 = vadd.f32 %v2887, %v3388
          %v3435 = vadd.f32 %v2888, %v3393
          %v3436 = vadd.f32 %v2889, %v3396
          %v3437 = vadd.f32 %v2890, %v3401
          %v3438 = vadd.f32 %v2891, %v3404
          %3439 = vst [vmem:[#allocation2] sm:$0xff] %v3407
          %3440 = vst [vmem:[#allocation2 + $0x8] sm:$0xff] %v3408
          %3441 = vst [vmem:[#allocation2 + $0x10] sm:$0xff] %v3409
          %3442 = vst [vmem:[#allocation2 + $0x18] sm:$0xff] %v3410
          %3443 = vst [vmem:[#allocation2 + $0x20] sm:$0xff] %v3411
          %3444 = vst [vmem:[#allocation2 + $0x28] sm:$0xff] %v3412
          %3445 = vst [vmem:[#allocation2 + $0x30] sm:$0xff] %v3413
          %3446 = vst [vmem:[#allocation2 + $0x38] sm:$0xff] %v3414
          %3447 = vst [vmem:[#allocation2 + $0x40] sm:$0xff] %v3415
          %3448 = vst [vmem:[#allocation2 + $0x48] sm:$0xff] %v3416
          %3449 = vst [vmem:[#allocation2 + $0x50] sm:$0xff] %v3417
          %3450 = vst [vmem:[#allocation2 + $0x58] sm:$0xff] %v3418
          %3451 = vst [vmem:[#allocation2 + $0x60] sm:$0xff] %v3419
          %3452 = vst [vmem:[#allocation2 + $0x68] sm:$0xff] %v3420
          %3453 = vst [vmem:[#allocation2 + $0x70] sm:$0xff] %v3421
          %3454 = vst [vmem:[#allocation2 + $0x78] sm:$0xff] %v3422
          %3455 = vst [vmem:[#allocation2 + $0x80] sm:$0xff] %v3423
          %3456 = vst [vmem:[#allocation2 + $0x88] sm:$0xff] %v3424
          %3457 = vst [vmem:[#allocation2 + $0x90] sm:$0xff] %v3425
          %3458 = vst [vmem:[#allocation2 + $0x98] sm:$0xff] %v3426
          %3459 = vst [vmem:[#allocation2 + $0xa0] sm:$0xff] %v3427
          %3460 = vst [vmem:[#allocation2 + $0xa8] sm:$0xff] %v3428
          %3461 = vst [vmem:[#allocation2 + $0xb0] sm:$0xff] %v3429
          %3462 = vst [vmem:[#allocation2 + $0xb8] sm:$0xff] %v3430
          %3463 = vst [vmem:[#allocation2 + $0xc0] sm:$0xff] %v3431
          %3464 = vst [vmem:[#allocation2 + $0xc8] sm:$0xff] %v3432
          %3465 = vst [vmem:[#allocation2 + $0xd0] sm:$0xff] %v3433
          %3466 = vst [vmem:[#allocation2 + $0xd8] sm:$0xff] %v3434
          %3467 = vst [vmem:[#allocation2 + $0xe0] sm:$0xff] %v3435
          %3468 = vst [vmem:[#allocation2 + $0xe8] sm:$0xff] %v3436
          %3469 = vst [vmem:[#allocation2 + $0xf0] sm:$0xff] %v3437
          %3470 = vst [vmem:[#allocation2 + $0xf8] sm:$0xff] %v3438
          %s3471 = scalar_lea.vmem [#allocation3], 192
          %v3472 = vld [vmem:[%s3471] sm:$0xff]
          %v3473 = vld [vmem:[%s3471 + $0x8] sm:$0xff]
          %v3474 = vld [vmem:[%s3471 + $0x10] sm:$0xff]
          %v3475 = vld [vmem:[%s3471 + $0x18] sm:$0xff]
          %v3476 = vld [vmem:[%s3471 + $0x20] sm:$0xff]
          %v3477 = vld [vmem:[%s3471 + $0x28] sm:$0xff]
          %v3478 = vld [vmem:[%s3471 + $0x30] sm:$0xff]
          %v3479 = vld [vmem:[%s3471 + $0x38] sm:$0xff]
          %v3480 = vld [vmem:[%s3471 + $0x40] sm:$0xff]
          %v3481 = vld [vmem:[%s3471 + $0x48] sm:$0xff]
          %v3482 = vld [vmem:[%s3471 + $0x50] sm:$0xff]
          %v3483 = vld [vmem:[%s3471 + $0x58] sm:$0xff]
          %v3484 = vld [vmem:[%s3471 + $0x60] sm:$0xff]
          %v3485 = vld [vmem:[%s3471 + $0x68] sm:$0xff]
          %v3486 = vld [vmem:[%s3471 + $0x70] sm:$0xff]
          %v3487 = vld [vmem:[%s3471 + $0x78] sm:$0xff]
          %v3488 = vld [vmem:[%s3471 + $0x80] sm:$0xff]
          %v3489 = vld [vmem:[%s3471 + $0x88] sm:$0xff]
          %v3490 = vld [vmem:[%s3471 + $0x90] sm:$0xff]
          %v3491 = vld [vmem:[%s3471 + $0x98] sm:$0xff]
          %v3492 = vld [vmem:[%s3471 + $0xa0] sm:$0xff]
          %v3493 = vld [vmem:[%s3471 + $0xa8] sm:$0xff]
          %v3494 = vld [vmem:[%s3471 + $0xb0] sm:$0xff]
          %v3495 = vld [vmem:[%s3471 + $0xb8] sm:$0xff]
          %v3496 = vld [vmem:[%s3471 + $0xc0] sm:$0xff]
          %v3497 = vld [vmem:[%s3471 + $0xc8] sm:$0xff]
          %v3498 = vld [vmem:[%s3471 + $0xd0] sm:$0xff]
          %v3499 = vld [vmem:[%s3471 + $0xd8] sm:$0xff]
          %v3500 = vld [vmem:[%s3471 + $0xe0] sm:$0xff]
          %v3501 = vld [vmem:[%s3471 + $0xe8] sm:$0xff]
          %v3502 = vld [vmem:[%s3471 + $0xf0] sm:$0xff]
          %v3503 = vld [vmem:[%s3471 + $0xf8] sm:$0xff]
          %v3504 = vld [vmem:[%s3471 + $0x100] sm:$0xff]
          %v3505 = vld [vmem:[%s3471 + $0x108] sm:$0xff]
          %v3506 = vld [vmem:[%s3471 + $0x110] sm:$0xff]
          %v3507 = vld [vmem:[%s3471 + $0x118] sm:$0xff]
          %v3508 = vld [vmem:[%s3471 + $0x120] sm:$0xff]
          %v3509 = vld [vmem:[%s3471 + $0x128] sm:$0xff]
          %v3510 = vld [vmem:[%s3471 + $0x130] sm:$0xff]
          %v3511 = vld [vmem:[%s3471 + $0x138] sm:$0xff]
          %v3512 = vld [vmem:[%s3471 + $0x140] sm:$0xff]
          %v3513 = vld [vmem:[%s3471 + $0x148] sm:$0xff]
          %v3514 = vld [vmem:[%s3471 + $0x150] sm:$0xff]
          %v3515 = vld [vmem:[%s3471 + $0x158] sm:$0xff]
          %v3516 = vld [vmem:[%s3471 + $0x160] sm:$0xff]
          %v3517 = vld [vmem:[%s3471 + $0x168] sm:$0xff]
          %v3518 = vld [vmem:[%s3471 + $0x170] sm:$0xff]
          %v3519 = vld [vmem:[%s3471 + $0x178] sm:$0xff]
          %v3520 = vld [vmem:[#allocation2] sm:$0xff]
          %v3521 = vld [vmem:[#allocation2 + $0x8] sm:$0xff]
          %v3522 = vld [vmem:[#allocation2 + $0x10] sm:$0xff]
          %v3523 = vld [vmem:[#allocation2 + $0x18] sm:$0xff]
          %v3524 = vld [vmem:[#allocation2 + $0x20] sm:$0xff]
          %v3525 = vld [vmem:[#allocation2 + $0x28] sm:$0xff]
          %v3526 = vld [vmem:[#allocation2 + $0x30] sm:$0xff]
          %v3527 = vld [vmem:[#allocation2 + $0x38] sm:$0xff]
          %v3528 = vld [vmem:[#allocation2 + $0x40] sm:$0xff]
          %v3529 = vld [vmem:[#allocation2 + $0x48] sm:$0xff]
          %v3530 = vld [vmem:[#allocation2 + $0x50] sm:$0xff]
          %v3531 = vld [vmem:[#allocation2 + $0x58] sm:$0xff]
          %v3532 = vld [vmem:[#allocation2 + $0x60] sm:$0xff]
          %v3533 = vld [vmem:[#allocation2 + $0x68] sm:$0xff]
          %v3534 = vld [vmem:[#allocation2 + $0x70] sm:$0xff]
          %v3535 = vld [vmem:[#allocation2 + $0x78] sm:$0xff]
          %v3536 = vld [vmem:[#allocation2 + $0x80] sm:$0xff]
          %v3537 = vld [vmem:[#allocation2 + $0x88] sm:$0xff]
          %v3538 = vld [vmem:[#allocation2 + $0x90] sm:$0xff]
          %v3539 = vld [vmem:[#allocation2 + $0x98] sm:$0xff]
          %v3540 = vld [vmem:[#allocation2 + $0xa0] sm:$0xff]
          %v3541 = vld [vmem:[#allocation2 + $0xa8] sm:$0xff]
          %v3542 = vld [vmem:[#allocation2 + $0xb0] sm:$0xff]
          %v3543 = vld [vmem:[#allocation2 + $0xb8] sm:$0xff]
          %v3544 = vld [vmem:[#allocation2 + $0xc0] sm:$0xff]
          %v3545 = vld [vmem:[#allocation2 + $0xc8] sm:$0xff]
          %v3546 = vld [vmem:[#allocation2 + $0xd0] sm:$0xff]
          %v3547 = vld [vmem:[#allocation2 + $0xd8] sm:$0xff]
          %v3548 = vld [vmem:[#allocation2 + $0xe0] sm:$0xff]
          %v3549 = vld [vmem:[#allocation2 + $0xe8] sm:$0xff]
          %v3550 = vld [vmem:[#allocation2 + $0xf0] sm:$0xff]
          %v3551 = vld [vmem:[#allocation2 + $0xf8] sm:$0xff]
          %s3552 = scalar_lea.vmem %s291, 384 [#allocation4]
          %v3553 = vld [vmem:[%s3552] sm:$0xf]
          %v3554 = vld [vmem:[%s3552 + $0x4] sm:$0xf]
          %v3555 = vld [vmem:[%s3552 + $0x8] sm:$0xf]
          %v3556 = vld [vmem:[%s3552 + $0xc] sm:$0xf]
          %v3557 = vld [vmem:[%s3552 + $0x10] sm:$0xf]
          %v3558 = vld [vmem:[%s3552 + $0x14] sm:$0xf]
          %v3559 = vld [vmem:[%s3552 + $0x18] sm:$0xf]
          %v3560 = vld [vmem:[%s3552 + $0x1c] sm:$0xf]
          %v3561 = vld [vmem:[%s3552 + $0x20] sm:$0xf]
          %v3562 = vld [vmem:[%s3552 + $0x24] sm:$0xf]
          %v3563 = vld [vmem:[%s3552 + $0x28] sm:$0xf]
          %v3564 = vld [vmem:[%s3552 + $0x2c] sm:$0xf]
          %v3565 = vld [vmem:[%s3552 + $0x30] sm:$0xf]
          %v3566 = vld [vmem:[%s3552 + $0x34] sm:$0xf]
          %v3567 = vld [vmem:[%s3552 + $0x38] sm:$0xf]
          %v3568 = vld [vmem:[%s3552 + $0x3c] sm:$0xf]
          %v3569 = vld [vmem:[%s3552 + $0x40] sm:$0xf]
          %v3570 = vld [vmem:[%s3552 + $0x44] sm:$0xf]
          %v3571 = vld [vmem:[%s3552 + $0x48] sm:$0xf]
          %v3572 = vld [vmem:[%s3552 + $0x4c] sm:$0xf]
          %v3573 = vld [vmem:[%s3552 + $0x50] sm:$0xf]
          %v3574 = vld [vmem:[%s3552 + $0x54] sm:$0xf]
          %v3575 = vld [vmem:[%s3552 + $0x58] sm:$0xf]
          %v3576 = vld [vmem:[%s3552 + $0x5c] sm:$0xf]
          %v3577 = vld [vmem:[%s3552 + $0x60] sm:$0xf]
          %v3578 = vld [vmem:[%s3552 + $0x64] sm:$0xf]
          %v3579 = vld [vmem:[%s3552 + $0x68] sm:$0xf]
          %v3580 = vld [vmem:[%s3552 + $0x6c] sm:$0xf]
          %v3581 = vld [vmem:[%s3552 + $0x70] sm:$0xf]
          %v3582 = vld [vmem:[%s3552 + $0x74] sm:$0xf]
          %v3583 = vld [vmem:[%s3552 + $0x78] sm:$0xf]
          %v3584 = vld [vmem:[%s3552 + $0x7c] sm:$0xf]
          %v3585 = vld [vmem:[%s3552 + $0x80] sm:$0xf]
          %v3586 = vld [vmem:[%s3552 + $0x84] sm:$0xf]
          %v3587 = vld [vmem:[%s3552 + $0x88] sm:$0xf]
          %v3588 = vld [vmem:[%s3552 + $0x8c] sm:$0xf]
          %v3589 = vld [vmem:[%s3552 + $0x90] sm:$0xf]
          %v3590 = vld [vmem:[%s3552 + $0x94] sm:$0xf]
          %v3591 = vld [vmem:[%s3552 + $0x98] sm:$0xf]
          %v3592 = vld [vmem:[%s3552 + $0x9c] sm:$0xf]
          %v3593 = vld [vmem:[%s3552 + $0xa0] sm:$0xf]
          %v3594 = vld [vmem:[%s3552 + $0xa4] sm:$0xf]
          %v3595 = vld [vmem:[%s3552 + $0xa8] sm:$0xf]
          %v3596 = vld [vmem:[%s3552 + $0xac] sm:$0xf]
          %v3597 = vld [vmem:[%s3552 + $0xb0] sm:$0xf]
          %v3598 = vld [vmem:[%s3552 + $0xb4] sm:$0xf]
          %v3599 = vld [vmem:[%s3552 + $0xb8] sm:$0xf]
          %v3600 = vld [vmem:[%s3552 + $0xbc] sm:$0xf]
          %v3649 = vunpack.c.l.b16 %v3553
          %v3650 = vunpack.c.l.b16 %v3554
          %v3651 = vunpack.c.l.b16 %v3555
          %v3652 = vunpack.c.l.b16 %v3556
          %v3653 = vunpack.c.l.b16 %v3557
          %v3654 = vunpack.c.l.b16 %v3558
          %v3655 = vunpack.c.l.b16 %v3559
          %v3656 = vunpack.c.l.b16 %v3560
          %v3657 = vunpack.c.l.b16 %v3561
          %v3658 = vunpack.c.l.b16 %v3562
          %v3659 = vunpack.c.l.b16 %v3563
          %v3660 = vunpack.c.l.b16 %v3564
          %v3661 = vunpack.c.l.b16 %v3565
          %v3662 = vunpack.c.l.b16 %v3566
          %v3663 = vunpack.c.l.b16 %v3567
          %v3664 = vunpack.c.l.b16 %v3568
          %v3665 = vunpack.c.l.b16 %v3569
          %v3666 = vunpack.c.l.b16 %v3570
          %v3667 = vunpack.c.l.b16 %v3571
          %v3668 = vunpack.c.l.b16 %v3572
          %v3669 = vunpack.c.l.b16 %v3573
          %v3670 = vunpack.c.l.b16 %v3574
          %v3671 = vunpack.c.l.b16 %v3575
          %v3672 = vunpack.c.l.b16 %v3576
          %v3673 = vunpack.c.l.b16 %v3577
          %v3674 = vunpack.c.l.b16 %v3578
          %v3675 = vunpack.c.l.b16 %v3579
          %v3676 = vunpack.c.l.b16 %v3580
          %v3677 = vunpack.c.l.b16 %v3581
          %v3678 = vunpack.c.l.b16 %v3582
          %v3679 = vunpack.c.l.b16 %v3583
          %v3680 = vunpack.c.l.b16 %v3584
          %v3681 = vunpack.c.l.b16 %v3585
          %v3682 = vunpack.c.l.b16 %v3586
          %v3683 = vunpack.c.l.b16 %v3587
          %v3684 = vunpack.c.l.b16 %v3588
          %v3685 = vunpack.c.l.b16 %v3589
          %v3686 = vunpack.c.l.b16 %v3590
          %v3687 = vunpack.c.l.b16 %v3591
          %v3688 = vunpack.c.l.b16 %v3592
          %v3689 = vunpack.c.l.b16 %v3593
          %v3690 = vunpack.c.l.b16 %v3594
          %v3691 = vunpack.c.l.b16 %v3595
          %v3692 = vunpack.c.l.b16 %v3596
          %v3693 = vunpack.c.l.b16 %v3597
          %v3694 = vunpack.c.l.b16 %v3598
          %v3695 = vunpack.c.l.b16 %v3599
          %v3696 = vunpack.c.l.b16 %v3600
          %v3697 = vpack.c.b16 %v3650, %v3649
          %v3698 = vpack.c.b16 %v3652, %v3651
          %v3699 = vpack.c.b16 %v3654, %v3653
          %v3700 = vpack.c.b16 %v3656, %v3655
          %v3701 = vpack.c.b16 %v3658, %v3657
          %v3702 = vpack.c.b16 %v3660, %v3659
          %v3703 = vpack.c.b16 %v3662, %v3661
          %v3704 = vpack.c.b16 %v3664, %v3663
          %v3705 = vpack.c.b16 %v3666, %v3665
          %v3706 = vpack.c.b16 %v3668, %v3667
          %v3707 = vpack.c.b16 %v3670, %v3669
          %v3708 = vpack.c.b16 %v3672, %v3671
          %v3709 = vpack.c.b16 %v3674, %v3673
          %v3710 = vpack.c.b16 %v3676, %v3675
          %v3711 = vpack.c.b16 %v3678, %v3677
          %v3712 = vpack.c.b16 %v3680, %v3679
          %v3713 = vpack.c.b16 %v3682, %v3681
          %v3714 = vpack.c.b16 %v3684, %v3683
          %v3715 = vpack.c.b16 %v3686, %v3685
          %v3716 = vpack.c.b16 %v3688, %v3687
          %v3717 = vpack.c.b16 %v3690, %v3689
          %v3718 = vpack.c.b16 %v3692, %v3691
          %v3719 = vpack.c.b16 %v3694, %v3693
          %v3720 = vpack.c.b16 %v3696, %v3695
          %3745 = vmatprep.subr.bf16.mxu0 0
          %3746 = vmatpush1.bf16.msra.mxu0 %v3697
          %3747 = vmatprep.subr.bf16.mxu0 0
          %3748 = vmatpush1.bf16.msra.mxu0 %v3698
          %3749 = vmatprep.subr.bf16.mxu0 0
          %3750 = vmatpush1.bf16.msra.mxu0 %v3699
          %3751 = vmatprep.subr.bf16.mxu0 0
          %3752 = vmatpush1.bf16.msra.mxu0 %v3700
          %3753 = vmatprep.subr.bf16.mxu0 0
          %3754 = vmatpush1.bf16.msra.mxu0 %v3701
          %3755 = vmatprep.subr.bf16.mxu0 0
          %3756 = vmatpush1.bf16.msra.mxu0 %v3702
          %3757 = vmatprep.subr.bf16.mxu0 0
          %3758 = vmatpush1.bf16.msra.mxu0 %v3703
          %3759 = vmatprep.subr.bf16.mxu0 0
          %3760 = vmatpush1.bf16.msra.mxu0 %v3704
          %3761 = vmatprep.subr.bf16.mxu0 0
          %3762 = vmatpush1.bf16.msra.mxu0 %v3705
          %3763 = vmatprep.subr.bf16.mxu0 0
          %3764 = vmatpush1.bf16.msra.mxu0 %v3706
          %3765 = vmatprep.subr.bf16.mxu0 0
          %3766 = vmatpush1.bf16.msra.mxu0 %v3707
          %3767 = vmatprep.subr.bf16.mxu0 0
          %3768 = vmatpush1.bf16.msra.mxu0 %v3708
          %3769 = vmatprep.subr.bf16.mxu0 0
          %3770 = vmatpush1.bf16.msra.mxu0 %v3709
          %3771 = vmatprep.subr.bf16.mxu0 0
          %3772 = vmatpush1.bf16.msra.mxu0 %v3710
          %3773 = vmatprep.subr.bf16.mxu0 0
          %3774 = vmatpush1.bf16.msra.mxu0 %v3711
          %3775 = vmatprep.subr.bf16.mxu0 0
          %3776 = vmatpush1.bf16.msra.mxu0 %v3712
          %3777 = vmatprep.mubr.bf16.mxu0 %v3473
          %3778 = vmatmul.mubr.bf16.gmra.mrb[0].mxu0 %v3472
          %v3779 = vpop.f32.mrb[0].mxu0
          %v3780 = vadd.f32 0.0, %v3779
          %v3781 = vpop.f32.mrb[0].mxu0
          %v3782 = vpop.f32.mrb[0].mxu0
          %v3783 = vadd.f32 0.0, %v3782
          %v3784 = vpop.f32.mrb[0].mxu0
          %3785 = vmatprep.mubr.bf16.mxu0 %v3476
          %3786 = vmatmul.mubr.bf16.gmra.mrb[0].mxu0 %v3475
          %v3787 = vpop.f32.mrb[0].mxu0
          %v3788 = vadd.f32 0.0, %v3787
          %v3789 = vpop.f32.mrb[0].mxu0
          %v3790 = vpop.f32.mrb[0].mxu0
          %v3791 = vadd.f32 0.0, %v3790
          %v3792 = vpop.f32.mrb[0].mxu0
          %3793 = vmatprep.mubr.bf16.mxu0 %v3479
          %3794 = vmatmul.mubr.bf16.gmra.mrb[0].mxu0 %v3478
          %v3795 = vpop.f32.mrb[0].mxu0
          %v3796 = vadd.f32 0.0, %v3795
          %v3797 = vpop.f32.mrb[0].mxu0
          %v3798 = vpop.f32.mrb[0].mxu0
          %v3799 = vadd.f32 0.0, %v3798
          %v3800 = vpop.f32.mrb[0].mxu0
          %3801 = vmatprep.mubr.bf16.mxu0 %v3482
          %3802 = vmatmul.mubr.bf16.gmra.mrb[0].mxu0 %v3481
          %v3803 = vpop.f32.mrb[0].mxu0
          %v3804 = vadd.f32 0.0, %v3803
          %v3805 = vpop.f32.mrb[0].mxu0
          %v3806 = vpop.f32.mrb[0].mxu0
          %v3807 = vadd.f32 0.0, %v3806
          %v3808 = vpop.f32.mrb[0].mxu0
          %3809 = vmatprep.mubr.bf16.mxu0 %v3485
          %3810 = vmatmul.mubr.bf16.gmra.mrb[0].mxu0 %v3484
          %v3811 = vpop.f32.mrb[0].mxu0
          %v3812 = vadd.f32 0.0, %v3811
          %v3813 = vpop.f32.mrb[0].mxu0
          %v3814 = vpop.f32.mrb[0].mxu0
          %v3815 = vadd.f32 0.0, %v3814
          %v3816 = vpop.f32.mrb[0].mxu0
          %3817 = vmatprep.mubr.bf16.mxu0 %v3488
          %3818 = vmatmul.mubr.bf16.gmra.mrb[0].mxu0 %v3487
          %v3819 = vpop.f32.mrb[0].mxu0
          %v3820 = vadd.f32 0.0, %v3819
          %v3821 = vpop.f32.mrb[0].mxu0
          %v3822 = vpop.f32.mrb[0].mxu0
          %v3823 = vadd.f32 0.0, %v3822
          %v3824 = vpop.f32.mrb[0].mxu0
          %3825 = vmatprep.mubr.bf16.mxu0 %v3491
          %3826 = vmatmul.mubr.bf16.gmra.mrb[0].mxu0 %v3490
          %v3827 = vpop.f32.mrb[0].mxu0
          %v3828 = vadd.f32 0.0, %v3827
          %v3829 = vpop.f32.mrb[0].mxu0
          %v3830 = vpop.f32.mrb[0].mxu0
          %v3831 = vadd.f32 0.0, %v3830
          %v3832 = vpop.f32.mrb[0].mxu0
          %3833 = vmatprep.mubr.bf16.mxu0 %v3494
          %3834 = vmatmul.mubr.bf16.gmra.mrb[0].mxu0 %v3493
          %v3835 = vpop.f32.mrb[0].mxu0
          %v3836 = vadd.f32 0.0, %v3835
          %v3837 = vpop.f32.mrb[0].mxu0
          %v3838 = vpop.f32.mrb[0].mxu0
          %v3839 = vadd.f32 0.0, %v3838
          %v3840 = vpop.f32.mrb[0].mxu0
          %3841 = vmatprep.mubr.bf16.mxu0 %v3497
          %3842 = vmatmul.mubr.bf16.gmra.mrb[0].mxu0 %v3496
          %v3843 = vpop.f32.mrb[0].mxu0
          %v3844 = vadd.f32 0.0, %v3843
          %v3845 = vpop.f32.mrb[0].mxu0
          %v3846 = vpop.f32.mrb[0].mxu0
          %v3847 = vadd.f32 0.0, %v3846
          %v3848 = vpop.f32.mrb[0].mxu0
          %3849 = vmatprep.mubr.bf16.mxu0 %v3500
          %3850 = vmatmul.mubr.bf16.gmra.mrb[0].mxu0 %v3499
          %v3851 = vpop.f32.mrb[0].mxu0
          %v3852 = vadd.f32 0.0, %v3851
          %v3853 = vpop.f32.mrb[0].mxu0
          %v3854 = vpop.f32.mrb[0].mxu0
          %v3855 = vadd.f32 0.0, %v3854
          %v3856 = vpop.f32.mrb[0].mxu0
          %3857 = vmatprep.mubr.bf16.mxu0 %v3503
          %3858 = vmatmul.mubr.bf16.gmra.mrb[0].mxu0 %v3502
          %v3859 = vpop.f32.mrb[0].mxu0
          %v3860 = vadd.f32 0.0, %v3859
          %v3861 = vpop.f32.mrb[0].mxu0
          %v3862 = vpop.f32.mrb[0].mxu0
          %v3863 = vadd.f32 0.0, %v3862
          %v3864 = vpop.f32.mrb[0].mxu0
          %3865 = vmatprep.mubr.bf16.mxu0 %v3506
          %3866 = vmatmul.mubr.bf16.gmra.mrb[0].mxu0 %v3505
          %v3867 = vpop.f32.mrb[0].mxu0
          %v3868 = vadd.f32 0.0, %v3867
          %v3869 = vpop.f32.mrb[0].mxu0
          %v3870 = vpop.f32.mrb[0].mxu0
          %v3871 = vadd.f32 0.0, %v3870
          %v3872 = vpop.f32.mrb[0].mxu0
          %3873 = vmatprep.mubr.bf16.mxu0 %v3509
          %3874 = vmatmul.mubr.bf16.gmra.mrb[0].mxu0 %v3508
          %v3875 = vpop.f32.mrb[0].mxu0
          %v3876 = vadd.f32 0.0, %v3875
          %v3877 = vpop.f32.mrb[0].mxu0
          %v3878 = vpop.f32.mrb[0].mxu0
          %v3879 = vadd.f32 0.0, %v3878
          %v3880 = vpop.f32.mrb[0].mxu0
          %3881 = vmatprep.mubr.bf16.mxu0 %v3512
          %3882 = vmatmul.mubr.bf16.gmra.mrb[0].mxu0 %v3511
          %v3883 = vpop.f32.mrb[0].mxu0
          %v3884 = vadd.f32 0.0, %v3883
          %v3885 = vpop.f32.mrb[0].mxu0
          %v3886 = vpop.f32.mrb[0].mxu0
          %v3887 = vadd.f32 0.0, %v3886
          %v3888 = vpop.f32.mrb[0].mxu0
          %3889 = vmatprep.mubr.bf16.mxu0 %v3515
          %3890 = vmatmul.mubr.bf16.gmra.mrb[0].mxu0 %v3514
          %v3891 = vpop.f32.mrb[0].mxu0
          %v3892 = vadd.f32 0.0, %v3891
          %v3893 = vpop.f32.mrb[0].mxu0
          %v3894 = vpop.f32.mrb[0].mxu0
          %v3895 = vadd.f32 0.0, %v3894
          %v3896 = vpop.f32.mrb[0].mxu0
          %3897 = vmatprep.mubr.bf16.mxu0 %v3518
          %3898 = vmatmul.mubr.bf16.gmra.mrb[0].mxu0 %v3517
          %v3899 = vpop.f32.mrb[0].mxu0
          %v3900 = vadd.f32 0.0, %v3899
          %v3901 = vpop.f32.mrb[0].mxu0
          %v3902 = vpop.f32.mrb[0].mxu0
          %v3903 = vadd.f32 0.0, %v3902
          %v3904 = vpop.f32.mrb[0].mxu0
          %3905 = vdwg.mxu0
          %3906 = vmatprep.subr.bf16.mxu0 0
          %3907 = vmatpush1.bf16.msra.mxu0 %v3713
          %3908 = vmatprep.subr.bf16.mxu0 0
          %3909 = vmatpush1.bf16.msra.mxu0 %v3714
          %3910 = vmatprep.subr.bf16.mxu0 0
          %3911 = vmatpush1.bf16.msra.mxu0 %v3715
          %3912 = vmatprep.subr.bf16.mxu0 0
          %3913 = vmatpush1.bf16.msra.mxu0 %v3716
          %3914 = vmatprep.subr.bf16.mxu0 0
          %3915 = vmatpush1.bf16.msra.mxu0 %v3717
          %3916 = vmatprep.subr.bf16.mxu0 0
          %3917 = vmatpush1.bf16.msra.mxu0 %v3718
          %3918 = vmatprep.subr.bf16.mxu0 0
          %3919 = vmatpush1.bf16.msra.mxu0 %v3719
          %3920 = vmatprep.subr.bf16.mxu0 0
          %3921 = vmatpush1.bf16.msra.mxu0 %v3720
          %3922 = vmatprep.subr.bf16.mxu0 0
          %3923 = vmatpush1.bf16.msra.mxu0 0
          %3924 = vmatprep.subr.bf16.mxu0 0
          %3925 = vmatpush1.bf16.msra.mxu0 0
          %3926 = vmatprep.subr.bf16.mxu0 0
          %3927 = vmatpush1.bf16.msra.mxu0 0
          %3928 = vmatprep.subr.bf16.mxu0 0
          %3929 = vmatpush1.bf16.msra.mxu0 0
          %3930 = vmatprep.subr.bf16.mxu0 0
          %3931 = vmatpush1.bf16.msra.mxu0 0
          %3932 = vmatprep.subr.bf16.mxu0 0
          %3933 = vmatpush1.bf16.msra.mxu0 0
          %3934 = vmatprep.subr.bf16.mxu0 0
          %3935 = vmatpush1.bf16.msra.mxu0 0
          %3936 = vmatprep.subr.bf16.mxu0 0
          %3937 = vmatpush1.bf16.msra.mxu0 0
          %3938 = vmatprep.mubr.bf16.mxu0 0
          %3939 = vmatmul.mubr.bf16.gmra.mrb[0].mxu0 %v3474
          %v3940 = vpop.f32.mrb[0].mxu0
          %v3941 = vadd.f32 %v3780, %v3940
          %v3942 = vpop.f32.mrb[0].mxu0
          %v3943 = vpop.f32.mrb[0].mxu0
          %v3944 = vadd.f32 %v3783, %v3943
          %v3945 = vpop.f32.mrb[0].mxu0
          %3946 = vmatprep.mubr.bf16.mxu0 0
          %3947 = vmatmul.mubr.bf16.gmra.mrb[0].mxu0 %v3477
          %v3948 = vpop.f32.mrb[0].mxu0
          %v3949 = vadd.f32 %v3788, %v3948
          %v3950 = vpop.f32.mrb[0].mxu0
          %v3951 = vpop.f32.mrb[0].mxu0
          %v3952 = vadd.f32 %v3791, %v3951
          %v3953 = vpop.f32.mrb[0].mxu0
          %3954 = vmatprep.mubr.bf16.mxu0 0
          %3955 = vmatmul.mubr.bf16.gmra.mrb[0].mxu0 %v3480
          %v3956 = vpop.f32.mrb[0].mxu0
          %v3957 = vadd.f32 %v3796, %v3956
          %v3958 = vpop.f32.mrb[0].mxu0
          %v3959 = vpop.f32.mrb[0].mxu0
          %v3960 = vadd.f32 %v3799, %v3959
          %v3961 = vpop.f32.mrb[0].mxu0
          %3962 = vmatprep.mubr.bf16.mxu0 0
          %3963 = vmatmul.mubr.bf16.gmra.mrb[0].mxu0 %v3483
          %v3964 = vpop.f32.mrb[0].mxu0
          %v3965 = vadd.f32 %v3804, %v3964
          %v3966 = vpop.f32.mrb[0].mxu0
          %v3967 = vpop.f32.mrb[0].mxu0
          %v3968 = vadd.f32 %v3807, %v3967
          %v3969 = vpop.f32.mrb[0].mxu0
          %3970 = vmatprep.mubr.bf16.mxu0 0
          %3971 = vmatmul.mubr.bf16.gmra.mrb[0].mxu0 %v3486
          %v3972 = vpop.f32.mrb[0].mxu0
          %v3973 = vadd.f32 %v3812, %v3972
          %v3974 = vpop.f32.mrb[0].mxu0
          %v3975 = vpop.f32.mrb[0].mxu0
          %v3976 = vadd.f32 %v3815, %v3975
          %v3977 = vpop.f32.mrb[0].mxu0
          %3978 = vmatprep.mubr.bf16.mxu0 0
          %3979 = vmatmul.mubr.bf16.gmra.mrb[0].mxu0 %v3489
          %v3980 = vpop.f32.mrb[0].mxu0
          %v3981 = vadd.f32 %v3820, %v3980
          %v3982 = vpop.f32.mrb[0].mxu0
          %v3983 = vpop.f32.mrb[0].mxu0
          %v3984 = vadd.f32 %v3823, %v3983
          %v3985 = vpop.f32.mrb[0].mxu0
          %3986 = vmatprep.mubr.bf16.mxu0 0
          %3987 = vmatmul.mubr.bf16.gmra.mrb[0].mxu0 %v3492
          %v3988 = vpop.f32.mrb[0].mxu0
          %v3989 = vadd.f32 %v3828, %v3988
          %v3990 = vpop.f32.mrb[0].mxu0
          %v3991 = vpop.f32.mrb[0].mxu0
          %v3992 = vadd.f32 %v3831, %v3991
          %v3993 = vpop.f32.mrb[0].mxu0
          %3994 = vmatprep.mubr.bf16.mxu0 0
          %3995 = vmatmul.mubr.bf16.gmra.mrb[0].mxu0 %v3495
          %v3996 = vpop.f32.mrb[0].mxu0
          %v3997 = vadd.f32 %v3836, %v3996
          %v3998 = vpop.f32.mrb[0].mxu0
          %v3999 = vpop.f32.mrb[0].mxu0
          %v4000 = vadd.f32 %v3839, %v3999
          %v4001 = vpop.f32.mrb[0].mxu0
          %4002 = vmatprep.mubr.bf16.mxu0 0
          %4003 = vmatmul.mubr.bf16.gmra.mrb[0].mxu0 %v3498
          %v4004 = vpop.f32.mrb[0].mxu0
          %v4005 = vadd.f32 %v3844, %v4004
          %v4006 = vpop.f32.mrb[0].mxu0
          %v4007 = vpop.f32.mrb[0].mxu0
          %v4008 = vadd.f32 %v3847, %v4007
          %v4009 = vpop.f32.mrb[0].mxu0
          %4010 = vmatprep.mubr.bf16.mxu0 0
          %4011 = vmatmul.mubr.bf16.gmra.mrb[0].mxu0 %v3501
          %v4012 = vpop.f32.mrb[0].mxu0
          %v4013 = vadd.f32 %v3852, %v4012
          %v4014 = vpop.f32.mrb[0].mxu0
          %v4015 = vpop.f32.mrb[0].mxu0
          %v4016 = vadd.f32 %v3855, %v4015
          %v4017 = vpop.f32.mrb[0].mxu0
          %4018 = vmatprep.mubr.bf16.mxu0 0
          %4019 = vmatmul.mubr.bf16.gmra.mrb[0].mxu0 %v3504
          %v4020 = vpop.f32.mrb[0].mxu0
          %v4021 = vadd.f32 %v3860, %v4020
          %v4022 = vpop.f32.mrb[0].mxu0
          %v4023 = vpop.f32.mrb[0].mxu0
          %v4024 = vadd.f32 %v3863, %v4023
          %v4025 = vpop.f32.mrb[0].mxu0
          %4026 = vmatprep.mubr.bf16.mxu0 0
          %4027 = vmatmul.mubr.bf16.gmra.mrb[0].mxu0 %v3507
          %v4028 = vpop.f32.mrb[0].mxu0
          %v4029 = vadd.f32 %v3868, %v4028
          %v4030 = vpop.f32.mrb[0].mxu0
          %v4031 = vpop.f32.mrb[0].mxu0
          %v4032 = vadd.f32 %v3871, %v4031
          %v4033 = vpop.f32.mrb[0].mxu0
          %4034 = vmatprep.mubr.bf16.mxu0 0
          %4035 = vmatmul.mubr.bf16.gmra.mrb[0].mxu0 %v3510
          %v4036 = vpop.f32.mrb[0].mxu0
          %v4037 = vadd.f32 %v3876, %v4036
          %v4038 = vpop.f32.mrb[0].mxu0
          %v4039 = vpop.f32.mrb[0].mxu0
          %v4040 = vadd.f32 %v3879, %v4039
          %v4041 = vpop.f32.mrb[0].mxu0
          %4042 = vmatprep.mubr.bf16.mxu0 0
          %4043 = vmatmul.mubr.bf16.gmra.mrb[0].mxu0 %v3513
          %v4044 = vpop.f32.mrb[0].mxu0
          %v4045 = vadd.f32 %v3884, %v4044
          %v4046 = vpop.f32.mrb[0].mxu0
          %v4047 = vpop.f32.mrb[0].mxu0
          %v4048 = vadd.f32 %v3887, %v4047
          %v4049 = vpop.f32.mrb[0].mxu0
          %4050 = vmatprep.mubr.bf16.mxu0 0
          %4051 = vmatmul.mubr.bf16.gmra.mrb[0].mxu0 %v3516
          %v4052 = vpop.f32.mrb[0].mxu0
          %v4053 = vadd.f32 %v3892, %v4052
          %v4054 = vpop.f32.mrb[0].mxu0
          %v4055 = vpop.f32.mrb[0].mxu0
          %v4056 = vadd.f32 %v3895, %v4055
          %v4057 = vpop.f32.mrb[0].mxu0
          %4058 = vmatprep.mubr.bf16.mxu0 0
          %4059 = vmatmul.mubr.bf16.gmra.mrb[0].mxu0 %v3519
          %v4060 = vpop.f32.mrb[0].mxu0
          %v4061 = vadd.f32 %v3900, %v4060
          %v4062 = vpop.f32.mrb[0].mxu0
          %v4063 = vpop.f32.mrb[0].mxu0
          %v4064 = vadd.f32 %v3903, %v4063
          %v4065 = vpop.f32.mrb[0].mxu0
          %4066 = vdwg.mxu0
          %v4067 = vadd.f32 %v3520, %v3941
          %v4068 = vadd.f32 %v3521, %v3944
          %v4069 = vadd.f32 %v3522, %v3949
          %v4070 = vadd.f32 %v3523, %v3952
          %v4071 = vadd.f32 %v3524, %v3957
          %v4072 = vadd.f32 %v3525, %v3960
          %v4073 = vadd.f32 %v3526, %v3965
          %v4074 = vadd.f32 %v3527, %v3968
          %v4075 = vadd.f32 %v3528, %v3973
          %v4076 = vadd.f32 %v3529, %v3976
          %v4077 = vadd.f32 %v3530, %v3981
          %v4078 = vadd.f32 %v3531, %v3984
          %v4079 = vadd.f32 %v3532, %v3989
          %v4080 = vadd.f32 %v3533, %v3992
          %v4081 = vadd.f32 %v3534, %v3997
          %v4082 = vadd.f32 %v3535, %v4000
          %v4083 = vadd.f32 %v3536, %v4005
          %v4084 = vadd.f32 %v3537, %v4008
          %v4085 = vadd.f32 %v3538, %v4013
          %v4086 = vadd.f32 %v3539, %v4016
          %v4087 = vadd.f32 %v3540, %v4021
          %v4088 = vadd.f32 %v3541, %v4024
          %v4089 = vadd.f32 %v3542, %v4029
          %v4090 = vadd.f32 %v3543, %v4032
          %v4091 = vadd.f32 %v3544, %v4037
          %v4092 = vadd.f32 %v3545, %v4040
          %v4093 = vadd.f32 %v3546, %v4045
          %v4094 = vadd.f32 %v3547, %v4048
          %v4095 = vadd.f32 %v3548, %v4053
          %v4096 = vadd.f32 %v3549, %v4056
          %v4097 = vadd.f32 %v3550, %v4061
          %v4098 = vadd.f32 %v3551, %v4064
          %4099 = vst [vmem:[#allocation2] sm:$0xff] %v4067
          %4100 = vst [vmem:[#allocation2 + $0x8] sm:$0xff] %v4068
          %4101 = vst [vmem:[#allocation2 + $0x10] sm:$0xff] %v4069
          %4102 = vst [vmem:[#allocation2 + $0x18] sm:$0xff] %v4070
          %4103 = vst [vmem:[#allocation2 + $0x20] sm:$0xff] %v4071
          %4104 = vst [vmem:[#allocation2 + $0x28] sm:$0xff] %v4072
          %4105 = vst [vmem:[#allocation2 + $0x30] sm:$0xff] %v4073
          %4106 = vst [vmem:[#allocation2 + $0x38] sm:$0xff] %v4074
          %4107 = vst [vmem:[#allocation2 + $0x40] sm:$0xff] %v4075
          %4108 = vst [vmem:[#allocation2 + $0x48] sm:$0xff] %v4076
          %4109 = vst [vmem:[#allocation2 + $0x50] sm:$0xff] %v4077
          %4110 = vst [vmem:[#allocation2 + $0x58] sm:$0xff] %v4078
          %4111 = vst [vmem:[#allocation2 + $0x60] sm:$0xff] %v4079
          %4112 = vst [vmem:[#allocation2 + $0x68] sm:$0xff] %v4080
          %4113 = vst [vmem:[#allocation2 + $0x70] sm:$0xff] %v4081
          %4114 = vst [vmem:[#allocation2 + $0x78] sm:$0xff] %v4082
          %4115 = vst [vmem:[#allocation2 + $0x80] sm:$0xff] %v4083
          %4116 = vst [vmem:[#allocation2 + $0x88] sm:$0xff] %v4084
          %4117 = vst [vmem:[#allocation2 + $0x90] sm:$0xff] %v4085
          %4118 = vst [vmem:[#allocation2 + $0x98] sm:$0xff] %v4086
          %4119 = vst [vmem:[#allocation2 + $0xa0] sm:$0xff] %v4087
          %4120 = vst [vmem:[#allocation2 + $0xa8] sm:$0xff] %v4088
          %4121 = vst [vmem:[#allocation2 + $0xb0] sm:$0xff] %v4089
          %4122 = vst [vmem:[#allocation2 + $0xb8] sm:$0xff] %v4090
          %4123 = vst [vmem:[#allocation2 + $0xc0] sm:$0xff] %v4091
          %4124 = vst [vmem:[#allocation2 + $0xc8] sm:$0xff] %v4092
          %4125 = vst [vmem:[#allocation2 + $0xd0] sm:$0xff] %v4093
          %4126 = vst [vmem:[#allocation2 + $0xd8] sm:$0xff] %v4094
          %4127 = vst [vmem:[#allocation2 + $0xe0] sm:$0xff] %v4095
          %4128 = vst [vmem:[#allocation2 + $0xe8] sm:$0xff] %v4096
          %4129 = vst [vmem:[#allocation2 + $0xf0] sm:$0xff] %v4097
          %4130 = vst [vmem:[#allocation2 + $0xf8] sm:$0xff] %v4098
        $region60: #{fused_aspp_convs.1} parent=35 // pred_fallthru
          _
        %p4131 = scmp.eq.s32.totalorder %s31, 2
        // Predicated region
        $region61: #{fused_aspp_convs.1} parent=35 // pred_check
          %p4132 = pneg %p4131
        $region62: #{fused_aspp_convs.1} parent=35 // pred_check_branch
          %4134 = sbr.rel (%p4132) target = $region64
        $region63: #{fused_aspp_convs.1} parent=35 // pred_region
          %v4135 = vld [vmem:[%s355] sm:$0xe]
          %v4136 = vld [vmem:[%s355 + $0x4] sm:$0xf]
          %v4137 = vld [vmem:[%s355 + $0x8] sm:$0x1]
          %v4138 = vld [vmem:[%s355 + $0x10] sm:$0xe]
          %v4139 = vld [vmem:[%s355 + $0x14] sm:$0xf]
          %v4140 = vld [vmem:[%s355 + $0x18] sm:$0x1]
          %v4141 = vld [vmem:[%s355 + $0x20] sm:$0xe]
          %v4142 = vld [vmem:[%s355 + $0x24] sm:$0xf]
          %v4143 = vld [vmem:[%s355 + $0x28] sm:$0x1]
          %v4144 = vld [vmem:[%s355 + $0x30] sm:$0xe]
          %v4145 = vld [vmem:[%s355 + $0x34] sm:$0xf]
          %v4146 = vld [vmem:[%s355 + $0x38] sm:$0x1]
          %v4147 = vld [vmem:[%s355 + $0x40] sm:$0xe]
          %v4148 = vld [vmem:[%s355 + $0x44] sm:$0xf]
          %v4149 = vld [vmem:[%s355 + $0x48] sm:$0x1]
          %v4150 = vld [vmem:[%s355 + $0x50] sm:$0xe]
          %v4151 = vld [vmem:[%s355 + $0x54] sm:$0xf]
          %v4152 = vld [vmem:[%s355 + $0x58] sm:$0x1]
          %v4153 = vld [vmem:[%s355 + $0x60] sm:$0xe]
          %v4154 = vld [vmem:[%s355 + $0x64] sm:$0xf]
          %v4155 = vld [vmem:[%s355 + $0x68] sm:$0x1]
          %v4156 = vld [vmem:[%s355 + $0x70] sm:$0xe]
          %v4157 = vld [vmem:[%s355 + $0x74] sm:$0xf]
          %v4158 = vld [vmem:[%s355 + $0x78] sm:$0x1]
          %v4159 = vld [vmem:[%s355 + $0x80] sm:$0xe]
          %v4160 = vld [vmem:[%s355 + $0x84] sm:$0xf]
          %v4161 = vld [vmem:[%s355 + $0x88] sm:$0x1]
          %v4162 = vld [vmem:[%s355 + $0x90] sm:$0xe]
          %v4163 = vld [vmem:[%s355 + $0x94] sm:$0xf]
          %v4164 = vld [vmem:[%s355 + $0x98] sm:$0x1]
          %v4165 = vld [vmem:[%s355 + $0xa0] sm:$0xe]
          %v4166 = vld [vmem:[%s355 + $0xa4] sm:$0xf]
          %v4167 = vld [vmem:[%s355 + $0xa8] sm:$0x1]
          %v4168 = vld [vmem:[%s355 + $0xb0] sm:$0xe]
          %v4169 = vld [vmem:[%s355 + $0xb4] sm:$0xf]
          %v4170 = vld [vmem:[%s355 + $0xb8] sm:$0x1]
          %v4171 = vld [vmem:[%s355 + $0xc0] sm:$0xe]
          %v4172 = vld [vmem:[%s355 + $0xc4] sm:$0xf]
          %v4173 = vld [vmem:[%s355 + $0xc8] sm:$0x1]
          %v4174 = vld [vmem:[%s355 + $0xd0] sm:$0xe]
          %v4175 = vld [vmem:[%s355 + $0xd4] sm:$0xf]
          %v4176 = vld [vmem:[%s355 + $0xd8] sm:$0x1]
          %v4177 = vld [vmem:[%s355 + $0xe0] sm:$0xe]
          %v4178 = vld [vmem:[%s355 + $0xe4] sm:$0xf]
          %v4179 = vld [vmem:[%s355 + $0xe8] sm:$0x1]
          %v4180 = vld [vmem:[%s355 + $0xf0] sm:$0xe]
          %v4181 = vld [vmem:[%s355 + $0xf4] sm:$0xf]
          %v4182 = vld [vmem:[%s355 + $0xf8] sm:$0x1]
          %v4183 = vld [vmem:[%s355 + $0x100] sm:$0xe]
          %v4184 = vld [vmem:[%s355 + $0x104] sm:$0xf]
          %v4185 = vld [vmem:[%s355 + $0x108] sm:$0x1]
          %v4186 = vld [vmem:[%s355 + $0x110] sm:$0xe]
          %v4187 = vld [vmem:[%s355 + $0x114] sm:$0xf]
          %v4188 = vld [vmem:[%s355 + $0x118] sm:$0x1]
          %v4189 = vld [vmem:[%s355 + $0x120] sm:$0xe]
          %v4190 = vld [vmem:[%s355 + $0x124] sm:$0xf]
          %v4191 = vld [vmem:[%s355 + $0x128] sm:$0x1]
          %v4192 = vld [vmem:[%s355 + $0x130] sm:$0xe]
          %v4193 = vld [vmem:[%s355 + $0x134] sm:$0xf]
          %v4194 = vld [vmem:[%s355 + $0x138] sm:$0x1]
          %v4195 = vld [vmem:[%s355 + $0x140] sm:$0xe]
          %v4196 = vld [vmem:[%s355 + $0x144] sm:$0xf]
          %v4197 = vld [vmem:[%s355 + $0x148] sm:$0x1]
          %v4198 = vld [vmem:[%s355 + $0x150] sm:$0xe]
          %v4199 = vld [vmem:[%s355 + $0x154] sm:$0xf]
          %v4200 = vld [vmem:[%s355 + $0x158] sm:$0x1]
          %v4201 = vld [vmem:[%s355 + $0x160] sm:$0xe]
          %v4202 = vld [vmem:[%s355 + $0x164] sm:$0xf]
          %v4203 = vld [vmem:[%s355 + $0x168] sm:$0x1]
          %v4204 = vld [vmem:[%s355 + $0x170] sm:$0xe]
          %v4205 = vld [vmem:[%s355 + $0x174] sm:$0xf]
          %v4206 = vld [vmem:[%s355 + $0x178] sm:$0x1]
          %v4207 = vld [vmem:[%s355 + $0x180] sm:$0xe]
          %v4208 = vld [vmem:[%s355 + $0x184] sm:$0xf]
          %v4209 = vld [vmem:[%s355 + $0x188] sm:$0x1]
          %v4210 = vld [vmem:[%s355 + $0x190] sm:$0xe]
          %v4211 = vld [vmem:[%s355 + $0x194] sm:$0xf]
          %v4212 = vld [vmem:[%s355 + $0x198] sm:$0x1]
          %v4213 = vld [vmem:[%s355 + $0x1a0] sm:$0xe]
          %v4214 = vld [vmem:[%s355 + $0x1a4] sm:$0xf]
          %v4215 = vld [vmem:[%s355 + $0x1a8] sm:$0x1]
          %v4216 = vld [vmem:[%s355 + $0x1b0] sm:$0xe]
          %v4217 = vld [vmem:[%s355 + $0x1b4] sm:$0xf]
          %v4218 = vld [vmem:[%s355 + $0x1b8] sm:$0x1]
          %v4303 = vunpack.c.l.b16 %v4135
          %v4304 = vunpack.c.l.b16 %v4136
          %v4305 = vunpack.c.l.b16 %v4137
          %v4306 = vunpack.c.l.b16 %v4138
          %v4307 = vunpack.c.l.b16 %v4139
          %v4308 = vunpack.c.l.b16 %v4140
          %v4309 = vunpack.c.l.b16 %v4141
          %v4310 = vunpack.c.l.b16 %v4142
          %v4311 = vunpack.c.l.b16 %v4143
          %v4312 = vunpack.c.l.b16 %v4144
          %v4313 = vunpack.c.l.b16 %v4145
          %v4314 = vunpack.c.l.b16 %v4146
          %v4315 = vunpack.c.l.b16 %v4147
          %v4316 = vunpack.c.l.b16 %v4148
          %v4317 = vunpack.c.l.b16 %v4149
          %v4318 = vunpack.c.l.b16 %v4150
          %v4319 = vunpack.c.l.b16 %v4151
          %v4320 = vunpack.c.l.b16 %v4152
          %v4321 = vunpack.c.l.b16 %v4153
          %v4322 = vunpack.c.l.b16 %v4154
          %v4323 = vunpack.c.l.b16 %v4155
          %v4324 = vunpack.c.l.b16 %v4156
          %v4325 = vunpack.c.l.b16 %v4157
          %v4326 = vunpack.c.l.b16 %v4158
          %v4327 = vunpack.c.l.b16 %v4159
          %v4328 = vunpack.c.l.b16 %v4160
          %v4329 = vunpack.c.l.b16 %v4161
          %v4330 = vunpack.c.l.b16 %v4162
          %v4331 = vunpack.c.l.b16 %v4163
          %v4332 = vunpack.c.l.b16 %v4164
          %v4333 = vunpack.c.l.b16 %v4165
          %v4334 = vunpack.c.l.b16 %v4166
          %v4335 = vunpack.c.l.b16 %v4167
          %v4336 = vunpack.c.l.b16 %v4168
          %v4337 = vunpack.c.l.b16 %v4169
          %v4338 = vunpack.c.l.b16 %v4170
          %v4339 = vunpack.c.l.b16 %v4171
          %v4340 = vunpack.c.l.b16 %v4172
          %v4341 = vunpack.c.l.b16 %v4173
          %v4342 = vunpack.c.l.b16 %v4174
          %v4343 = vunpack.c.l.b16 %v4175
          %v4344 = vunpack.c.l.b16 %v4176
          %v4345 = vunpack.c.l.b16 %v4177
          %v4346 = vunpack.c.l.b16 %v4178
          %v4347 = vunpack.c.l.b16 %v4179
          %v4348 = vunpack.c.l.b16 %v4180
          %v4349 = vunpack.c.l.b16 %v4181
          %v4350 = vunpack.c.l.b16 %v4182
          %v4351 = vunpack.c.l.b16 %v4183
          %v4352 = vunpack.c.l.b16 %v4184
          %v4353 = vunpack.c.l.b16 %v4185
          %v4354 = vunpack.c.l.b16 %v4186
          %v4355 = vunpack.c.l.b16 %v4187
          %v4356 = vunpack.c.l.b16 %v4188
          %v4357 = vunpack.c.l.b16 %v4189
          %v4358 = vunpack.c.l.b16 %v4190
          %v4359 = vunpack.c.l.b16 %v4191
          %v4360 = vunpack.c.l.b16 %v4192
          %v4361 = vunpack.c.l.b16 %v4193
          %v4362 = vunpack.c.l.b16 %v4194
          %v4363 = vunpack.c.l.b16 %v4195
          %v4364 = vunpack.c.l.b16 %v4196
          %v4365 = vunpack.c.l.b16 %v4197
          %v4366 = vunpack.c.l.b16 %v4198
          %v4367 = vunpack.c.l.b16 %v4199
          %v4368 = vunpack.c.l.b16 %v4200
          %v4369 = vunpack.c.l.b16 %v4201
          %v4370 = vunpack.c.l.b16 %v4202
          %v4371 = vunpack.c.l.b16 %v4203
          %v4372 = vunpack.c.l.b16 %v4204
          %v4373 = vunpack.c.l.b16 %v4205
          %v4374 = vunpack.c.l.b16 %v4206
          %v4375 = vunpack.c.l.b16 %v4207
          %v4376 = vunpack.c.l.b16 %v4208
          %v4377 = vunpack.c.l.b16 %v4209
          %v4378 = vunpack.c.l.b16 %v4210
          %v4379 = vunpack.c.l.b16 %v4211
          %v4380 = vunpack.c.l.b16 %v4212
          %v4381 = vunpack.c.l.b16 %v4213
          %v4382 = vunpack.c.l.b16 %v4214
          %v4383 = vunpack.c.l.b16 %v4215
          %v4384 = vunpack.c.l.b16 %v4216
          %v4385 = vunpack.c.l.b16 %v4217
          %v4386 = vunpack.c.l.b16 %v4218
          %v4387 = vpack.c.b16 %v4304, %v4303
          %v4388 = vpack.c.b16 %v4305, %v4305
          %v4389 = vpack.c.b16 %v4307, %v4306
          %v4390 = vpack.c.b16 %v4308, %v4308
          %v4391 = vpack.c.b16 %v4310, %v4309
          %v4392 = vpack.c.b16 %v4311, %v4311
          %v4393 = vpack.c.b16 %v4313, %v4312
          %v4394 = vpack.c.b16 %v4314, %v4314
          %v4395 = vpack.c.b16 %v4316, %v4315
          %v4396 = vpack.c.b16 %v4317, %v4317
          %v4397 = vpack.c.b16 %v4319, %v4318
          %v4398 = vpack.c.b16 %v4320, %v4320
          %v4399 = vpack.c.b16 %v4322, %v4321
          %v4400 = vpack.c.b16 %v4323, %v4323
          %v4401 = vpack.c.b16 %v4325, %v4324
          %v4402 = vpack.c.b16 %v4326, %v4326
          %v4403 = vpack.c.b16 %v4328, %v4327
          %v4404 = vpack.c.b16 %v4329, %v4329
          %v4405 = vpack.c.b16 %v4331, %v4330
          %v4406 = vpack.c.b16 %v4332, %v4332
          %v4407 = vpack.c.b16 %v4334, %v4333
          %v4408 = vpack.c.b16 %v4335, %v4335
          %v4409 = vpack.c.b16 %v4337, %v4336
          %v4410 = vpack.c.b16 %v4338, %v4338
          %v4411 = vpack.c.b16 %v4340, %v4339
          %v4412 = vpack.c.b16 %v4341, %v4341
          %v4413 = vpack.c.b16 %v4343, %v4342
          %v4414 = vpack.c.b16 %v4344, %v4344
          %v4415 = vpack.c.b16 %v4346, %v4345
          %v4416 = vpack.c.b16 %v4347, %v4347
          %v4417 = vpack.c.b16 %v4349, %v4348
          %v4418 = vpack.c.b16 %v4350, %v4350
          %v4419 = vpack.c.b16 %v4352, %v4351
          %v4420 = vpack.c.b16 %v4353, %v4353
          %v4421 = vpack.c.b16 %v4355, %v4354
          %v4422 = vpack.c.b16 %v4356, %v4356
          %v4423 = vpack.c.b16 %v4358, %v4357
          %v4424 = vpack.c.b16 %v4359, %v4359
          %v4425 = vpack.c.b16 %v4361, %v4360
          %v4426 = vpack.c.b16 %v4362, %v4362
          %v4427 = vpack.c.b16 %v4364, %v4363
          %v4428 = vpack.c.b16 %v4365, %v4365
          %v4429 = vpack.c.b16 %v4367, %v4366
          %v4430 = vpack.c.b16 %v4368, %v4368
          %v4431 = vpack.c.b16 %v4370, %v4369
          %v4432 = vpack.c.b16 %v4371, %v4371
          %v4433 = vpack.c.b16 %v4373, %v4372
          %v4434 = vpack.c.b16 %v4374, %v4374
          %v4435 = vpack.c.b16 %v4376, %v4375
          %v4436 = vpack.c.b16 %v4377, %v4377
          %v4437 = vpack.c.b16 %v4379, %v4378
          %v4438 = vpack.c.b16 %v4380, %v4380
          %v4439 = vpack.c.b16 %v4382, %v4381
          %v4440 = vpack.c.b16 %v4383, %v4383
          %v4441 = vpack.c.b16 %v4385, %v4384
          %v4442 = vpack.c.b16 %v4386, %v4386
          %vm4443 = vcmask 1046528
          %v4444 = vrot.slane %v4387, 1
          %v4445 = vrot.slane %v4388, 1
          %v4446 = vsel %vm4443, %v4444, %v4445
          %v4447 = vrot.slane %v4389, 1
          %v4448 = vrot.slane %v4390, 1
          %v4449 = vsel %vm4443, %v4447, %v4448
          %v4450 = vrot.slane %v4391, 1
          %v4451 = vrot.slane %v4392, 1
          %v4452 = vsel %vm4443, %v4450, %v4451
          %v4453 = vrot.slane %v4393, 1
          %v4454 = vrot.slane %v4394, 1
          %v4455 = vsel %vm4443, %v4453, %v4454
          %v4456 = vrot.slane %v4395, 1
          %v4457 = vrot.slane %v4396, 1
          %v4458 = vsel %vm4443, %v4456, %v4457
          %v4459 = vrot.slane %v4397, 1
          %v4460 = vrot.slane %v4398, 1
          %v4461 = vsel %vm4443, %v4459, %v4460
          %v4462 = vrot.slane %v4399, 1
          %v4463 = vrot.slane %v4400, 1
          %v4464 = vsel %vm4443, %v4462, %v4463
          %v4465 = vrot.slane %v4401, 1
          %v4466 = vrot.slane %v4402, 1
          %v4467 = vsel %vm4443, %v4465, %v4466
          %v4468 = vrot.slane %v4403, 1
          %v4469 = vrot.slane %v4404, 1
          %v4470 = vsel %vm4443, %v4468, %v4469
          %v4471 = vrot.slane %v4405, 1
          %v4472 = vrot.slane %v4406, 1
          %v4473 = vsel %vm4443, %v4471, %v4472
          %v4474 = vrot.slane %v4407, 1
          %v4475 = vrot.slane %v4408, 1
          %v4476 = vsel %vm4443, %v4474, %v4475
          %v4477 = vrot.slane %v4409, 1
          %v4478 = vrot.slane %v4410, 1
          %v4479 = vsel %vm4443, %v4477, %v4478
          %v4480 = vrot.slane %v4411, 1
          %v4481 = vrot.slane %v4412, 1
          %v4482 = vsel %vm4443, %v4480, %v4481
          %v4483 = vrot.slane %v4413, 1
          %v4484 = vrot.slane %v4414, 1
          %v4485 = vsel %vm4443, %v4483, %v4484
          %v4486 = vrot.slane %v4415, 1
          %v4487 = vrot.slane %v4416, 1
          %v4488 = vsel %vm4443, %v4486, %v4487
          %v4489 = vrot.slane %v4417, 1
          %v4490 = vrot.slane %v4418, 1
          %v4491 = vsel %vm4443, %v4489, %v4490
          %v4492 = vrot.slane %v4419, 1
          %v4493 = vrot.slane %v4420, 1
          %v4494 = vsel %vm4443, %v4492, %v4493
          %v4495 = vrot.slane %v4421, 1
          %v4496 = vrot.slane %v4422, 1
          %v4497 = vsel %vm4443, %v4495, %v4496
          %v4498 = vrot.slane %v4423, 1
          %v4499 = vrot.slane %v4424, 1
          %v4500 = vsel %vm4443, %v4498, %v4499
          %v4501 = vrot.slane %v4425, 1
          %v4502 = vrot.slane %v4426, 1
          %v4503 = vsel %vm4443, %v4501, %v4502
          %v4504 = vrot.slane %v4427, 1
          %v4505 = vrot.slane %v4428, 1
          %v4506 = vsel %vm4443, %v4504, %v4505
          %v4507 = vrot.slane %v4429, 1
          %v4508 = vrot.slane %v4430, 1
          %v4509 = vsel %vm4443, %v4507, %v4508
          %v4510 = vrot.slane %v4431, 1
          %v4511 = vrot.slane %v4432, 1
          %v4512 = vsel %vm4443, %v4510, %v4511
          %v4513 = vrot.slane %v4433, 1
          %v4514 = vrot.slane %v4434, 1
          %v4515 = vsel %vm4443, %v4513, %v4514
          %v4516 = vrot.slane %v4435, 1
          %v4517 = vrot.slane %v4436, 1
          %v4518 = vsel %vm4443, %v4516, %v4517
          %v4519 = vrot.slane %v4437, 1
          %v4520 = vrot.slane %v4438, 1
          %v4521 = vsel %vm4443, %v4519, %v4520
          %v4522 = vrot.slane %v4439, 1
          %v4523 = vrot.slane %v4440, 1
          %v4524 = vsel %vm4443, %v4522, %v4523
          %v4525 = vrot.slane %v4441, 1
          %v4526 = vrot.slane %v4442, 1
          %v4527 = vsel %vm4443, %v4525, %v4526
          %4556 = vst [vmem:[#allocation3] sm:$0xff] %v4446
          %4557 = vst [vmem:[#allocation3 + $0x18] sm:$0xff] %v4449
          %4558 = vst [vmem:[#allocation3 + $0x30] sm:$0xff] %v4452
          %4559 = vst [vmem:[#allocation3 + $0x48] sm:$0xff] %v4455
          %4560 = vst [vmem:[#allocation3 + $0x60] sm:$0xff] %v4458
          %4561 = vst [vmem:[#allocation3 + $0x78] sm:$0xff] %v4461
          %4562 = vst [vmem:[#allocation3 + $0x90] sm:$0xff] %v4464
          %4563 = vst [vmem:[#allocation3 + $0xa8] sm:$0xff] %v4467
          %4564 = vst [vmem:[#allocation3 + $0xc0] sm:$0xff] %v4470
          %4565 = vst [vmem:[#allocation3 + $0xd8] sm:$0xff] %v4473
          %4566 = vst [vmem:[#allocation3 + $0xf0] sm:$0xff] %v4476
          %4567 = vst [vmem:[#allocation3 + $0x108] sm:$0xff] %v4479
          %4568 = vst [vmem:[#allocation3 + $0x120] sm:$0xff] %v4482
          %4569 = vst [vmem:[#allocation3 + $0x138] sm:$0xff] %v4485
          %4570 = vst [vmem:[#allocation3 + $0x150] sm:$0xff] %v4488
          %4571 = vst [vmem:[#allocation3 + $0x168] sm:$0xff] %v4491
          %4572 = vst [vmem:[#allocation3 + $0x180] sm:$0xff] %v4494
          %4573 = vst [vmem:[#allocation3 + $0x198] sm:$0xff] %v4497
          %4574 = vst [vmem:[#allocation3 + $0x1b0] sm:$0xff] %v4500
          %4575 = vst [vmem:[#allocation3 + $0x1c8] sm:$0xff] %v4503
          %4576 = vst [vmem:[#allocation3 + $0x1e0] sm:$0xff] %v4506
          %4577 = vst [vmem:[#allocation3 + $0x1f8] sm:$0xff] %v4509
          %4578 = vst [vmem:[#allocation3 + $0x210] sm:$0xff] %v4512
          %4579 = vst [vmem:[#allocation3 + $0x228] sm:$0xff] %v4515
          %4580 = vst [vmem:[#allocation3 + $0x240] sm:$0xff] %v4518
          %4581 = vst [vmem:[#allocation3 + $0x258] sm:$0xff] %v4521
          %4582 = vst [vmem:[#allocation3 + $0x270] sm:$0xff] %v4524
          %4583 = vst [vmem:[#allocation3 + $0x288] sm:$0xff] %v4527
          %v4584 = vld [vmem:[%s355] sm:$0x8]
          %v4585 = vld [vmem:[%s355 + $0x4] sm:$0xf]
          %v4586 = vld [vmem:[%s355 + $0x8] sm:$0x7]
          %v4587 = vld [vmem:[%s355 + $0x10] sm:$0x8]
          %v4588 = vld [vmem:[%s355 + $0x14] sm:$0xf]
          %v4589 = vld [vmem:[%s355 + $0x18] sm:$0x7]
          %v4590 = vld [vmem:[%s355 + $0x20] sm:$0x8]
          %v4591 = vld [vmem:[%s355 + $0x24] sm:$0xf]
          %v4592 = vld [vmem:[%s355 + $0x28] sm:$0x7]
          %v4593 = vld [vmem:[%s355 + $0x30] sm:$0x8]
          %v4594 = vld [vmem:[%s355 + $0x34] sm:$0xf]
          %v4595 = vld [vmem:[%s355 + $0x38] sm:$0x7]
          %v4596 = vld [vmem:[%s355 + $0x40] sm:$0x8]
          %v4597 = vld [vmem:[%s355 + $0x44] sm:$0xf]
          %v4598 = vld [vmem:[%s355 + $0x48] sm:$0x7]
          %v4599 = vld [vmem:[%s355 + $0x50] sm:$0x8]
          %v4600 = vld [vmem:[%s355 + $0x54] sm:$0xf]
          %v4601 = vld [vmem:[%s355 + $0x58] sm:$0x7]
          %v4602 = vld [vmem:[%s355 + $0x60] sm:$0x8]
          %v4603 = vld [vmem:[%s355 + $0x64] sm:$0xf]
          %v4604 = vld [vmem:[%s355 + $0x68] sm:$0x7]
          %v4605 = vld [vmem:[%s355 + $0x70] sm:$0x8]
          %v4606 = vld [vmem:[%s355 + $0x74] sm:$0xf]
          %v4607 = vld [vmem:[%s355 + $0x78] sm:$0x7]
          %v4608 = vld [vmem:[%s355 + $0x80] sm:$0x8]
          %v4609 = vld [vmem:[%s355 + $0x84] sm:$0xf]
          %v4610 = vld [vmem:[%s355 + $0x88] sm:$0x7]
          %v4611 = vld [vmem:[%s355 + $0x90] sm:$0x8]
          %v4612 = vld [vmem:[%s355 + $0x94] sm:$0xf]
          %v4613 = vld [vmem:[%s355 + $0x98] sm:$0x7]
          %v4614 = vld [vmem:[%s355 + $0xa0] sm:$0x8]
          %v4615 = vld [vmem:[%s355 + $0xa4] sm:$0xf]
          %v4616 = vld [vmem:[%s355 + $0xa8] sm:$0x7]
          %v4617 = vld [vmem:[%s355 + $0xb0] sm:$0x8]
          %v4618 = vld [vmem:[%s355 + $0xb4] sm:$0xf]
          %v4619 = vld [vmem:[%s355 + $0xb8] sm:$0x7]
          %v4620 = vld [vmem:[%s355 + $0xc0] sm:$0x8]
          %v4621 = vld [vmem:[%s355 + $0xc4] sm:$0xf]
          %v4622 = vld [vmem:[%s355 + $0xc8] sm:$0x7]
          %v4623 = vld [vmem:[%s355 + $0xd0] sm:$0x8]
          %v4624 = vld [vmem:[%s355 + $0xd4] sm:$0xf]
          %v4625 = vld [vmem:[%s355 + $0xd8] sm:$0x7]
          %v4626 = vld [vmem:[%s355 + $0xe0] sm:$0x8]
          %v4627 = vld [vmem:[%s355 + $0xe4] sm:$0xf]
          %v4628 = vld [vmem:[%s355 + $0xe8] sm:$0x7]
          %v4629 = vld [vmem:[%s355 + $0xf0] sm:$0x8]
          %v4630 = vld [vmem:[%s355 + $0xf4] sm:$0xf]
          %v4631 = vld [vmem:[%s355 + $0xf8] sm:$0x7]
          %v4632 = vld [vmem:[%s355 + $0x100] sm:$0x8]
          %v4633 = vld [vmem:[%s355 + $0x104] sm:$0xf]
          %v4634 = vld [vmem:[%s355 + $0x108] sm:$0x7]
          %v4635 = vld [vmem:[%s355 + $0x110] sm:$0x8]
          %v4636 = vld [vmem:[%s355 + $0x114] sm:$0xf]
          %v4637 = vld [vmem:[%s355 + $0x118] sm:$0x7]
          %v4638 = vld [vmem:[%s355 + $0x120] sm:$0x8]
          %v4639 = vld [vmem:[%s355 + $0x124] sm:$0xf]
          %v4640 = vld [vmem:[%s355 + $0x128] sm:$0x7]
          %v4641 = vld [vmem:[%s355 + $0x130] sm:$0x8]
          %v4642 = vld [vmem:[%s355 + $0x134] sm:$0xf]
          %v4643 = vld [vmem:[%s355 + $0x138] sm:$0x7]
          %v4644 = vld [vmem:[%s355 + $0x140] sm:$0x8]
          %v4645 = vld [vmem:[%s355 + $0x144] sm:$0xf]
          %v4646 = vld [vmem:[%s355 + $0x148] sm:$0x7]
          %v4647 = vld [vmem:[%s355 + $0x150] sm:$0x8]
          %v4648 = vld [vmem:[%s355 + $0x154] sm:$0xf]
          %v4649 = vld [vmem:[%s355 + $0x158] sm:$0x7]
          %v4650 = vld [vmem:[%s355 + $0x160] sm:$0x8]
          %v4651 = vld [vmem:[%s355 + $0x164] sm:$0xf]
          %v4652 = vld [vmem:[%s355 + $0x168] sm:$0x7]
          %v4653 = vld [vmem:[%s355 + $0x170] sm:$0x8]
          %v4654 = vld [vmem:[%s355 + $0x174] sm:$0xf]
          %v4655 = vld [vmem:[%s355 + $0x178] sm:$0x7]
          %v4656 = vld [vmem:[%s355 + $0x180] sm:$0x8]
          %v4657 = vld [vmem:[%s355 + $0x184] sm:$0xf]
          %v4658 = vld [vmem:[%s355 + $0x188] sm:$0x7]
          %v4659 = vld [vmem:[%s355 + $0x190] sm:$0x8]
          %v4660 = vld [vmem:[%s355 + $0x194] sm:$0xf]
          %v4661 = vld [vmem:[%s355 + $0x198] sm:$0x7]
          %v4662 = vld [vmem:[%s355 + $0x1a0] sm:$0x8]
          %v4663 = vld [vmem:[%s355 + $0x1a4] sm:$0xf]
          %v4664 = vld [vmem:[%s355 + $0x1a8] sm:$0x7]
          %v4665 = vld [vmem:[%s355 + $0x1b0] sm:$0x8]
          %v4666 = vld [vmem:[%s355 + $0x1b4] sm:$0xf]
          %v4667 = vld [vmem:[%s355 + $0x1b8] sm:$0x7]
          %v4752 = vunpack.c.l.b16 %v4584
          %v4753 = vunpack.c.l.b16 %v4585
          %v4754 = vunpack.c.l.b16 %v4586
          %v4755 = vunpack.c.l.b16 %v4587
          %v4756 = vunpack.c.l.b16 %v4588
          %v4757 = vunpack.c.l.b16 %v4589
          %v4758 = vunpack.c.l.b16 %v4590
          %v4759 = vunpack.c.l.b16 %v4591
          %v4760 = vunpack.c.l.b16 %v4592
          %v4761 = vunpack.c.l.b16 %v4593
          %v4762 = vunpack.c.l.b16 %v4594
          %v4763 = vunpack.c.l.b16 %v4595
          %v4764 = vunpack.c.l.b16 %v4596
          %v4765 = vunpack.c.l.b16 %v4597
          %v4766 = vunpack.c.l.b16 %v4598
          %v4767 = vunpack.c.l.b16 %v4599
          %v4768 = vunpack.c.l.b16 %v4600
          %v4769 = vunpack.c.l.b16 %v4601
          %v4770 = vunpack.c.l.b16 %v4602
          %v4771 = vunpack.c.l.b16 %v4603
          %v4772 = vunpack.c.l.b16 %v4604
          %v4773 = vunpack.c.l.b16 %v4605
          %v4774 = vunpack.c.l.b16 %v4606
          %v4775 = vunpack.c.l.b16 %v4607
          %v4776 = vunpack.c.l.b16 %v4608
          %v4777 = vunpack.c.l.b16 %v4609
          %v4778 = vunpack.c.l.b16 %v4610
          %v4779 = vunpack.c.l.b16 %v4611
          %v4780 = vunpack.c.l.b16 %v4612
          %v4781 = vunpack.c.l.b16 %v4613
          %v4782 = vunpack.c.l.b16 %v4614
          %v4783 = vunpack.c.l.b16 %v4615
          %v4784 = vunpack.c.l.b16 %v4616
          %v4785 = vunpack.c.l.b16 %v4617
          %v4786 = vunpack.c.l.b16 %v4618
          %v4787 = vunpack.c.l.b16 %v4619
          %v4788 = vunpack.c.l.b16 %v4620
          %v4789 = vunpack.c.l.b16 %v4621
          %v4790 = vunpack.c.l.b16 %v4622
          %v4791 = vunpack.c.l.b16 %v4623
          %v4792 = vunpack.c.l.b16 %v4624
          %v4793 = vunpack.c.l.b16 %v4625
          %v4794 = vunpack.c.l.b16 %v4626
          %v4795 = vunpack.c.l.b16 %v4627
          %v4796 = vunpack.c.l.b16 %v4628
          %v4797 = vunpack.c.l.b16 %v4629
          %v4798 = vunpack.c.l.b16 %v4630
          %v4799 = vunpack.c.l.b16 %v4631
          %v4800 = vunpack.c.l.b16 %v4632
          %v4801 = vunpack.c.l.b16 %v4633
          %v4802 = vunpack.c.l.b16 %v4634
          %v4803 = vunpack.c.l.b16 %v4635
          %v4804 = vunpack.c.l.b16 %v4636
          %v4805 = vunpack.c.l.b16 %v4637
          %v4806 = vunpack.c.l.b16 %v4638
          %v4807 = vunpack.c.l.b16 %v4639
          %v4808 = vunpack.c.l.b16 %v4640
          %v4809 = vunpack.c.l.b16 %v4641
          %v4810 = vunpack.c.l.b16 %v4642
          %v4811 = vunpack.c.l.b16 %v4643
          %v4812 = vunpack.c.l.b16 %v4644
          %v4813 = vunpack.c.l.b16 %v4645
          %v4814 = vunpack.c.l.b16 %v4646
          %v4815 = vunpack.c.l.b16 %v4647
          %v4816 = vunpack.c.l.b16 %v4648
          %v4817 = vunpack.c.l.b16 %v4649
          %v4818 = vunpack.c.l.b16 %v4650
          %v4819 = vunpack.c.l.b16 %v4651
          %v4820 = vunpack.c.l.b16 %v4652
          %v4821 = vunpack.c.l.b16 %v4653
          %v4822 = vunpack.c.l.b16 %v4654
          %v4823 = vunpack.c.l.b16 %v4655
          %v4824 = vunpack.c.l.b16 %v4656
          %v4825 = vunpack.c.l.b16 %v4657
          %v4826 = vunpack.c.l.b16 %v4658
          %v4827 = vunpack.c.l.b16 %v4659
          %v4828 = vunpack.c.l.b16 %v4660
          %v4829 = vunpack.c.l.b16 %v4661
          %v4830 = vunpack.c.l.b16 %v4662
          %v4831 = vunpack.c.l.b16 %v4663
          %v4832 = vunpack.c.l.b16 %v4664
          %v4833 = vunpack.c.l.b16 %v4665
          %v4834 = vunpack.c.l.b16 %v4666
          %v4835 = vunpack.c.l.b16 %v4667
          %v4836 = vpack.c.b16 %v4753, %v4752
          %v4837 = vpack.c.b16 %v4754, %v4754
          %v4838 = vpack.c.b16 %v4756, %v4755
          %v4839 = vpack.c.b16 %v4757, %v4757
          %v4840 = vpack.c.b16 %v4759, %v4758
          %v4841 = vpack.c.b16 %v4760, %v4760
          %v4842 = vpack.c.b16 %v4762, %v4761
          %v4843 = vpack.c.b16 %v4763, %v4763
          %v4844 = vpack.c.b16 %v4765, %v4764
          %v4845 = vpack.c.b16 %v4766, %v4766
          %v4846 = vpack.c.b16 %v4768, %v4767
          %v4847 = vpack.c.b16 %v4769, %v4769
          %v4848 = vpack.c.b16 %v4771, %v4770
          %v4849 = vpack.c.b16 %v4772, %v4772
          %v4850 = vpack.c.b16 %v4774, %v4773
          %v4851 = vpack.c.b16 %v4775, %v4775
          %v4852 = vpack.c.b16 %v4777, %v4776
          %v4853 = vpack.c.b16 %v4778, %v4778
          %v4854 = vpack.c.b16 %v4780, %v4779
          %v4855 = vpack.c.b16 %v4781, %v4781
          %v4856 = vpack.c.b16 %v4783, %v4782
          %v4857 = vpack.c.b16 %v4784, %v4784
          %v4858 = vpack.c.b16 %v4786, %v4785
          %v4859 = vpack.c.b16 %v4787, %v4787
          %v4860 = vpack.c.b16 %v4789, %v4788
          %v4861 = vpack.c.b16 %v4790, %v4790
          %v4862 = vpack.c.b16 %v4792, %v4791
          %v4863 = vpack.c.b16 %v4793, %v4793
          %v4864 = vpack.c.b16 %v4795, %v4794
          %v4865 = vpack.c.b16 %v4796, %v4796
          %v4866 = vpack.c.b16 %v4798, %v4797
          %v4867 = vpack.c.b16 %v4799, %v4799
          %v4868 = vpack.c.b16 %v4801, %v4800
          %v4869 = vpack.c.b16 %v4802, %v4802
          %v4870 = vpack.c.b16 %v4804, %v4803
          %v4871 = vpack.c.b16 %v4805, %v4805
          %v4872 = vpack.c.b16 %v4807, %v4806
          %v4873 = vpack.c.b16 %v4808, %v4808
          %v4874 = vpack.c.b16 %v4810, %v4809
          %v4875 = vpack.c.b16 %v4811, %v4811
          %v4876 = vpack.c.b16 %v4813, %v4812
          %v4877 = vpack.c.b16 %v4814, %v4814
          %v4878 = vpack.c.b16 %v4816, %v4815
          %v4879 = vpack.c.b16 %v4817, %v4817
          %v4880 = vpack.c.b16 %v4819, %v4818
          %v4881 = vpack.c.b16 %v4820, %v4820
          %v4882 = vpack.c.b16 %v4822, %v4821
          %v4883 = vpack.c.b16 %v4823, %v4823
          %v4884 = vpack.c.b16 %v4825, %v4824
          %v4885 = vpack.c.b16 %v4826, %v4826
          %v4886 = vpack.c.b16 %v4828, %v4827
          %v4887 = vpack.c.b16 %v4829, %v4829
          %v4888 = vpack.c.b16 %v4831, %v4830
          %v4889 = vpack.c.b16 %v4832, %v4832
          %v4890 = vpack.c.b16 %v4834, %v4833
          %v4891 = vpack.c.b16 %v4835, %v4835
          %vm4892 = vcmask 1044480
          %v4893 = vrot.slane %v4836, 3
          %v4894 = vrot.slane %v4837, 3
          %v4895 = vsel %vm4892, %v4893, %v4894
          %v4896 = vrot.slane %v4838, 3
          %v4897 = vrot.slane %v4839, 3
          %v4898 = vsel %vm4892, %v4896, %v4897
          %v4899 = vrot.slane %v4840, 3
          %v4900 = vrot.slane %v4841, 3
          %v4901 = vsel %vm4892, %v4899, %v4900
          %v4902 = vrot.slane %v4842, 3
          %v4903 = vrot.slane %v4843, 3
          %v4904 = vsel %vm4892, %v4902, %v4903
          %v4905 = vrot.slane %v4844, 3
          %v4906 = vrot.slane %v4845, 3
          %v4907 = vsel %vm4892, %v4905, %v4906
          %v4908 = vrot.slane %v4846, 3
          %v4909 = vrot.slane %v4847, 3
          %v4910 = vsel %vm4892, %v4908, %v4909
          %v4911 = vrot.slane %v4848, 3
          %v4912 = vrot.slane %v4849, 3
          %v4913 = vsel %vm4892, %v4911, %v4912
          %v4914 = vrot.slane %v4850, 3
          %v4915 = vrot.slane %v4851, 3
          %v4916 = vsel %vm4892, %v4914, %v4915
          %v4917 = vrot.slane %v4852, 3
          %v4918 = vrot.slane %v4853, 3
          %v4919 = vsel %vm4892, %v4917, %v4918
          %v4920 = vrot.slane %v4854, 3
          %v4921 = vrot.slane %v4855, 3
          %v4922 = vsel %vm4892, %v4920, %v4921
          %v4923 = vrot.slane %v4856, 3
          %v4924 = vrot.slane %v4857, 3
          %v4925 = vsel %vm4892, %v4923, %v4924
          %v4926 = vrot.slane %v4858, 3
          %v4927 = vrot.slane %v4859, 3
          %v4928 = vsel %vm4892, %v4926, %v4927
          %v4929 = vrot.slane %v4860, 3
          %v4930 = vrot.slane %v4861, 3
          %v4931 = vsel %vm4892, %v4929, %v4930
          %v4932 = vrot.slane %v4862, 3
          %v4933 = vrot.slane %v4863, 3
          %v4934 = vsel %vm4892, %v4932, %v4933
          %v4935 = vrot.slane %v4864, 3
          %v4936 = vrot.slane %v4865, 3
          %v4937 = vsel %vm4892, %v4935, %v4936
          %v4938 = vrot.slane %v4866, 3
          %v4939 = vrot.slane %v4867, 3
          %v4940 = vsel %vm4892, %v4938, %v4939
          %v4941 = vrot.slane %v4868, 3
          %v4942 = vrot.slane %v4869, 3
          %v4943 = vsel %vm4892, %v4941, %v4942
          %v4944 = vrot.slane %v4870, 3
          %v4945 = vrot.slane %v4871, 3
          %v4946 = vsel %vm4892, %v4944, %v4945
          %v4947 = vrot.slane %v4872, 3
          %v4948 = vrot.slane %v4873, 3
          %v4949 = vsel %vm4892, %v4947, %v4948
          %v4950 = vrot.slane %v4874, 3
          %v4951 = vrot.slane %v4875, 3
          %v4952 = vsel %vm4892, %v4950, %v4951
          %v4953 = vrot.slane %v4876, 3
          %v4954 = vrot.slane %v4877, 3
          %v4955 = vsel %vm4892, %v4953, %v4954
          %v4956 = vrot.slane %v4878, 3
          %v4957 = vrot.slane %v4879, 3
          %v4958 = vsel %vm4892, %v4956, %v4957
          %v4959 = vrot.slane %v4880, 3
          %v4960 = vrot.slane %v4881, 3
          %v4961 = vsel %vm4892, %v4959, %v4960
          %v4962 = vrot.slane %v4882, 3
          %v4963 = vrot.slane %v4883, 3
          %v4964 = vsel %vm4892, %v4962, %v4963
          %v4965 = vrot.slane %v4884, 3
          %v4966 = vrot.slane %v4885, 3
          %v4967 = vsel %vm4892, %v4965, %v4966
          %v4968 = vrot.slane %v4886, 3
          %v4969 = vrot.slane %v4887, 3
          %v4970 = vsel %vm4892, %v4968, %v4969
          %v4971 = vrot.slane %v4888, 3
          %v4972 = vrot.slane %v4889, 3
          %v4973 = vsel %vm4892, %v4971, %v4972
          %v4974 = vrot.slane %v4890, 3
          %v4975 = vrot.slane %v4891, 3
          %v4976 = vsel %vm4892, %v4974, %v4975
          %5005 = vst [vmem:[#allocation3 + $0x8] sm:$0xff] %v4895
          %5006 = vst [vmem:[#allocation3 + $0x20] sm:$0xff] %v4898
          %5007 = vst [vmem:[#allocation3 + $0x38] sm:$0xff] %v4901
          %5008 = vst [vmem:[#allocation3 + $0x50] sm:$0xff] %v4904
          %5009 = vst [vmem:[#allocation3 + $0x68] sm:$0xff] %v4907
          %5010 = vst [vmem:[#allocation3 + $0x80] sm:$0xff] %v4910
          %5011 = vst [vmem:[#allocation3 + $0x98] sm:$0xff] %v4913
          %5012 = vst [vmem:[#allocation3 + $0xb0] sm:$0xff] %v4916
          %5013 = vst [vmem:[#allocation3 + $0xc8] sm:$0xff] %v4919
          %5014 = vst [vmem:[#allocation3 + $0xe0] sm:$0xff] %v4922
          %5015 = vst [vmem:[#allocation3 + $0xf8] sm:$0xff] %v4925
          %5016 = vst [vmem:[#allocation3 + $0x110] sm:$0xff] %v4928
          %5017 = vst [vmem:[#allocation3 + $0x128] sm:$0xff] %v4931
          %5018 = vst [vmem:[#allocation3 + $0x140] sm:$0xff] %v4934
          %5019 = vst [vmem:[#allocation3 + $0x158] sm:$0xff] %v4937
          %5020 = vst [vmem:[#allocation3 + $0x170] sm:$0xff] %v4940
          %5021 = vst [vmem:[#allocation3 + $0x188] sm:$0xff] %v4943
          %5022 = vst [vmem:[#allocation3 + $0x1a0] sm:$0xff] %v4946
          %5023 = vst [vmem:[#allocation3 + $0x1b8] sm:$0xff] %v4949
          %5024 = vst [vmem:[#allocation3 + $0x1d0] sm:$0xff] %v4952
          %5025 = vst [vmem:[#allocation3 + $0x1e8] sm:$0xff] %v4955
          %5026 = vst [vmem:[#allocation3 + $0x200] sm:$0xff] %v4958
          %5027 = vst [vmem:[#allocation3 + $0x218] sm:$0xff] %v4961
          %5028 = vst [vmem:[#allocation3 + $0x230] sm:$0xff] %v4964
          %5029 = vst [vmem:[#allocation3 + $0x248] sm:$0xff] %v4967
          %5030 = vst [vmem:[#allocation3 + $0x260] sm:$0xff] %v4970
          %5031 = vst [vmem:[#allocation3 + $0x278] sm:$0xff] %v4973
          %5032 = vst [vmem:[#allocation3 + $0x290] sm:$0xff] %v4976
          %v5033 = vld [vmem:[%s355 + $0x4] sm:$0xe]
          %v5034 = vld [vmem:[%s355 + $0x8] sm:$0xf]
          %v5035 = vld [vmem:[%s355 + $0xc] sm:$0x1]
          %v5036 = vld [vmem:[%s355 + $0x14] sm:$0xe]
          %v5037 = vld [vmem:[%s355 + $0x18] sm:$0xf]
          %v5038 = vld [vmem:[%s355 + $0x1c] sm:$0x1]
          %v5039 = vld [vmem:[%s355 + $0x24] sm:$0xe]
          %v5040 = vld [vmem:[%s355 + $0x28] sm:$0xf]
          %v5041 = vld [vmem:[%s355 + $0x2c] sm:$0x1]
          %v5042 = vld [vmem:[%s355 + $0x34] sm:$0xe]
          %v5043 = vld [vmem:[%s355 + $0x38] sm:$0xf]
          %v5044 = vld [vmem:[%s355 + $0x3c] sm:$0x1]
          %v5045 = vld [vmem:[%s355 + $0x44] sm:$0xe]
          %v5046 = vld [vmem:[%s355 + $0x48] sm:$0xf]
          %v5047 = vld [vmem:[%s355 + $0x4c] sm:$0x1]
          %v5048 = vld [vmem:[%s355 + $0x54] sm:$0xe]
          %v5049 = vld [vmem:[%s355 + $0x58] sm:$0xf]
          %v5050 = vld [vmem:[%s355 + $0x5c] sm:$0x1]
          %v5051 = vld [vmem:[%s355 + $0x64] sm:$0xe]
          %v5052 = vld [vmem:[%s355 + $0x68] sm:$0xf]
          %v5053 = vld [vmem:[%s355 + $0x6c] sm:$0x1]
          %v5054 = vld [vmem:[%s355 + $0x74] sm:$0xe]
          %v5055 = vld [vmem:[%s355 + $0x78] sm:$0xf]
          %v5056 = vld [vmem:[%s355 + $0x7c] sm:$0x1]
          %v5057 = vld [vmem:[%s355 + $0x84] sm:$0xe]
          %v5058 = vld [vmem:[%s355 + $0x88] sm:$0xf]
          %v5059 = vld [vmem:[%s355 + $0x8c] sm:$0x1]
          %v5060 = vld [vmem:[%s355 + $0x94] sm:$0xe]
          %v5061 = vld [vmem:[%s355 + $0x98] sm:$0xf]
          %v5062 = vld [vmem:[%s355 + $0x9c] sm:$0x1]
          %v5063 = vld [vmem:[%s355 + $0xa4] sm:$0xe]
          %v5064 = vld [vmem:[%s355 + $0xa8] sm:$0xf]
          %v5065 = vld [vmem:[%s355 + $0xac] sm:$0x1]
          %v5066 = vld [vmem:[%s355 + $0xb4] sm:$0xe]
          %v5067 = vld [vmem:[%s355 + $0xb8] sm:$0xf]
          %v5068 = vld [vmem:[%s355 + $0xbc] sm:$0x1]
          %v5069 = vld [vmem:[%s355 + $0xc4] sm:$0xe]
          %v5070 = vld [vmem:[%s355 + $0xc8] sm:$0xf]
          %v5071 = vld [vmem:[%s355 + $0xcc] sm:$0x1]
          %v5072 = vld [vmem:[%s355 + $0xd4] sm:$0xe]
          %v5073 = vld [vmem:[%s355 + $0xd8] sm:$0xf]
          %v5074 = vld [vmem:[%s355 + $0xdc] sm:$0x1]
          %v5075 = vld [vmem:[%s355 + $0xe4] sm:$0xe]
          %v5076 = vld [vmem:[%s355 + $0xe8] sm:$0xf]
          %v5077 = vld [vmem:[%s355 + $0xec] sm:$0x1]
          %v5078 = vld [vmem:[%s355 + $0xf4] sm:$0xe]
          %v5079 = vld [vmem:[%s355 + $0xf8] sm:$0xf]
          %v5080 = vld [vmem:[%s355 + $0xfc] sm:$0x1]
          %v5081 = vld [vmem:[%s355 + $0x104] sm:$0xe]
          %v5082 = vld [vmem:[%s355 + $0x108] sm:$0xf]
          %v5083 = vld [vmem:[%s355 + $0x10c] sm:$0x1]
          %v5084 = vld [vmem:[%s355 + $0x114] sm:$0xe]
          %v5085 = vld [vmem:[%s355 + $0x118] sm:$0xf]
          %v5086 = vld [vmem:[%s355 + $0x11c] sm:$0x1]
          %v5087 = vld [vmem:[%s355 + $0x124] sm:$0xe]
          %v5088 = vld [vmem:[%s355 + $0x128] sm:$0xf]
          %v5089 = vld [vmem:[%s355 + $0x12c] sm:$0x1]
          %v5090 = vld [vmem:[%s355 + $0x134] sm:$0xe]
          %v5091 = vld [vmem:[%s355 + $0x138] sm:$0xf]
          %v5092 = vld [vmem:[%s355 + $0x13c] sm:$0x1]
          %v5093 = vld [vmem:[%s355 + $0x144] sm:$0xe]
          %v5094 = vld [vmem:[%s355 + $0x148] sm:$0xf]
          %v5095 = vld [vmem:[%s355 + $0x14c] sm:$0x1]
          %v5096 = vld [vmem:[%s355 + $0x154] sm:$0xe]
          %v5097 = vld [vmem:[%s355 + $0x158] sm:$0xf]
          %v5098 = vld [vmem:[%s355 + $0x15c] sm:$0x1]
          %v5099 = vld [vmem:[%s355 + $0x164] sm:$0xe]
          %v5100 = vld [vmem:[%s355 + $0x168] sm:$0xf]
          %v5101 = vld [vmem:[%s355 + $0x16c] sm:$0x1]
          %v5102 = vld [vmem:[%s355 + $0x174] sm:$0xe]
          %v5103 = vld [vmem:[%s355 + $0x178] sm:$0xf]
          %v5104 = vld [vmem:[%s355 + $0x17c] sm:$0x1]
          %v5105 = vld [vmem:[%s355 + $0x184] sm:$0xe]
          %v5106 = vld [vmem:[%s355 + $0x188] sm:$0xf]
          %v5107 = vld [vmem:[%s355 + $0x18c] sm:$0x1]
          %v5108 = vld [vmem:[%s355 + $0x194] sm:$0xe]
          %v5109 = vld [vmem:[%s355 + $0x198] sm:$0xf]
          %v5110 = vld [vmem:[%s355 + $0x19c] sm:$0x1]
          %v5111 = vld [vmem:[%s355 + $0x1a4] sm:$0xe]
          %v5112 = vld [vmem:[%s355 + $0x1a8] sm:$0xf]
          %v5113 = vld [vmem:[%s355 + $0x1ac] sm:$0x1]
          %v5114 = vld [vmem:[%s355 + $0x1b4] sm:$0xe]
          %v5115 = vld [vmem:[%s355 + $0x1b8] sm:$0xf]
          %v5116 = vld [vmem:[%s355 + $0x1bc] sm:$0x1]
          %v5201 = vunpack.c.l.b16 %v5033
          %v5202 = vunpack.c.l.b16 %v5034
          %v5203 = vunpack.c.l.b16 %v5035
          %v5204 = vunpack.c.l.b16 %v5036
          %v5205 = vunpack.c.l.b16 %v5037
          %v5206 = vunpack.c.l.b16 %v5038
          %v5207 = vunpack.c.l.b16 %v5039
          %v5208 = vunpack.c.l.b16 %v5040
          %v5209 = vunpack.c.l.b16 %v5041
          %v5210 = vunpack.c.l.b16 %v5042
          %v5211 = vunpack.c.l.b16 %v5043
          %v5212 = vunpack.c.l.b16 %v5044
          %v5213 = vunpack.c.l.b16 %v5045
          %v5214 = vunpack.c.l.b16 %v5046
          %v5215 = vunpack.c.l.b16 %v5047
          %v5216 = vunpack.c.l.b16 %v5048
          %v5217 = vunpack.c.l.b16 %v5049
          %v5218 = vunpack.c.l.b16 %v5050
          %v5219 = vunpack.c.l.b16 %v5051
          %v5220 = vunpack.c.l.b16 %v5052
          %v5221 = vunpack.c.l.b16 %v5053
          %v5222 = vunpack.c.l.b16 %v5054
          %v5223 = vunpack.c.l.b16 %v5055
          %v5224 = vunpack.c.l.b16 %v5056
          %v5225 = vunpack.c.l.b16 %v5057
          %v5226 = vunpack.c.l.b16 %v5058
          %v5227 = vunpack.c.l.b16 %v5059
          %v5228 = vunpack.c.l.b16 %v5060
          %v5229 = vunpack.c.l.b16 %v5061
          %v5230 = vunpack.c.l.b16 %v5062
          %v5231 = vunpack.c.l.b16 %v5063
          %v5232 = vunpack.c.l.b16 %v5064
          %v5233 = vunpack.c.l.b16 %v5065
          %v5234 = vunpack.c.l.b16 %v5066
          %v5235 = vunpack.c.l.b16 %v5067
          %v5236 = vunpack.c.l.b16 %v5068
          %v5237 = vunpack.c.l.b16 %v5069
          %v5238 = vunpack.c.l.b16 %v5070
          %v5239 = vunpack.c.l.b16 %v5071
          %v5240 = vunpack.c.l.b16 %v5072
          %v5241 = vunpack.c.l.b16 %v5073
          %v5242 = vunpack.c.l.b16 %v5074
          %v5243 = vunpack.c.l.b16 %v5075
          %v5244 = vunpack.c.l.b16 %v5076
          %v5245 = vunpack.c.l.b16 %v5077
          %v5246 = vunpack.c.l.b16 %v5078
          %v5247 = vunpack.c.l.b16 %v5079
          %v5248 = vunpack.c.l.b16 %v5080
          %v5249 = vunpack.c.l.b16 %v5081
          %v5250 = vunpack.c.l.b16 %v5082
          %v5251 = vunpack.c.l.b16 %v5083
          %v5252 = vunpack.c.l.b16 %v5084
          %v5253 = vunpack.c.l.b16 %v5085
          %v5254 = vunpack.c.l.b16 %v5086
          %v5255 = vunpack.c.l.b16 %v5087
          %v5256 = vunpack.c.l.b16 %v5088
          %v5257 = vunpack.c.l.b16 %v5089
          %v5258 = vunpack.c.l.b16 %v5090
          %v5259 = vunpack.c.l.b16 %v5091
          %v5260 = vunpack.c.l.b16 %v5092
          %v5261 = vunpack.c.l.b16 %v5093
          %v5262 = vunpack.c.l.b16 %v5094
          %v5263 = vunpack.c.l.b16 %v5095
          %v5264 = vunpack.c.l.b16 %v5096
          %v5265 = vunpack.c.l.b16 %v5097
          %v5266 = vunpack.c.l.b16 %v5098
          %v5267 = vunpack.c.l.b16 %v5099
          %v5268 = vunpack.c.l.b16 %v5100
          %v5269 = vunpack.c.l.b16 %v5101
          %v5270 = vunpack.c.l.b16 %v5102
          %v5271 = vunpack.c.l.b16 %v5103
          %v5272 = vunpack.c.l.b16 %v5104
          %v5273 = vunpack.c.l.b16 %v5105
          %v5274 = vunpack.c.l.b16 %v5106
          %v5275 = vunpack.c.l.b16 %v5107
          %v5276 = vunpack.c.l.b16 %v5108
          %v5277 = vunpack.c.l.b16 %v5109
          %v5278 = vunpack.c.l.b16 %v5110
          %v5279 = vunpack.c.l.b16 %v5111
          %v5280 = vunpack.c.l.b16 %v5112
          %v5281 = vunpack.c.l.b16 %v5113
          %v5282 = vunpack.c.l.b16 %v5114
          %v5283 = vunpack.c.l.b16 %v5115
          %v5284 = vunpack.c.l.b16 %v5116
          %v5285 = vpack.c.b16 %v5202, %v5201
          %v5286 = vpack.c.b16 %v5203, %v5203
          %v5287 = vpack.c.b16 %v5205, %v5204
          %v5288 = vpack.c.b16 %v5206, %v5206
          %v5289 = vpack.c.b16 %v5208, %v5207
          %v5290 = vpack.c.b16 %v5209, %v5209
          %v5291 = vpack.c.b16 %v5211, %v5210
          %v5292 = vpack.c.b16 %v5212, %v5212
          %v5293 = vpack.c.b16 %v5214, %v5213
          %v5294 = vpack.c.b16 %v5215, %v5215
          %v5295 = vpack.c.b16 %v5217, %v5216
          %v5296 = vpack.c.b16 %v5218, %v5218
          %v5297 = vpack.c.b16 %v5220, %v5219
          %v5298 = vpack.c.b16 %v5221, %v5221
          %v5299 = vpack.c.b16 %v5223, %v5222
          %v5300 = vpack.c.b16 %v5224, %v5224
          %v5301 = vpack.c.b16 %v5226, %v5225
          %v5302 = vpack.c.b16 %v5227, %v5227
          %v5303 = vpack.c.b16 %v5229, %v5228
          %v5304 = vpack.c.b16 %v5230, %v5230
          %v5305 = vpack.c.b16 %v5232, %v5231
          %v5306 = vpack.c.b16 %v5233, %v5233
          %v5307 = vpack.c.b16 %v5235, %v5234
          %v5308 = vpack.c.b16 %v5236, %v5236
          %v5309 = vpack.c.b16 %v5238, %v5237
          %v5310 = vpack.c.b16 %v5239, %v5239
          %v5311 = vpack.c.b16 %v5241, %v5240
          %v5312 = vpack.c.b16 %v5242, %v5242
          %v5313 = vpack.c.b16 %v5244, %v5243
          %v5314 = vpack.c.b16 %v5245, %v5245
          %v5315 = vpack.c.b16 %v5247, %v5246
          %v5316 = vpack.c.b16 %v5248, %v5248
          %v5317 = vpack.c.b16 %v5250, %v5249
          %v5318 = vpack.c.b16 %v5251, %v5251
          %v5319 = vpack.c.b16 %v5253, %v5252
          %v5320 = vpack.c.b16 %v5254, %v5254
          %v5321 = vpack.c.b16 %v5256, %v5255
          %v5322 = vpack.c.b16 %v5257, %v5257
          %v5323 = vpack.c.b16 %v5259, %v5258
          %v5324 = vpack.c.b16 %v5260, %v5260
          %v5325 = vpack.c.b16 %v5262, %v5261
          %v5326 = vpack.c.b16 %v5263, %v5263
          %v5327 = vpack.c.b16 %v5265, %v5264
          %v5328 = vpack.c.b16 %v5266, %v5266
          %v5329 = vpack.c.b16 %v5268, %v5267
          %v5330 = vpack.c.b16 %v5269, %v5269
          %v5331 = vpack.c.b16 %v5271, %v5270
          %v5332 = vpack.c.b16 %v5272, %v5272
          %v5333 = vpack.c.b16 %v5274, %v5273
          %v5334 = vpack.c.b16 %v5275, %v5275
          %v5335 = vpack.c.b16 %v5277, %v5276
          %v5336 = vpack.c.b16 %v5278, %v5278
          %v5337 = vpack.c.b16 %v5280, %v5279
          %v5338 = vpack.c.b16 %v5281, %v5281
          %v5339 = vpack.c.b16 %v5283, %v5282
          %v5340 = vpack.c.b16 %v5284, %v5284
          %v5341 = vrot.slane %v5285, 1
          %v5342 = vrot.slane %v5286, 1
          %v5343 = vsel %vm4443, %v5341, %v5342
          %v5344 = vrot.slane %v5287, 1
          %v5345 = vrot.slane %v5288, 1
          %v5346 = vsel %vm4443, %v5344, %v5345
          %v5347 = vrot.slane %v5289, 1
          %v5348 = vrot.slane %v5290, 1
          %v5349 = vsel %vm4443, %v5347, %v5348
          %v5350 = vrot.slane %v5291, 1
          %v5351 = vrot.slane %v5292, 1
          %v5352 = vsel %vm4443, %v5350, %v5351
          %v5353 = vrot.slane %v5293, 1
          %v5354 = vrot.slane %v5294, 1
          %v5355 = vsel %vm4443, %v5353, %v5354
          %v5356 = vrot.slane %v5295, 1
          %v5357 = vrot.slane %v5296, 1
          %v5358 = vsel %vm4443, %v5356, %v5357
          %v5359 = vrot.slane %v5297, 1
          %v5360 = vrot.slane %v5298, 1
          %v5361 = vsel %vm4443, %v5359, %v5360
          %v5362 = vrot.slane %v5299, 1
          %v5363 = vrot.slane %v5300, 1
          %v5364 = vsel %vm4443, %v5362, %v5363
          %v5365 = vrot.slane %v5301, 1
          %v5366 = vrot.slane %v5302, 1
          %v5367 = vsel %vm4443, %v5365, %v5366
          %v5368 = vrot.slane %v5303, 1
          %v5369 = vrot.slane %v5304, 1
          %v5370 = vsel %vm4443, %v5368, %v5369
          %v5371 = vrot.slane %v5305, 1
          %v5372 = vrot.slane %v5306, 1
          %v5373 = vsel %vm4443, %v5371, %v5372
          %v5374 = vrot.slane %v5307, 1
          %v5375 = vrot.slane %v5308, 1
          %v5376 = vsel %vm4443, %v5374, %v5375
          %v5377 = vrot.slane %v5309, 1
          %v5378 = vrot.slane %v5310, 1
          %v5379 = vsel %vm4443, %v5377, %v5378
          %v5380 = vrot.slane %v5311, 1
          %v5381 = vrot.slane %v5312, 1
          %v5382 = vsel %vm4443, %v5380, %v5381
          %v5383 = vrot.slane %v5313, 1
          %v5384 = vrot.slane %v5314, 1
          %v5385 = vsel %vm4443, %v5383, %v5384
          %v5386 = vrot.slane %v5315, 1
          %v5387 = vrot.slane %v5316, 1
          %v5388 = vsel %vm4443, %v5386, %v5387
          %v5389 = vrot.slane %v5317, 1
          %v5390 = vrot.slane %v5318, 1
          %v5391 = vsel %vm4443, %v5389, %v5390
          %v5392 = vrot.slane %v5319, 1
          %v5393 = vrot.slane %v5320, 1
          %v5394 = vsel %vm4443, %v5392, %v5393
          %v5395 = vrot.slane %v5321, 1
          %v5396 = vrot.slane %v5322, 1
          %v5397 = vsel %vm4443, %v5395, %v5396
          %v5398 = vrot.slane %v5323, 1
          %v5399 = vrot.slane %v5324, 1
          %v5400 = vsel %vm4443, %v5398, %v5399
          %v5401 = vrot.slane %v5325, 1
          %v5402 = vrot.slane %v5326, 1
          %v5403 = vsel %vm4443, %v5401, %v5402
          %v5404 = vrot.slane %v5327, 1
          %v5405 = vrot.slane %v5328, 1
          %v5406 = vsel %vm4443, %v5404, %v5405
          %v5407 = vrot.slane %v5329, 1
          %v5408 = vrot.slane %v5330, 1
          %v5409 = vsel %vm4443, %v5407, %v5408
          %v5410 = vrot.slane %v5331, 1
          %v5411 = vrot.slane %v5332, 1
          %v5412 = vsel %vm4443, %v5410, %v5411
          %v5413 = vrot.slane %v5333, 1
          %v5414 = vrot.slane %v5334, 1
          %v5415 = vsel %vm4443, %v5413, %v5414
          %v5416 = vrot.slane %v5335, 1
          %v5417 = vrot.slane %v5336, 1
          %v5418 = vsel %vm4443, %v5416, %v5417
          %v5419 = vrot.slane %v5337, 1
          %v5420 = vrot.slane %v5338, 1
          %v5421 = vsel %vm4443, %v5419, %v5420
          %v5422 = vrot.slane %v5339, 1
          %v5423 = vrot.slane %v5340, 1
          %v5424 = vsel %vm4443, %v5422, %v5423
          %5453 = vst [vmem:[#allocation3 + $0x10] sm:$0xff] %v5343
          %5454 = vst [vmem:[#allocation3 + $0x28] sm:$0xff] %v5346
          %5455 = vst [vmem:[#allocation3 + $0x40] sm:$0xff] %v5349
          %5456 = vst [vmem:[#allocation3 + $0x58] sm:$0xff] %v5352
          %5457 = vst [vmem:[#allocation3 + $0x70] sm:$0xff] %v5355
          %5458 = vst [vmem:[#allocation3 + $0x88] sm:$0xff] %v5358
          %5459 = vst [vmem:[#allocation3 + $0xa0] sm:$0xff] %v5361
          %5460 = vst [vmem:[#allocation3 + $0xb8] sm:$0xff] %v5364
          %5461 = vst [vmem:[#allocation3 + $0xd0] sm:$0xff] %v5367
          %5462 = vst [vmem:[#allocation3 + $0xe8] sm:$0xff] %v5370
          %5463 = vst [vmem:[#allocation3 + $0x100] sm:$0xff] %v5373
          %5464 = vst [vmem:[#allocation3 + $0x118] sm:$0xff] %v5376
          %5465 = vst [vmem:[#allocation3 + $0x130] sm:$0xff] %v5379
          %5466 = vst [vmem:[#allocation3 + $0x148] sm:$0xff] %v5382
          %5467 = vst [vmem:[#allocation3 + $0x160] sm:$0xff] %v5385
          %5468 = vst [vmem:[#allocation3 + $0x178] sm:$0xff] %v5388
          %5469 = vst [vmem:[#allocation3 + $0x190] sm:$0xff] %v5391
          %5470 = vst [vmem:[#allocation3 + $0x1a8] sm:$0xff] %v5394
          %5471 = vst [vmem:[#allocation3 + $0x1c0] sm:$0xff] %v5397
          %5472 = vst [vmem:[#allocation3 + $0x1d8] sm:$0xff] %v5400
          %5473 = vst [vmem:[#allocation3 + $0x1f0] sm:$0xff] %v5403
          %5474 = vst [vmem:[#allocation3 + $0x208] sm:$0xff] %v5406
          %5475 = vst [vmem:[#allocation3 + $0x220] sm:$0xff] %v5409
          %5476 = vst [vmem:[#allocation3 + $0x238] sm:$0xff] %v5412
          %5477 = vst [vmem:[#allocation3 + $0x250] sm:$0xff] %v5415
          %5478 = vst [vmem:[#allocation3 + $0x268] sm:$0xff] %v5418
          %5479 = vst [vmem:[#allocation3 + $0x280] sm:$0xff] %v5421
          %5480 = vst [vmem:[#allocation3 + $0x298] sm:$0xff] %v5424
          %s5481 = scalar_lea.vmem [#allocation3], 48
          %v5482 = vld [vmem:[%s5481] sm:$0xff]
          %v5483 = vld [vmem:[%s5481 + $0x8] sm:$0xff]
          %v5484 = vld [vmem:[%s5481 + $0x10] sm:$0xff]
          %v5485 = vld [vmem:[%s5481 + $0x18] sm:$0xff]
          %v5486 = vld [vmem:[%s5481 + $0x20] sm:$0xff]
          %v5487 = vld [vmem:[%s5481 + $0x28] sm:$0xff]
          %v5488 = vld [vmem:[%s5481 + $0x30] sm:$0xff]
          %v5489 = vld [vmem:[%s5481 + $0x38] sm:$0xff]
          %v5490 = vld [vmem:[%s5481 + $0x40] sm:$0xff]
          %v5491 = vld [vmem:[%s5481 + $0x48] sm:$0xff]
          %v5492 = vld [vmem:[%s5481 + $0x50] sm:$0xff]
          %v5493 = vld [vmem:[%s5481 + $0x58] sm:$0xff]
          %v5494 = vld [vmem:[%s5481 + $0x60] sm:$0xff]
          %v5495 = vld [vmem:[%s5481 + $0x68] sm:$0xff]
          %v5496 = vld [vmem:[%s5481 + $0x70] sm:$0xff]
          %v5497 = vld [vmem:[%s5481 + $0x78] sm:$0xff]
          %v5498 = vld [vmem:[%s5481 + $0x80] sm:$0xff]
          %v5499 = vld [vmem:[%s5481 + $0x88] sm:$0xff]
          %v5500 = vld [vmem:[%s5481 + $0x90] sm:$0xff]
          %v5501 = vld [vmem:[%s5481 + $0x98] sm:$0xff]
          %v5502 = vld [vmem:[%s5481 + $0xa0] sm:$0xff]
          %v5503 = vld [vmem:[%s5481 + $0xa8] sm:$0xff]
          %v5504 = vld [vmem:[%s5481 + $0xb0] sm:$0xff]
          %v5505 = vld [vmem:[%s5481 + $0xb8] sm:$0xff]
          %v5506 = vld [vmem:[%s5481 + $0xc0] sm:$0xff]
          %v5507 = vld [vmem:[%s5481 + $0xc8] sm:$0xff]
          %v5508 = vld [vmem:[%s5481 + $0xd0] sm:$0xff]
          %v5509 = vld [vmem:[%s5481 + $0xd8] sm:$0xff]
          %v5510 = vld [vmem:[%s5481 + $0xe0] sm:$0xff]
          %v5511 = vld [vmem:[%s5481 + $0xe8] sm:$0xff]
          %v5512 = vld [vmem:[%s5481 + $0xf0] sm:$0xff]
          %v5513 = vld [vmem:[%s5481 + $0xf8] sm:$0xff]
          %v5514 = vld [vmem:[%s5481 + $0x100] sm:$0xff]
          %v5515 = vld [vmem:[%s5481 + $0x108] sm:$0xff]
          %v5516 = vld [vmem:[%s5481 + $0x110] sm:$0xff]
          %v5517 = vld [vmem:[%s5481 + $0x118] sm:$0xff]
          %v5518 = vld [vmem:[%s5481 + $0x120] sm:$0xff]
          %v5519 = vld [vmem:[%s5481 + $0x128] sm:$0xff]
          %v5520 = vld [vmem:[%s5481 + $0x130] sm:$0xff]
          %v5521 = vld [vmem:[%s5481 + $0x138] sm:$0xff]
          %v5522 = vld [vmem:[%s5481 + $0x140] sm:$0xff]
          %v5523 = vld [vmem:[%s5481 + $0x148] sm:$0xff]
          %v5524 = vld [vmem:[%s5481 + $0x150] sm:$0xff]
          %v5525 = vld [vmem:[%s5481 + $0x158] sm:$0xff]
          %v5526 = vld [vmem:[%s5481 + $0x160] sm:$0xff]
          %v5527 = vld [vmem:[%s5481 + $0x168] sm:$0xff]
          %v5528 = vld [vmem:[%s5481 + $0x170] sm:$0xff]
          %v5529 = vld [vmem:[%s5481 + $0x178] sm:$0xff]
          %v5530 = vld [vmem:[#allocation2] sm:$0xff]
          %v5531 = vld [vmem:[#allocation2 + $0x8] sm:$0xff]
          %v5532 = vld [vmem:[#allocation2 + $0x10] sm:$0xff]
          %v5533 = vld [vmem:[#allocation2 + $0x18] sm:$0xff]
          %v5534 = vld [vmem:[#allocation2 + $0x20] sm:$0xff]
          %v5535 = vld [vmem:[#allocation2 + $0x28] sm:$0xff]
          %v5536 = vld [vmem:[#allocation2 + $0x30] sm:$0xff]
          %v5537 = vld [vmem:[#allocation2 + $0x38] sm:$0xff]
          %v5538 = vld [vmem:[#allocation2 + $0x40] sm:$0xff]
          %v5539 = vld [vmem:[#allocation2 + $0x48] sm:$0xff]
          %v5540 = vld [vmem:[#allocation2 + $0x50] sm:$0xff]
          %v5541 = vld [vmem:[#allocation2 + $0x58] sm:$0xff]
          %v5542 = vld [vmem:[#allocation2 + $0x60] sm:$0xff]
          %v5543 = vld [vmem:[#allocation2 + $0x68] sm:$0xff]
          %v5544 = vld [vmem:[#allocation2 + $0x70] sm:$0xff]
          %v5545 = vld [vmem:[#allocation2 + $0x78] sm:$0xff]
          %v5546 = vld [vmem:[#allocation2 + $0x80] sm:$0xff]
          %v5547 = vld [vmem:[#allocation2 + $0x88] sm:$0xff]
          %v5548 = vld [vmem:[#allocation2 + $0x90] sm:$0xff]
          %v5549 = vld [vmem:[#allocation2 + $0x98] sm:$0xff]
          %v5550 = vld [vmem:[#allocation2 + $0xa0] sm:$0xff]
          %v5551 = vld [vmem:[#allocation2 + $0xa8] sm:$0xff]
          %v5552 = vld [vmem:[#allocation2 + $0xb0] sm:$0xff]
          %v5553 = vld [vmem:[#allocation2 + $0xb8] sm:$0xff]
          %v5554 = vld [vmem:[#allocation2 + $0xc0] sm:$0xff]
          %v5555 = vld [vmem:[#allocation2 + $0xc8] sm:$0xff]
          %v5556 = vld [vmem:[#allocation2 + $0xd0] sm:$0xff]
          %v5557 = vld [vmem:[#allocation2 + $0xd8] sm:$0xff]
          %v5558 = vld [vmem:[#allocation2 + $0xe0] sm:$0xff]
          %v5559 = vld [vmem:[#allocation2 + $0xe8] sm:$0xff]
          %v5560 = vld [vmem:[#allocation2 + $0xf0] sm:$0xff]
          %v5561 = vld [vmem:[#allocation2 + $0xf8] sm:$0xff]
          %v5562 = vld [vmem:[%s291] sm:$0xf]
          %v5563 = vld [vmem:[%s291 + $0x4] sm:$0xf]
          %v5564 = vld [vmem:[%s291 + $0x8] sm:$0xf]
          %v5565 = vld [vmem:[%s291 + $0xc] sm:$0xf]
          %v5566 = vld [vmem:[%s291 + $0x10] sm:$0xf]
          %v5567 = vld [vmem:[%s291 + $0x14] sm:$0xf]
          %v5568 = vld [vmem:[%s291 + $0x18] sm:$0xf]
          %v5569 = vld [vmem:[%s291 + $0x1c] sm:$0xf]
          %v5570 = vld [vmem:[%s291 + $0x20] sm:$0xf]
          %v5571 = vld [vmem:[%s291 + $0x24] sm:$0xf]
          %v5572 = vld [vmem:[%s291 + $0x28] sm:$0xf]
          %v5573 = vld [vmem:[%s291 + $0x2c] sm:$0xf]
          %v5574 = vld [vmem:[%s291 + $0x30] sm:$0xf]
          %v5575 = vld [vmem:[%s291 + $0x34] sm:$0xf]
          %v5576 = vld [vmem:[%s291 + $0x38] sm:$0xf]
          %v5577 = vld [vmem:[%s291 + $0x3c] sm:$0xf]
          %v5578 = vld [vmem:[%s291 + $0x40] sm:$0xf]
          %v5579 = vld [vmem:[%s291 + $0x44] sm:$0xf]
          %v5580 = vld [vmem:[%s291 + $0x48] sm:$0xf]
          %v5581 = vld [vmem:[%s291 + $0x4c] sm:$0xf]
          %v5582 = vld [vmem:[%s291 + $0x50] sm:$0xf]
          %v5583 = vld [vmem:[%s291 + $0x54] sm:$0xf]
          %v5584 = vld [vmem:[%s291 + $0x58] sm:$0xf]
          %v5585 = vld [vmem:[%s291 + $0x5c] sm:$0xf]
          %v5586 = vld [vmem:[%s291 + $0x60] sm:$0xf]
          %v5587 = vld [vmem:[%s291 + $0x64] sm:$0xf]
          %v5588 = vld [vmem:[%s291 + $0x68] sm:$0xf]
          %v5589 = vld [vmem:[%s291 + $0x6c] sm:$0xf]
          %v5590 = vld [vmem:[%s291 + $0x70] sm:$0xf]
          %v5591 = vld [vmem:[%s291 + $0x74] sm:$0xf]
          %v5592 = vld [vmem:[%s291 + $0x78] sm:$0xf]
          %v5593 = vld [vmem:[%s291 + $0x7c] sm:$0xf]
          %v5594 = vld [vmem:[%s291 + $0x80] sm:$0xf]
          %v5595 = vld [vmem:[%s291 + $0x84] sm:$0xf]
          %v5596 = vld [vmem:[%s291 + $0x88] sm:$0xf]
          %v5597 = vld [vmem:[%s291 + $0x8c] sm:$0xf]
          %v5598 = vld [vmem:[%s291 + $0x90] sm:$0xf]
          %v5599 = vld [vmem:[%s291 + $0x94] sm:$0xf]
          %v5600 = vld [vmem:[%s291 + $0x98] sm:$0xf]
          %v5601 = vld [vmem:[%s291 + $0x9c] sm:$0xf]
          %v5602 = vld [vmem:[%s291 + $0xa0] sm:$0xf]
          %v5603 = vld [vmem:[%s291 + $0xa4] sm:$0xf]
          %v5604 = vld [vmem:[%s291 + $0xa8] sm:$0xf]
          %v5605 = vld [vmem:[%s291 + $0xac] sm:$0xf]
          %v5606 = vld [vmem:[%s291 + $0xb0] sm:$0xf]
          %v5607 = vld [vmem:[%s291 + $0xb4] sm:$0xf]
          %v5608 = vld [vmem:[%s291 + $0xb8] sm:$0xf]
          %v5609 = vld [vmem:[%s291 + $0xbc] sm:$0xf]
          %v5658 = vunpack.c.l.b16 %v5562
          %v5659 = vunpack.c.l.b16 %v5563
          %v5660 = vunpack.c.l.b16 %v5564
          %v5661 = vunpack.c.l.b16 %v5565
          %v5662 = vunpack.c.l.b16 %v5566
          %v5663 = vunpack.c.l.b16 %v5567
          %v5664 = vunpack.c.l.b16 %v5568
          %v5665 = vunpack.c.l.b16 %v5569
          %v5666 = vunpack.c.l.b16 %v5570
          %v5667 = vunpack.c.l.b16 %v5571
          %v5668 = vunpack.c.l.b16 %v5572
          %v5669 = vunpack.c.l.b16 %v5573
          %v5670 = vunpack.c.l.b16 %v5574
          %v5671 = vunpack.c.l.b16 %v5575
          %v5672 = vunpack.c.l.b16 %v5576
          %v5673 = vunpack.c.l.b16 %v5577
          %v5674 = vunpack.c.l.b16 %v5578
          %v5675 = vunpack.c.l.b16 %v5579
          %v5676 = vunpack.c.l.b16 %v5580
          %v5677 = vunpack.c.l.b16 %v5581
          %v5678 = vunpack.c.l.b16 %v5582
          %v5679 = vunpack.c.l.b16 %v5583
          %v5680 = vunpack.c.l.b16 %v5584
          %v5681 = vunpack.c.l.b16 %v5585
          %v5682 = vunpack.c.l.b16 %v5586
          %v5683 = vunpack.c.l.b16 %v5587
          %v5684 = vunpack.c.l.b16 %v5588
          %v5685 = vunpack.c.l.b16 %v5589
          %v5686 = vunpack.c.l.b16 %v5590
          %v5687 = vunpack.c.l.b16 %v5591
          %v5688 = vunpack.c.l.b16 %v5592
          %v5689 = vunpack.c.l.b16 %v5593
          %v5690 = vunpack.c.l.b16 %v5594
          %v5691 = vunpack.c.l.b16 %v5595
          %v5692 = vunpack.c.l.b16 %v5596
          %v5693 = vunpack.c.l.b16 %v5597
          %v5694 = vunpack.c.l.b16 %v5598
          %v5695 = vunpack.c.l.b16 %v5599
          %v5696 = vunpack.c.l.b16 %v5600
          %v5697 = vunpack.c.l.b16 %v5601
          %v5698 = vunpack.c.l.b16 %v5602
          %v5699 = vunpack.c.l.b16 %v5603
          %v5700 = vunpack.c.l.b16 %v5604
          %v5701 = vunpack.c.l.b16 %v5605
          %v5702 = vunpack.c.l.b16 %v5606
          %v5703 = vunpack.c.l.b16 %v5607
          %v5704 = vunpack.c.l.b16 %v5608
          %v5705 = vunpack.c.l.b16 %v5609
          %v5706 = vpack.c.b16 %v5659, %v5658
          %v5707 = vpack.c.b16 %v5661, %v5660
          %v5708 = vpack.c.b16 %v5663, %v5662
          %v5709 = vpack.c.b16 %v5665, %v5664
          %v5710 = vpack.c.b16 %v5667, %v5666
          %v5711 = vpack.c.b16 %v5669, %v5668
          %v5712 = vpack.c.b16 %v5671, %v5670
          %v5713 = vpack.c.b16 %v5673, %v5672
          %v5714 = vpack.c.b16 %v5675, %v5674
          %v5715 = vpack.c.b16 %v5677, %v5676
          %v5716 = vpack.c.b16 %v5679, %v5678
          %v5717 = vpack.c.b16 %v5681, %v5680
          %v5718 = vpack.c.b16 %v5683, %v5682
          %v5719 = vpack.c.b16 %v5685, %v5684
          %v5720 = vpack.c.b16 %v5687, %v5686
          %v5721 = vpack.c.b16 %v5689, %v5688
          %v5722 = vpack.c.b16 %v5691, %v5690
          %v5723 = vpack.c.b16 %v5693, %v5692
          %v5724 = vpack.c.b16 %v5695, %v5694
          %v5725 = vpack.c.b16 %v5697, %v5696
          %v5726 = vpack.c.b16 %v5699, %v5698
          %v5727 = vpack.c.b16 %v5701, %v5700
          %v5728 = vpack.c.b16 %v5703, %v5702
          %v5729 = vpack.c.b16 %v5705, %v5704
          %5754 = vmatprep.subr.bf16.mxu0 0
          %5755 = vmatpush1.bf16.msra.mxu0 %v5706
          %5756 = vmatprep.subr.bf16.mxu0 0
          %5757 = vmatpush1.bf16.msra.mxu0 %v5707
          %5758 = vmatprep.subr.bf16.mxu0 0
          %5759 = vmatpush1.bf16.msra.mxu0 %v5708
          %5760 = vmatprep.subr.bf16.mxu0 0
          %5761 = vmatpush1.bf16.msra.mxu0 %v5709
          %5762 = vmatprep.subr.bf16.mxu0 0
          %5763 = vmatpush1.bf16.msra.mxu0 %v5710
          %5764 = vmatprep.subr.bf16.mxu0 0
          %5765 = vmatpush1.bf16.msra.mxu0 %v5711
          %5766 = vmatprep.subr.bf16.mxu0 0
          %5767 = vmatpush1.bf16.msra.mxu0 %v5712
          %5768 = vmatprep.subr.bf16.mxu0 0
          %5769 = vmatpush1.bf16.msra.mxu0 %v5713
          %5770 = vmatprep.subr.bf16.mxu0 0
          %5771 = vmatpush1.bf16.msra.mxu0 %v5714
          %5772 = vmatprep.subr.bf16.mxu0 0
          %5773 = vmatpush1.bf16.msra.mxu0 %v5715
          %5774 = vmatprep.subr.bf16.mxu0 0
          %5775 = vmatpush1.bf16.msra.mxu0 %v5716
          %5776 = vmatprep.subr.bf16.mxu0 0
          %5777 = vmatpush1.bf16.msra.mxu0 %v5717
          %5778 = vmatprep.subr.bf16.mxu0 0
          %5779 = vmatpush1.bf16.msra.mxu0 %v5718
          %5780 = vmatprep.subr.bf16.mxu0 0
          %5781 = vmatpush1.bf16.msra.mxu0 %v5719
          %5782 = vmatprep.subr.bf16.mxu0 0
          %5783 = vmatpush1.bf16.msra.mxu0 %v5720
          %5784 = vmatprep.subr.bf16.mxu0 0
          %5785 = vmatpush1.bf16.msra.mxu0 %v5721
          %5786 = vmatprep.mubr.bf16.mxu0 %v5483
          %5787 = vmatmul.mubr.bf16.gmra.mrb[0].mxu0 %v5482
          %v5788 = vpop.f32.mrb[0].mxu0
          %v5789 = vadd.f32 0.0, %v5788
          %v5790 = vpop.f32.mrb[0].mxu0
          %v5791 = vpop.f32.mrb[0].mxu0
          %v5792 = vadd.f32 0.0, %v5791
          %v5793 = vpop.f32.mrb[0].mxu0
          %5794 = vmatprep.mubr.bf16.mxu0 %v5486
          %5795 = vmatmul.mubr.bf16.gmra.mrb[0].mxu0 %v5485
          %v5796 = vpop.f32.mrb[0].mxu0
          %v5797 = vadd.f32 0.0, %v5796
          %v5798 = vpop.f32.mrb[0].mxu0
          %v5799 = vpop.f32.mrb[0].mxu0
          %v5800 = vadd.f32 0.0, %v5799
          %v5801 = vpop.f32.mrb[0].mxu0
          %5802 = vmatprep.mubr.bf16.mxu0 %v5489
          %5803 = vmatmul.mubr.bf16.gmra.mrb[0].mxu0 %v5488
          %v5804 = vpop.f32.mrb[0].mxu0
          %v5805 = vadd.f32 0.0, %v5804
          %v5806 = vpop.f32.mrb[0].mxu0
          %v5807 = vpop.f32.mrb[0].mxu0
          %v5808 = vadd.f32 0.0, %v5807
          %v5809 = vpop.f32.mrb[0].mxu0
          %5810 = vmatprep.mubr.bf16.mxu0 %v5492
          %5811 = vmatmul.mubr.bf16.gmra.mrb[0].mxu0 %v5491
          %v5812 = vpop.f32.mrb[0].mxu0
          %v5813 = vadd.f32 0.0, %v5812
          %v5814 = vpop.f32.mrb[0].mxu0
          %v5815 = vpop.f32.mrb[0].mxu0
          %v5816 = vadd.f32 0.0, %v5815
          %v5817 = vpop.f32.mrb[0].mxu0
          %5818 = vmatprep.mubr.bf16.mxu0 %v5495
          %5819 = vmatmul.mubr.bf16.gmra.mrb[0].mxu0 %v5494
          %v5820 = vpop.f32.mrb[0].mxu0
          %v5821 = vadd.f32 0.0, %v5820
          %v5822 = vpop.f32.mrb[0].mxu0
          %v5823 = vpop.f32.mrb[0].mxu0
          %v5824 = vadd.f32 0.0, %v5823
          %v5825 = vpop.f32.mrb[0].mxu0
          %5826 = vmatprep.mubr.bf16.mxu0 %v5498
          %5827 = vmatmul.mubr.bf16.gmra.mrb[0].mxu0 %v5497
          %v5828 = vpop.f32.mrb[0].mxu0
          %v5829 = vadd.f32 0.0, %v5828
          %v5830 = vpop.f32.mrb[0].mxu0
          %v5831 = vpop.f32.mrb[0].mxu0
          %v5832 = vadd.f32 0.0, %v5831
          %v5833 = vpop.f32.mrb[0].mxu0
          %5834 = vmatprep.mubr.bf16.mxu0 %v5501
          %5835 = vmatmul.mubr.bf16.gmra.mrb[0].mxu0 %v5500
          %v5836 = vpop.f32.mrb[0].mxu0
          %v5837 = vadd.f32 0.0, %v5836
          %v5838 = vpop.f32.mrb[0].mxu0
          %v5839 = vpop.f32.mrb[0].mxu0
          %v5840 = vadd.f32 0.0, %v5839
          %v5841 = vpop.f32.mrb[0].mxu0
          %5842 = vmatprep.mubr.bf16.mxu0 %v5504
          %5843 = vmatmul.mubr.bf16.gmra.mrb[0].mxu0 %v5503
          %v5844 = vpop.f32.mrb[0].mxu0
          %v5845 = vadd.f32 0.0, %v5844
          %v5846 = vpop.f32.mrb[0].mxu0
          %v5847 = vpop.f32.mrb[0].mxu0
          %v5848 = vadd.f32 0.0, %v5847
          %v5849 = vpop.f32.mrb[0].mxu0
          %5850 = vmatprep.mubr.bf16.mxu0 %v5507
          %5851 = vmatmul.mubr.bf16.gmra.mrb[0].mxu0 %v5506
          %v5852 = vpop.f32.mrb[0].mxu0
          %v5853 = vadd.f32 0.0, %v5852
          %v5854 = vpop.f32.mrb[0].mxu0
          %v5855 = vpop.f32.mrb[0].mxu0
          %v5856 = vadd.f32 0.0, %v5855
          %v5857 = vpop.f32.mrb[0].mxu0
          %5858 = vmatprep.mubr.bf16.mxu0 %v5510
          %5859 = vmatmul.mubr.bf16.gmra.mrb[0].mxu0 %v5509
          %v5860 = vpop.f32.mrb[0].mxu0
          %v5861 = vadd.f32 0.0, %v5860
          %v5862 = vpop.f32.mrb[0].mxu0
          %v5863 = vpop.f32.mrb[0].mxu0
          %v5864 = vadd.f32 0.0, %v5863
          %v5865 = vpop.f32.mrb[0].mxu0
          %5866 = vmatprep.mubr.bf16.mxu0 %v5513
          %5867 = vmatmul.mubr.bf16.gmra.mrb[0].mxu0 %v5512
          %v5868 = vpop.f32.mrb[0].mxu0
          %v5869 = vadd.f32 0.0, %v5868
          %v5870 = vpop.f32.mrb[0].mxu0
          %v5871 = vpop.f32.mrb[0].mxu0
          %v5872 = vadd.f32 0.0, %v5871
          %v5873 = vpop.f32.mrb[0].mxu0
          %5874 = vmatprep.mubr.bf16.mxu0 %v5516
          %5875 = vmatmul.mubr.bf16.gmra.mrb[0].mxu0 %v5515
          %v5876 = vpop.f32.mrb[0].mxu0
          %v5877 = vadd.f32 0.0, %v5876
          %v5878 = vpop.f32.mrb[0].mxu0
          %v5879 = vpop.f32.mrb[0].mxu0
          %v5880 = vadd.f32 0.0, %v5879
          %v5881 = vpop.f32.mrb[0].mxu0
          %5882 = vmatprep.mubr.bf16.mxu0 %v5519
          %5883 = vmatmul.mubr.bf16.gmra.mrb[0].mxu0 %v5518
          %v5884 = vpop.f32.mrb[0].mxu0
          %v5885 = vadd.f32 0.0, %v5884
          %v5886 = vpop.f32.mrb[0].mxu0
          %v5887 = vpop.f32.mrb[0].mxu0
          %v5888 = vadd.f32 0.0, %v5887
          %v5889 = vpop.f32.mrb[0].mxu0
          %5890 = vmatprep.mubr.bf16.mxu0 %v5522
          %5891 = vmatmul.mubr.bf16.gmra.mrb[0].mxu0 %v5521
          %v5892 = vpop.f32.mrb[0].mxu0
          %v5893 = vadd.f32 0.0, %v5892
          %v5894 = vpop.f32.mrb[0].mxu0
          %v5895 = vpop.f32.mrb[0].mxu0
          %v5896 = vadd.f32 0.0, %v5895
          %v5897 = vpop.f32.mrb[0].mxu0
          %5898 = vmatprep.mubr.bf16.mxu0 %v5525
          %5899 = vmatmul.mubr.bf16.gmra.mrb[0].mxu0 %v5524
          %v5900 = vpop.f32.mrb[0].mxu0
          %v5901 = vadd.f32 0.0, %v5900
          %v5902 = vpop.f32.mrb[0].mxu0
          %v5903 = vpop.f32.mrb[0].mxu0
          %v5904 = vadd.f32 0.0, %v5903
          %v5905 = vpop.f32.mrb[0].mxu0
          %5906 = vmatprep.mubr.bf16.mxu0 %v5528
          %5907 = vmatmul.mubr.bf16.gmra.mrb[0].mxu0 %v5527
          %v5908 = vpop.f32.mrb[0].mxu0
          %v5909 = vadd.f32 0.0, %v5908
          %v5910 = vpop.f32.mrb[0].mxu0
          %v5911 = vpop.f32.mrb[0].mxu0
          %v5912 = vadd.f32 0.0, %v5911
          %v5913 = vpop.f32.mrb[0].mxu0
          %5914 = vdwg.mxu0
          %5915 = vmatprep.subr.bf16.mxu0 0
          %5916 = vmatpush1.bf16.msra.mxu0 %v5722
          %5917 = vmatprep.subr.bf16.mxu0 0
          %5918 = vmatpush1.bf16.msra.mxu0 %v5723
          %5919 = vmatprep.subr.bf16.mxu0 0
          %5920 = vmatpush1.bf16.msra.mxu0 %v5724
          %5921 = vmatprep.subr.bf16.mxu0 0
          %5922 = vmatpush1.bf16.msra.mxu0 %v5725
          %5923 = vmatprep.subr.bf16.mxu0 0
          %5924 = vmatpush1.bf16.msra.mxu0 %v5726
          %5925 = vmatprep.subr.bf16.mxu0 0
          %5926 = vmatpush1.bf16.msra.mxu0 %v5727
          %5927 = vmatprep.subr.bf16.mxu0 0
          %5928 = vmatpush1.bf16.msra.mxu0 %v5728
          %5929 = vmatprep.subr.bf16.mxu0 0
          %5930 = vmatpush1.bf16.msra.mxu0 %v5729
          %5931 = vmatprep.subr.bf16.mxu0 0
          %5932 = vmatpush1.bf16.msra.mxu0 0
          %5933 = vmatprep.subr.bf16.mxu0 0
          %5934 = vmatpush1.bf16.msra.mxu0 0
          %5935 = vmatprep.subr.bf16.mxu0 0
          %5936 = vmatpush1.bf16.msra.mxu0 0
          %5937 = vmatprep.subr.bf16.mxu0 0
          %5938 = vmatpush1.bf16.msra.mxu0 0
          %5939 = vmatprep.subr.bf16.mxu0 0
          %5940 = vmatpush1.bf16.msra.mxu0 0
          %5941 = vmatprep.subr.bf16.mxu0 0
          %5942 = vmatpush1.bf16.msra.mxu0 0
          %5943 = vmatprep.subr.bf16.mxu0 0
          %5944 = vmatpush1.bf16.msra.mxu0 0
          %5945 = vmatprep.subr.bf16.mxu0 0
          %5946 = vmatpush1.bf16.msra.mxu0 0
          %5947 = vmatprep.mubr.bf16.mxu0 0
          %5948 = vmatmul.mubr.bf16.gmra.mrb[0].mxu0 %v5484
          %v5949 = vpop.f32.mrb[0].mxu0
          %v5950 = vadd.f32 %v5789, %v5949
          %v5951 = vpop.f32.mrb[0].mxu0
          %v5952 = vpop.f32.mrb[0].mxu0
          %v5953 = vadd.f32 %v5792, %v5952
          %v5954 = vpop.f32.mrb[0].mxu0
          %5955 = vmatprep.mubr.bf16.mxu0 0
          %5956 = vmatmul.mubr.bf16.gmra.mrb[0].mxu0 %v5487
          %v5957 = vpop.f32.mrb[0].mxu0
          %v5958 = vadd.f32 %v5797, %v5957
          %v5959 = vpop.f32.mrb[0].mxu0
          %v5960 = vpop.f32.mrb[0].mxu0
          %v5961 = vadd.f32 %v5800, %v5960
          %v5962 = vpop.f32.mrb[0].mxu0
          %5963 = vmatprep.mubr.bf16.mxu0 0
          %5964 = vmatmul.mubr.bf16.gmra.mrb[0].mxu0 %v5490
          %v5965 = vpop.f32.mrb[0].mxu0
          %v5966 = vadd.f32 %v5805, %v5965
          %v5967 = vpop.f32.mrb[0].mxu0
          %v5968 = vpop.f32.mrb[0].mxu0
          %v5969 = vadd.f32 %v5808, %v5968
          %v5970 = vpop.f32.mrb[0].mxu0
          %5971 = vmatprep.mubr.bf16.mxu0 0
          %5972 = vmatmul.mubr.bf16.gmra.mrb[0].mxu0 %v5493
          %v5973 = vpop.f32.mrb[0].mxu0
          %v5974 = vadd.f32 %v5813, %v5973
          %v5975 = vpop.f32.mrb[0].mxu0
          %v5976 = vpop.f32.mrb[0].mxu0
          %v5977 = vadd.f32 %v5816, %v5976
          %v5978 = vpop.f32.mrb[0].mxu0
          %5979 = vmatprep.mubr.bf16.mxu0 0
          %5980 = vmatmul.mubr.bf16.gmra.mrb[0].mxu0 %v5496
          %v5981 = vpop.f32.mrb[0].mxu0
          %v5982 = vadd.f32 %v5821, %v5981
          %v5983 = vpop.f32.mrb[0].mxu0
          %v5984 = vpop.f32.mrb[0].mxu0
          %v5985 = vadd.f32 %v5824, %v5984
          %v5986 = vpop.f32.mrb[0].mxu0
          %5987 = vmatprep.mubr.bf16.mxu0 0
          %5988 = vmatmul.mubr.bf16.gmra.mrb[0].mxu0 %v5499
          %v5989 = vpop.f32.mrb[0].mxu0
          %v5990 = vadd.f32 %v5829, %v5989
          %v5991 = vpop.f32.mrb[0].mxu0
          %v5992 = vpop.f32.mrb[0].mxu0
          %v5993 = vadd.f32 %v5832, %v5992
          %v5994 = vpop.f32.mrb[0].mxu0
          %5995 = vmatprep.mubr.bf16.mxu0 0
          %5996 = vmatmul.mubr.bf16.gmra.mrb[0].mxu0 %v5502
          %v5997 = vpop.f32.mrb[0].mxu0
          %v5998 = vadd.f32 %v5837, %v5997
          %v5999 = vpop.f32.mrb[0].mxu0
          %v6000 = vpop.f32.mrb[0].mxu0
          %v6001 = vadd.f32 %v5840, %v6000
          %v6002 = vpop.f32.mrb[0].mxu0
          %6003 = vmatprep.mubr.bf16.mxu0 0
          %6004 = vmatmul.mubr.bf16.gmra.mrb[0].mxu0 %v5505
          %v6005 = vpop.f32.mrb[0].mxu0
          %v6006 = vadd.f32 %v5845, %v6005
          %v6007 = vpop.f32.mrb[0].mxu0
          %v6008 = vpop.f32.mrb[0].mxu0
          %v6009 = vadd.f32 %v5848, %v6008
          %v6010 = vpop.f32.mrb[0].mxu0
          %6011 = vmatprep.mubr.bf16.mxu0 0
          %6012 = vmatmul.mubr.bf16.gmra.mrb[0].mxu0 %v5508
          %v6013 = vpop.f32.mrb[0].mxu0
          %v6014 = vadd.f32 %v5853, %v6013
          %v6015 = vpop.f32.mrb[0].mxu0
          %v6016 = vpop.f32.mrb[0].mxu0
          %v6017 = vadd.f32 %v5856, %v6016
          %v6018 = vpop.f32.mrb[0].mxu0
          %6019 = vmatprep.mubr.bf16.mxu0 0
          %6020 = vmatmul.mubr.bf16.gmra.mrb[0].mxu0 %v5511
          %v6021 = vpop.f32.mrb[0].mxu0
          %v6022 = vadd.f32 %v5861, %v6021
          %v6023 = vpop.f32.mrb[0].mxu0
          %v6024 = vpop.f32.mrb[0].mxu0
          %v6025 = vadd.f32 %v5864, %v6024
          %v6026 = vpop.f32.mrb[0].mxu0
          %6027 = vmatprep.mubr.bf16.mxu0 0
          %6028 = vmatmul.mubr.bf16.gmra.mrb[0].mxu0 %v5514
          %v6029 = vpop.f32.mrb[0].mxu0
          %v6030 = vadd.f32 %v5869, %v6029
          %v6031 = vpop.f32.mrb[0].mxu0
          %v6032 = vpop.f32.mrb[0].mxu0
          %v6033 = vadd.f32 %v5872, %v6032
          %v6034 = vpop.f32.mrb[0].mxu0
          %6035 = vmatprep.mubr.bf16.mxu0 0
          %6036 = vmatmul.mubr.bf16.gmra.mrb[0].mxu0 %v5517
          %v6037 = vpop.f32.mrb[0].mxu0
          %v6038 = vadd.f32 %v5877, %v6037
          %v6039 = vpop.f32.mrb[0].mxu0
          %v6040 = vpop.f32.mrb[0].mxu0
          %v6041 = vadd.f32 %v5880, %v6040
          %v6042 = vpop.f32.mrb[0].mxu0
          %6043 = vmatprep.mubr.bf16.mxu0 0
          %6044 = vmatmul.mubr.bf16.gmra.mrb[0].mxu0 %v5520
          %v6045 = vpop.f32.mrb[0].mxu0
          %v6046 = vadd.f32 %v5885, %v6045
          %v6047 = vpop.f32.mrb[0].mxu0
          %v6048 = vpop.f32.mrb[0].mxu0
          %v6049 = vadd.f32 %v5888, %v6048
          %v6050 = vpop.f32.mrb[0].mxu0
          %6051 = vmatprep.mubr.bf16.mxu0 0
          %6052 = vmatmul.mubr.bf16.gmra.mrb[0].mxu0 %v5523
          %v6053 = vpop.f32.mrb[0].mxu0
          %v6054 = vadd.f32 %v5893, %v6053
          %v6055 = vpop.f32.mrb[0].mxu0
          %v6056 = vpop.f32.mrb[0].mxu0
          %v6057 = vadd.f32 %v5896, %v6056
          %v6058 = vpop.f32.mrb[0].mxu0
          %6059 = vmatprep.mubr.bf16.mxu0 0
          %6060 = vmatmul.mubr.bf16.gmra.mrb[0].mxu0 %v5526
          %v6061 = vpop.f32.mrb[0].mxu0
          %v6062 = vadd.f32 %v5901, %v6061
          %v6063 = vpop.f32.mrb[0].mxu0
          %v6064 = vpop.f32.mrb[0].mxu0
          %v6065 = vadd.f32 %v5904, %v6064
          %v6066 = vpop.f32.mrb[0].mxu0
          %6067 = vmatprep.mubr.bf16.mxu0 0
          %6068 = vmatmul.mubr.bf16.gmra.mrb[0].mxu0 %v5529
          %v6069 = vpop.f32.mrb[0].mxu0
          %v6070 = vadd.f32 %v5909, %v6069
          %v6071 = vpop.f32.mrb[0].mxu0
          %v6072 = vpop.f32.mrb[0].mxu0
          %v6073 = vadd.f32 %v5912, %v6072
          %v6074 = vpop.f32.mrb[0].mxu0
          %6075 = vdwg.mxu0
          %v6076 = vadd.f32 %v5530, %v5950
          %v6077 = vadd.f32 %v5531, %v5953
          %v6078 = vadd.f32 %v5532, %v5958
          %v6079 = vadd.f32 %v5533, %v5961
          %v6080 = vadd.f32 %v5534, %v5966
          %v6081 = vadd.f32 %v5535, %v5969
          %v6082 = vadd.f32 %v5536, %v5974
          %v6083 = vadd.f32 %v5537, %v5977
          %v6084 = vadd.f32 %v5538, %v5982
          %v6085 = vadd.f32 %v5539, %v5985
          %v6086 = vadd.f32 %v5540, %v5990
          %v6087 = vadd.f32 %v5541, %v5993
          %v6088 = vadd.f32 %v5542, %v5998
          %v6089 = vadd.f32 %v5543, %v6001
          %v6090 = vadd.f32 %v5544, %v6006
          %v6091 = vadd.f32 %v5545, %v6009
          %v6092 = vadd.f32 %v5546, %v6014
          %v6093 = vadd.f32 %v5547, %v6017
          %v6094 = vadd.f32 %v5548, %v6022
          %v6095 = vadd.f32 %v5549, %v6025
          %v6096 = vadd.f32 %v5550, %v6030
          %v6097 = vadd.f32 %v5551, %v6033
          %v6098 = vadd.f32 %v5552, %v6038
          %v6099 = vadd.f32 %v5553, %v6041
          %v6100 = vadd.f32 %v5554, %v6046
          %v6101 = vadd.f32 %v5555, %v6049
          %v6102 = vadd.f32 %v5556, %v6054
          %v6103 = vadd.f32 %v5557, %v6057
          %v6104 = vadd.f32 %v5558, %v6062
          %v6105 = vadd.f32 %v5559, %v6065
          %v6106 = vadd.f32 %v5560, %v6070
          %v6107 = vadd.f32 %v5561, %v6073
          %6108 = vst [vmem:[#allocation2] sm:$0xff] %v6076
          %6109 = vst [vmem:[#allocation2 + $0x8] sm:$0xff] %v6077
          %6110 = vst [vmem:[#allocation2 + $0x10] sm:$0xff] %v6078
          %6111 = vst [vmem:[#allocation2 + $0x18] sm:$0xff] %v6079
          %6112 = vst [vmem:[#allocation2 + $0x20] sm:$0xff] %v6080
          %6113 = vst [vmem:[#allocation2 + $0x28] sm:$0xff] %v6081
          %6114 = vst [vmem:[#allocation2 + $0x30] sm:$0xff] %v6082
          %6115 = vst [vmem:[#allocation2 + $0x38] sm:$0xff] %v6083
          %6116 = vst [vmem:[#allocation2 + $0x40] sm:$0xff] %v6084
          %6117 = vst [vmem:[#allocation2 + $0x48] sm:$0xff] %v6085
          %6118 = vst [vmem:[#allocation2 + $0x50] sm:$0xff] %v6086
          %6119 = vst [vmem:[#allocation2 + $0x58] sm:$0xff] %v6087
          %6120 = vst [vmem:[#allocation2 + $0x60] sm:$0xff] %v6088
          %6121 = vst [vmem:[#allocation2 + $0x68] sm:$0xff] %v6089
          %6122 = vst [vmem:[#allocation2 + $0x70] sm:$0xff] %v6090
          %6123 = vst [vmem:[#allocation2 + $0x78] sm:$0xff] %v6091
          %6124 = vst [vmem:[#allocation2 + $0x80] sm:$0xff] %v6092
          %6125 = vst [vmem:[#allocation2 + $0x88] sm:$0xff] %v6093
          %6126 = vst [vmem:[#allocation2 + $0x90] sm:$0xff] %v6094
          %6127 = vst [vmem:[#allocation2 + $0x98] sm:$0xff] %v6095
          %6128 = vst [vmem:[#allocation2 + $0xa0] sm:$0xff] %v6096
          %6129 = vst [vmem:[#allocation2 + $0xa8] sm:$0xff] %v6097
          %6130 = vst [vmem:[#allocation2 + $0xb0] sm:$0xff] %v6098
          %6131 = vst [vmem:[#allocation2 + $0xb8] sm:$0xff] %v6099
          %6132 = vst [vmem:[#allocation2 + $0xc0] sm:$0xff] %v6100
          %6133 = vst [vmem:[#allocation2 + $0xc8] sm:$0xff] %v6101
          %6134 = vst [vmem:[#allocation2 + $0xd0] sm:$0xff] %v6102
          %6135 = vst [vmem:[#allocation2 + $0xd8] sm:$0xff] %v6103
          %6136 = vst [vmem:[#allocation2 + $0xe0] sm:$0xff] %v6104
          %6137 = vst [vmem:[#allocation2 + $0xe8] sm:$0xff] %v6105
          %6138 = vst [vmem:[#allocation2 + $0xf0] sm:$0xff] %v6106
          %6139 = vst [vmem:[#allocation2 + $0xf8] sm:$0xff] %v6107
          %s6140 = scalar_lea.vmem [#allocation3], 144
          %v6141 = vld [vmem:[%s6140] sm:$0xff]
          %v6142 = vld [vmem:[%s6140 + $0x8] sm:$0xff]
          %v6143 = vld [vmem:[%s6140 + $0x10] sm:$0xff]
          %v6144 = vld [vmem:[%s6140 + $0x18] sm:$0xff]
          %v6145 = vld [vmem:[%s6140 + $0x20] sm:$0xff]
          %v6146 = vld [vmem:[%s6140 + $0x28] sm:$0xff]
          %v6147 = vld [vmem:[%s6140 + $0x30] sm:$0xff]
          %v6148 = vld [vmem:[%s6140 + $0x38] sm:$0xff]
          %v6149 = vld [vmem:[%s6140 + $0x40] sm:$0xff]
          %v6150 = vld [vmem:[%s6140 + $0x48] sm:$0xff]
          %v6151 = vld [vmem:[%s6140 + $0x50] sm:$0xff]
          %v6152 = vld [vmem:[%s6140 + $0x58] sm:$0xff]
          %v6153 = vld [vmem:[%s6140 + $0x60] sm:$0xff]
          %v6154 = vld [vmem:[%s6140 + $0x68] sm:$0xff]
          %v6155 = vld [vmem:[%s6140 + $0x70] sm:$0xff]
          %v6156 = vld [vmem:[%s6140 + $0x78] sm:$0xff]
          %v6157 = vld [vmem:[%s6140 + $0x80] sm:$0xff]
          %v6158 = vld [vmem:[%s6140 + $0x88] sm:$0xff]
          %v6159 = vld [vmem:[%s6140 + $0x90] sm:$0xff]
          %v6160 = vld [vmem:[%s6140 + $0x98] sm:$0xff]
          %v6161 = vld [vmem:[%s6140 + $0xa0] sm:$0xff]
          %v6162 = vld [vmem:[%s6140 + $0xa8] sm:$0xff]
          %v6163 = vld [vmem:[%s6140 + $0xb0] sm:$0xff]
          %v6164 = vld [vmem:[%s6140 + $0xb8] sm:$0xff]
          %v6165 = vld [vmem:[%s6140 + $0xc0] sm:$0xff]
          %v6166 = vld [vmem:[%s6140 + $0xc8] sm:$0xff]
          %v6167 = vld [vmem:[%s6140 + $0xd0] sm:$0xff]
          %v6168 = vld [vmem:[%s6140 + $0xd8] sm:$0xff]
          %v6169 = vld [vmem:[%s6140 + $0xe0] sm:$0xff]
          %v6170 = vld [vmem:[%s6140 + $0xe8] sm:$0xff]
          %v6171 = vld [vmem:[%s6140 + $0xf0] sm:$0xff]
          %v6172 = vld [vmem:[%s6140 + $0xf8] sm:$0xff]
          %v6173 = vld [vmem:[%s6140 + $0x100] sm:$0xff]
          %v6174 = vld [vmem:[%s6140 + $0x108] sm:$0xff]
          %v6175 = vld [vmem:[%s6140 + $0x110] sm:$0xff]
          %v6176 = vld [vmem:[%s6140 + $0x118] sm:$0xff]
          %v6177 = vld [vmem:[%s6140 + $0x120] sm:$0xff]
          %v6178 = vld [vmem:[%s6140 + $0x128] sm:$0xff]
          %v6179 = vld [vmem:[%s6140 + $0x130] sm:$0xff]
          %v6180 = vld [vmem:[%s6140 + $0x138] sm:$0xff]
          %v6181 = vld [vmem:[%s6140 + $0x140] sm:$0xff]
          %v6182 = vld [vmem:[%s6140 + $0x148] sm:$0xff]
          %v6183 = vld [vmem:[%s6140 + $0x150] sm:$0xff]
          %v6184 = vld [vmem:[%s6140 + $0x158] sm:$0xff]
          %v6185 = vld [vmem:[%s6140 + $0x160] sm:$0xff]
          %v6186 = vld [vmem:[%s6140 + $0x168] sm:$0xff]
          %v6187 = vld [vmem:[%s6140 + $0x170] sm:$0xff]
          %v6188 = vld [vmem:[%s6140 + $0x178] sm:$0xff]
          %v6189 = vld [vmem:[#allocation2] sm:$0xff]
          %v6190 = vld [vmem:[#allocation2 + $0x8] sm:$0xff]
          %v6191 = vld [vmem:[#allocation2 + $0x10] sm:$0xff]
          %v6192 = vld [vmem:[#allocation2 + $0x18] sm:$0xff]
          %v6193 = vld [vmem:[#allocation2 + $0x20] sm:$0xff]
          %v6194 = vld [vmem:[#allocation2 + $0x28] sm:$0xff]
          %v6195 = vld [vmem:[#allocation2 + $0x30] sm:$0xff]
          %v6196 = vld [vmem:[#allocation2 + $0x38] sm:$0xff]
          %v6197 = vld [vmem:[#allocation2 + $0x40] sm:$0xff]
          %v6198 = vld [vmem:[#allocation2 + $0x48] sm:$0xff]
          %v6199 = vld [vmem:[#allocation2 + $0x50] sm:$0xff]
          %v6200 = vld [vmem:[#allocation2 + $0x58] sm:$0xff]
          %v6201 = vld [vmem:[#allocation2 + $0x60] sm:$0xff]
          %v6202 = vld [vmem:[#allocation2 + $0x68] sm:$0xff]
          %v6203 = vld [vmem:[#allocation2 + $0x70] sm:$0xff]
          %v6204 = vld [vmem:[#allocation2 + $0x78] sm:$0xff]
          %v6205 = vld [vmem:[#allocation2 + $0x80] sm:$0xff]
          %v6206 = vld [vmem:[#allocation2 + $0x88] sm:$0xff]
          %v6207 = vld [vmem:[#allocation2 + $0x90] sm:$0xff]
          %v6208 = vld [vmem:[#allocation2 + $0x98] sm:$0xff]
          %v6209 = vld [vmem:[#allocation2 + $0xa0] sm:$0xff]
          %v6210 = vld [vmem:[#allocation2 + $0xa8] sm:$0xff]
          %v6211 = vld [vmem:[#allocation2 + $0xb0] sm:$0xff]
          %v6212 = vld [vmem:[#allocation2 + $0xb8] sm:$0xff]
          %v6213 = vld [vmem:[#allocation2 + $0xc0] sm:$0xff]
          %v6214 = vld [vmem:[#allocation2 + $0xc8] sm:$0xff]
          %v6215 = vld [vmem:[#allocation2 + $0xd0] sm:$0xff]
          %v6216 = vld [vmem:[#allocation2 + $0xd8] sm:$0xff]
          %v6217 = vld [vmem:[#allocation2 + $0xe0] sm:$0xff]
          %v6218 = vld [vmem:[#allocation2 + $0xe8] sm:$0xff]
          %v6219 = vld [vmem:[#allocation2 + $0xf0] sm:$0xff]
          %v6220 = vld [vmem:[#allocation2 + $0xf8] sm:$0xff]
          %s6221 = scalar_lea.vmem %s291, 192 [#allocation4]
          %v6222 = vld [vmem:[%s6221] sm:$0xf]
          %v6223 = vld [vmem:[%s6221 + $0x4] sm:$0xf]
          %v6224 = vld [vmem:[%s6221 + $0x8] sm:$0xf]
          %v6225 = vld [vmem:[%s6221 + $0xc] sm:$0xf]
          %v6226 = vld [vmem:[%s6221 + $0x10] sm:$0xf]
          %v6227 = vld [vmem:[%s6221 + $0x14] sm:$0xf]
          %v6228 = vld [vmem:[%s6221 + $0x18] sm:$0xf]
          %v6229 = vld [vmem:[%s6221 + $0x1c] sm:$0xf]
          %v6230 = vld [vmem:[%s6221 + $0x20] sm:$0xf]
          %v6231 = vld [vmem:[%s6221 + $0x24] sm:$0xf]
          %v6232 = vld [vmem:[%s6221 + $0x28] sm:$0xf]
          %v6233 = vld [vmem:[%s6221 + $0x2c] sm:$0xf]
          %v6234 = vld [vmem:[%s6221 + $0x30] sm:$0xf]
          %v6235 = vld [vmem:[%s6221 + $0x34] sm:$0xf]
          %v6236 = vld [vmem:[%s6221 + $0x38] sm:$0xf]
          %v6237 = vld [vmem:[%s6221 + $0x3c] sm:$0xf]
          %v6238 = vld [vmem:[%s6221 + $0x40] sm:$0xf]
          %v6239 = vld [vmem:[%s6221 + $0x44] sm:$0xf]
          %v6240 = vld [vmem:[%s6221 + $0x48] sm:$0xf]
          %v6241 = vld [vmem:[%s6221 + $0x4c] sm:$0xf]
          %v6242 = vld [vmem:[%s6221 + $0x50] sm:$0xf]
          %v6243 = vld [vmem:[%s6221 + $0x54] sm:$0xf]
          %v6244 = vld [vmem:[%s6221 + $0x58] sm:$0xf]
          %v6245 = vld [vmem:[%s6221 + $0x5c] sm:$0xf]
          %v6246 = vld [vmem:[%s6221 + $0x60] sm:$0xf]
          %v6247 = vld [vmem:[%s6221 + $0x64] sm:$0xf]
          %v6248 = vld [vmem:[%s6221 + $0x68] sm:$0xf]
          %v6249 = vld [vmem:[%s6221 + $0x6c] sm:$0xf]
          %v6250 = vld [vmem:[%s6221 + $0x70] sm:$0xf]
          %v6251 = vld [vmem:[%s6221 + $0x74] sm:$0xf]
          %v6252 = vld [vmem:[%s6221 + $0x78] sm:$0xf]
          %v6253 = vld [vmem:[%s6221 + $0x7c] sm:$0xf]
          %v6254 = vld [vmem:[%s6221 + $0x80] sm:$0xf]
          %v6255 = vld [vmem:[%s6221 + $0x84] sm:$0xf]
          %v6256 = vld [vmem:[%s6221 + $0x88] sm:$0xf]
          %v6257 = vld [vmem:[%s6221 + $0x8c] sm:$0xf]
          %v6258 = vld [vmem:[%s6221 + $0x90] sm:$0xf]
          %v6259 = vld [vmem:[%s6221 + $0x94] sm:$0xf]
          %v6260 = vld [vmem:[%s6221 + $0x98] sm:$0xf]
          %v6261 = vld [vmem:[%s6221 + $0x9c] sm:$0xf]
          %v6262 = vld [vmem:[%s6221 + $0xa0] sm:$0xf]
          %v6263 = vld [vmem:[%s6221 + $0xa4] sm:$0xf]
          %v6264 = vld [vmem:[%s6221 + $0xa8] sm:$0xf]
          %v6265 = vld [vmem:[%s6221 + $0xac] sm:$0xf]
          %v6266 = vld [vmem:[%s6221 + $0xb0] sm:$0xf]
          %v6267 = vld [vmem:[%s6221 + $0xb4] sm:$0xf]
          %v6268 = vld [vmem:[%s6221 + $0xb8] sm:$0xf]
          %v6269 = vld [vmem:[%s6221 + $0xbc] sm:$0xf]
          %v6318 = vunpack.c.l.b16 %v6222
          %v6319 = vunpack.c.l.b16 %v6223
          %v6320 = vunpack.c.l.b16 %v6224
          %v6321 = vunpack.c.l.b16 %v6225
          %v6322 = vunpack.c.l.b16 %v6226
          %v6323 = vunpack.c.l.b16 %v6227
          %v6324 = vunpack.c.l.b16 %v6228
          %v6325 = vunpack.c.l.b16 %v6229
          %v6326 = vunpack.c.l.b16 %v6230
          %v6327 = vunpack.c.l.b16 %v6231
          %v6328 = vunpack.c.l.b16 %v6232
          %v6329 = vunpack.c.l.b16 %v6233
          %v6330 = vunpack.c.l.b16 %v6234
          %v6331 = vunpack.c.l.b16 %v6235
          %v6332 = vunpack.c.l.b16 %v6236
          %v6333 = vunpack.c.l.b16 %v6237
          %v6334 = vunpack.c.l.b16 %v6238
          %v6335 = vunpack.c.l.b16 %v6239
          %v6336 = vunpack.c.l.b16 %v6240
          %v6337 = vunpack.c.l.b16 %v6241
          %v6338 = vunpack.c.l.b16 %v6242
          %v6339 = vunpack.c.l.b16 %v6243
          %v6340 = vunpack.c.l.b16 %v6244
          %v6341 = vunpack.c.l.b16 %v6245
          %v6342 = vunpack.c.l.b16 %v6246
          %v6343 = vunpack.c.l.b16 %v6247
          %v6344 = vunpack.c.l.b16 %v6248
          %v6345 = vunpack.c.l.b16 %v6249
          %v6346 = vunpack.c.l.b16 %v6250
          %v6347 = vunpack.c.l.b16 %v6251
          %v6348 = vunpack.c.l.b16 %v6252
          %v6349 = vunpack.c.l.b16 %v6253
          %v6350 = vunpack.c.l.b16 %v6254
          %v6351 = vunpack.c.l.b16 %v6255
          %v6352 = vunpack.c.l.b16 %v6256
          %v6353 = vunpack.c.l.b16 %v6257
          %v6354 = vunpack.c.l.b16 %v6258
          %v6355 = vunpack.c.l.b16 %v6259
          %v6356 = vunpack.c.l.b16 %v6260
          %v6357 = vunpack.c.l.b16 %v6261
          %v6358 = vunpack.c.l.b16 %v6262
          %v6359 = vunpack.c.l.b16 %v6263
          %v6360 = vunpack.c.l.b16 %v6264
          %v6361 = vunpack.c.l.b16 %v6265
          %v6362 = vunpack.c.l.b16 %v6266
          %v6363 = vunpack.c.l.b16 %v6267
          %v6364 = vunpack.c.l.b16 %v6268
          %v6365 = vunpack.c.l.b16 %v6269
          %v6366 = vpack.c.b16 %v6319, %v6318
          %v6367 = vpack.c.b16 %v6321, %v6320
          %v6368 = vpack.c.b16 %v6323, %v6322
          %v6369 = vpack.c.b16 %v6325, %v6324
          %v6370 = vpack.c.b16 %v6327, %v6326
          %v6371 = vpack.c.b16 %v6329, %v6328
          %v6372 = vpack.c.b16 %v6331, %v6330
          %v6373 = vpack.c.b16 %v6333, %v6332
          %v6374 = vpack.c.b16 %v6335, %v6334
          %v6375 = vpack.c.b16 %v6337, %v6336
          %v6376 = vpack.c.b16 %v6339, %v6338
          %v6377 = vpack.c.b16 %v6341, %v6340
          %v6378 = vpack.c.b16 %v6343, %v6342
          %v6379 = vpack.c.b16 %v6345, %v6344
          %v6380 = vpack.c.b16 %v6347, %v6346
          %v6381 = vpack.c.b16 %v6349, %v6348
          %v6382 = vpack.c.b16 %v6351, %v6350
          %v6383 = vpack.c.b16 %v6353, %v6352
          %v6384 = vpack.c.b16 %v6355, %v6354
          %v6385 = vpack.c.b16 %v6357, %v6356
          %v6386 = vpack.c.b16 %v6359, %v6358
          %v6387 = vpack.c.b16 %v6361, %v6360
          %v6388 = vpack.c.b16 %v6363, %v6362
          %v6389 = vpack.c.b16 %v6365, %v6364
          %6414 = vmatprep.subr.bf16.mxu0 0
          %6415 = vmatpush1.bf16.msra.mxu0 %v6366
          %6416 = vmatprep.subr.bf16.mxu0 0
          %6417 = vmatpush1.bf16.msra.mxu0 %v6367
          %6418 = vmatprep.subr.bf16.mxu0 0
          %6419 = vmatpush1.bf16.msra.mxu0 %v6368
          %6420 = vmatprep.subr.bf16.mxu0 0
          %6421 = vmatpush1.bf16.msra.mxu0 %v6369
          %6422 = vmatprep.subr.bf16.mxu0 0
          %6423 = vmatpush1.bf16.msra.mxu0 %v6370
          %6424 = vmatprep.subr.bf16.mxu0 0
          %6425 = vmatpush1.bf16.msra.mxu0 %v6371
          %6426 = vmatprep.subr.bf16.mxu0 0
          %6427 = vmatpush1.bf16.msra.mxu0 %v6372
          %6428 = vmatprep.subr.bf16.mxu0 0
          %6429 = vmatpush1.bf16.msra.mxu0 %v6373
          %6430 = vmatprep.subr.bf16.mxu0 0
          %6431 = vmatpush1.bf16.msra.mxu0 %v6374
          %6432 = vmatprep.subr.bf16.mxu0 0
          %6433 = vmatpush1.bf16.msra.mxu0 %v6375
          %6434 = vmatprep.subr.bf16.mxu0 0
          %6435 = vmatpush1.bf16.msra.mxu0 %v6376
          %6436 = vmatprep.subr.bf16.mxu0 0
          %6437 = vmatpush1.bf16.msra.mxu0 %v6377
          %6438 = vmatprep.subr.bf16.mxu0 0
          %6439 = vmatpush1.bf16.msra.mxu0 %v6378
          %6440 = vmatprep.subr.bf16.mxu0 0
          %6441 = vmatpush1.bf16.msra.mxu0 %v6379
          %6442 = vmatprep.subr.bf16.mxu0 0
          %6443 = vmatpush1.bf16.msra.mxu0 %v6380
          %6444 = vmatprep.subr.bf16.mxu0 0
          %6445 = vmatpush1.bf16.msra.mxu0 %v6381
          %6446 = vmatprep.mubr.bf16.mxu0 %v6142
          %6447 = vmatmul.mubr.bf16.gmra.mrb[0].mxu0 %v6141
          %v6448 = vpop.f32.mrb[0].mxu0
          %v6449 = vadd.f32 0.0, %v6448
          %v6450 = vpop.f32.mrb[0].mxu0
          %v6451 = vpop.f32.mrb[0].mxu0
          %v6452 = vadd.f32 0.0, %v6451
          %v6453 = vpop.f32.mrb[0].mxu0
          %6454 = vmatprep.mubr.bf16.mxu0 %v6145
          %6455 = vmatmul.mubr.bf16.gmra.mrb[0].mxu0 %v6144
          %v6456 = vpop.f32.mrb[0].mxu0
          %v6457 = vadd.f32 0.0, %v6456
          %v6458 = vpop.f32.mrb[0].mxu0
          %v6459 = vpop.f32.mrb[0].mxu0
          %v6460 = vadd.f32 0.0, %v6459
          %v6461 = vpop.f32.mrb[0].mxu0
          %6462 = vmatprep.mubr.bf16.mxu0 %v6148
          %6463 = vmatmul.mubr.bf16.gmra.mrb[0].mxu0 %v6147
          %v6464 = vpop.f32.mrb[0].mxu0
          %v6465 = vadd.f32 0.0, %v6464
          %v6466 = vpop.f32.mrb[0].mxu0
          %v6467 = vpop.f32.mrb[0].mxu0
          %v6468 = vadd.f32 0.0, %v6467
          %v6469 = vpop.f32.mrb[0].mxu0
          %6470 = vmatprep.mubr.bf16.mxu0 %v6151
          %6471 = vmatmul.mubr.bf16.gmra.mrb[0].mxu0 %v6150
          %v6472 = vpop.f32.mrb[0].mxu0
          %v6473 = vadd.f32 0.0, %v6472
          %v6474 = vpop.f32.mrb[0].mxu0
          %v6475 = vpop.f32.mrb[0].mxu0
          %v6476 = vadd.f32 0.0, %v6475
          %v6477 = vpop.f32.mrb[0].mxu0
          %6478 = vmatprep.mubr.bf16.mxu0 %v6154
          %6479 = vmatmul.mubr.bf16.gmra.mrb[0].mxu0 %v6153
          %v6480 = vpop.f32.mrb[0].mxu0
          %v6481 = vadd.f32 0.0, %v6480
          %v6482 = vpop.f32.mrb[0].mxu0
          %v6483 = vpop.f32.mrb[0].mxu0
          %v6484 = vadd.f32 0.0, %v6483
          %v6485 = vpop.f32.mrb[0].mxu0
          %6486 = vmatprep.mubr.bf16.mxu0 %v6157
          %6487 = vmatmul.mubr.bf16.gmra.mrb[0].mxu0 %v6156
          %v6488 = vpop.f32.mrb[0].mxu0
          %v6489 = vadd.f32 0.0, %v6488
          %v6490 = vpop.f32.mrb[0].mxu0
          %v6491 = vpop.f32.mrb[0].mxu0
          %v6492 = vadd.f32 0.0, %v6491
          %v6493 = vpop.f32.mrb[0].mxu0
          %6494 = vmatprep.mubr.bf16.mxu0 %v6160
          %6495 = vmatmul.mubr.bf16.gmra.mrb[0].mxu0 %v6159
          %v6496 = vpop.f32.mrb[0].mxu0
          %v6497 = vadd.f32 0.0, %v6496
          %v6498 = vpop.f32.mrb[0].mxu0
          %v6499 = vpop.f32.mrb[0].mxu0
          %v6500 = vadd.f32 0.0, %v6499
          %v6501 = vpop.f32.mrb[0].mxu0
          %6502 = vmatprep.mubr.bf16.mxu0 %v6163
          %6503 = vmatmul.mubr.bf16.gmra.mrb[0].mxu0 %v6162
          %v6504 = vpop.f32.mrb[0].mxu0
          %v6505 = vadd.f32 0.0, %v6504
          %v6506 = vpop.f32.mrb[0].mxu0
          %v6507 = vpop.f32.mrb[0].mxu0
          %v6508 = vadd.f32 0.0, %v6507
          %v6509 = vpop.f32.mrb[0].mxu0
          %6510 = vmatprep.mubr.bf16.mxu0 %v6166
          %6511 = vmatmul.mubr.bf16.gmra.mrb[0].mxu0 %v6165
          %v6512 = vpop.f32.mrb[0].mxu0
          %v6513 = vadd.f32 0.0, %v6512
          %v6514 = vpop.f32.mrb[0].mxu0
          %v6515 = vpop.f32.mrb[0].mxu0
          %v6516 = vadd.f32 0.0, %v6515
          %v6517 = vpop.f32.mrb[0].mxu0
          %6518 = vmatprep.mubr.bf16.mxu0 %v6169
          %6519 = vmatmul.mubr.bf16.gmra.mrb[0].mxu0 %v6168
          %v6520 = vpop.f32.mrb[0].mxu0
          %v6521 = vadd.f32 0.0, %v6520
          %v6522 = vpop.f32.mrb[0].mxu0
          %v6523 = vpop.f32.mrb[0].mxu0
          %v6524 = vadd.f32 0.0, %v6523
          %v6525 = vpop.f32.mrb[0].mxu0
          %6526 = vmatprep.mubr.bf16.mxu0 %v6172
          %6527 = vmatmul.mubr.bf16.gmra.mrb[0].mxu0 %v6171
          %v6528 = vpop.f32.mrb[0].mxu0
          %v6529 = vadd.f32 0.0, %v6528
          %v6530 = vpop.f32.mrb[0].mxu0
          %v6531 = vpop.f32.mrb[0].mxu0
          %v6532 = vadd.f32 0.0, %v6531
          %v6533 = vpop.f32.mrb[0].mxu0
          %6534 = vmatprep.mubr.bf16.mxu0 %v6175
          %6535 = vmatmul.mubr.bf16.gmra.mrb[0].mxu0 %v6174
          %v6536 = vpop.f32.mrb[0].mxu0
          %v6537 = vadd.f32 0.0, %v6536
          %v6538 = vpop.f32.mrb[0].mxu0
          %v6539 = vpop.f32.mrb[0].mxu0
          %v6540 = vadd.f32 0.0, %v6539
          %v6541 = vpop.f32.mrb[0].mxu0
          %6542 = vmatprep.mubr.bf16.mxu0 %v6178
          %6543 = vmatmul.mubr.bf16.gmra.mrb[0].mxu0 %v6177
          %v6544 = vpop.f32.mrb[0].mxu0
          %v6545 = vadd.f32 0.0, %v6544
          %v6546 = vpop.f32.mrb[0].mxu0
          %v6547 = vpop.f32.mrb[0].mxu0
          %v6548 = vadd.f32 0.0, %v6547
          %v6549 = vpop.f32.mrb[0].mxu0
          %6550 = vmatprep.mubr.bf16.mxu0 %v6181
          %6551 = vmatmul.mubr.bf16.gmra.mrb[0].mxu0 %v6180
          %v6552 = vpop.f32.mrb[0].mxu0
          %v6553 = vadd.f32 0.0, %v6552
          %v6554 = vpop.f32.mrb[0].mxu0
          %v6555 = vpop.f32.mrb[0].mxu0
          %v6556 = vadd.f32 0.0, %v6555
          %v6557 = vpop.f32.mrb[0].mxu0
          %6558 = vmatprep.mubr.bf16.mxu0 %v6184
          %6559 = vmatmul.mubr.bf16.gmra.mrb[0].mxu0 %v6183
          %v6560 = vpop.f32.mrb[0].mxu0
          %v6561 = vadd.f32 0.0, %v6560
          %v6562 = vpop.f32.mrb[0].mxu0
          %v6563 = vpop.f32.mrb[0].mxu0
          %v6564 = vadd.f32 0.0, %v6563
          %v6565 = vpop.f32.mrb[0].mxu0
          %6566 = vmatprep.mubr.bf16.mxu0 %v6187
          %6567 = vmatmul.mubr.bf16.gmra.mrb[0].mxu0 %v6186
          %v6568 = vpop.f32.mrb[0].mxu0
          %v6569 = vadd.f32 0.0, %v6568
          %v6570 = vpop.f32.mrb[0].mxu0
          %v6571 = vpop.f32.mrb[0].mxu0
          %v6572 = vadd.f32 0.0, %v6571
          %v6573 = vpop.f32.mrb[0].mxu0
          %6574 = vdwg.mxu0
          %6575 = vmatprep.subr.bf16.mxu0 0
          %6576 = vmatpush1.bf16.msra.mxu0 %v6382
          %6577 = vmatprep.subr.bf16.mxu0 0
          %6578 = vmatpush1.bf16.msra.mxu0 %v6383
          %6579 = vmatprep.subr.bf16.mxu0 0
          %6580 = vmatpush1.bf16.msra.mxu0 %v6384
          %6581 = vmatprep.subr.bf16.mxu0 0
          %6582 = vmatpush1.bf16.msra.mxu0 %v6385
          %6583 = vmatprep.subr.bf16.mxu0 0
          %6584 = vmatpush1.bf16.msra.mxu0 %v6386
          %6585 = vmatprep.subr.bf16.mxu0 0
          %6586 = vmatpush1.bf16.msra.mxu0 %v6387
          %6587 = vmatprep.subr.bf16.mxu0 0
          %6588 = vmatpush1.bf16.msra.mxu0 %v6388
          %6589 = vmatprep.subr.bf16.mxu0 0
          %6590 = vmatpush1.bf16.msra.mxu0 %v6389
          %6591 = vmatprep.subr.bf16.mxu0 0
          %6592 = vmatpush1.bf16.msra.mxu0 0
          %6593 = vmatprep.subr.bf16.mxu0 0
          %6594 = vmatpush1.bf16.msra.mxu0 0
          %6595 = vmatprep.subr.bf16.mxu0 0
          %6596 = vmatpush1.bf16.msra.mxu0 0
          %6597 = vmatprep.subr.bf16.mxu0 0
          %6598 = vmatpush1.bf16.msra.mxu0 0
          %6599 = vmatprep.subr.bf16.mxu0 0
          %6600 = vmatpush1.bf16.msra.mxu0 0
          %6601 = vmatprep.subr.bf16.mxu0 0
          %6602 = vmatpush1.bf16.msra.mxu0 0
          %6603 = vmatprep.subr.bf16.mxu0 0
          %6604 = vmatpush1.bf16.msra.mxu0 0
          %6605 = vmatprep.subr.bf16.mxu0 0
          %6606 = vmatpush1.bf16.msra.mxu0 0
          %6607 = vmatprep.mubr.bf16.mxu0 0
          %6608 = vmatmul.mubr.bf16.gmra.mrb[0].mxu0 %v6143
          %v6609 = vpop.f32.mrb[0].mxu0
          %v6610 = vadd.f32 %v6449, %v6609
          %v6611 = vpop.f32.mrb[0].mxu0
          %v6612 = vpop.f32.mrb[0].mxu0
          %v6613 = vadd.f32 %v6452, %v6612
          %v6614 = vpop.f32.mrb[0].mxu0
          %6615 = vmatprep.mubr.bf16.mxu0 0
          %6616 = vmatmul.mubr.bf16.gmra.mrb[0].mxu0 %v6146
          %v6617 = vpop.f32.mrb[0].mxu0
          %v6618 = vadd.f32 %v6457, %v6617
          %v6619 = vpop.f32.mrb[0].mxu0
          %v6620 = vpop.f32.mrb[0].mxu0
          %v6621 = vadd.f32 %v6460, %v6620
          %v6622 = vpop.f32.mrb[0].mxu0
          %6623 = vmatprep.mubr.bf16.mxu0 0
          %6624 = vmatmul.mubr.bf16.gmra.mrb[0].mxu0 %v6149
          %v6625 = vpop.f32.mrb[0].mxu0
          %v6626 = vadd.f32 %v6465, %v6625
          %v6627 = vpop.f32.mrb[0].mxu0
          %v6628 = vpop.f32.mrb[0].mxu0
          %v6629 = vadd.f32 %v6468, %v6628
          %v6630 = vpop.f32.mrb[0].mxu0
          %6631 = vmatprep.mubr.bf16.mxu0 0
          %6632 = vmatmul.mubr.bf16.gmra.mrb[0].mxu0 %v6152
          %v6633 = vpop.f32.mrb[0].mxu0
          %v6634 = vadd.f32 %v6473, %v6633
          %v6635 = vpop.f32.mrb[0].mxu0
          %v6636 = vpop.f32.mrb[0].mxu0
          %v6637 = vadd.f32 %v6476, %v6636
          %v6638 = vpop.f32.mrb[0].mxu0
          %6639 = vmatprep.mubr.bf16.mxu0 0
          %6640 = vmatmul.mubr.bf16.gmra.mrb[0].mxu0 %v6155
          %v6641 = vpop.f32.mrb[0].mxu0
          %v6642 = vadd.f32 %v6481, %v6641
          %v6643 = vpop.f32.mrb[0].mxu0
          %v6644 = vpop.f32.mrb[0].mxu0
          %v6645 = vadd.f32 %v6484, %v6644
          %v6646 = vpop.f32.mrb[0].mxu0
          %6647 = vmatprep.mubr.bf16.mxu0 0
          %6648 = vmatmul.mubr.bf16.gmra.mrb[0].mxu0 %v6158
          %v6649 = vpop.f32.mrb[0].mxu0
          %v6650 = vadd.f32 %v6489, %v6649
          %v6651 = vpop.f32.mrb[0].mxu0
          %v6652 = vpop.f32.mrb[0].mxu0
          %v6653 = vadd.f32 %v6492, %v6652
          %v6654 = vpop.f32.mrb[0].mxu0
          %6655 = vmatprep.mubr.bf16.mxu0 0
          %6656 = vmatmul.mubr.bf16.gmra.mrb[0].mxu0 %v6161
          %v6657 = vpop.f32.mrb[0].mxu0
          %v6658 = vadd.f32 %v6497, %v6657
          %v6659 = vpop.f32.mrb[0].mxu0
          %v6660 = vpop.f32.mrb[0].mxu0
          %v6661 = vadd.f32 %v6500, %v6660
          %v6662 = vpop.f32.mrb[0].mxu0
          %6663 = vmatprep.mubr.bf16.mxu0 0
          %6664 = vmatmul.mubr.bf16.gmra.mrb[0].mxu0 %v6164
          %v6665 = vpop.f32.mrb[0].mxu0
          %v6666 = vadd.f32 %v6505, %v6665
          %v6667 = vpop.f32.mrb[0].mxu0
          %v6668 = vpop.f32.mrb[0].mxu0
          %v6669 = vadd.f32 %v6508, %v6668
          %v6670 = vpop.f32.mrb[0].mxu0
          %6671 = vmatprep.mubr.bf16.mxu0 0
          %6672 = vmatmul.mubr.bf16.gmra.mrb[0].mxu0 %v6167
          %v6673 = vpop.f32.mrb[0].mxu0
          %v6674 = vadd.f32 %v6513, %v6673
          %v6675 = vpop.f32.mrb[0].mxu0
          %v6676 = vpop.f32.mrb[0].mxu0
          %v6677 = vadd.f32 %v6516, %v6676
          %v6678 = vpop.f32.mrb[0].mxu0
          %6679 = vmatprep.mubr.bf16.mxu0 0
          %6680 = vmatmul.mubr.bf16.gmra.mrb[0].mxu0 %v6170
          %v6681 = vpop.f32.mrb[0].mxu0
          %v6682 = vadd.f32 %v6521, %v6681
          %v6683 = vpop.f32.mrb[0].mxu0
          %v6684 = vpop.f32.mrb[0].mxu0
          %v6685 = vadd.f32 %v6524, %v6684
          %v6686 = vpop.f32.mrb[0].mxu0
          %6687 = vmatprep.mubr.bf16.mxu0 0
          %6688 = vmatmul.mubr.bf16.gmra.mrb[0].mxu0 %v6173
          %v6689 = vpop.f32.mrb[0].mxu0
          %v6690 = vadd.f32 %v6529, %v6689
          %v6691 = vpop.f32.mrb[0].mxu0
          %v6692 = vpop.f32.mrb[0].mxu0
          %v6693 = vadd.f32 %v6532, %v6692
          %v6694 = vpop.f32.mrb[0].mxu0
          %6695 = vmatprep.mubr.bf16.mxu0 0
          %6696 = vmatmul.mubr.bf16.gmra.mrb[0].mxu0 %v6176
          %v6697 = vpop.f32.mrb[0].mxu0
          %v6698 = vadd.f32 %v6537, %v6697
          %v6699 = vpop.f32.mrb[0].mxu0
          %v6700 = vpop.f32.mrb[0].mxu0
          %v6701 = vadd.f32 %v6540, %v6700
          %v6702 = vpop.f32.mrb[0].mxu0
          %6703 = vmatprep.mubr.bf16.mxu0 0
          %6704 = vmatmul.mubr.bf16.gmra.mrb[0].mxu0 %v6179
          %v6705 = vpop.f32.mrb[0].mxu0
          %v6706 = vadd.f32 %v6545, %v6705
          %v6707 = vpop.f32.mrb[0].mxu0
          %v6708 = vpop.f32.mrb[0].mxu0
          %v6709 = vadd.f32 %v6548, %v6708
          %v6710 = vpop.f32.mrb[0].mxu0
          %6711 = vmatprep.mubr.bf16.mxu0 0
          %6712 = vmatmul.mubr.bf16.gmra.mrb[0].mxu0 %v6182
          %v6713 = vpop.f32.mrb[0].mxu0
          %v6714 = vadd.f32 %v6553, %v6713
          %v6715 = vpop.f32.mrb[0].mxu0
          %v6716 = vpop.f32.mrb[0].mxu0
          %v6717 = vadd.f32 %v6556, %v6716
          %v6718 = vpop.f32.mrb[0].mxu0
          %6719 = vmatprep.mubr.bf16.mxu0 0
          %6720 = vmatmul.mubr.bf16.gmra.mrb[0].mxu0 %v6185
          %v6721 = vpop.f32.mrb[0].mxu0
          %v6722 = vadd.f32 %v6561, %v6721
          %v6723 = vpop.f32.mrb[0].mxu0
          %v6724 = vpop.f32.mrb[0].mxu0
          %v6725 = vadd.f32 %v6564, %v6724
          %v6726 = vpop.f32.mrb[0].mxu0
          %6727 = vmatprep.mubr.bf16.mxu0 0
          %6728 = vmatmul.mubr.bf16.gmra.mrb[0].mxu0 %v6188
          %v6729 = vpop.f32.mrb[0].mxu0
          %v6730 = vadd.f32 %v6569, %v6729
          %v6731 = vpop.f32.mrb[0].mxu0
          %v6732 = vpop.f32.mrb[0].mxu0
          %v6733 = vadd.f32 %v6572, %v6732
          %v6734 = vpop.f32.mrb[0].mxu0
          %6735 = vdwg.mxu0
          %v6736 = vadd.f32 %v6189, %v6610
          %v6737 = vadd.f32 %v6190, %v6613
          %v6738 = vadd.f32 %v6191, %v6618
          %v6739 = vadd.f32 %v6192, %v6621
          %v6740 = vadd.f32 %v6193, %v6626
          %v6741 = vadd.f32 %v6194, %v6629
          %v6742 = vadd.f32 %v6195, %v6634
          %v6743 = vadd.f32 %v6196, %v6637
          %v6744 = vadd.f32 %v6197, %v6642
          %v6745 = vadd.f32 %v6198, %v6645
          %v6746 = vadd.f32 %v6199, %v6650
          %v6747 = vadd.f32 %v6200, %v6653
          %v6748 = vadd.f32 %v6201, %v6658
          %v6749 = vadd.f32 %v6202, %v6661
          %v6750 = vadd.f32 %v6203, %v6666
          %v6751 = vadd.f32 %v6204, %v6669
          %v6752 = vadd.f32 %v6205, %v6674
          %v6753 = vadd.f32 %v6206, %v6677
          %v6754 = vadd.f32 %v6207, %v6682
          %v6755 = vadd.f32 %v6208, %v6685
          %v6756 = vadd.f32 %v6209, %v6690
          %v6757 = vadd.f32 %v6210, %v6693
          %v6758 = vadd.f32 %v6211, %v6698
          %v6759 = vadd.f32 %v6212, %v6701
          %v6760 = vadd.f32 %v6213, %v6706
          %v6761 = vadd.f32 %v6214, %v6709
          %v6762 = vadd.f32 %v6215, %v6714
          %v6763 = vadd.f32 %v6216, %v6717
          %v6764 = vadd.f32 %v6217, %v6722
          %v6765 = vadd.f32 %v6218, %v6725
          %v6766 = vadd.f32 %v6219, %v6730
          %v6767 = vadd.f32 %v6220, %v6733
          %6768 = vst [vmem:[#allocation2] sm:$0xff] %v6736
          %6769 = vst [vmem:[#allocation2 + $0x8] sm:$0xff] %v6737
          %6770 = vst [vmem:[#allocation2 + $0x10] sm:$0xff] %v6738
          %6771 = vst [vmem:[#allocation2 + $0x18] sm:$0xff] %v6739
          %6772 = vst [vmem:[#allocation2 + $0x20] sm:$0xff] %v6740
          %6773 = vst [vmem:[#allocation2 + $0x28] sm:$0xff] %v6741
          %6774 = vst [vmem:[#allocation2 + $0x30] sm:$0xff] %v6742
          %6775 = vst [vmem:[#allocation2 + $0x38] sm:$0xff] %v6743
          %6776 = vst [vmem:[#allocation2 + $0x40] sm:$0xff] %v6744
          %6777 = vst [vmem:[#allocation2 + $0x48] sm:$0xff] %v6745
          %6778 = vst [vmem:[#allocation2 + $0x50] sm:$0xff] %v6746
          %6779 = vst [vmem:[#allocation2 + $0x58] sm:$0xff] %v6747
          %6780 = vst [vmem:[#allocation2 + $0x60] sm:$0xff] %v6748
          %6781 = vst [vmem:[#allocation2 + $0x68] sm:$0xff] %v6749
          %6782 = vst [vmem:[#allocation2 + $0x70] sm:$0xff] %v6750
          %6783 = vst [vmem:[#allocation2 + $0x78] sm:$0xff] %v6751
          %6784 = vst [vmem:[#allocation2 + $0x80] sm:$0xff] %v6752
          %6785 = vst [vmem:[#allocation2 + $0x88] sm:$0xff] %v6753
          %6786 = vst [vmem:[#allocation2 + $0x90] sm:$0xff] %v6754
          %6787 = vst [vmem:[#allocation2 + $0x98] sm:$0xff] %v6755
          %6788 = vst [vmem:[#allocation2 + $0xa0] sm:$0xff] %v6756
          %6789 = vst [vmem:[#allocation2 + $0xa8] sm:$0xff] %v6757
          %6790 = vst [vmem:[#allocation2 + $0xb0] sm:$0xff] %v6758
          %6791 = vst [vmem:[#allocation2 + $0xb8] sm:$0xff] %v6759
          %6792 = vst [vmem:[#allocation2 + $0xc0] sm:$0xff] %v6760
          %6793 = vst [vmem:[#allocation2 + $0xc8] sm:$0xff] %v6761
          %6794 = vst [vmem:[#allocation2 + $0xd0] sm:$0xff] %v6762
          %6795 = vst [vmem:[#allocation2 + $0xd8] sm:$0xff] %v6763
          %6796 = vst [vmem:[#allocation2 + $0xe0] sm:$0xff] %v6764
          %6797 = vst [vmem:[#allocation2 + $0xe8] sm:$0xff] %v6765
          %6798 = vst [vmem:[#allocation2 + $0xf0] sm:$0xff] %v6766
          %6799 = vst [vmem:[#allocation2 + $0xf8] sm:$0xff] %v6767
          %s6800 = scalar_lea.vmem [#allocation3], 240
          %v6801 = vld [vmem:[%s6800] sm:$0xff]
          %v6802 = vld [vmem:[%s6800 + $0x8] sm:$0xff]
          %v6803 = vld [vmem:[%s6800 + $0x10] sm:$0xff]
          %v6804 = vld [vmem:[%s6800 + $0x18] sm:$0xff]
          %v6805 = vld [vmem:[%s6800 + $0x20] sm:$0xff]
          %v6806 = vld [vmem:[%s6800 + $0x28] sm:$0xff]
          %v6807 = vld [vmem:[%s6800 + $0x30] sm:$0xff]
          %v6808 = vld [vmem:[%s6800 + $0x38] sm:$0xff]
          %v6809 = vld [vmem:[%s6800 + $0x40] sm:$0xff]
          %v6810 = vld [vmem:[%s6800 + $0x48] sm:$0xff]
          %v6811 = vld [vmem:[%s6800 + $0x50] sm:$0xff]
          %v6812 = vld [vmem:[%s6800 + $0x58] sm:$0xff]
          %v6813 = vld [vmem:[%s6800 + $0x60] sm:$0xff]
          %v6814 = vld [vmem:[%s6800 + $0x68] sm:$0xff]
          %v6815 = vld [vmem:[%s6800 + $0x70] sm:$0xff]
          %v6816 = vld [vmem:[%s6800 + $0x78] sm:$0xff]
          %v6817 = vld [vmem:[%s6800 + $0x80] sm:$0xff]
          %v6818 = vld [vmem:[%s6800 + $0x88] sm:$0xff]
          %v6819 = vld [vmem:[%s6800 + $0x90] sm:$0xff]
          %v6820 = vld [vmem:[%s6800 + $0x98] sm:$0xff]
          %v6821 = vld [vmem:[%s6800 + $0xa0] sm:$0xff]
          %v6822 = vld [vmem:[%s6800 + $0xa8] sm:$0xff]
          %v6823 = vld [vmem:[%s6800 + $0xb0] sm:$0xff]
          %v6824 = vld [vmem:[%s6800 + $0xb8] sm:$0xff]
          %v6825 = vld [vmem:[%s6800 + $0xc0] sm:$0xff]
          %v6826 = vld [vmem:[%s6800 + $0xc8] sm:$0xff]
          %v6827 = vld [vmem:[%s6800 + $0xd0] sm:$0xff]
          %v6828 = vld [vmem:[%s6800 + $0xd8] sm:$0xff]
          %v6829 = vld [vmem:[%s6800 + $0xe0] sm:$0xff]
          %v6830 = vld [vmem:[%s6800 + $0xe8] sm:$0xff]
          %v6831 = vld [vmem:[%s6800 + $0xf0] sm:$0xff]
          %v6832 = vld [vmem:[%s6800 + $0xf8] sm:$0xff]
          %v6833 = vld [vmem:[%s6800 + $0x100] sm:$0xff]
          %v6834 = vld [vmem:[%s6800 + $0x108] sm:$0xff]
          %v6835 = vld [vmem:[%s6800 + $0x110] sm:$0xff]
          %v6836 = vld [vmem:[%s6800 + $0x118] sm:$0xff]
          %v6837 = vld [vmem:[%s6800 + $0x120] sm:$0xff]
          %v6838 = vld [vmem:[%s6800 + $0x128] sm:$0xff]
          %v6839 = vld [vmem:[%s6800 + $0x130] sm:$0xff]
          %v6840 = vld [vmem:[%s6800 + $0x138] sm:$0xff]
          %v6841 = vld [vmem:[%s6800 + $0x140] sm:$0xff]
          %v6842 = vld [vmem:[%s6800 + $0x148] sm:$0xff]
          %v6843 = vld [vmem:[%s6800 + $0x150] sm:$0xff]
          %v6844 = vld [vmem:[%s6800 + $0x158] sm:$0xff]
          %v6845 = vld [vmem:[%s6800 + $0x160] sm:$0xff]
          %v6846 = vld [vmem:[%s6800 + $0x168] sm:$0xff]
          %v6847 = vld [vmem:[%s6800 + $0x170] sm:$0xff]
          %v6848 = vld [vmem:[%s6800 + $0x178] sm:$0xff]
          %v6849 = vld [vmem:[#allocation2] sm:$0xff]
          %v6850 = vld [vmem:[#allocation2 + $0x8] sm:$0xff]
          %v6851 = vld [vmem:[#allocation2 + $0x10] sm:$0xff]
          %v6852 = vld [vmem:[#allocation2 + $0x18] sm:$0xff]
          %v6853 = vld [vmem:[#allocation2 + $0x20] sm:$0xff]
          %v6854 = vld [vmem:[#allocation2 + $0x28] sm:$0xff]
          %v6855 = vld [vmem:[#allocation2 + $0x30] sm:$0xff]
          %v6856 = vld [vmem:[#allocation2 + $0x38] sm:$0xff]
          %v6857 = vld [vmem:[#allocation2 + $0x40] sm:$0xff]
          %v6858 = vld [vmem:[#allocation2 + $0x48] sm:$0xff]
          %v6859 = vld [vmem:[#allocation2 + $0x50] sm:$0xff]
          %v6860 = vld [vmem:[#allocation2 + $0x58] sm:$0xff]
          %v6861 = vld [vmem:[#allocation2 + $0x60] sm:$0xff]
          %v6862 = vld [vmem:[#allocation2 + $0x68] sm:$0xff]
          %v6863 = vld [vmem:[#allocation2 + $0x70] sm:$0xff]
          %v6864 = vld [vmem:[#allocation2 + $0x78] sm:$0xff]
          %v6865 = vld [vmem:[#allocation2 + $0x80] sm:$0xff]
          %v6866 = vld [vmem:[#allocation2 + $0x88] sm:$0xff]
          %v6867 = vld [vmem:[#allocation2 + $0x90] sm:$0xff]
          %v6868 = vld [vmem:[#allocation2 + $0x98] sm:$0xff]
          %v6869 = vld [vmem:[#allocation2 + $0xa0] sm:$0xff]
          %v6870 = vld [vmem:[#allocation2 + $0xa8] sm:$0xff]
          %v6871 = vld [vmem:[#allocation2 + $0xb0] sm:$0xff]
          %v6872 = vld [vmem:[#allocation2 + $0xb8] sm:$0xff]
          %v6873 = vld [vmem:[#allocation2 + $0xc0] sm:$0xff]
          %v6874 = vld [vmem:[#allocation2 + $0xc8] sm:$0xff]
          %v6875 = vld [vmem:[#allocation2 + $0xd0] sm:$0xff]
          %v6876 = vld [vmem:[#allocation2 + $0xd8] sm:$0xff]
          %v6877 = vld [vmem:[#allocation2 + $0xe0] sm:$0xff]
          %v6878 = vld [vmem:[#allocation2 + $0xe8] sm:$0xff]
          %v6879 = vld [vmem:[#allocation2 + $0xf0] sm:$0xff]
          %v6880 = vld [vmem:[#allocation2 + $0xf8] sm:$0xff]
          %s6881 = scalar_lea.vmem %s291, 384 [#allocation4]
          %v6882 = vld [vmem:[%s6881] sm:$0xf]
          %v6883 = vld [vmem:[%s6881 + $0x4] sm:$0xf]
          %v6884 = vld [vmem:[%s6881 + $0x8] sm:$0xf]
          %v6885 = vld [vmem:[%s6881 + $0xc] sm:$0xf]
          %v6886 = vld [vmem:[%s6881 + $0x10] sm:$0xf]
          %v6887 = vld [vmem:[%s6881 + $0x14] sm:$0xf]
          %v6888 = vld [vmem:[%s6881 + $0x18] sm:$0xf]
          %v6889 = vld [vmem:[%s6881 + $0x1c] sm:$0xf]
          %v6890 = vld [vmem:[%s6881 + $0x20] sm:$0xf]
          %v6891 = vld [vmem:[%s6881 + $0x24] sm:$0xf]
          %v6892 = vld [vmem:[%s6881 + $0x28] sm:$0xf]
          %v6893 = vld [vmem:[%s6881 + $0x2c] sm:$0xf]
          %v6894 = vld [vmem:[%s6881 + $0x30] sm:$0xf]
          %v6895 = vld [vmem:[%s6881 + $0x34] sm:$0xf]
          %v6896 = vld [vmem:[%s6881 + $0x38] sm:$0xf]
          %v6897 = vld [vmem:[%s6881 + $0x3c] sm:$0xf]
          %v6898 = vld [vmem:[%s6881 + $0x40] sm:$0xf]
          %v6899 = vld [vmem:[%s6881 + $0x44] sm:$0xf]
          %v6900 = vld [vmem:[%s6881 + $0x48] sm:$0xf]
          %v6901 = vld [vmem:[%s6881 + $0x4c] sm:$0xf]
          %v6902 = vld [vmem:[%s6881 + $0x50] sm:$0xf]
          %v6903 = vld [vmem:[%s6881 + $0x54] sm:$0xf]
          %v6904 = vld [vmem:[%s6881 + $0x58] sm:$0xf]
          %v6905 = vld [vmem:[%s6881 + $0x5c] sm:$0xf]
          %v6906 = vld [vmem:[%s6881 + $0x60] sm:$0xf]
          %v6907 = vld [vmem:[%s6881 + $0x64] sm:$0xf]
          %v6908 = vld [vmem:[%s6881 + $0x68] sm:$0xf]
          %v6909 = vld [vmem:[%s6881 + $0x6c] sm:$0xf]
          %v6910 = vld [vmem:[%s6881 + $0x70] sm:$0xf]
          %v6911 = vld [vmem:[%s6881 + $0x74] sm:$0xf]
          %v6912 = vld [vmem:[%s6881 + $0x78] sm:$0xf]
          %v6913 = vld [vmem:[%s6881 + $0x7c] sm:$0xf]
          %v6914 = vld [vmem:[%s6881 + $0x80] sm:$0xf]
          %v6915 = vld [vmem:[%s6881 + $0x84] sm:$0xf]
          %v6916 = vld [vmem:[%s6881 + $0x88] sm:$0xf]
          %v6917 = vld [vmem:[%s6881 + $0x8c] sm:$0xf]
          %v6918 = vld [vmem:[%s6881 + $0x90] sm:$0xf]
          %v6919 = vld [vmem:[%s6881 + $0x94] sm:$0xf]
          %v6920 = vld [vmem:[%s6881 + $0x98] sm:$0xf]
          %v6921 = vld [vmem:[%s6881 + $0x9c] sm:$0xf]
          %v6922 = vld [vmem:[%s6881 + $0xa0] sm:$0xf]
          %v6923 = vld [vmem:[%s6881 + $0xa4] sm:$0xf]
          %v6924 = vld [vmem:[%s6881 + $0xa8] sm:$0xf]
          %v6925 = vld [vmem:[%s6881 + $0xac] sm:$0xf]
          %v6926 = vld [vmem:[%s6881 + $0xb0] sm:$0xf]
          %v6927 = vld [vmem:[%s6881 + $0xb4] sm:$0xf]
          %v6928 = vld [vmem:[%s6881 + $0xb8] sm:$0xf]
          %v6929 = vld [vmem:[%s6881 + $0xbc] sm:$0xf]
          %v6978 = vunpack.c.l.b16 %v6882
          %v6979 = vunpack.c.l.b16 %v6883
          %v6980 = vunpack.c.l.b16 %v6884
          %v6981 = vunpack.c.l.b16 %v6885
          %v6982 = vunpack.c.l.b16 %v6886
          %v6983 = vunpack.c.l.b16 %v6887
          %v6984 = vunpack.c.l.b16 %v6888
          %v6985 = vunpack.c.l.b16 %v6889
          %v6986 = vunpack.c.l.b16 %v6890
          %v6987 = vunpack.c.l.b16 %v6891
          %v6988 = vunpack.c.l.b16 %v6892
          %v6989 = vunpack.c.l.b16 %v6893
          %v6990 = vunpack.c.l.b16 %v6894
          %v6991 = vunpack.c.l.b16 %v6895
          %v6992 = vunpack.c.l.b16 %v6896
          %v6993 = vunpack.c.l.b16 %v6897
          %v6994 = vunpack.c.l.b16 %v6898
          %v6995 = vunpack.c.l.b16 %v6899
          %v6996 = vunpack.c.l.b16 %v6900
          %v6997 = vunpack.c.l.b16 %v6901
          %v6998 = vunpack.c.l.b16 %v6902
          %v6999 = vunpack.c.l.b16 %v6903
          %v7000 = vunpack.c.l.b16 %v6904
          %v7001 = vunpack.c.l.b16 %v6905
          %v7002 = vunpack.c.l.b16 %v6906
          %v7003 = vunpack.c.l.b16 %v6907
          %v7004 = vunpack.c.l.b16 %v6908
          %v7005 = vunpack.c.l.b16 %v6909
          %v7006 = vunpack.c.l.b16 %v6910
          %v7007 = vunpack.c.l.b16 %v6911
          %v7008 = vunpack.c.l.b16 %v6912
          %v7009 = vunpack.c.l.b16 %v6913
          %v7010 = vunpack.c.l.b16 %v6914
          %v7011 = vunpack.c.l.b16 %v6915
          %v7012 = vunpack.c.l.b16 %v6916
          %v7013 = vunpack.c.l.b16 %v6917
          %v7014 = vunpack.c.l.b16 %v6918
          %v7015 = vunpack.c.l.b16 %v6919
          %v7016 = vunpack.c.l.b16 %v6920
          %v7017 = vunpack.c.l.b16 %v6921
          %v7018 = vunpack.c.l.b16 %v6922
          %v7019 = vunpack.c.l.b16 %v6923
          %v7020 = vunpack.c.l.b16 %v6924
          %v7021 = vunpack.c.l.b16 %v6925
          %v7022 = vunpack.c.l.b16 %v6926
          %v7023 = vunpack.c.l.b16 %v6927
          %v7024 = vunpack.c.l.b16 %v6928
          %v7025 = vunpack.c.l.b16 %v6929
          %v7026 = vpack.c.b16 %v6979, %v6978
          %v7027 = vpack.c.b16 %v6981, %v6980
          %v7028 = vpack.c.b16 %v6983, %v6982
          %v7029 = vpack.c.b16 %v6985, %v6984
          %v7030 = vpack.c.b16 %v6987, %v6986
          %v7031 = vpack.c.b16 %v6989, %v6988
          %v7032 = vpack.c.b16 %v6991, %v6990
          %v7033 = vpack.c.b16 %v6993, %v6992
          %v7034 = vpack.c.b16 %v6995, %v6994
          %v7035 = vpack.c.b16 %v6997, %v6996
          %v7036 = vpack.c.b16 %v6999, %v6998
          %v7037 = vpack.c.b16 %v7001, %v7000
          %v7038 = vpack.c.b16 %v7003, %v7002
          %v7039 = vpack.c.b16 %v7005, %v7004
          %v7040 = vpack.c.b16 %v7007, %v7006
          %v7041 = vpack.c.b16 %v7009, %v7008
          %v7042 = vpack.c.b16 %v7011, %v7010
          %v7043 = vpack.c.b16 %v7013, %v7012
          %v7044 = vpack.c.b16 %v7015, %v7014
          %v7045 = vpack.c.b16 %v7017, %v7016
          %v7046 = vpack.c.b16 %v7019, %v7018
          %v7047 = vpack.c.b16 %v7021, %v7020
          %v7048 = vpack.c.b16 %v7023, %v7022
          %v7049 = vpack.c.b16 %v7025, %v7024
          %7074 = vmatprep.subr.bf16.mxu0 0
          %7075 = vmatpush1.bf16.msra.mxu0 %v7026
          %7076 = vmatprep.subr.bf16.mxu0 0
          %7077 = vmatpush1.bf16.msra.mxu0 %v7027
          %7078 = vmatprep.subr.bf16.mxu0 0
          %7079 = vmatpush1.bf16.msra.mxu0 %v7028
          %7080 = vmatprep.subr.bf16.mxu0 0
          %7081 = vmatpush1.bf16.msra.mxu0 %v7029
          %7082 = vmatprep.subr.bf16.mxu0 0
          %7083 = vmatpush1.bf16.msra.mxu0 %v7030
          %7084 = vmatprep.subr.bf16.mxu0 0
          %7085 = vmatpush1.bf16.msra.mxu0 %v7031
          %7086 = vmatprep.subr.bf16.mxu0 0
          %7087 = vmatpush1.bf16.msra.mxu0 %v7032
          %7088 = vmatprep.subr.bf16.mxu0 0
          %7089 = vmatpush1.bf16.msra.mxu0 %v7033
          %7090 = vmatprep.subr.bf16.mxu0 0
          %7091 = vmatpush1.bf16.msra.mxu0 %v7034
          %7092 = vmatprep.subr.bf16.mxu0 0
          %7093 = vmatpush1.bf16.msra.mxu0 %v7035
          %7094 = vmatprep.subr.bf16.mxu0 0
          %7095 = vmatpush1.bf16.msra.mxu0 %v7036
          %7096 = vmatprep.subr.bf16.mxu0 0
          %7097 = vmatpush1.bf16.msra.mxu0 %v7037
          %7098 = vmatprep.subr.bf16.mxu0 0
          %7099 = vmatpush1.bf16.msra.mxu0 %v7038
          %7100 = vmatprep.subr.bf16.mxu0 0
          %7101 = vmatpush1.bf16.msra.mxu0 %v7039
          %7102 = vmatprep.subr.bf16.mxu0 0
          %7103 = vmatpush1.bf16.msra.mxu0 %v7040
          %7104 = vmatprep.subr.bf16.mxu0 0
          %7105 = vmatpush1.bf16.msra.mxu0 %v7041
          %7106 = vmatprep.mubr.bf16.mxu0 %v6802
          %7107 = vmatmul.mubr.bf16.gmra.mrb[0].mxu0 %v6801
          %v7108 = vpop.f32.mrb[0].mxu0
          %v7109 = vadd.f32 0.0, %v7108
          %v7110 = vpop.f32.mrb[0].mxu0
          %v7111 = vpop.f32.mrb[0].mxu0
          %v7112 = vadd.f32 0.0, %v7111
          %v7113 = vpop.f32.mrb[0].mxu0
          %7114 = vmatprep.mubr.bf16.mxu0 %v6805
          %7115 = vmatmul.mubr.bf16.gmra.mrb[0].mxu0 %v6804
          %v7116 = vpop.f32.mrb[0].mxu0
          %v7117 = vadd.f32 0.0, %v7116
          %v7118 = vpop.f32.mrb[0].mxu0
          %v7119 = vpop.f32.mrb[0].mxu0
          %v7120 = vadd.f32 0.0, %v7119
          %v7121 = vpop.f32.mrb[0].mxu0
          %7122 = vmatprep.mubr.bf16.mxu0 %v6808
          %7123 = vmatmul.mubr.bf16.gmra.mrb[0].mxu0 %v6807
          %v7124 = vpop.f32.mrb[0].mxu0
          %v7125 = vadd.f32 0.0, %v7124
          %v7126 = vpop.f32.mrb[0].mxu0
          %v7127 = vpop.f32.mrb[0].mxu0
          %v7128 = vadd.f32 0.0, %v7127
          %v7129 = vpop.f32.mrb[0].mxu0
          %7130 = vmatprep.mubr.bf16.mxu0 %v6811
          %7131 = vmatmul.mubr.bf16.gmra.mrb[0].mxu0 %v6810
          %v7132 = vpop.f32.mrb[0].mxu0
          %v7133 = vadd.f32 0.0, %v7132
          %v7134 = vpop.f32.mrb[0].mxu0
          %v7135 = vpop.f32.mrb[0].mxu0
          %v7136 = vadd.f32 0.0, %v7135
          %v7137 = vpop.f32.mrb[0].mxu0
          %7138 = vmatprep.mubr.bf16.mxu0 %v6814
          %7139 = vmatmul.mubr.bf16.gmra.mrb[0].mxu0 %v6813
          %v7140 = vpop.f32.mrb[0].mxu0
          %v7141 = vadd.f32 0.0, %v7140
          %v7142 = vpop.f32.mrb[0].mxu0
          %v7143 = vpop.f32.mrb[0].mxu0
          %v7144 = vadd.f32 0.0, %v7143
          %v7145 = vpop.f32.mrb[0].mxu0
          %7146 = vmatprep.mubr.bf16.mxu0 %v6817
          %7147 = vmatmul.mubr.bf16.gmra.mrb[0].mxu0 %v6816
          %v7148 = vpop.f32.mrb[0].mxu0
          %v7149 = vadd.f32 0.0, %v7148
          %v7150 = vpop.f32.mrb[0].mxu0
          %v7151 = vpop.f32.mrb[0].mxu0
          %v7152 = vadd.f32 0.0, %v7151
          %v7153 = vpop.f32.mrb[0].mxu0
          %7154 = vmatprep.mubr.bf16.mxu0 %v6820
          %7155 = vmatmul.mubr.bf16.gmra.mrb[0].mxu0 %v6819
          %v7156 = vpop.f32.mrb[0].mxu0
          %v7157 = vadd.f32 0.0, %v7156
          %v7158 = vpop.f32.mrb[0].mxu0
          %v7159 = vpop.f32.mrb[0].mxu0
          %v7160 = vadd.f32 0.0, %v7159
          %v7161 = vpop.f32.mrb[0].mxu0
          %7162 = vmatprep.mubr.bf16.mxu0 %v6823
          %7163 = vmatmul.mubr.bf16.gmra.mrb[0].mxu0 %v6822
          %v7164 = vpop.f32.mrb[0].mxu0
          %v7165 = vadd.f32 0.0, %v7164
          %v7166 = vpop.f32.mrb[0].mxu0
          %v7167 = vpop.f32.mrb[0].mxu0
          %v7168 = vadd.f32 0.0, %v7167
          %v7169 = vpop.f32.mrb[0].mxu0
          %7170 = vmatprep.mubr.bf16.mxu0 %v6826
          %7171 = vmatmul.mubr.bf16.gmra.mrb[0].mxu0 %v6825
          %v7172 = vpop.f32.mrb[0].mxu0
          %v7173 = vadd.f32 0.0, %v7172
          %v7174 = vpop.f32.mrb[0].mxu0
          %v7175 = vpop.f32.mrb[0].mxu0
          %v7176 = vadd.f32 0.0, %v7175
          %v7177 = vpop.f32.mrb[0].mxu0
          %7178 = vmatprep.mubr.bf16.mxu0 %v6829
          %7179 = vmatmul.mubr.bf16.gmra.mrb[0].mxu0 %v6828
          %v7180 = vpop.f32.mrb[0].mxu0
          %v7181 = vadd.f32 0.0, %v7180
          %v7182 = vpop.f32.mrb[0].mxu0
          %v7183 = vpop.f32.mrb[0].mxu0
          %v7184 = vadd.f32 0.0, %v7183
          %v7185 = vpop.f32.mrb[0].mxu0
          %7186 = vmatprep.mubr.bf16.mxu0 %v6832
          %7187 = vmatmul.mubr.bf16.gmra.mrb[0].mxu0 %v6831
          %v7188 = vpop.f32.mrb[0].mxu0
          %v7189 = vadd.f32 0.0, %v7188
          %v7190 = vpop.f32.mrb[0].mxu0
          %v7191 = vpop.f32.mrb[0].mxu0
          %v7192 = vadd.f32 0.0, %v7191
          %v7193 = vpop.f32.mrb[0].mxu0
          %7194 = vmatprep.mubr.bf16.mxu0 %v6835
          %7195 = vmatmul.mubr.bf16.gmra.mrb[0].mxu0 %v6834
          %v7196 = vpop.f32.mrb[0].mxu0
          %v7197 = vadd.f32 0.0, %v7196
          %v7198 = vpop.f32.mrb[0].mxu0
          %v7199 = vpop.f32.mrb[0].mxu0
          %v7200 = vadd.f32 0.0, %v7199
          %v7201 = vpop.f32.mrb[0].mxu0
          %7202 = vmatprep.mubr.bf16.mxu0 %v6838
          %7203 = vmatmul.mubr.bf16.gmra.mrb[0].mxu0 %v6837
          %v7204 = vpop.f32.mrb[0].mxu0
          %v7205 = vadd.f32 0.0, %v7204
          %v7206 = vpop.f32.mrb[0].mxu0
          %v7207 = vpop.f32.mrb[0].mxu0
          %v7208 = vadd.f32 0.0, %v7207
          %v7209 = vpop.f32.mrb[0].mxu0
          %7210 = vmatprep.mubr.bf16.mxu0 %v6841
          %7211 = vmatmul.mubr.bf16.gmra.mrb[0].mxu0 %v6840
          %v7212 = vpop.f32.mrb[0].mxu0
          %v7213 = vadd.f32 0.0, %v7212
          %v7214 = vpop.f32.mrb[0].mxu0
          %v7215 = vpop.f32.mrb[0].mxu0
          %v7216 = vadd.f32 0.0, %v7215
          %v7217 = vpop.f32.mrb[0].mxu0
          %7218 = vmatprep.mubr.bf16.mxu0 %v6844
          %7219 = vmatmul.mubr.bf16.gmra.mrb[0].mxu0 %v6843
          %v7220 = vpop.f32.mrb[0].mxu0
          %v7221 = vadd.f32 0.0, %v7220
          %v7222 = vpop.f32.mrb[0].mxu0
          %v7223 = vpop.f32.mrb[0].mxu0
          %v7224 = vadd.f32 0.0, %v7223
          %v7225 = vpop.f32.mrb[0].mxu0
          %7226 = vmatprep.mubr.bf16.mxu0 %v6847
          %7227 = vmatmul.mubr.bf16.gmra.mrb[0].mxu0 %v6846
          %v7228 = vpop.f32.mrb[0].mxu0
          %v7229 = vadd.f32 0.0, %v7228
          %v7230 = vpop.f32.mrb[0].mxu0
          %v7231 = vpop.f32.mrb[0].mxu0
          %v7232 = vadd.f32 0.0, %v7231
          %v7233 = vpop.f32.mrb[0].mxu0
          %7234 = vdwg.mxu0
          %7235 = vmatprep.subr.bf16.mxu0 0
          %7236 = vmatpush1.bf16.msra.mxu0 %v7042
          %7237 = vmatprep.subr.bf16.mxu0 0
          %7238 = vmatpush1.bf16.msra.mxu0 %v7043
          %7239 = vmatprep.subr.bf16.mxu0 0
          %7240 = vmatpush1.bf16.msra.mxu0 %v7044
          %7241 = vmatprep.subr.bf16.mxu0 0
          %7242 = vmatpush1.bf16.msra.mxu0 %v7045
          %7243 = vmatprep.subr.bf16.mxu0 0
          %7244 = vmatpush1.bf16.msra.mxu0 %v7046
          %7245 = vmatprep.subr.bf16.mxu0 0
          %7246 = vmatpush1.bf16.msra.mxu0 %v7047
          %7247 = vmatprep.subr.bf16.mxu0 0
          %7248 = vmatpush1.bf16.msra.mxu0 %v7048
          %7249 = vmatprep.subr.bf16.mxu0 0
          %7250 = vmatpush1.bf16.msra.mxu0 %v7049
          %7251 = vmatprep.subr.bf16.mxu0 0
          %7252 = vmatpush1.bf16.msra.mxu0 0
          %7253 = vmatprep.subr.bf16.mxu0 0
          %7254 = vmatpush1.bf16.msra.mxu0 0
          %7255 = vmatprep.subr.bf16.mxu0 0
          %7256 = vmatpush1.bf16.msra.mxu0 0
          %7257 = vmatprep.subr.bf16.mxu0 0
          %7258 = vmatpush1.bf16.msra.mxu0 0
          %7259 = vmatprep.subr.bf16.mxu0 0
          %7260 = vmatpush1.bf16.msra.mxu0 0
          %7261 = vmatprep.subr.bf16.mxu0 0
          %7262 = vmatpush1.bf16.msra.mxu0 0
          %7263 = vmatprep.subr.bf16.mxu0 0
          %7264 = vmatpush1.bf16.msra.mxu0 0
          %7265 = vmatprep.subr.bf16.mxu0 0
          %7266 = vmatpush1.bf16.msra.mxu0 0
          %7267 = vmatprep.mubr.bf16.mxu0 0
          %7268 = vmatmul.mubr.bf16.gmra.mrb[0].mxu0 %v6803
          %v7269 = vpop.f32.mrb[0].mxu0
          %v7270 = vadd.f32 %v7109, %v7269
          %v7271 = vpop.f32.mrb[0].mxu0
          %v7272 = vpop.f32.mrb[0].mxu0
          %v7273 = vadd.f32 %v7112, %v7272
          %v7274 = vpop.f32.mrb[0].mxu0
          %7275 = vmatprep.mubr.bf16.mxu0 0
          %7276 = vmatmul.mubr.bf16.gmra.mrb[0].mxu0 %v6806
          %v7277 = vpop.f32.mrb[0].mxu0
          %v7278 = vadd.f32 %v7117, %v7277
          %v7279 = vpop.f32.mrb[0].mxu0
          %v7280 = vpop.f32.mrb[0].mxu0
          %v7281 = vadd.f32 %v7120, %v7280
          %v7282 = vpop.f32.mrb[0].mxu0
          %7283 = vmatprep.mubr.bf16.mxu0 0
          %7284 = vmatmul.mubr.bf16.gmra.mrb[0].mxu0 %v6809
          %v7285 = vpop.f32.mrb[0].mxu0
          %v7286 = vadd.f32 %v7125, %v7285
          %v7287 = vpop.f32.mrb[0].mxu0
          %v7288 = vpop.f32.mrb[0].mxu0
          %v7289 = vadd.f32 %v7128, %v7288
          %v7290 = vpop.f32.mrb[0].mxu0
          %7291 = vmatprep.mubr.bf16.mxu0 0
          %7292 = vmatmul.mubr.bf16.gmra.mrb[0].mxu0 %v6812
          %v7293 = vpop.f32.mrb[0].mxu0
          %v7294 = vadd.f32 %v7133, %v7293
          %v7295 = vpop.f32.mrb[0].mxu0
          %v7296 = vpop.f32.mrb[0].mxu0
          %v7297 = vadd.f32 %v7136, %v7296
          %v7298 = vpop.f32.mrb[0].mxu0
          %7299 = vmatprep.mubr.bf16.mxu0 0
          %7300 = vmatmul.mubr.bf16.gmra.mrb[0].mxu0 %v6815
          %v7301 = vpop.f32.mrb[0].mxu0
          %v7302 = vadd.f32 %v7141, %v7301
          %v7303 = vpop.f32.mrb[0].mxu0
          %v7304 = vpop.f32.mrb[0].mxu0
          %v7305 = vadd.f32 %v7144, %v7304
          %v7306 = vpop.f32.mrb[0].mxu0
          %7307 = vmatprep.mubr.bf16.mxu0 0
          %7308 = vmatmul.mubr.bf16.gmra.mrb[0].mxu0 %v6818
          %v7309 = vpop.f32.mrb[0].mxu0
          %v7310 = vadd.f32 %v7149, %v7309
          %v7311 = vpop.f32.mrb[0].mxu0
          %v7312 = vpop.f32.mrb[0].mxu0
          %v7313 = vadd.f32 %v7152, %v7312
          %v7314 = vpop.f32.mrb[0].mxu0
          %7315 = vmatprep.mubr.bf16.mxu0 0
          %7316 = vmatmul.mubr.bf16.gmra.mrb[0].mxu0 %v6821
          %v7317 = vpop.f32.mrb[0].mxu0
          %v7318 = vadd.f32 %v7157, %v7317
          %v7319 = vpop.f32.mrb[0].mxu0
          %v7320 = vpop.f32.mrb[0].mxu0
          %v7321 = vadd.f32 %v7160, %v7320
          %v7322 = vpop.f32.mrb[0].mxu0
          %7323 = vmatprep.mubr.bf16.mxu0 0
          %7324 = vmatmul.mubr.bf16.gmra.mrb[0].mxu0 %v6824
          %v7325 = vpop.f32.mrb[0].mxu0
          %v7326 = vadd.f32 %v7165, %v7325
          %v7327 = vpop.f32.mrb[0].mxu0
          %v7328 = vpop.f32.mrb[0].mxu0
          %v7329 = vadd.f32 %v7168, %v7328
          %v7330 = vpop.f32.mrb[0].mxu0
          %7331 = vmatprep.mubr.bf16.mxu0 0
          %7332 = vmatmul.mubr.bf16.gmra.mrb[0].mxu0 %v6827
          %v7333 = vpop.f32.mrb[0].mxu0
          %v7334 = vadd.f32 %v7173, %v7333
          %v7335 = vpop.f32.mrb[0].mxu0
          %v7336 = vpop.f32.mrb[0].mxu0
          %v7337 = vadd.f32 %v7176, %v7336
          %v7338 = vpop.f32.mrb[0].mxu0
          %7339 = vmatprep.mubr.bf16.mxu0 0
          %7340 = vmatmul.mubr.bf16.gmra.mrb[0].mxu0 %v6830
          %v7341 = vpop.f32.mrb[0].mxu0
          %v7342 = vadd.f32 %v7181, %v7341
          %v7343 = vpop.f32.mrb[0].mxu0
          %v7344 = vpop.f32.mrb[0].mxu0
          %v7345 = vadd.f32 %v7184, %v7344
          %v7346 = vpop.f32.mrb[0].mxu0
          %7347 = vmatprep.mubr.bf16.mxu0 0
          %7348 = vmatmul.mubr.bf16.gmra.mrb[0].mxu0 %v6833
          %v7349 = vpop.f32.mrb[0].mxu0
          %v7350 = vadd.f32 %v7189, %v7349
          %v7351 = vpop.f32.mrb[0].mxu0
          %v7352 = vpop.f32.mrb[0].mxu0
          %v7353 = vadd.f32 %v7192, %v7352
          %v7354 = vpop.f32.mrb[0].mxu0
          %7355 = vmatprep.mubr.bf16.mxu0 0
          %7356 = vmatmul.mubr.bf16.gmra.mrb[0].mxu0 %v6836
          %v7357 = vpop.f32.mrb[0].mxu0
          %v7358 = vadd.f32 %v7197, %v7357
          %v7359 = vpop.f32.mrb[0].mxu0
          %v7360 = vpop.f32.mrb[0].mxu0
          %v7361 = vadd.f32 %v7200, %v7360
          %v7362 = vpop.f32.mrb[0].mxu0
          %7363 = vmatprep.mubr.bf16.mxu0 0
          %7364 = vmatmul.mubr.bf16.gmra.mrb[0].mxu0 %v6839
          %v7365 = vpop.f32.mrb[0].mxu0
          %v7366 = vadd.f32 %v7205, %v7365
          %v7367 = vpop.f32.mrb[0].mxu0
          %v7368 = vpop.f32.mrb[0].mxu0
          %v7369 = vadd.f32 %v7208, %v7368
          %v7370 = vpop.f32.mrb[0].mxu0
          %7371 = vmatprep.mubr.bf16.mxu0 0
          %7372 = vmatmul.mubr.bf16.gmra.mrb[0].mxu0 %v6842
          %v7373 = vpop.f32.mrb[0].mxu0
          %v7374 = vadd.f32 %v7213, %v7373
          %v7375 = vpop.f32.mrb[0].mxu0
          %v7376 = vpop.f32.mrb[0].mxu0
          %v7377 = vadd.f32 %v7216, %v7376
          %v7378 = vpop.f32.mrb[0].mxu0
          %7379 = vmatprep.mubr.bf16.mxu0 0
          %7380 = vmatmul.mubr.bf16.gmra.mrb[0].mxu0 %v6845
          %v7381 = vpop.f32.mrb[0].mxu0
          %v7382 = vadd.f32 %v7221, %v7381
          %v7383 = vpop.f32.mrb[0].mxu0
          %v7384 = vpop.f32.mrb[0].mxu0
          %v7385 = vadd.f32 %v7224, %v7384
          %v7386 = vpop.f32.mrb[0].mxu0
          %7387 = vmatprep.mubr.bf16.mxu0 0
          %7388 = vmatmul.mubr.bf16.gmra.mrb[0].mxu0 %v6848
          %v7389 = vpop.f32.mrb[0].mxu0
          %v7390 = vadd.f32 %v7229, %v7389
          %v7391 = vpop.f32.mrb[0].mxu0
          %v7392 = vpop.f32.mrb[0].mxu0
          %v7393 = vadd.f32 %v7232, %v7392
          %v7394 = vpop.f32.mrb[0].mxu0
          %7395 = vdwg.mxu0
          %v7396 = vadd.f32 %v6849, %v7270
          %v7397 = vadd.f32 %v6850, %v7273
          %v7398 = vadd.f32 %v6851, %v7278
          %v7399 = vadd.f32 %v6852, %v7281
          %v7400 = vadd.f32 %v6853, %v7286
          %v7401 = vadd.f32 %v6854, %v7289
          %v7402 = vadd.f32 %v6855, %v7294
          %v7403 = vadd.f32 %v6856, %v7297
          %v7404 = vadd.f32 %v6857, %v7302
          %v7405 = vadd.f32 %v6858, %v7305
          %v7406 = vadd.f32 %v6859, %v7310
          %v7407 = vadd.f32 %v6860, %v7313
          %v7408 = vadd.f32 %v6861, %v7318
          %v7409 = vadd.f32 %v6862, %v7321
          %v7410 = vadd.f32 %v6863, %v7326
          %v7411 = vadd.f32 %v6864, %v7329
          %v7412 = vadd.f32 %v6865, %v7334
          %v7413 = vadd.f32 %v6866, %v7337
          %v7414 = vadd.f32 %v6867, %v7342
          %v7415 = vadd.f32 %v6868, %v7345
          %v7416 = vadd.f32 %v6869, %v7350
          %v7417 = vadd.f32 %v6870, %v7353
          %v7418 = vadd.f32 %v6871, %v7358
          %v7419 = vadd.f32 %v6872, %v7361
          %v7420 = vadd.f32 %v6873, %v7366
          %v7421 = vadd.f32 %v6874, %v7369
          %v7422 = vadd.f32 %v6875, %v7374
          %v7423 = vadd.f32 %v6876, %v7377
          %v7424 = vadd.f32 %v6877, %v7382
          %v7425 = vadd.f32 %v6878, %v7385
          %v7426 = vadd.f32 %v6879, %v7390
          %v7427 = vadd.f32 %v6880, %v7393
          %7428 = vst [vmem:[#allocation2] sm:$0xff] %v7396
          %7429 = vst [vmem:[#allocation2 + $0x8] sm:$0xff] %v7397
          %7430 = vst [vmem:[#allocation2 + $0x10] sm:$0xff] %v7398
          %7431 = vst [vmem:[#allocation2 + $0x18] sm:$0xff] %v7399
          %7432 = vst [vmem:[#allocation2 + $0x20] sm:$0xff] %v7400
          %7433 = vst [vmem:[#allocation2 + $0x28] sm:$0xff] %v7401
          %7434 = vst [vmem:[#allocation2 + $0x30] sm:$0xff] %v7402
          %7435 = vst [vmem:[#allocation2 + $0x38] sm:$0xff] %v7403
          %7436 = vst [vmem:[#allocation2 + $0x40] sm:$0xff] %v7404
          %7437 = vst [vmem:[#allocation2 + $0x48] sm:$0xff] %v7405
          %7438 = vst [vmem:[#allocation2 + $0x50] sm:$0xff] %v7406
          %7439 = vst [vmem:[#allocation2 + $0x58] sm:$0xff] %v7407
          %7440 = vst [vmem:[#allocation2 + $0x60] sm:$0xff] %v7408
          %7441 = vst [vmem:[#allocation2 + $0x68] sm:$0xff] %v7409
          %7442 = vst [vmem:[#allocation2 + $0x70] sm:$0xff] %v7410
          %7443 = vst [vmem:[#allocation2 + $0x78] sm:$0xff] %v7411
          %7444 = vst [vmem:[#allocation2 + $0x80] sm:$0xff] %v7412
          %7445 = vst [vmem:[#allocation2 + $0x88] sm:$0xff] %v7413
          %7446 = vst [vmem:[#allocation2 + $0x90] sm:$0xff] %v7414
          %7447 = vst [vmem:[#allocation2 + $0x98] sm:$0xff] %v7415
          %7448 = vst [vmem:[#allocation2 + $0xa0] sm:$0xff] %v7416
          %7449 = vst [vmem:[#allocation2 + $0xa8] sm:$0xff] %v7417
          %7450 = vst [vmem:[#allocation2 + $0xb0] sm:$0xff] %v7418
          %7451 = vst [vmem:[#allocation2 + $0xb8] sm:$0xff] %v7419
          %7452 = vst [vmem:[#allocation2 + $0xc0] sm:$0xff] %v7420
          %7453 = vst [vmem:[#allocation2 + $0xc8] sm:$0xff] %v7421
          %7454 = vst [vmem:[#allocation2 + $0xd0] sm:$0xff] %v7422
          %7455 = vst [vmem:[#allocation2 + $0xd8] sm:$0xff] %v7423
          %7456 = vst [vmem:[#allocation2 + $0xe0] sm:$0xff] %v7424
          %7457 = vst [vmem:[#allocation2 + $0xe8] sm:$0xff] %v7425
          %7458 = vst [vmem:[#allocation2 + $0xf0] sm:$0xff] %v7426
          %7459 = vst [vmem:[#allocation2 + $0xf8] sm:$0xff] %v7427
        $region64: #{fused_aspp_convs.1} parent=35 // pred_fallthru
          _
        %p7460 = scmp.eq.s32.totalorder %s31, 3
        // Predicated region
        $region65: #{fused_aspp_convs.1} parent=35 // pred_check
          %p7461 = pneg %p7460
        $region66: #{fused_aspp_convs.1} parent=35 // pred_check_branch
          %7463 = sbr.rel (%p7461) target = $region68
        $region67: #{fused_aspp_convs.1} parent=35 // pred_region
          %v7464 = vld [vmem:[%s355] sm:$0xf]
          %v7465 = vld [vmem:[%s355 + $0x4] sm:$0xf]
          %v7466 = vld [vmem:[%s355 + $0x10] sm:$0xf]
          %v7467 = vld [vmem:[%s355 + $0x14] sm:$0xf]
          %v7468 = vld [vmem:[%s355 + $0x20] sm:$0xf]
          %v7469 = vld [vmem:[%s355 + $0x24] sm:$0xf]
          %v7470 = vld [vmem:[%s355 + $0x30] sm:$0xf]
          %v7471 = vld [vmem:[%s355 + $0x34] sm:$0xf]
          %v7472 = vld [vmem:[%s355 + $0x40] sm:$0xf]
          %v7473 = vld [vmem:[%s355 + $0x44] sm:$0xf]
          %v7474 = vld [vmem:[%s355 + $0x50] sm:$0xf]
          %v7475 = vld [vmem:[%s355 + $0x54] sm:$0xf]
          %v7476 = vld [vmem:[%s355 + $0x60] sm:$0xf]
          %v7477 = vld [vmem:[%s355 + $0x64] sm:$0xf]
          %v7478 = vld [vmem:[%s355 + $0x70] sm:$0xf]
          %v7479 = vld [vmem:[%s355 + $0x74] sm:$0xf]
          %v7480 = vld [vmem:[%s355 + $0x80] sm:$0xf]
          %v7481 = vld [vmem:[%s355 + $0x84] sm:$0xf]
          %v7482 = vld [vmem:[%s355 + $0x90] sm:$0xf]
          %v7483 = vld [vmem:[%s355 + $0x94] sm:$0xf]
          %v7484 = vld [vmem:[%s355 + $0xa0] sm:$0xf]
          %v7485 = vld [vmem:[%s355 + $0xa4] sm:$0xf]
          %v7486 = vld [vmem:[%s355 + $0xb0] sm:$0xf]
          %v7487 = vld [vmem:[%s355 + $0xb4] sm:$0xf]
          %v7488 = vld [vmem:[%s355 + $0xc0] sm:$0xf]
          %v7489 = vld [vmem:[%s355 + $0xc4] sm:$0xf]
          %v7490 = vld [vmem:[%s355 + $0xd0] sm:$0xf]
          %v7491 = vld [vmem:[%s355 + $0xd4] sm:$0xf]
          %v7492 = vld [vmem:[%s355 + $0xe0] sm:$0xf]
          %v7493 = vld [vmem:[%s355 + $0xe4] sm:$0xf]
          %v7494 = vld [vmem:[%s355 + $0xf0] sm:$0xf]
          %v7495 = vld [vmem:[%s355 + $0xf4] sm:$0xf]
          %v7496 = vld [vmem:[%s355 + $0x100] sm:$0xf]
          %v7497 = vld [vmem:[%s355 + $0x104] sm:$0xf]
          %v7498 = vld [vmem:[%s355 + $0x110] sm:$0xf]
          %v7499 = vld [vmem:[%s355 + $0x114] sm:$0xf]
          %v7500 = vld [vmem:[%s355 + $0x120] sm:$0xf]
          %v7501 = vld [vmem:[%s355 + $0x124] sm:$0xf]
          %v7502 = vld [vmem:[%s355 + $0x130] sm:$0xf]
          %v7503 = vld [vmem:[%s355 + $0x134] sm:$0xf]
          %v7504 = vld [vmem:[%s355 + $0x140] sm:$0xf]
          %v7505 = vld [vmem:[%s355 + $0x144] sm:$0xf]
          %v7506 = vld [vmem:[%s355 + $0x150] sm:$0xf]
          %v7507 = vld [vmem:[%s355 + $0x154] sm:$0xf]
          %v7508 = vld [vmem:[%s355 + $0x160] sm:$0xf]
          %v7509 = vld [vmem:[%s355 + $0x164] sm:$0xf]
          %v7510 = vld [vmem:[%s355 + $0x170] sm:$0xf]
          %v7511 = vld [vmem:[%s355 + $0x174] sm:$0xf]
          %v7512 = vld [vmem:[%s355 + $0x180] sm:$0xf]
          %v7513 = vld [vmem:[%s355 + $0x184] sm:$0xf]
          %v7514 = vld [vmem:[%s355 + $0x190] sm:$0xf]
          %v7515 = vld [vmem:[%s355 + $0x194] sm:$0xf]
          %v7516 = vld [vmem:[%s355 + $0x1a0] sm:$0xf]
          %v7517 = vld [vmem:[%s355 + $0x1a4] sm:$0xf]
          %v7518 = vld [vmem:[%s355 + $0x1b0] sm:$0xf]
          %v7519 = vld [vmem:[%s355 + $0x1b4] sm:$0xf]
          %v7576 = vunpack.c.l.b16 %v7464
          %v7577 = vunpack.c.l.b16 %v7465
          %v7578 = vunpack.c.l.b16 %v7466
          %v7579 = vunpack.c.l.b16 %v7467
          %v7580 = vunpack.c.l.b16 %v7468
          %v7581 = vunpack.c.l.b16 %v7469
          %v7582 = vunpack.c.l.b16 %v7470
          %v7583 = vunpack.c.l.b16 %v7471
          %v7584 = vunpack.c.l.b16 %v7472
          %v7585 = vunpack.c.l.b16 %v7473
          %v7586 = vunpack.c.l.b16 %v7474
          %v7587 = vunpack.c.l.b16 %v7475
          %v7588 = vunpack.c.l.b16 %v7476
          %v7589 = vunpack.c.l.b16 %v7477
          %v7590 = vunpack.c.l.b16 %v7478
          %v7591 = vunpack.c.l.b16 %v7479
          %v7592 = vunpack.c.l.b16 %v7480
          %v7593 = vunpack.c.l.b16 %v7481
          %v7594 = vunpack.c.l.b16 %v7482
          %v7595 = vunpack.c.l.b16 %v7483
          %v7596 = vunpack.c.l.b16 %v7484
          %v7597 = vunpack.c.l.b16 %v7485
          %v7598 = vunpack.c.l.b16 %v7486
          %v7599 = vunpack.c.l.b16 %v7487
          %v7600 = vunpack.c.l.b16 %v7488
          %v7601 = vunpack.c.l.b16 %v7489
          %v7602 = vunpack.c.l.b16 %v7490
          %v7603 = vunpack.c.l.b16 %v7491
          %v7604 = vunpack.c.l.b16 %v7492
          %v7605 = vunpack.c.l.b16 %v7493
          %v7606 = vunpack.c.l.b16 %v7494
          %v7607 = vunpack.c.l.b16 %v7495
          %v7608 = vunpack.c.l.b16 %v7496
          %v7609 = vunpack.c.l.b16 %v7497
          %v7610 = vunpack.c.l.b16 %v7498
          %v7611 = vunpack.c.l.b16 %v7499
          %v7612 = vunpack.c.l.b16 %v7500
          %v7613 = vunpack.c.l.b16 %v7501
          %v7614 = vunpack.c.l.b16 %v7502
          %v7615 = vunpack.c.l.b16 %v7503
          %v7616 = vunpack.c.l.b16 %v7504
          %v7617 = vunpack.c.l.b16 %v7505
          %v7618 = vunpack.c.l.b16 %v7506
          %v7619 = vunpack.c.l.b16 %v7507
          %v7620 = vunpack.c.l.b16 %v7508
          %v7621 = vunpack.c.l.b16 %v7509
          %v7622 = vunpack.c.l.b16 %v7510
          %v7623 = vunpack.c.l.b16 %v7511
          %v7624 = vunpack.c.l.b16 %v7512
          %v7625 = vunpack.c.l.b16 %v7513
          %v7626 = vunpack.c.l.b16 %v7514
          %v7627 = vunpack.c.l.b16 %v7515
          %v7628 = vunpack.c.l.b16 %v7516
          %v7629 = vunpack.c.l.b16 %v7517
          %v7630 = vunpack.c.l.b16 %v7518
          %v7631 = vunpack.c.l.b16 %v7519
          %v7632 = vpack.c.b16 %v7577, %v7576
          %v7633 = vpack.c.b16 %v7579, %v7578
          %v7634 = vpack.c.b16 %v7581, %v7580
          %v7635 = vpack.c.b16 %v7583, %v7582
          %v7636 = vpack.c.b16 %v7585, %v7584
          %v7637 = vpack.c.b16 %v7587, %v7586
          %v7638 = vpack.c.b16 %v7589, %v7588
          %v7639 = vpack.c.b16 %v7591, %v7590
          %v7640 = vpack.c.b16 %v7593, %v7592
          %v7641 = vpack.c.b16 %v7595, %v7594
          %v7642 = vpack.c.b16 %v7597, %v7596
          %v7643 = vpack.c.b16 %v7599, %v7598
          %v7644 = vpack.c.b16 %v7601, %v7600
          %v7645 = vpack.c.b16 %v7603, %v7602
          %v7646 = vpack.c.b16 %v7605, %v7604
          %v7647 = vpack.c.b16 %v7607, %v7606
          %v7648 = vpack.c.b16 %v7609, %v7608
          %v7649 = vpack.c.b16 %v7611, %v7610
          %v7650 = vpack.c.b16 %v7613, %v7612
          %v7651 = vpack.c.b16 %v7615, %v7614
          %v7652 = vpack.c.b16 %v7617, %v7616
          %v7653 = vpack.c.b16 %v7619, %v7618
          %v7654 = vpack.c.b16 %v7621, %v7620
          %v7655 = vpack.c.b16 %v7623, %v7622
          %v7656 = vpack.c.b16 %v7625, %v7624
          %v7657 = vpack.c.b16 %v7627, %v7626
          %v7658 = vpack.c.b16 %v7629, %v7628
          %v7659 = vpack.c.b16 %v7631, %v7630
          %7688 = vst [vmem:[#allocation3] sm:$0xff] %v7632
          %7689 = vst [vmem:[#allocation3 + $0x18] sm:$0xff] %v7633
          %7690 = vst [vmem:[#allocation3 + $0x30] sm:$0xff] %v7634
          %7691 = vst [vmem:[#allocation3 + $0x48] sm:$0xff] %v7635
          %7692 = vst [vmem:[#allocation3 + $0x60] sm:$0xff] %v7636
          %7693 = vst [vmem:[#allocation3 + $0x78] sm:$0xff] %v7637
          %7694 = vst [vmem:[#allocation3 + $0x90] sm:$0xff] %v7638
          %7695 = vst [vmem:[#allocation3 + $0xa8] sm:$0xff] %v7639
          %7696 = vst [vmem:[#allocation3 + $0xc0] sm:$0xff] %v7640
          %7697 = vst [vmem:[#allocation3 + $0xd8] sm:$0xff] %v7641
          %7698 = vst [vmem:[#allocation3 + $0xf0] sm:$0xff] %v7642
          %7699 = vst [vmem:[#allocation3 + $0x108] sm:$0xff] %v7643
          %7700 = vst [vmem:[#allocation3 + $0x120] sm:$0xff] %v7644
          %7701 = vst [vmem:[#allocation3 + $0x138] sm:$0xff] %v7645
          %7702 = vst [vmem:[#allocation3 + $0x150] sm:$0xff] %v7646
          %7703 = vst [vmem:[#allocation3 + $0x168] sm:$0xff] %v7647
          %7704 = vst [vmem:[#allocation3 + $0x180] sm:$0xff] %v7648
          %7705 = vst [vmem:[#allocation3 + $0x198] sm:$0xff] %v7649
          %7706 = vst [vmem:[#allocation3 + $0x1b0] sm:$0xff] %v7650
          %7707 = vst [vmem:[#allocation3 + $0x1c8] sm:$0xff] %v7651
          %7708 = vst [vmem:[#allocation3 + $0x1e0] sm:$0xff] %v7652
          %7709 = vst [vmem:[#allocation3 + $0x1f8] sm:$0xff] %v7653
          %7710 = vst [vmem:[#allocation3 + $0x210] sm:$0xff] %v7654
          %7711 = vst [vmem:[#allocation3 + $0x228] sm:$0xff] %v7655
          %7712 = vst [vmem:[#allocation3 + $0x240] sm:$0xff] %v7656
          %7713 = vst [vmem:[#allocation3 + $0x258] sm:$0xff] %v7657
          %7714 = vst [vmem:[#allocation3 + $0x270] sm:$0xff] %v7658
          %7715 = vst [vmem:[#allocation3 + $0x288] sm:$0xff] %v7659
          %v7716 = vld [vmem:[%s355] sm:$0x8]
          %v7717 = vld [vmem:[%s355 + $0x4] sm:$0xf]
          %v7718 = vld [vmem:[%s355 + $0x8] sm:$0x7]
          %v7719 = vld [vmem:[%s355 + $0x10] sm:$0x8]
          %v7720 = vld [vmem:[%s355 + $0x14] sm:$0xf]
          %v7721 = vld [vmem:[%s355 + $0x18] sm:$0x7]
          %v7722 = vld [vmem:[%s355 + $0x20] sm:$0x8]
          %v7723 = vld [vmem:[%s355 + $0x24] sm:$0xf]
          %v7724 = vld [vmem:[%s355 + $0x28] sm:$0x7]
          %v7725 = vld [vmem:[%s355 + $0x30] sm:$0x8]
          %v7726 = vld [vmem:[%s355 + $0x34] sm:$0xf]
          %v7727 = vld [vmem:[%s355 + $0x38] sm:$0x7]
          %v7728 = vld [vmem:[%s355 + $0x40] sm:$0x8]
          %v7729 = vld [vmem:[%s355 + $0x44] sm:$0xf]
          %v7730 = vld [vmem:[%s355 + $0x48] sm:$0x7]
          %v7731 = vld [vmem:[%s355 + $0x50] sm:$0x8]
          %v7732 = vld [vmem:[%s355 + $0x54] sm:$0xf]
          %v7733 = vld [vmem:[%s355 + $0x58] sm:$0x7]
          %v7734 = vld [vmem:[%s355 + $0x60] sm:$0x8]
          %v7735 = vld [vmem:[%s355 + $0x64] sm:$0xf]
          %v7736 = vld [vmem:[%s355 + $0x68] sm:$0x7]
          %v7737 = vld [vmem:[%s355 + $0x70] sm:$0x8]
          %v7738 = vld [vmem:[%s355 + $0x74] sm:$0xf]
          %v7739 = vld [vmem:[%s355 + $0x78] sm:$0x7]
          %v7740 = vld [vmem:[%s355 + $0x80] sm:$0x8]
          %v7741 = vld [vmem:[%s355 + $0x84] sm:$0xf]
          %v7742 = vld [vmem:[%s355 + $0x88] sm:$0x7]
          %v7743 = vld [vmem:[%s355 + $0x90] sm:$0x8]
          %v7744 = vld [vmem:[%s355 + $0x94] sm:$0xf]
          %v7745 = vld [vmem:[%s355 + $0x98] sm:$0x7]
          %v7746 = vld [vmem:[%s355 + $0xa0] sm:$0x8]
          %v7747 = vld [vmem:[%s355 + $0xa4] sm:$0xf]
          %v7748 = vld [vmem:[%s355 + $0xa8] sm:$0x7]
          %v7749 = vld [vmem:[%s355 + $0xb0] sm:$0x8]
          %v7750 = vld [vmem:[%s355 + $0xb4] sm:$0xf]
          %v7751 = vld [vmem:[%s355 + $0xb8] sm:$0x7]
          %v7752 = vld [vmem:[%s355 + $0xc0] sm:$0x8]
          %v7753 = vld [vmem:[%s355 + $0xc4] sm:$0xf]
          %v7754 = vld [vmem:[%s355 + $0xc8] sm:$0x7]
          %v7755 = vld [vmem:[%s355 + $0xd0] sm:$0x8]
          %v7756 = vld [vmem:[%s355 + $0xd4] sm:$0xf]
          %v7757 = vld [vmem:[%s355 + $0xd8] sm:$0x7]
          %v7758 = vld [vmem:[%s355 + $0xe0] sm:$0x8]
          %v7759 = vld [vmem:[%s355 + $0xe4] sm:$0xf]
          %v7760 = vld [vmem:[%s355 + $0xe8] sm:$0x7]
          %v7761 = vld [vmem:[%s355 + $0xf0] sm:$0x8]
          %v7762 = vld [vmem:[%s355 + $0xf4] sm:$0xf]
          %v7763 = vld [vmem:[%s355 + $0xf8] sm:$0x7]
          %v7764 = vld [vmem:[%s355 + $0x100] sm:$0x8]
          %v7765 = vld [vmem:[%s355 + $0x104] sm:$0xf]
          %v7766 = vld [vmem:[%s355 + $0x108] sm:$0x7]
          %v7767 = vld [vmem:[%s355 + $0x110] sm:$0x8]
          %v7768 = vld [vmem:[%s355 + $0x114] sm:$0xf]
          %v7769 = vld [vmem:[%s355 + $0x118] sm:$0x7]
          %v7770 = vld [vmem:[%s355 + $0x120] sm:$0x8]
          %v7771 = vld [vmem:[%s355 + $0x124] sm:$0xf]
          %v7772 = vld [vmem:[%s355 + $0x128] sm:$0x7]
          %v7773 = vld [vmem:[%s355 + $0x130] sm:$0x8]
          %v7774 = vld [vmem:[%s355 + $0x134] sm:$0xf]
          %v7775 = vld [vmem:[%s355 + $0x138] sm:$0x7]
          %v7776 = vld [vmem:[%s355 + $0x140] sm:$0x8]
          %v7777 = vld [vmem:[%s355 + $0x144] sm:$0xf]
          %v7778 = vld [vmem:[%s355 + $0x148] sm:$0x7]
          %v7779 = vld [vmem:[%s355 + $0x150] sm:$0x8]
          %v7780 = vld [vmem:[%s355 + $0x154] sm:$0xf]
          %v7781 = vld [vmem:[%s355 + $0x158] sm:$0x7]
          %v7782 = vld [vmem:[%s355 + $0x160] sm:$0x8]
          %v7783 = vld [vmem:[%s355 + $0x164] sm:$0xf]
          %v7784 = vld [vmem:[%s355 + $0x168] sm:$0x7]
          %v7785 = vld [vmem:[%s355 + $0x170] sm:$0x8]
          %v7786 = vld [vmem:[%s355 + $0x174] sm:$0xf]
          %v7787 = vld [vmem:[%s355 + $0x178] sm:$0x7]
          %v7788 = vld [vmem:[%s355 + $0x180] sm:$0x8]
          %v7789 = vld [vmem:[%s355 + $0x184] sm:$0xf]
          %v7790 = vld [vmem:[%s355 + $0x188] sm:$0x7]
          %v7791 = vld [vmem:[%s355 + $0x190] sm:$0x8]
          %v7792 = vld [vmem:[%s355 + $0x194] sm:$0xf]
          %v7793 = vld [vmem:[%s355 + $0x198] sm:$0x7]
          %v7794 = vld [vmem:[%s355 + $0x1a0] sm:$0x8]
          %v7795 = vld [vmem:[%s355 + $0x1a4] sm:$0xf]
          %v7796 = vld [vmem:[%s355 + $0x1a8] sm:$0x7]
          %v7797 = vld [vmem:[%s355 + $0x1b0] sm:$0x8]
          %v7798 = vld [vmem:[%s355 + $0x1b4] sm:$0xf]
          %v7799 = vld [vmem:[%s355 + $0x1b8] sm:$0x7]
          %v7884 = vunpack.c.l.b16 %v7716
          %v7885 = vunpack.c.l.b16 %v7717
          %v7886 = vunpack.c.l.b16 %v7718
          %v7887 = vunpack.c.l.b16 %v7719
          %v7888 = vunpack.c.l.b16 %v7720
          %v7889 = vunpack.c.l.b16 %v7721
          %v7890 = vunpack.c.l.b16 %v7722
          %v7891 = vunpack.c.l.b16 %v7723
          %v7892 = vunpack.c.l.b16 %v7724
          %v7893 = vunpack.c.l.b16 %v7725
          %v7894 = vunpack.c.l.b16 %v7726
          %v7895 = vunpack.c.l.b16 %v7727
          %v7896 = vunpack.c.l.b16 %v7728
          %v7897 = vunpack.c.l.b16 %v7729
          %v7898 = vunpack.c.l.b16 %v7730
          %v7899 = vunpack.c.l.b16 %v7731
          %v7900 = vunpack.c.l.b16 %v7732
          %v7901 = vunpack.c.l.b16 %v7733
          %v7902 = vunpack.c.l.b16 %v7734
          %v7903 = vunpack.c.l.b16 %v7735
          %v7904 = vunpack.c.l.b16 %v7736
          %v7905 = vunpack.c.l.b16 %v7737
          %v7906 = vunpack.c.l.b16 %v7738
          %v7907 = vunpack.c.l.b16 %v7739
          %v7908 = vunpack.c.l.b16 %v7740
          %v7909 = vunpack.c.l.b16 %v7741
          %v7910 = vunpack.c.l.b16 %v7742
          %v7911 = vunpack.c.l.b16 %v7743
          %v7912 = vunpack.c.l.b16 %v7744
          %v7913 = vunpack.c.l.b16 %v7745
          %v7914 = vunpack.c.l.b16 %v7746
          %v7915 = vunpack.c.l.b16 %v7747
          %v7916 = vunpack.c.l.b16 %v7748
          %v7917 = vunpack.c.l.b16 %v7749
          %v7918 = vunpack.c.l.b16 %v7750
          %v7919 = vunpack.c.l.b16 %v7751
          %v7920 = vunpack.c.l.b16 %v7752
          %v7921 = vunpack.c.l.b16 %v7753
          %v7922 = vunpack.c.l.b16 %v7754
          %v7923 = vunpack.c.l.b16 %v7755
          %v7924 = vunpack.c.l.b16 %v7756
          %v7925 = vunpack.c.l.b16 %v7757
          %v7926 = vunpack.c.l.b16 %v7758
          %v7927 = vunpack.c.l.b16 %v7759
          %v7928 = vunpack.c.l.b16 %v7760
          %v7929 = vunpack.c.l.b16 %v7761
          %v7930 = vunpack.c.l.b16 %v7762
          %v7931 = vunpack.c.l.b16 %v7763
          %v7932 = vunpack.c.l.b16 %v7764
          %v7933 = vunpack.c.l.b16 %v7765
          %v7934 = vunpack.c.l.b16 %v7766
          %v7935 = vunpack.c.l.b16 %v7767
          %v7936 = vunpack.c.l.b16 %v7768
          %v7937 = vunpack.c.l.b16 %v7769
          %v7938 = vunpack.c.l.b16 %v7770
          %v7939 = vunpack.c.l.b16 %v7771
          %v7940 = vunpack.c.l.b16 %v7772
          %v7941 = vunpack.c.l.b16 %v7773
          %v7942 = vunpack.c.l.b16 %v7774
          %v7943 = vunpack.c.l.b16 %v7775
          %v7944 = vunpack.c.l.b16 %v7776
          %v7945 = vunpack.c.l.b16 %v7777
          %v7946 = vunpack.c.l.b16 %v7778
          %v7947 = vunpack.c.l.b16 %v7779
          %v7948 = vunpack.c.l.b16 %v7780
          %v7949 = vunpack.c.l.b16 %v7781
          %v7950 = vunpack.c.l.b16 %v7782
          %v7951 = vunpack.c.l.b16 %v7783
          %v7952 = vunpack.c.l.b16 %v7784
          %v7953 = vunpack.c.l.b16 %v7785
          %v7954 = vunpack.c.l.b16 %v7786
          %v7955 = vunpack.c.l.b16 %v7787
          %v7956 = vunpack.c.l.b16 %v7788
          %v7957 = vunpack.c.l.b16 %v7789
          %v7958 = vunpack.c.l.b16 %v7790
          %v7959 = vunpack.c.l.b16 %v7791
          %v7960 = vunpack.c.l.b16 %v7792
          %v7961 = vunpack.c.l.b16 %v7793
          %v7962 = vunpack.c.l.b16 %v7794
          %v7963 = vunpack.c.l.b16 %v7795
          %v7964 = vunpack.c.l.b16 %v7796
          %v7965 = vunpack.c.l.b16 %v7797
          %v7966 = vunpack.c.l.b16 %v7798
          %v7967 = vunpack.c.l.b16 %v7799
          %v7968 = vpack.c.b16 %v7885, %v7884
          %v7969 = vpack.c.b16 %v7886, %v7886
          %v7970 = vpack.c.b16 %v7888, %v7887
          %v7971 = vpack.c.b16 %v7889, %v7889
          %v7972 = vpack.c.b16 %v7891, %v7890
          %v7973 = vpack.c.b16 %v7892, %v7892
          %v7974 = vpack.c.b16 %v7894, %v7893
          %v7975 = vpack.c.b16 %v7895, %v7895
          %v7976 = vpack.c.b16 %v7897, %v7896
          %v7977 = vpack.c.b16 %v7898, %v7898
          %v7978 = vpack.c.b16 %v7900, %v7899
          %v7979 = vpack.c.b16 %v7901, %v7901
          %v7980 = vpack.c.b16 %v7903, %v7902
          %v7981 = vpack.c.b16 %v7904, %v7904
          %v7982 = vpack.c.b16 %v7906, %v7905
          %v7983 = vpack.c.b16 %v7907, %v7907
          %v7984 = vpack.c.b16 %v7909, %v7908
          %v7985 = vpack.c.b16 %v7910, %v7910
          %v7986 = vpack.c.b16 %v7912, %v7911
          %v7987 = vpack.c.b16 %v7913, %v7913
          %v7988 = vpack.c.b16 %v7915, %v7914
          %v7989 = vpack.c.b16 %v7916, %v7916
          %v7990 = vpack.c.b16 %v7918, %v7917
          %v7991 = vpack.c.b16 %v7919, %v7919
          %v7992 = vpack.c.b16 %v7921, %v7920
          %v7993 = vpack.c.b16 %v7922, %v7922
          %v7994 = vpack.c.b16 %v7924, %v7923
          %v7995 = vpack.c.b16 %v7925, %v7925
          %v7996 = vpack.c.b16 %v7927, %v7926
          %v7997 = vpack.c.b16 %v7928, %v7928
          %v7998 = vpack.c.b16 %v7930, %v7929
          %v7999 = vpack.c.b16 %v7931, %v7931
          %v8000 = vpack.c.b16 %v7933, %v7932
          %v8001 = vpack.c.b16 %v7934, %v7934
          %v8002 = vpack.c.b16 %v7936, %v7935
          %v8003 = vpack.c.b16 %v7937, %v7937
          %v8004 = vpack.c.b16 %v7939, %v7938
          %v8005 = vpack.c.b16 %v7940, %v7940
          %v8006 = vpack.c.b16 %v7942, %v7941
          %v8007 = vpack.c.b16 %v7943, %v7943
          %v8008 = vpack.c.b16 %v7945, %v7944
          %v8009 = vpack.c.b16 %v7946, %v7946
          %v8010 = vpack.c.b16 %v7948, %v7947
          %v8011 = vpack.c.b16 %v7949, %v7949
          %v8012 = vpack.c.b16 %v7951, %v7950
          %v8013 = vpack.c.b16 %v7952, %v7952
          %v8014 = vpack.c.b16 %v7954, %v7953
          %v8015 = vpack.c.b16 %v7955, %v7955
          %v8016 = vpack.c.b16 %v7957, %v7956
          %v8017 = vpack.c.b16 %v7958, %v7958
          %v8018 = vpack.c.b16 %v7960, %v7959
          %v8019 = vpack.c.b16 %v7961, %v7961
          %v8020 = vpack.c.b16 %v7963, %v7962
          %v8021 = vpack.c.b16 %v7964, %v7964
          %v8022 = vpack.c.b16 %v7966, %v7965
          %v8023 = vpack.c.b16 %v7967, %v7967
          %vm8024 = vcmask 1044480
          %v8025 = vrot.slane %v7968, 3
          %v8026 = vrot.slane %v7969, 3
          %v8027 = vsel %vm8024, %v8025, %v8026
          %v8028 = vrot.slane %v7970, 3
          %v8029 = vrot.slane %v7971, 3
          %v8030 = vsel %vm8024, %v8028, %v8029
          %v8031 = vrot.slane %v7972, 3
          %v8032 = vrot.slane %v7973, 3
          %v8033 = vsel %vm8024, %v8031, %v8032
          %v8034 = vrot.slane %v7974, 3
          %v8035 = vrot.slane %v7975, 3
          %v8036 = vsel %vm8024, %v8034, %v8035
          %v8037 = vrot.slane %v7976, 3
          %v8038 = vrot.slane %v7977, 3
          %v8039 = vsel %vm8024, %v8037, %v8038
          %v8040 = vrot.slane %v7978, 3
          %v8041 = vrot.slane %v7979, 3
          %v8042 = vsel %vm8024, %v8040, %v8041
          %v8043 = vrot.slane %v7980, 3
          %v8044 = vrot.slane %v7981, 3
          %v8045 = vsel %vm8024, %v8043, %v8044
          %v8046 = vrot.slane %v7982, 3
          %v8047 = vrot.slane %v7983, 3
          %v8048 = vsel %vm8024, %v8046, %v8047
          %v8049 = vrot.slane %v7984, 3
          %v8050 = vrot.slane %v7985, 3
          %v8051 = vsel %vm8024, %v8049, %v8050
          %v8052 = vrot.slane %v7986, 3
          %v8053 = vrot.slane %v7987, 3
          %v8054 = vsel %vm8024, %v8052, %v8053
          %v8055 = vrot.slane %v7988, 3
          %v8056 = vrot.slane %v7989, 3
          %v8057 = vsel %vm8024, %v8055, %v8056
          %v8058 = vrot.slane %v7990, 3
          %v8059 = vrot.slane %v7991, 3
          %v8060 = vsel %vm8024, %v8058, %v8059
          %v8061 = vrot.slane %v7992, 3
          %v8062 = vrot.slane %v7993, 3
          %v8063 = vsel %vm8024, %v8061, %v8062
          %v8064 = vrot.slane %v7994, 3
          %v8065 = vrot.slane %v7995, 3
          %v8066 = vsel %vm8024, %v8064, %v8065
          %v8067 = vrot.slane %v7996, 3
          %v8068 = vrot.slane %v7997, 3
          %v8069 = vsel %vm8024, %v8067, %v8068
          %v8070 = vrot.slane %v7998, 3
          %v8071 = vrot.slane %v7999, 3
          %v8072 = vsel %vm8024, %v8070, %v8071
          %v8073 = vrot.slane %v8000, 3
          %v8074 = vrot.slane %v8001, 3
          %v8075 = vsel %vm8024, %v8073, %v8074
          %v8076 = vrot.slane %v8002, 3
          %v8077 = vrot.slane %v8003, 3
          %v8078 = vsel %vm8024, %v8076, %v8077
          %v8079 = vrot.slane %v8004, 3
          %v8080 = vrot.slane %v8005, 3
          %v8081 = vsel %vm8024, %v8079, %v8080
          %v8082 = vrot.slane %v8006, 3
          %v8083 = vrot.slane %v8007, 3
          %v8084 = vsel %vm8024, %v8082, %v8083
          %v8085 = vrot.slane %v8008, 3
          %v8086 = vrot.slane %v8009, 3
          %v8087 = vsel %vm8024, %v8085, %v8086
          %v8088 = vrot.slane %v8010, 3
          %v8089 = vrot.slane %v8011, 3
          %v8090 = vsel %vm8024, %v8088, %v8089
          %v8091 = vrot.slane %v8012, 3
          %v8092 = vrot.slane %v8013, 3
          %v8093 = vsel %vm8024, %v8091, %v8092
          %v8094 = vrot.slane %v8014, 3
          %v8095 = vrot.slane %v8015, 3
          %v8096 = vsel %vm8024, %v8094, %v8095
          %v8097 = vrot.slane %v8016, 3
          %v8098 = vrot.slane %v8017, 3
          %v8099 = vsel %vm8024, %v8097, %v8098
          %v8100 = vrot.slane %v8018, 3
          %v8101 = vrot.slane %v8019, 3
          %v8102 = vsel %vm8024, %v8100, %v8101
          %v8103 = vrot.slane %v8020, 3
          %v8104 = vrot.slane %v8021, 3
          %v8105 = vsel %vm8024, %v8103, %v8104
          %v8106 = vrot.slane %v8022, 3
          %v8107 = vrot.slane %v8023, 3
          %v8108 = vsel %vm8024, %v8106, %v8107
          %8137 = vst [vmem:[#allocation3 + $0x8] sm:$0xff] %v8027
          %8138 = vst [vmem:[#allocation3 + $0x20] sm:$0xff] %v8030
          %8139 = vst [vmem:[#allocation3 + $0x38] sm:$0xff] %v8033
          %8140 = vst [vmem:[#allocation3 + $0x50] sm:$0xff] %v8036
          %8141 = vst [vmem:[#allocation3 + $0x68] sm:$0xff] %v8039
          %8142 = vst [vmem:[#allocation3 + $0x80] sm:$0xff] %v8042
          %8143 = vst [vmem:[#allocation3 + $0x98] sm:$0xff] %v8045
          %8144 = vst [vmem:[#allocation3 + $0xb0] sm:$0xff] %v8048
          %8145 = vst [vmem:[#allocation3 + $0xc8] sm:$0xff] %v8051
          %8146 = vst [vmem:[#allocation3 + $0xe0] sm:$0xff] %v8054
          %8147 = vst [vmem:[#allocation3 + $0xf8] sm:$0xff] %v8057
          %8148 = vst [vmem:[#allocation3 + $0x110] sm:$0xff] %v8060
          %8149 = vst [vmem:[#allocation3 + $0x128] sm:$0xff] %v8063
          %8150 = vst [vmem:[#allocation3 + $0x140] sm:$0xff] %v8066
          %8151 = vst [vmem:[#allocation3 + $0x158] sm:$0xff] %v8069
          %8152 = vst [vmem:[#allocation3 + $0x170] sm:$0xff] %v8072
          %8153 = vst [vmem:[#allocation3 + $0x188] sm:$0xff] %v8075
          %8154 = vst [vmem:[#allocation3 + $0x1a0] sm:$0xff] %v8078
          %8155 = vst [vmem:[#allocation3 + $0x1b8] sm:$0xff] %v8081
          %8156 = vst [vmem:[#allocation3 + $0x1d0] sm:$0xff] %v8084
          %8157 = vst [vmem:[#allocation3 + $0x1e8] sm:$0xff] %v8087
          %8158 = vst [vmem:[#allocation3 + $0x200] sm:$0xff] %v8090
          %8159 = vst [vmem:[#allocation3 + $0x218] sm:$0xff] %v8093
          %8160 = vst [vmem:[#allocation3 + $0x230] sm:$0xff] %v8096
          %8161 = vst [vmem:[#allocation3 + $0x248] sm:$0xff] %v8099
          %8162 = vst [vmem:[#allocation3 + $0x260] sm:$0xff] %v8102
          %8163 = vst [vmem:[#allocation3 + $0x278] sm:$0xff] %v8105
          %8164 = vst [vmem:[#allocation3 + $0x290] sm:$0xff] %v8108
          %v8165 = vld [vmem:[%s355 + $0x4] sm:$0xc]
          %v8166 = vld [vmem:[%s355 + $0x8] sm:$0xf]
          %v8167 = vld [vmem:[%s355 + $0xc] sm:$0x3]
          %v8168 = vld [vmem:[%s355 + $0x14] sm:$0xc]
          %v8169 = vld [vmem:[%s355 + $0x18] sm:$0xf]
          %v8170 = vld [vmem:[%s355 + $0x1c] sm:$0x3]
          %v8171 = vld [vmem:[%s355 + $0x24] sm:$0xc]
          %v8172 = vld [vmem:[%s355 + $0x28] sm:$0xf]
          %v8173 = vld [vmem:[%s355 + $0x2c] sm:$0x3]
          %v8174 = vld [vmem:[%s355 + $0x34] sm:$0xc]
          %v8175 = vld [vmem:[%s355 + $0x38] sm:$0xf]
          %v8176 = vld [vmem:[%s355 + $0x3c] sm:$0x3]
          %v8177 = vld [vmem:[%s355 + $0x44] sm:$0xc]
          %v8178 = vld [vmem:[%s355 + $0x48] sm:$0xf]
          %v8179 = vld [vmem:[%s355 + $0x4c] sm:$0x3]
          %v8180 = vld [vmem:[%s355 + $0x54] sm:$0xc]
          %v8181 = vld [vmem:[%s355 + $0x58] sm:$0xf]
          %v8182 = vld [vmem:[%s355 + $0x5c] sm:$0x3]
          %v8183 = vld [vmem:[%s355 + $0x64] sm:$0xc]
          %v8184 = vld [vmem:[%s355 + $0x68] sm:$0xf]
          %v8185 = vld [vmem:[%s355 + $0x6c] sm:$0x3]
          %v8186 = vld [vmem:[%s355 + $0x74] sm:$0xc]
          %v8187 = vld [vmem:[%s355 + $0x78] sm:$0xf]
          %v8188 = vld [vmem:[%s355 + $0x7c] sm:$0x3]
          %v8189 = vld [vmem:[%s355 + $0x84] sm:$0xc]
          %v8190 = vld [vmem:[%s355 + $0x88] sm:$0xf]
          %v8191 = vld [vmem:[%s355 + $0x8c] sm:$0x3]
          %v8192 = vld [vmem:[%s355 + $0x94] sm:$0xc]
          %v8193 = vld [vmem:[%s355 + $0x98] sm:$0xf]
          %v8194 = vld [vmem:[%s355 + $0x9c] sm:$0x3]
          %v8195 = vld [vmem:[%s355 + $0xa4] sm:$0xc]
          %v8196 = vld [vmem:[%s355 + $0xa8] sm:$0xf]
          %v8197 = vld [vmem:[%s355 + $0xac] sm:$0x3]
          %v8198 = vld [vmem:[%s355 + $0xb4] sm:$0xc]
          %v8199 = vld [vmem:[%s355 + $0xb8] sm:$0xf]
          %v8200 = vld [vmem:[%s355 + $0xbc] sm:$0x3]
          %v8201 = vld [vmem:[%s355 + $0xc4] sm:$0xc]
          %v8202 = vld [vmem:[%s355 + $0xc8] sm:$0xf]
          %v8203 = vld [vmem:[%s355 + $0xcc] sm:$0x3]
          %v8204 = vld [vmem:[%s355 + $0xd4] sm:$0xc]
          %v8205 = vld [vmem:[%s355 + $0xd8] sm:$0xf]
          %v8206 = vld [vmem:[%s355 + $0xdc] sm:$0x3]
          %v8207 = vld [vmem:[%s355 + $0xe4] sm:$0xc]
          %v8208 = vld [vmem:[%s355 + $0xe8] sm:$0xf]
          %v8209 = vld [vmem:[%s355 + $0xec] sm:$0x3]
          %v8210 = vld [vmem:[%s355 + $0xf4] sm:$0xc]
          %v8211 = vld [vmem:[%s355 + $0xf8] sm:$0xf]
          %v8212 = vld [vmem:[%s355 + $0xfc] sm:$0x3]
          %v8213 = vld [vmem:[%s355 + $0x104] sm:$0xc]
          %v8214 = vld [vmem:[%s355 + $0x108] sm:$0xf]
          %v8215 = vld [vmem:[%s355 + $0x10c] sm:$0x3]
          %v8216 = vld [vmem:[%s355 + $0x114] sm:$0xc]
          %v8217 = vld [vmem:[%s355 + $0x118] sm:$0xf]
          %v8218 = vld [vmem:[%s355 + $0x11c] sm:$0x3]
          %v8219 = vld [vmem:[%s355 + $0x124] sm:$0xc]
          %v8220 = vld [vmem:[%s355 + $0x128] sm:$0xf]
          %v8221 = vld [vmem:[%s355 + $0x12c] sm:$0x3]
          %v8222 = vld [vmem:[%s355 + $0x134] sm:$0xc]
          %v8223 = vld [vmem:[%s355 + $0x138] sm:$0xf]
          %v8224 = vld [vmem:[%s355 + $0x13c] sm:$0x3]
          %v8225 = vld [vmem:[%s355 + $0x144] sm:$0xc]
          %v8226 = vld [vmem:[%s355 + $0x148] sm:$0xf]
          %v8227 = vld [vmem:[%s355 + $0x14c] sm:$0x3]
          %v8228 = vld [vmem:[%s355 + $0x154] sm:$0xc]
          %v8229 = vld [vmem:[%s355 + $0x158] sm:$0xf]
          %v8230 = vld [vmem:[%s355 + $0x15c] sm:$0x3]
          %v8231 = vld [vmem:[%s355 + $0x164] sm:$0xc]
          %v8232 = vld [vmem:[%s355 + $0x168] sm:$0xf]
          %v8233 = vld [vmem:[%s355 + $0x16c] sm:$0x3]
          %v8234 = vld [vmem:[%s355 + $0x174] sm:$0xc]
          %v8235 = vld [vmem:[%s355 + $0x178] sm:$0xf]
          %v8236 = vld [vmem:[%s355 + $0x17c] sm:$0x3]
          %v8237 = vld [vmem:[%s355 + $0x184] sm:$0xc]
          %v8238 = vld [vmem:[%s355 + $0x188] sm:$0xf]
          %v8239 = vld [vmem:[%s355 + $0x18c] sm:$0x3]
          %v8240 = vld [vmem:[%s355 + $0x194] sm:$0xc]
          %v8241 = vld [vmem:[%s355 + $0x198] sm:$0xf]
          %v8242 = vld [vmem:[%s355 + $0x19c] sm:$0x3]
          %v8243 = vld [vmem:[%s355 + $0x1a4] sm:$0xc]
          %v8244 = vld [vmem:[%s355 + $0x1a8] sm:$0xf]
          %v8245 = vld [vmem:[%s355 + $0x1ac] sm:$0x3]
          %v8246 = vld [vmem:[%s355 + $0x1b4] sm:$0xc]
          %v8247 = vld [vmem:[%s355 + $0x1b8] sm:$0xf]
          %v8248 = vld [vmem:[%s355 + $0x1bc] sm:$0x3]
          %v8333 = vunpack.c.l.b16 %v8165
          %v8334 = vunpack.c.l.b16 %v8166
          %v8335 = vunpack.c.l.b16 %v8167
          %v8336 = vunpack.c.l.b16 %v8168
          %v8337 = vunpack.c.l.b16 %v8169
          %v8338 = vunpack.c.l.b16 %v8170
          %v8339 = vunpack.c.l.b16 %v8171
          %v8340 = vunpack.c.l.b16 %v8172
          %v8341 = vunpack.c.l.b16 %v8173
          %v8342 = vunpack.c.l.b16 %v8174
          %v8343 = vunpack.c.l.b16 %v8175
          %v8344 = vunpack.c.l.b16 %v8176
          %v8345 = vunpack.c.l.b16 %v8177
          %v8346 = vunpack.c.l.b16 %v8178
          %v8347 = vunpack.c.l.b16 %v8179
          %v8348 = vunpack.c.l.b16 %v8180
          %v8349 = vunpack.c.l.b16 %v8181
          %v8350 = vunpack.c.l.b16 %v8182
          %v8351 = vunpack.c.l.b16 %v8183
          %v8352 = vunpack.c.l.b16 %v8184
          %v8353 = vunpack.c.l.b16 %v8185
          %v8354 = vunpack.c.l.b16 %v8186
          %v8355 = vunpack.c.l.b16 %v8187
          %v8356 = vunpack.c.l.b16 %v8188
          %v8357 = vunpack.c.l.b16 %v8189
          %v8358 = vunpack.c.l.b16 %v8190
          %v8359 = vunpack.c.l.b16 %v8191
          %v8360 = vunpack.c.l.b16 %v8192
          %v8361 = vunpack.c.l.b16 %v8193
          %v8362 = vunpack.c.l.b16 %v8194
          %v8363 = vunpack.c.l.b16 %v8195
          %v8364 = vunpack.c.l.b16 %v8196
          %v8365 = vunpack.c.l.b16 %v8197
          %v8366 = vunpack.c.l.b16 %v8198
          %v8367 = vunpack.c.l.b16 %v8199
          %v8368 = vunpack.c.l.b16 %v8200
          %v8369 = vunpack.c.l.b16 %v8201
          %v8370 = vunpack.c.l.b16 %v8202
          %v8371 = vunpack.c.l.b16 %v8203
          %v8372 = vunpack.c.l.b16 %v8204
          %v8373 = vunpack.c.l.b16 %v8205
          %v8374 = vunpack.c.l.b16 %v8206
          %v8375 = vunpack.c.l.b16 %v8207
          %v8376 = vunpack.c.l.b16 %v8208
          %v8377 = vunpack.c.l.b16 %v8209
          %v8378 = vunpack.c.l.b16 %v8210
          %v8379 = vunpack.c.l.b16 %v8211
          %v8380 = vunpack.c.l.b16 %v8212
          %v8381 = vunpack.c.l.b16 %v8213
          %v8382 = vunpack.c.l.b16 %v8214
          %v8383 = vunpack.c.l.b16 %v8215
          %v8384 = vunpack.c.l.b16 %v8216
          %v8385 = vunpack.c.l.b16 %v8217
          %v8386 = vunpack.c.l.b16 %v8218
          %v8387 = vunpack.c.l.b16 %v8219
          %v8388 = vunpack.c.l.b16 %v8220
          %v8389 = vunpack.c.l.b16 %v8221
          %v8390 = vunpack.c.l.b16 %v8222
          %v8391 = vunpack.c.l.b16 %v8223
          %v8392 = vunpack.c.l.b16 %v8224
          %v8393 = vunpack.c.l.b16 %v8225
          %v8394 = vunpack.c.l.b16 %v8226
          %v8395 = vunpack.c.l.b16 %v8227
          %v8396 = vunpack.c.l.b16 %v8228
          %v8397 = vunpack.c.l.b16 %v8229
          %v8398 = vunpack.c.l.b16 %v8230
          %v8399 = vunpack.c.l.b16 %v8231
          %v8400 = vunpack.c.l.b16 %v8232
          %v8401 = vunpack.c.l.b16 %v8233
          %v8402 = vunpack.c.l.b16 %v8234
          %v8403 = vunpack.c.l.b16 %v8235
          %v8404 = vunpack.c.l.b16 %v8236
          %v8405 = vunpack.c.l.b16 %v8237
          %v8406 = vunpack.c.l.b16 %v8238
          %v8407 = vunpack.c.l.b16 %v8239
          %v8408 = vunpack.c.l.b16 %v8240
          %v8409 = vunpack.c.l.b16 %v8241
          %v8410 = vunpack.c.l.b16 %v8242
          %v8411 = vunpack.c.l.b16 %v8243
          %v8412 = vunpack.c.l.b16 %v8244
          %v8413 = vunpack.c.l.b16 %v8245
          %v8414 = vunpack.c.l.b16 %v8246
          %v8415 = vunpack.c.l.b16 %v8247
          %v8416 = vunpack.c.l.b16 %v8248
          %v8417 = vpack.c.b16 %v8334, %v8333
          %v8418 = vpack.c.b16 %v8335, %v8335
          %v8419 = vpack.c.b16 %v8337, %v8336
          %v8420 = vpack.c.b16 %v8338, %v8338
          %v8421 = vpack.c.b16 %v8340, %v8339
          %v8422 = vpack.c.b16 %v8341, %v8341
          %v8423 = vpack.c.b16 %v8343, %v8342
          %v8424 = vpack.c.b16 %v8344, %v8344
          %v8425 = vpack.c.b16 %v8346, %v8345
          %v8426 = vpack.c.b16 %v8347, %v8347
          %v8427 = vpack.c.b16 %v8349, %v8348
          %v8428 = vpack.c.b16 %v8350, %v8350
          %v8429 = vpack.c.b16 %v8352, %v8351
          %v8430 = vpack.c.b16 %v8353, %v8353
          %v8431 = vpack.c.b16 %v8355, %v8354
          %v8432 = vpack.c.b16 %v8356, %v8356
          %v8433 = vpack.c.b16 %v8358, %v8357
          %v8434 = vpack.c.b16 %v8359, %v8359
          %v8435 = vpack.c.b16 %v8361, %v8360
          %v8436 = vpack.c.b16 %v8362, %v8362
          %v8437 = vpack.c.b16 %v8364, %v8363
          %v8438 = vpack.c.b16 %v8365, %v8365
          %v8439 = vpack.c.b16 %v8367, %v8366
          %v8440 = vpack.c.b16 %v8368, %v8368
          %v8441 = vpack.c.b16 %v8370, %v8369
          %v8442 = vpack.c.b16 %v8371, %v8371
          %v8443 = vpack.c.b16 %v8373, %v8372
          %v8444 = vpack.c.b16 %v8374, %v8374
          %v8445 = vpack.c.b16 %v8376, %v8375
          %v8446 = vpack.c.b16 %v8377, %v8377
          %v8447 = vpack.c.b16 %v8379, %v8378
          %v8448 = vpack.c.b16 %v8380, %v8380
          %v8449 = vpack.c.b16 %v8382, %v8381
          %v8450 = vpack.c.b16 %v8383, %v8383
          %v8451 = vpack.c.b16 %v8385, %v8384
          %v8452 = vpack.c.b16 %v8386, %v8386
          %v8453 = vpack.c.b16 %v8388, %v8387
          %v8454 = vpack.c.b16 %v8389, %v8389
          %v8455 = vpack.c.b16 %v8391, %v8390
          %v8456 = vpack.c.b16 %v8392, %v8392
          %v8457 = vpack.c.b16 %v8394, %v8393
          %v8458 = vpack.c.b16 %v8395, %v8395
          %v8459 = vpack.c.b16 %v8397, %v8396
          %v8460 = vpack.c.b16 %v8398, %v8398
          %v8461 = vpack.c.b16 %v8400, %v8399
          %v8462 = vpack.c.b16 %v8401, %v8401
          %v8463 = vpack.c.b16 %v8403, %v8402
          %v8464 = vpack.c.b16 %v8404, %v8404
          %v8465 = vpack.c.b16 %v8406, %v8405
          %v8466 = vpack.c.b16 %v8407, %v8407
          %v8467 = vpack.c.b16 %v8409, %v8408
          %v8468 = vpack.c.b16 %v8410, %v8410
          %v8469 = vpack.c.b16 %v8412, %v8411
          %v8470 = vpack.c.b16 %v8413, %v8413
          %v8471 = vpack.c.b16 %v8415, %v8414
          %v8472 = vpack.c.b16 %v8416, %v8416
          %vm8473 = vcmask 1045504
          %v8474 = vrot.slane %v8417, 2
          %v8475 = vrot.slane %v8418, 2
          %v8476 = vsel %vm8473, %v8474, %v8475
          %v8477 = vrot.slane %v8419, 2
          %v8478 = vrot.slane %v8420, 2
          %v8479 = vsel %vm8473, %v8477, %v8478
          %v8480 = vrot.slane %v8421, 2
          %v8481 = vrot.slane %v8422, 2
          %v8482 = vsel %vm8473, %v8480, %v8481
          %v8483 = vrot.slane %v8423, 2
          %v8484 = vrot.slane %v8424, 2
          %v8485 = vsel %vm8473, %v8483, %v8484
          %v8486 = vrot.slane %v8425, 2
          %v8487 = vrot.slane %v8426, 2
          %v8488 = vsel %vm8473, %v8486, %v8487
          %v8489 = vrot.slane %v8427, 2
          %v8490 = vrot.slane %v8428, 2
          %v8491 = vsel %vm8473, %v8489, %v8490
          %v8492 = vrot.slane %v8429, 2
          %v8493 = vrot.slane %v8430, 2
          %v8494 = vsel %vm8473, %v8492, %v8493
          %v8495 = vrot.slane %v8431, 2
          %v8496 = vrot.slane %v8432, 2
          %v8497 = vsel %vm8473, %v8495, %v8496
          %v8498 = vrot.slane %v8433, 2
          %v8499 = vrot.slane %v8434, 2
          %v8500 = vsel %vm8473, %v8498, %v8499
          %v8501 = vrot.slane %v8435, 2
          %v8502 = vrot.slane %v8436, 2
          %v8503 = vsel %vm8473, %v8501, %v8502
          %v8504 = vrot.slane %v8437, 2
          %v8505 = vrot.slane %v8438, 2
          %v8506 = vsel %vm8473, %v8504, %v8505
          %v8507 = vrot.slane %v8439, 2
          %v8508 = vrot.slane %v8440, 2
          %v8509 = vsel %vm8473, %v8507, %v8508
          %v8510 = vrot.slane %v8441, 2
          %v8511 = vrot.slane %v8442, 2
          %v8512 = vsel %vm8473, %v8510, %v8511
          %v8513 = vrot.slane %v8443, 2
          %v8514 = vrot.slane %v8444, 2
          %v8515 = vsel %vm8473, %v8513, %v8514
          %v8516 = vrot.slane %v8445, 2
          %v8517 = vrot.slane %v8446, 2
          %v8518 = vsel %vm8473, %v8516, %v8517
          %v8519 = vrot.slane %v8447, 2
          %v8520 = vrot.slane %v8448, 2
          %v8521 = vsel %vm8473, %v8519, %v8520
          %v8522 = vrot.slane %v8449, 2
          %v8523 = vrot.slane %v8450, 2
          %v8524 = vsel %vm8473, %v8522, %v8523
          %v8525 = vrot.slane %v8451, 2
          %v8526 = vrot.slane %v8452, 2
          %v8527 = vsel %vm8473, %v8525, %v8526
          %v8528 = vrot.slane %v8453, 2
          %v8529 = vrot.slane %v8454, 2
          %v8530 = vsel %vm8473, %v8528, %v8529
          %v8531 = vrot.slane %v8455, 2
          %v8532 = vrot.slane %v8456, 2
          %v8533 = vsel %vm8473, %v8531, %v8532
          %v8534 = vrot.slane %v8457, 2
          %v8535 = vrot.slane %v8458, 2
          %v8536 = vsel %vm8473, %v8534, %v8535
          %v8537 = vrot.slane %v8459, 2
          %v8538 = vrot.slane %v8460, 2
          %v8539 = vsel %vm8473, %v8537, %v8538
          %v8540 = vrot.slane %v8461, 2
          %v8541 = vrot.slane %v8462, 2
          %v8542 = vsel %vm8473, %v8540, %v8541
          %v8543 = vrot.slane %v8463, 2
          %v8544 = vrot.slane %v8464, 2
          %v8545 = vsel %vm8473, %v8543, %v8544
          %v8546 = vrot.slane %v8465, 2
          %v8547 = vrot.slane %v8466, 2
          %v8548 = vsel %vm8473, %v8546, %v8547
          %v8549 = vrot.slane %v8467, 2
          %v8550 = vrot.slane %v8468, 2
          %v8551 = vsel %vm8473, %v8549, %v8550
          %v8552 = vrot.slane %v8469, 2
          %v8553 = vrot.slane %v8470, 2
          %v8554 = vsel %vm8473, %v8552, %v8553
          %v8555 = vrot.slane %v8471, 2
          %v8556 = vrot.slane %v8472, 2
          %v8557 = vsel %vm8473, %v8555, %v8556
          %8586 = vst [vmem:[#allocation3 + $0x10] sm:$0xff] %v8476
          %8587 = vst [vmem:[#allocation3 + $0x28] sm:$0xff] %v8479
          %8588 = vst [vmem:[#allocation3 + $0x40] sm:$0xff] %v8482
          %8589 = vst [vmem:[#allocation3 + $0x58] sm:$0xff] %v8485
          %8590 = vst [vmem:[#allocation3 + $0x70] sm:$0xff] %v8488
          %8591 = vst [vmem:[#allocation3 + $0x88] sm:$0xff] %v8491
          %8592 = vst [vmem:[#allocation3 + $0xa0] sm:$0xff] %v8494
          %8593 = vst [vmem:[#allocation3 + $0xb8] sm:$0xff] %v8497
          %8594 = vst [vmem:[#allocation3 + $0xd0] sm:$0xff] %v8500
          %8595 = vst [vmem:[#allocation3 + $0xe8] sm:$0xff] %v8503
          %8596 = vst [vmem:[#allocation3 + $0x100] sm:$0xff] %v8506
          %8597 = vst [vmem:[#allocation3 + $0x118] sm:$0xff] %v8509
          %8598 = vst [vmem:[#allocation3 + $0x130] sm:$0xff] %v8512
          %8599 = vst [vmem:[#allocation3 + $0x148] sm:$0xff] %v8515
          %8600 = vst [vmem:[#allocation3 + $0x160] sm:$0xff] %v8518
          %8601 = vst [vmem:[#allocation3 + $0x178] sm:$0xff] %v8521
          %8602 = vst [vmem:[#allocation3 + $0x190] sm:$0xff] %v8524
          %8603 = vst [vmem:[#allocation3 + $0x1a8] sm:$0xff] %v8527
          %8604 = vst [vmem:[#allocation3 + $0x1c0] sm:$0xff] %v8530
          %8605 = vst [vmem:[#allocation3 + $0x1d8] sm:$0xff] %v8533
          %8606 = vst [vmem:[#allocation3 + $0x1f0] sm:$0xff] %v8536
          %8607 = vst [vmem:[#allocation3 + $0x208] sm:$0xff] %v8539
          %8608 = vst [vmem:[#allocation3 + $0x220] sm:$0xff] %v8542
          %8609 = vst [vmem:[#allocation3 + $0x238] sm:$0xff] %v8545
          %8610 = vst [vmem:[#allocation3 + $0x250] sm:$0xff] %v8548
          %8611 = vst [vmem:[#allocation3 + $0x268] sm:$0xff] %v8551
          %8612 = vst [vmem:[#allocation3 + $0x280] sm:$0xff] %v8554
          %8613 = vst [vmem:[#allocation3 + $0x298] sm:$0xff] %v8557
          %v8614 = vld [vmem:[#allocation3] sm:$0xff]
          %v8615 = vld [vmem:[#allocation3 + $0x8] sm:$0xff]
          %v8616 = vld [vmem:[#allocation3 + $0x10] sm:$0xff]
          %v8617 = vld [vmem:[#allocation3 + $0x18] sm:$0xff]
          %v8618 = vld [vmem:[#allocation3 + $0x20] sm:$0xff]
          %v8619 = vld [vmem:[#allocation3 + $0x28] sm:$0xff]
          %v8620 = vld [vmem:[#allocation3 + $0x30] sm:$0xff]
          %v8621 = vld [vmem:[#allocation3 + $0x38] sm:$0xff]
          %v8622 = vld [vmem:[#allocation3 + $0x40] sm:$0xff]
          %v8623 = vld [vmem:[#allocation3 + $0x48] sm:$0xff]
          %v8624 = vld [vmem:[#allocation3 + $0x50] sm:$0xff]
          %v8625 = vld [vmem:[#allocation3 + $0x58] sm:$0xff]
          %v8626 = vld [vmem:[#allocation3 + $0x60] sm:$0xff]
          %v8627 = vld [vmem:[#allocation3 + $0x68] sm:$0xff]
          %v8628 = vld [vmem:[#allocation3 + $0x70] sm:$0xff]
          %v8629 = vld [vmem:[#allocation3 + $0x78] sm:$0xff]
          %v8630 = vld [vmem:[#allocation3 + $0x80] sm:$0xff]
          %v8631 = vld [vmem:[#allocation3 + $0x88] sm:$0xff]
          %v8632 = vld [vmem:[#allocation3 + $0x90] sm:$0xff]
          %v8633 = vld [vmem:[#allocation3 + $0x98] sm:$0xff]
          %v8634 = vld [vmem:[#allocation3 + $0xa0] sm:$0xff]
          %v8635 = vld [vmem:[#allocation3 + $0xa8] sm:$0xff]
          %v8636 = vld [vmem:[#allocation3 + $0xb0] sm:$0xff]
          %v8637 = vld [vmem:[#allocation3 + $0xb8] sm:$0xff]
          %v8638 = vld [vmem:[#allocation3 + $0xc0] sm:$0xff]
          %v8639 = vld [vmem:[#allocation3 + $0xc8] sm:$0xff]
          %v8640 = vld [vmem:[#allocation3 + $0xd0] sm:$0xff]
          %v8641 = vld [vmem:[#allocation3 + $0xd8] sm:$0xff]
          %v8642 = vld [vmem:[#allocation3 + $0xe0] sm:$0xff]
          %v8643 = vld [vmem:[#allocation3 + $0xe8] sm:$0xff]
          %v8644 = vld [vmem:[#allocation3 + $0xf0] sm:$0xff]
          %v8645 = vld [vmem:[#allocation3 + $0xf8] sm:$0xff]
          %v8646 = vld [vmem:[#allocation3 + $0x100] sm:$0xff]
          %v8647 = vld [vmem:[#allocation3 + $0x108] sm:$0xff]
          %v8648 = vld [vmem:[#allocation3 + $0x110] sm:$0xff]
          %v8649 = vld [vmem:[#allocation3 + $0x118] sm:$0xff]
          %v8650 = vld [vmem:[#allocation3 + $0x120] sm:$0xff]
          %v8651 = vld [vmem:[#allocation3 + $0x128] sm:$0xff]
          %v8652 = vld [vmem:[#allocation3 + $0x130] sm:$0xff]
          %v8653 = vld [vmem:[#allocation3 + $0x138] sm:$0xff]
          %v8654 = vld [vmem:[#allocation3 + $0x140] sm:$0xff]
          %v8655 = vld [vmem:[#allocation3 + $0x148] sm:$0xff]
          %v8656 = vld [vmem:[#allocation3 + $0x150] sm:$0xff]
          %v8657 = vld [vmem:[#allocation3 + $0x158] sm:$0xff]
          %v8658 = vld [vmem:[#allocation3 + $0x160] sm:$0xff]
          %v8659 = vld [vmem:[#allocation3 + $0x168] sm:$0xff]
          %v8660 = vld [vmem:[#allocation3 + $0x170] sm:$0xff]
          %v8661 = vld [vmem:[#allocation3 + $0x178] sm:$0xff]
          %v8662 = vld [vmem:[#allocation2] sm:$0xff]
          %v8663 = vld [vmem:[#allocation2 + $0x8] sm:$0xff]
          %v8664 = vld [vmem:[#allocation2 + $0x10] sm:$0xff]
          %v8665 = vld [vmem:[#allocation2 + $0x18] sm:$0xff]
          %v8666 = vld [vmem:[#allocation2 + $0x20] sm:$0xff]
          %v8667 = vld [vmem:[#allocation2 + $0x28] sm:$0xff]
          %v8668 = vld [vmem:[#allocation2 + $0x30] sm:$0xff]
          %v8669 = vld [vmem:[#allocation2 + $0x38] sm:$0xff]
          %v8670 = vld [vmem:[#allocation2 + $0x40] sm:$0xff]
          %v8671 = vld [vmem:[#allocation2 + $0x48] sm:$0xff]
          %v8672 = vld [vmem:[#allocation2 + $0x50] sm:$0xff]
          %v8673 = vld [vmem:[#allocation2 + $0x58] sm:$0xff]
          %v8674 = vld [vmem:[#allocation2 + $0x60] sm:$0xff]
          %v8675 = vld [vmem:[#allocation2 + $0x68] sm:$0xff]
          %v8676 = vld [vmem:[#allocation2 + $0x70] sm:$0xff]
          %v8677 = vld [vmem:[#allocation2 + $0x78] sm:$0xff]
          %v8678 = vld [vmem:[#allocation2 + $0x80] sm:$0xff]
          %v8679 = vld [vmem:[#allocation2 + $0x88] sm:$0xff]
          %v8680 = vld [vmem:[#allocation2 + $0x90] sm:$0xff]
          %v8681 = vld [vmem:[#allocation2 + $0x98] sm:$0xff]
          %v8682 = vld [vmem:[#allocation2 + $0xa0] sm:$0xff]
          %v8683 = vld [vmem:[#allocation2 + $0xa8] sm:$0xff]
          %v8684 = vld [vmem:[#allocation2 + $0xb0] sm:$0xff]
          %v8685 = vld [vmem:[#allocation2 + $0xb8] sm:$0xff]
          %v8686 = vld [vmem:[#allocation2 + $0xc0] sm:$0xff]
          %v8687 = vld [vmem:[#allocation2 + $0xc8] sm:$0xff]
          %v8688 = vld [vmem:[#allocation2 + $0xd0] sm:$0xff]
          %v8689 = vld [vmem:[#allocation2 + $0xd8] sm:$0xff]
          %v8690 = vld [vmem:[#allocation2 + $0xe0] sm:$0xff]
          %v8691 = vld [vmem:[#allocation2 + $0xe8] sm:$0xff]
          %v8692 = vld [vmem:[#allocation2 + $0xf0] sm:$0xff]
          %v8693 = vld [vmem:[#allocation2 + $0xf8] sm:$0xff]
          %v8694 = vld [vmem:[%s291] sm:$0xf]
          %v8695 = vld [vmem:[%s291 + $0x4] sm:$0xf]
          %v8696 = vld [vmem:[%s291 + $0x8] sm:$0xf]
          %v8697 = vld [vmem:[%s291 + $0xc] sm:$0xf]
          %v8698 = vld [vmem:[%s291 + $0x10] sm:$0xf]
          %v8699 = vld [vmem:[%s291 + $0x14] sm:$0xf]
          %v8700 = vld [vmem:[%s291 + $0x18] sm:$0xf]
          %v8701 = vld [vmem:[%s291 + $0x1c] sm:$0xf]
          %v8702 = vld [vmem:[%s291 + $0x20] sm:$0xf]
          %v8703 = vld [vmem:[%s291 + $0x24] sm:$0xf]
          %v8704 = vld [vmem:[%s291 + $0x28] sm:$0xf]
          %v8705 = vld [vmem:[%s291 + $0x2c] sm:$0xf]
          %v8706 = vld [vmem:[%s291 + $0x30] sm:$0xf]
          %v8707 = vld [vmem:[%s291 + $0x34] sm:$0xf]
          %v8708 = vld [vmem:[%s291 + $0x38] sm:$0xf]
          %v8709 = vld [vmem:[%s291 + $0x3c] sm:$0xf]
          %v8710 = vld [vmem:[%s291 + $0x40] sm:$0xf]
          %v8711 = vld [vmem:[%s291 + $0x44] sm:$0xf]
          %v8712 = vld [vmem:[%s291 + $0x48] sm:$0xf]
          %v8713 = vld [vmem:[%s291 + $0x4c] sm:$0xf]
          %v8714 = vld [vmem:[%s291 + $0x50] sm:$0xf]
          %v8715 = vld [vmem:[%s291 + $0x54] sm:$0xf]
          %v8716 = vld [vmem:[%s291 + $0x58] sm:$0xf]
          %v8717 = vld [vmem:[%s291 + $0x5c] sm:$0xf]
          %v8718 = vld [vmem:[%s291 + $0x60] sm:$0xf]
          %v8719 = vld [vmem:[%s291 + $0x64] sm:$0xf]
          %v8720 = vld [vmem:[%s291 + $0x68] sm:$0xf]
          %v8721 = vld [vmem:[%s291 + $0x6c] sm:$0xf]
          %v8722 = vld [vmem:[%s291 + $0x70] sm:$0xf]
          %v8723 = vld [vmem:[%s291 + $0x74] sm:$0xf]
          %v8724 = vld [vmem:[%s291 + $0x78] sm:$0xf]
          %v8725 = vld [vmem:[%s291 + $0x7c] sm:$0xf]
          %v8726 = vld [vmem:[%s291 + $0x80] sm:$0xf]
          %v8727 = vld [vmem:[%s291 + $0x84] sm:$0xf]
          %v8728 = vld [vmem:[%s291 + $0x88] sm:$0xf]
          %v8729 = vld [vmem:[%s291 + $0x8c] sm:$0xf]
          %v8730 = vld [vmem:[%s291 + $0x90] sm:$0xf]
          %v8731 = vld [vmem:[%s291 + $0x94] sm:$0xf]
          %v8732 = vld [vmem:[%s291 + $0x98] sm:$0xf]
          %v8733 = vld [vmem:[%s291 + $0x9c] sm:$0xf]
          %v8734 = vld [vmem:[%s291 + $0xa0] sm:$0xf]
          %v8735 = vld [vmem:[%s291 + $0xa4] sm:$0xf]
          %v8736 = vld [vmem:[%s291 + $0xa8] sm:$0xf]
          %v8737 = vld [vmem:[%s291 + $0xac] sm:$0xf]
          %v8738 = vld [vmem:[%s291 + $0xb0] sm:$0xf]
          %v8739 = vld [vmem:[%s291 + $0xb4] sm:$0xf]
          %v8740 = vld [vmem:[%s291 + $0xb8] sm:$0xf]
          %v8741 = vld [vmem:[%s291 + $0xbc] sm:$0xf]
          %v8790 = vunpack.c.l.b16 %v8694
          %v8791 = vunpack.c.l.b16 %v8695
          %v8792 = vunpack.c.l.b16 %v8696
          %v8793 = vunpack.c.l.b16 %v8697
          %v8794 = vunpack.c.l.b16 %v8698
          %v8795 = vunpack.c.l.b16 %v8699
          %v8796 = vunpack.c.l.b16 %v8700
          %v8797 = vunpack.c.l.b16 %v8701
          %v8798 = vunpack.c.l.b16 %v8702
          %v8799 = vunpack.c.l.b16 %v8703
          %v8800 = vunpack.c.l.b16 %v8704
          %v8801 = vunpack.c.l.b16 %v8705
          %v8802 = vunpack.c.l.b16 %v8706
          %v8803 = vunpack.c.l.b16 %v8707
          %v8804 = vunpack.c.l.b16 %v8708
          %v8805 = vunpack.c.l.b16 %v8709
          %v8806 = vunpack.c.l.b16 %v8710
          %v8807 = vunpack.c.l.b16 %v8711
          %v8808 = vunpack.c.l.b16 %v8712
          %v8809 = vunpack.c.l.b16 %v8713
          %v8810 = vunpack.c.l.b16 %v8714
          %v8811 = vunpack.c.l.b16 %v8715
          %v8812 = vunpack.c.l.b16 %v8716
          %v8813 = vunpack.c.l.b16 %v8717
          %v8814 = vunpack.c.l.b16 %v8718
          %v8815 = vunpack.c.l.b16 %v8719
          %v8816 = vunpack.c.l.b16 %v8720
          %v8817 = vunpack.c.l.b16 %v8721
          %v8818 = vunpack.c.l.b16 %v8722
          %v8819 = vunpack.c.l.b16 %v8723
          %v8820 = vunpack.c.l.b16 %v8724
          %v8821 = vunpack.c.l.b16 %v8725
          %v8822 = vunpack.c.l.b16 %v8726
          %v8823 = vunpack.c.l.b16 %v8727
          %v8824 = vunpack.c.l.b16 %v8728
          %v8825 = vunpack.c.l.b16 %v8729
          %v8826 = vunpack.c.l.b16 %v8730
          %v8827 = vunpack.c.l.b16 %v8731
          %v8828 = vunpack.c.l.b16 %v8732
          %v8829 = vunpack.c.l.b16 %v8733
          %v8830 = vunpack.c.l.b16 %v8734
          %v8831 = vunpack.c.l.b16 %v8735
          %v8832 = vunpack.c.l.b16 %v8736
          %v8833 = vunpack.c.l.b16 %v8737
          %v8834 = vunpack.c.l.b16 %v8738
          %v8835 = vunpack.c.l.b16 %v8739
          %v8836 = vunpack.c.l.b16 %v8740
          %v8837 = vunpack.c.l.b16 %v8741
          %v8838 = vpack.c.b16 %v8791, %v8790
          %v8839 = vpack.c.b16 %v8793, %v8792
          %v8840 = vpack.c.b16 %v8795, %v8794
          %v8841 = vpack.c.b16 %v8797, %v8796
          %v8842 = vpack.c.b16 %v8799, %v8798
          %v8843 = vpack.c.b16 %v8801, %v8800
          %v8844 = vpack.c.b16 %v8803, %v8802
          %v8845 = vpack.c.b16 %v8805, %v8804
          %v8846 = vpack.c.b16 %v8807, %v8806
          %v8847 = vpack.c.b16 %v8809, %v8808
          %v8848 = vpack.c.b16 %v8811, %v8810
          %v8849 = vpack.c.b16 %v8813, %v8812
          %v8850 = vpack.c.b16 %v8815, %v8814
          %v8851 = vpack.c.b16 %v8817, %v8816
          %v8852 = vpack.c.b16 %v8819, %v8818
          %v8853 = vpack.c.b16 %v8821, %v8820
          %v8854 = vpack.c.b16 %v8823, %v8822
          %v8855 = vpack.c.b16 %v8825, %v8824
          %v8856 = vpack.c.b16 %v8827, %v8826
          %v8857 = vpack.c.b16 %v8829, %v8828
          %v8858 = vpack.c.b16 %v8831, %v8830
          %v8859 = vpack.c.b16 %v8833, %v8832
          %v8860 = vpack.c.b16 %v8835, %v8834
          %v8861 = vpack.c.b16 %v8837, %v8836
          %8886 = vmatprep.subr.bf16.mxu0 0
          %8887 = vmatpush1.bf16.msra.mxu0 %v8838
          %8888 = vmatprep.subr.bf16.mxu0 0
          %8889 = vmatpush1.bf16.msra.mxu0 %v8839
          %8890 = vmatprep.subr.bf16.mxu0 0
          %8891 = vmatpush1.bf16.msra.mxu0 %v8840
          %8892 = vmatprep.subr.bf16.mxu0 0
          %8893 = vmatpush1.bf16.msra.mxu0 %v8841
          %8894 = vmatprep.subr.bf16.mxu0 0
          %8895 = vmatpush1.bf16.msra.mxu0 %v8842
          %8896 = vmatprep.subr.bf16.mxu0 0
          %8897 = vmatpush1.bf16.msra.mxu0 %v8843
          %8898 = vmatprep.subr.bf16.mxu0 0
          %8899 = vmatpush1.bf16.msra.mxu0 %v8844
          %8900 = vmatprep.subr.bf16.mxu0 0
          %8901 = vmatpush1.bf16.msra.mxu0 %v8845
          %8902 = vmatprep.subr.bf16.mxu0 0
          %8903 = vmatpush1.bf16.msra.mxu0 %v8846
          %8904 = vmatprep.subr.bf16.mxu0 0
          %8905 = vmatpush1.bf16.msra.mxu0 %v8847
          %8906 = vmatprep.subr.bf16.mxu0 0
          %8907 = vmatpush1.bf16.msra.mxu0 %v8848
          %8908 = vmatprep.subr.bf16.mxu0 0
          %8909 = vmatpush1.bf16.msra.mxu0 %v8849
          %8910 = vmatprep.subr.bf16.mxu0 0
          %8911 = vmatpush1.bf16.msra.mxu0 %v8850
          %8912 = vmatprep.subr.bf16.mxu0 0
          %8913 = vmatpush1.bf16.msra.mxu0 %v8851
          %8914 = vmatprep.subr.bf16.mxu0 0
          %8915 = vmatpush1.bf16.msra.mxu0 %v8852
          %8916 = vmatprep.subr.bf16.mxu0 0
          %8917 = vmatpush1.bf16.msra.mxu0 %v8853
          %8918 = vmatprep.mubr.bf16.mxu0 %v8615
          %8919 = vmatmul.mubr.bf16.gmra.mrb[0].mxu0 %v8614
          %v8920 = vpop.f32.mrb[0].mxu0
          %v8921 = vadd.f32 0.0, %v8920
          %v8922 = vpop.f32.mrb[0].mxu0
          %v8923 = vpop.f32.mrb[0].mxu0
          %v8924 = vadd.f32 0.0, %v8923
          %v8925 = vpop.f32.mrb[0].mxu0
          %8926 = vmatprep.mubr.bf16.mxu0 %v8618
          %8927 = vmatmul.mubr.bf16.gmra.mrb[0].mxu0 %v8617
          %v8928 = vpop.f32.mrb[0].mxu0
          %v8929 = vadd.f32 0.0, %v8928
          %v8930 = vpop.f32.mrb[0].mxu0
          %v8931 = vpop.f32.mrb[0].mxu0
          %v8932 = vadd.f32 0.0, %v8931
          %v8933 = vpop.f32.mrb[0].mxu0
          %8934 = vmatprep.mubr.bf16.mxu0 %v8621
          %8935 = vmatmul.mubr.bf16.gmra.mrb[0].mxu0 %v8620
          %v8936 = vpop.f32.mrb[0].mxu0
          %v8937 = vadd.f32 0.0, %v8936
          %v8938 = vpop.f32.mrb[0].mxu0
          %v8939 = vpop.f32.mrb[0].mxu0
          %v8940 = vadd.f32 0.0, %v8939
          %v8941 = vpop.f32.mrb[0].mxu0
          %8942 = vmatprep.mubr.bf16.mxu0 %v8624
          %8943 = vmatmul.mubr.bf16.gmra.mrb[0].mxu0 %v8623
          %v8944 = vpop.f32.mrb[0].mxu0
          %v8945 = vadd.f32 0.0, %v8944
          %v8946 = vpop.f32.mrb[0].mxu0
          %v8947 = vpop.f32.mrb[0].mxu0
          %v8948 = vadd.f32 0.0, %v8947
          %v8949 = vpop.f32.mrb[0].mxu0
          %8950 = vmatprep.mubr.bf16.mxu0 %v8627
          %8951 = vmatmul.mubr.bf16.gmra.mrb[0].mxu0 %v8626
          %v8952 = vpop.f32.mrb[0].mxu0
          %v8953 = vadd.f32 0.0, %v8952
          %v8954 = vpop.f32.mrb[0].mxu0
          %v8955 = vpop.f32.mrb[0].mxu0
          %v8956 = vadd.f32 0.0, %v8955
          %v8957 = vpop.f32.mrb[0].mxu0
          %8958 = vmatprep.mubr.bf16.mxu0 %v8630
          %8959 = vmatmul.mubr.bf16.gmra.mrb[0].mxu0 %v8629
          %v8960 = vpop.f32.mrb[0].mxu0
          %v8961 = vadd.f32 0.0, %v8960
          %v8962 = vpop.f32.mrb[0].mxu0
          %v8963 = vpop.f32.mrb[0].mxu0
          %v8964 = vadd.f32 0.0, %v8963
          %v8965 = vpop.f32.mrb[0].mxu0
          %8966 = vmatprep.mubr.bf16.mxu0 %v8633
          %8967 = vmatmul.mubr.bf16.gmra.mrb[0].mxu0 %v8632
          %v8968 = vpop.f32.mrb[0].mxu0
          %v8969 = vadd.f32 0.0, %v8968
          %v8970 = vpop.f32.mrb[0].mxu0
          %v8971 = vpop.f32.mrb[0].mxu0
          %v8972 = vadd.f32 0.0, %v8971
          %v8973 = vpop.f32.mrb[0].mxu0
          %8974 = vmatprep.mubr.bf16.mxu0 %v8636
          %8975 = vmatmul.mubr.bf16.gmra.mrb[0].mxu0 %v8635
          %v8976 = vpop.f32.mrb[0].mxu0
          %v8977 = vadd.f32 0.0, %v8976
          %v8978 = vpop.f32.mrb[0].mxu0
          %v8979 = vpop.f32.mrb[0].mxu0
          %v8980 = vadd.f32 0.0, %v8979
          %v8981 = vpop.f32.mrb[0].mxu0
          %8982 = vmatprep.mubr.bf16.mxu0 %v8639
          %8983 = vmatmul.mubr.bf16.gmra.mrb[0].mxu0 %v8638
          %v8984 = vpop.f32.mrb[0].mxu0
          %v8985 = vadd.f32 0.0, %v8984
          %v8986 = vpop.f32.mrb[0].mxu0
          %v8987 = vpop.f32.mrb[0].mxu0
          %v8988 = vadd.f32 0.0, %v8987
          %v8989 = vpop.f32.mrb[0].mxu0
          %8990 = vmatprep.mubr.bf16.mxu0 %v8642
          %8991 = vmatmul.mubr.bf16.gmra.mrb[0].mxu0 %v8641
          %v8992 = vpop.f32.mrb[0].mxu0
          %v8993 = vadd.f32 0.0, %v8992
          %v8994 = vpop.f32.mrb[0].mxu0
          %v8995 = vpop.f32.mrb[0].mxu0
          %v8996 = vadd.f32 0.0, %v8995
          %v8997 = vpop.f32.mrb[0].mxu0
          %8998 = vmatprep.mubr.bf16.mxu0 %v8645
          %8999 = vmatmul.mubr.bf16.gmra.mrb[0].mxu0 %v8644
          %v9000 = vpop.f32.mrb[0].mxu0
          %v9001 = vadd.f32 0.0, %v9000
          %v9002 = vpop.f32.mrb[0].mxu0
          %v9003 = vpop.f32.mrb[0].mxu0
          %v9004 = vadd.f32 0.0, %v9003
          %v9005 = vpop.f32.mrb[0].mxu0
          %9006 = vmatprep.mubr.bf16.mxu0 %v8648
          %9007 = vmatmul.mubr.bf16.gmra.mrb[0].mxu0 %v8647
          %v9008 = vpop.f32.mrb[0].mxu0
          %v9009 = vadd.f32 0.0, %v9008
          %v9010 = vpop.f32.mrb[0].mxu0
          %v9011 = vpop.f32.mrb[0].mxu0
          %v9012 = vadd.f32 0.0, %v9011
          %v9013 = vpop.f32.mrb[0].mxu0
          %9014 = vmatprep.mubr.bf16.mxu0 %v8651
          %9015 = vmatmul.mubr.bf16.gmra.mrb[0].mxu0 %v8650
          %v9016 = vpop.f32.mrb[0].mxu0
          %v9017 = vadd.f32 0.0, %v9016
          %v9018 = vpop.f32.mrb[0].mxu0
          %v9019 = vpop.f32.mrb[0].mxu0
          %v9020 = vadd.f32 0.0, %v9019
          %v9021 = vpop.f32.mrb[0].mxu0
          %9022 = vmatprep.mubr.bf16.mxu0 %v8654
          %9023 = vmatmul.mubr.bf16.gmra.mrb[0].mxu0 %v8653
          %v9024 = vpop.f32.mrb[0].mxu0
          %v9025 = vadd.f32 0.0, %v9024
          %v9026 = vpop.f32.mrb[0].mxu0
          %v9027 = vpop.f32.mrb[0].mxu0
          %v9028 = vadd.f32 0.0, %v9027
          %v9029 = vpop.f32.mrb[0].mxu0
          %9030 = vmatprep.mubr.bf16.mxu0 %v8657
          %9031 = vmatmul.mubr.bf16.gmra.mrb[0].mxu0 %v8656
          %v9032 = vpop.f32.mrb[0].mxu0
          %v9033 = vadd.f32 0.0, %v9032
          %v9034 = vpop.f32.mrb[0].mxu0
          %v9035 = vpop.f32.mrb[0].mxu0
          %v9036 = vadd.f32 0.0, %v9035
          %v9037 = vpop.f32.mrb[0].mxu0
          %9038 = vmatprep.mubr.bf16.mxu0 %v8660
          %9039 = vmatmul.mubr.bf16.gmra.mrb[0].mxu0 %v8659
          %v9040 = vpop.f32.mrb[0].mxu0
          %v9041 = vadd.f32 0.0, %v9040
          %v9042 = vpop.f32.mrb[0].mxu0
          %v9043 = vpop.f32.mrb[0].mxu0
          %v9044 = vadd.f32 0.0, %v9043
          %v9045 = vpop.f32.mrb[0].mxu0
          %9046 = vdwg.mxu0
          %9047 = vmatprep.subr.bf16.mxu0 0
          %9048 = vmatpush1.bf16.msra.mxu0 %v8854
          %9049 = vmatprep.subr.bf16.mxu0 0
          %9050 = vmatpush1.bf16.msra.mxu0 %v8855
          %9051 = vmatprep.subr.bf16.mxu0 0
          %9052 = vmatpush1.bf16.msra.mxu0 %v8856
          %9053 = vmatprep.subr.bf16.mxu0 0
          %9054 = vmatpush1.bf16.msra.mxu0 %v8857
          %9055 = vmatprep.subr.bf16.mxu0 0
          %9056 = vmatpush1.bf16.msra.mxu0 %v8858
          %9057 = vmatprep.subr.bf16.mxu0 0
          %9058 = vmatpush1.bf16.msra.mxu0 %v8859
          %9059 = vmatprep.subr.bf16.mxu0 0
          %9060 = vmatpush1.bf16.msra.mxu0 %v8860
          %9061 = vmatprep.subr.bf16.mxu0 0
          %9062 = vmatpush1.bf16.msra.mxu0 %v8861
          %9063 = vmatprep.subr.bf16.mxu0 0
          %9064 = vmatpush1.bf16.msra.mxu0 0
          %9065 = vmatprep.subr.bf16.mxu0 0
          %9066 = vmatpush1.bf16.msra.mxu0 0
          %9067 = vmatprep.subr.bf16.mxu0 0
          %9068 = vmatpush1.bf16.msra.mxu0 0
          %9069 = vmatprep.subr.bf16.mxu0 0
          %9070 = vmatpush1.bf16.msra.mxu0 0
          %9071 = vmatprep.subr.bf16.mxu0 0
          %9072 = vmatpush1.bf16.msra.mxu0 0
          %9073 = vmatprep.subr.bf16.mxu0 0
          %9074 = vmatpush1.bf16.msra.mxu0 0
          %9075 = vmatprep.subr.bf16.mxu0 0
          %9076 = vmatpush1.bf16.msra.mxu0 0
          %9077 = vmatprep.subr.bf16.mxu0 0
          %9078 = vmatpush1.bf16.msra.mxu0 0
          %9079 = vmatprep.mubr.bf16.mxu0 0
          %9080 = vmatmul.mubr.bf16.gmra.mrb[0].mxu0 %v8616
          %v9081 = vpop.f32.mrb[0].mxu0
          %v9082 = vadd.f32 %v8921, %v9081
          %v9083 = vpop.f32.mrb[0].mxu0
          %v9084 = vpop.f32.mrb[0].mxu0
          %v9085 = vadd.f32 %v8924, %v9084
          %v9086 = vpop.f32.mrb[0].mxu0
          %9087 = vmatprep.mubr.bf16.mxu0 0
          %9088 = vmatmul.mubr.bf16.gmra.mrb[0].mxu0 %v8619
          %v9089 = vpop.f32.mrb[0].mxu0
          %v9090 = vadd.f32 %v8929, %v9089
          %v9091 = vpop.f32.mrb[0].mxu0
          %v9092 = vpop.f32.mrb[0].mxu0
          %v9093 = vadd.f32 %v8932, %v9092
          %v9094 = vpop.f32.mrb[0].mxu0
          %9095 = vmatprep.mubr.bf16.mxu0 0
          %9096 = vmatmul.mubr.bf16.gmra.mrb[0].mxu0 %v8622
          %v9097 = vpop.f32.mrb[0].mxu0
          %v9098 = vadd.f32 %v8937, %v9097
          %v9099 = vpop.f32.mrb[0].mxu0
          %v9100 = vpop.f32.mrb[0].mxu0
          %v9101 = vadd.f32 %v8940, %v9100
          %v9102 = vpop.f32.mrb[0].mxu0
          %9103 = vmatprep.mubr.bf16.mxu0 0
          %9104 = vmatmul.mubr.bf16.gmra.mrb[0].mxu0 %v8625
          %v9105 = vpop.f32.mrb[0].mxu0
          %v9106 = vadd.f32 %v8945, %v9105
          %v9107 = vpop.f32.mrb[0].mxu0
          %v9108 = vpop.f32.mrb[0].mxu0
          %v9109 = vadd.f32 %v8948, %v9108
          %v9110 = vpop.f32.mrb[0].mxu0
          %9111 = vmatprep.mubr.bf16.mxu0 0
          %9112 = vmatmul.mubr.bf16.gmra.mrb[0].mxu0 %v8628
          %v9113 = vpop.f32.mrb[0].mxu0
          %v9114 = vadd.f32 %v8953, %v9113
          %v9115 = vpop.f32.mrb[0].mxu0
          %v9116 = vpop.f32.mrb[0].mxu0
          %v9117 = vadd.f32 %v8956, %v9116
          %v9118 = vpop.f32.mrb[0].mxu0
          %9119 = vmatprep.mubr.bf16.mxu0 0
          %9120 = vmatmul.mubr.bf16.gmra.mrb[0].mxu0 %v8631
          %v9121 = vpop.f32.mrb[0].mxu0
          %v9122 = vadd.f32 %v8961, %v9121
          %v9123 = vpop.f32.mrb[0].mxu0
          %v9124 = vpop.f32.mrb[0].mxu0
          %v9125 = vadd.f32 %v8964, %v9124
          %v9126 = vpop.f32.mrb[0].mxu0
          %9127 = vmatprep.mubr.bf16.mxu0 0
          %9128 = vmatmul.mubr.bf16.gmra.mrb[0].mxu0 %v8634
          %v9129 = vpop.f32.mrb[0].mxu0
          %v9130 = vadd.f32 %v8969, %v9129
          %v9131 = vpop.f32.mrb[0].mxu0
          %v9132 = vpop.f32.mrb[0].mxu0
          %v9133 = vadd.f32 %v8972, %v9132
          %v9134 = vpop.f32.mrb[0].mxu0
          %9135 = vmatprep.mubr.bf16.mxu0 0
          %9136 = vmatmul.mubr.bf16.gmra.mrb[0].mxu0 %v8637
          %v9137 = vpop.f32.mrb[0].mxu0
          %v9138 = vadd.f32 %v8977, %v9137
          %v9139 = vpop.f32.mrb[0].mxu0
          %v9140 = vpop.f32.mrb[0].mxu0
          %v9141 = vadd.f32 %v8980, %v9140
          %v9142 = vpop.f32.mrb[0].mxu0
          %9143 = vmatprep.mubr.bf16.mxu0 0
          %9144 = vmatmul.mubr.bf16.gmra.mrb[0].mxu0 %v8640
          %v9145 = vpop.f32.mrb[0].mxu0
          %v9146 = vadd.f32 %v8985, %v9145
          %v9147 = vpop.f32.mrb[0].mxu0
          %v9148 = vpop.f32.mrb[0].mxu0
          %v9149 = vadd.f32 %v8988, %v9148
          %v9150 = vpop.f32.mrb[0].mxu0
          %9151 = vmatprep.mubr.bf16.mxu0 0
          %9152 = vmatmul.mubr.bf16.gmra.mrb[0].mxu0 %v8643
          %v9153 = vpop.f32.mrb[0].mxu0
          %v9154 = vadd.f32 %v8993, %v9153
          %v9155 = vpop.f32.mrb[0].mxu0
          %v9156 = vpop.f32.mrb[0].mxu0
          %v9157 = vadd.f32 %v8996, %v9156
          %v9158 = vpop.f32.mrb[0].mxu0
          %9159 = vmatprep.mubr.bf16.mxu0 0
          %9160 = vmatmul.mubr.bf16.gmra.mrb[0].mxu0 %v8646
          %v9161 = vpop.f32.mrb[0].mxu0
          %v9162 = vadd.f32 %v9001, %v9161
          %v9163 = vpop.f32.mrb[0].mxu0
          %v9164 = vpop.f32.mrb[0].mxu0
          %v9165 = vadd.f32 %v9004, %v9164
          %v9166 = vpop.f32.mrb[0].mxu0
          %9167 = vmatprep.mubr.bf16.mxu0 0
          %9168 = vmatmul.mubr.bf16.gmra.mrb[0].mxu0 %v8649
          %v9169 = vpop.f32.mrb[0].mxu0
          %v9170 = vadd.f32 %v9009, %v9169
          %v9171 = vpop.f32.mrb[0].mxu0
          %v9172 = vpop.f32.mrb[0].mxu0
          %v9173 = vadd.f32 %v9012, %v9172
          %v9174 = vpop.f32.mrb[0].mxu0
          %9175 = vmatprep.mubr.bf16.mxu0 0
          %9176 = vmatmul.mubr.bf16.gmra.mrb[0].mxu0 %v8652
          %v9177 = vpop.f32.mrb[0].mxu0
          %v9178 = vadd.f32 %v9017, %v9177
          %v9179 = vpop.f32.mrb[0].mxu0
          %v9180 = vpop.f32.mrb[0].mxu0
          %v9181 = vadd.f32 %v9020, %v9180
          %v9182 = vpop.f32.mrb[0].mxu0
          %9183 = vmatprep.mubr.bf16.mxu0 0
          %9184 = vmatmul.mubr.bf16.gmra.mrb[0].mxu0 %v8655
          %v9185 = vpop.f32.mrb[0].mxu0
          %v9186 = vadd.f32 %v9025, %v9185
          %v9187 = vpop.f32.mrb[0].mxu0
          %v9188 = vpop.f32.mrb[0].mxu0
          %v9189 = vadd.f32 %v9028, %v9188
          %v9190 = vpop.f32.mrb[0].mxu0
          %9191 = vmatprep.mubr.bf16.mxu0 0
          %9192 = vmatmul.mubr.bf16.gmra.mrb[0].mxu0 %v8658
          %v9193 = vpop.f32.mrb[0].mxu0
          %v9194 = vadd.f32 %v9033, %v9193
          %v9195 = vpop.f32.mrb[0].mxu0
          %v9196 = vpop.f32.mrb[0].mxu0
          %v9197 = vadd.f32 %v9036, %v9196
          %v9198 = vpop.f32.mrb[0].mxu0
          %9199 = vmatprep.mubr.bf16.mxu0 0
          %9200 = vmatmul.mubr.bf16.gmra.mrb[0].mxu0 %v8661
          %v9201 = vpop.f32.mrb[0].mxu0
          %v9202 = vadd.f32 %v9041, %v9201
          %v9203 = vpop.f32.mrb[0].mxu0
          %v9204 = vpop.f32.mrb[0].mxu0
          %v9205 = vadd.f32 %v9044, %v9204
          %v9206 = vpop.f32.mrb[0].mxu0
          %9207 = vdwg.mxu0
          %v9208 = vadd.f32 %v8662, %v9082
          %v9209 = vadd.f32 %v8663, %v9085
          %v9210 = vadd.f32 %v8664, %v9090
          %v9211 = vadd.f32 %v8665, %v9093
          %v9212 = vadd.f32 %v8666, %v9098
          %v9213 = vadd.f32 %v8667, %v9101
          %v9214 = vadd.f32 %v8668, %v9106
          %v9215 = vadd.f32 %v8669, %v9109
          %v9216 = vadd.f32 %v8670, %v9114
          %v9217 = vadd.f32 %v8671, %v9117
          %v9218 = vadd.f32 %v8672, %v9122
          %v9219 = vadd.f32 %v8673, %v9125
          %v9220 = vadd.f32 %v8674, %v9130
          %v9221 = vadd.f32 %v8675, %v9133
          %v9222 = vadd.f32 %v8676, %v9138
          %v9223 = vadd.f32 %v8677, %v9141
          %v9224 = vadd.f32 %v8678, %v9146
          %v9225 = vadd.f32 %v8679, %v9149
          %v9226 = vadd.f32 %v8680, %v9154
          %v9227 = vadd.f32 %v8681, %v9157
          %v9228 = vadd.f32 %v8682, %v9162
          %v9229 = vadd.f32 %v8683, %v9165
          %v9230 = vadd.f32 %v8684, %v9170
          %v9231 = vadd.f32 %v8685, %v9173
          %v9232 = vadd.f32 %v8686, %v9178
          %v9233 = vadd.f32 %v8687, %v9181
          %v9234 = vadd.f32 %v8688, %v9186
          %v9235 = vadd.f32 %v8689, %v9189
          %v9236 = vadd.f32 %v8690, %v9194
          %v9237 = vadd.f32 %v8691, %v9197
          %v9238 = vadd.f32 %v8692, %v9202
          %v9239 = vadd.f32 %v8693, %v9205
          %9240 = vst [vmem:[#allocation2] sm:$0xff] %v9208
          %9241 = vst [vmem:[#allocation2 + $0x8] sm:$0xff] %v9209
          %9242 = vst [vmem:[#allocation2 + $0x10] sm:$0xff] %v9210
          %9243 = vst [vmem:[#allocation2 + $0x18] sm:$0xff] %v9211
          %9244 = vst [vmem:[#allocation2 + $0x20] sm:$0xff] %v9212
          %9245 = vst [vmem:[#allocation2 + $0x28] sm:$0xff] %v9213
          %9246 = vst [vmem:[#allocation2 + $0x30] sm:$0xff] %v9214
          %9247 = vst [vmem:[#allocation2 + $0x38] sm:$0xff] %v9215
          %9248 = vst [vmem:[#allocation2 + $0x40] sm:$0xff] %v9216
          %9249 = vst [vmem:[#allocation2 + $0x48] sm:$0xff] %v9217
          %9250 = vst [vmem:[#allocation2 + $0x50] sm:$0xff] %v9218
          %9251 = vst [vmem:[#allocation2 + $0x58] sm:$0xff] %v9219
          %9252 = vst [vmem:[#allocation2 + $0x60] sm:$0xff] %v9220
          %9253 = vst [vmem:[#allocation2 + $0x68] sm:$0xff] %v9221
          %9254 = vst [vmem:[#allocation2 + $0x70] sm:$0xff] %v9222
          %9255 = vst [vmem:[#allocation2 + $0x78] sm:$0xff] %v9223
          %9256 = vst [vmem:[#allocation2 + $0x80] sm:$0xff] %v9224
          %9257 = vst [vmem:[#allocation2 + $0x88] sm:$0xff] %v9225
          %9258 = vst [vmem:[#allocation2 + $0x90] sm:$0xff] %v9226
          %9259 = vst [vmem:[#allocation2 + $0x98] sm:$0xff] %v9227
          %9260 = vst [vmem:[#allocation2 + $0xa0] sm:$0xff] %v9228
          %9261 = vst [vmem:[#allocation2 + $0xa8] sm:$0xff] %v9229
          %9262 = vst [vmem:[#allocation2 + $0xb0] sm:$0xff] %v9230
          %9263 = vst [vmem:[#allocation2 + $0xb8] sm:$0xff] %v9231
          %9264 = vst [vmem:[#allocation2 + $0xc0] sm:$0xff] %v9232
          %9265 = vst [vmem:[#allocation2 + $0xc8] sm:$0xff] %v9233
          %9266 = vst [vmem:[#allocation2 + $0xd0] sm:$0xff] %v9234
          %9267 = vst [vmem:[#allocation2 + $0xd8] sm:$0xff] %v9235
          %9268 = vst [vmem:[#allocation2 + $0xe0] sm:$0xff] %v9236
          %9269 = vst [vmem:[#allocation2 + $0xe8] sm:$0xff] %v9237
          %9270 = vst [vmem:[#allocation2 + $0xf0] sm:$0xff] %v9238
          %9271 = vst [vmem:[#allocation2 + $0xf8] sm:$0xff] %v9239
          %s9272 = scalar_lea.vmem [#allocation3], 144
          %v9273 = vld [vmem:[%s9272] sm:$0xff]
          %v9274 = vld [vmem:[%s9272 + $0x8] sm:$0xff]
          %v9275 = vld [vmem:[%s9272 + $0x10] sm:$0xff]
          %v9276 = vld [vmem:[%s9272 + $0x18] sm:$0xff]
          %v9277 = vld [vmem:[%s9272 + $0x20] sm:$0xff]
          %v9278 = vld [vmem:[%s9272 + $0x28] sm:$0xff]
          %v9279 = vld [vmem:[%s9272 + $0x30] sm:$0xff]
          %v9280 = vld [vmem:[%s9272 + $0x38] sm:$0xff]
          %v9281 = vld [vmem:[%s9272 + $0x40] sm:$0xff]
          %v9282 = vld [vmem:[%s9272 + $0x48] sm:$0xff]
          %v9283 = vld [vmem:[%s9272 + $0x50] sm:$0xff]
          %v9284 = vld [vmem:[%s9272 + $0x58] sm:$0xff]
          %v9285 = vld [vmem:[%s9272 + $0x60] sm:$0xff]
          %v9286 = vld [vmem:[%s9272 + $0x68] sm:$0xff]
          %v9287 = vld [vmem:[%s9272 + $0x70] sm:$0xff]
          %v9288 = vld [vmem:[%s9272 + $0x78] sm:$0xff]
          %v9289 = vld [vmem:[%s9272 + $0x80] sm:$0xff]
          %v9290 = vld [vmem:[%s9272 + $0x88] sm:$0xff]
          %v9291 = vld [vmem:[%s9272 + $0x90] sm:$0xff]
          %v9292 = vld [vmem:[%s9272 + $0x98] sm:$0xff]
          %v9293 = vld [vmem:[%s9272 + $0xa0] sm:$0xff]
          %v9294 = vld [vmem:[%s9272 + $0xa8] sm:$0xff]
          %v9295 = vld [vmem:[%s9272 + $0xb0] sm:$0xff]
          %v9296 = vld [vmem:[%s9272 + $0xb8] sm:$0xff]
          %v9297 = vld [vmem:[%s9272 + $0xc0] sm:$0xff]
          %v9298 = vld [vmem:[%s9272 + $0xc8] sm:$0xff]
          %v9299 = vld [vmem:[%s9272 + $0xd0] sm:$0xff]
          %v9300 = vld [vmem:[%s9272 + $0xd8] sm:$0xff]
          %v9301 = vld [vmem:[%s9272 + $0xe0] sm:$0xff]
          %v9302 = vld [vmem:[%s9272 + $0xe8] sm:$0xff]
          %v9303 = vld [vmem:[%s9272 + $0xf0] sm:$0xff]
          %v9304 = vld [vmem:[%s9272 + $0xf8] sm:$0xff]
          %v9305 = vld [vmem:[%s9272 + $0x100] sm:$0xff]
          %v9306 = vld [vmem:[%s9272 + $0x108] sm:$0xff]
          %v9307 = vld [vmem:[%s9272 + $0x110] sm:$0xff]
          %v9308 = vld [vmem:[%s9272 + $0x118] sm:$0xff]
          %v9309 = vld [vmem:[%s9272 + $0x120] sm:$0xff]
          %v9310 = vld [vmem:[%s9272 + $0x128] sm:$0xff]
          %v9311 = vld [vmem:[%s9272 + $0x130] sm:$0xff]
          %v9312 = vld [vmem:[%s9272 + $0x138] sm:$0xff]
          %v9313 = vld [vmem:[%s9272 + $0x140] sm:$0xff]
          %v9314 = vld [vmem:[%s9272 + $0x148] sm:$0xff]
          %v9315 = vld [vmem:[%s9272 + $0x150] sm:$0xff]
          %v9316 = vld [vmem:[%s9272 + $0x158] sm:$0xff]
          %v9317 = vld [vmem:[%s9272 + $0x160] sm:$0xff]
          %v9318 = vld [vmem:[%s9272 + $0x168] sm:$0xff]
          %v9319 = vld [vmem:[%s9272 + $0x170] sm:$0xff]
          %v9320 = vld [vmem:[%s9272 + $0x178] sm:$0xff]
          %v9321 = vld [vmem:[#allocation2] sm:$0xff]
          %v9322 = vld [vmem:[#allocation2 + $0x8] sm:$0xff]
          %v9323 = vld [vmem:[#allocation2 + $0x10] sm:$0xff]
          %v9324 = vld [vmem:[#allocation2 + $0x18] sm:$0xff]
          %v9325 = vld [vmem:[#allocation2 + $0x20] sm:$0xff]
          %v9326 = vld [vmem:[#allocation2 + $0x28] sm:$0xff]
          %v9327 = vld [vmem:[#allocation2 + $0x30] sm:$0xff]
          %v9328 = vld [vmem:[#allocation2 + $0x38] sm:$0xff]
          %v9329 = vld [vmem:[#allocation2 + $0x40] sm:$0xff]
          %v9330 = vld [vmem:[#allocation2 + $0x48] sm:$0xff]
          %v9331 = vld [vmem:[#allocation2 + $0x50] sm:$0xff]
          %v9332 = vld [vmem:[#allocation2 + $0x58] sm:$0xff]
          %v9333 = vld [vmem:[#allocation2 + $0x60] sm:$0xff]
          %v9334 = vld [vmem:[#allocation2 + $0x68] sm:$0xff]
          %v9335 = vld [vmem:[#allocation2 + $0x70] sm:$0xff]
          %v9336 = vld [vmem:[#allocation2 + $0x78] sm:$0xff]
          %v9337 = vld [vmem:[#allocation2 + $0x80] sm:$0xff]
          %v9338 = vld [vmem:[#allocation2 + $0x88] sm:$0xff]
          %v9339 = vld [vmem:[#allocation2 + $0x90] sm:$0xff]
          %v9340 = vld [vmem:[#allocation2 + $0x98] sm:$0xff]
          %v9341 = vld [vmem:[#allocation2 + $0xa0] sm:$0xff]
          %v9342 = vld [vmem:[#allocation2 + $0xa8] sm:$0xff]
          %v9343 = vld [vmem:[#allocation2 + $0xb0] sm:$0xff]
          %v9344 = vld [vmem:[#allocation2 + $0xb8] sm:$0xff]
          %v9345 = vld [vmem:[#allocation2 + $0xc0] sm:$0xff]
          %v9346 = vld [vmem:[#allocation2 + $0xc8] sm:$0xff]
          %v9347 = vld [vmem:[#allocation2 + $0xd0] sm:$0xff]
          %v9348 = vld [vmem:[#allocation2 + $0xd8] sm:$0xff]
          %v9349 = vld [vmem:[#allocation2 + $0xe0] sm:$0xff]
          %v9350 = vld [vmem:[#allocation2 + $0xe8] sm:$0xff]
          %v9351 = vld [vmem:[#allocation2 + $0xf0] sm:$0xff]
          %v9352 = vld [vmem:[#allocation2 + $0xf8] sm:$0xff]
          %s9353 = scalar_lea.vmem %s291, 192 [#allocation4]
          %v9354 = vld [vmem:[%s9353] sm:$0xf]
          %v9355 = vld [vmem:[%s9353 + $0x4] sm:$0xf]
          %v9356 = vld [vmem:[%s9353 + $0x8] sm:$0xf]
          %v9357 = vld [vmem:[%s9353 + $0xc] sm:$0xf]
          %v9358 = vld [vmem:[%s9353 + $0x10] sm:$0xf]
          %v9359 = vld [vmem:[%s9353 + $0x14] sm:$0xf]
          %v9360 = vld [vmem:[%s9353 + $0x18] sm:$0xf]
          %v9361 = vld [vmem:[%s9353 + $0x1c] sm:$0xf]
          %v9362 = vld [vmem:[%s9353 + $0x20] sm:$0xf]
          %v9363 = vld [vmem:[%s9353 + $0x24] sm:$0xf]
          %v9364 = vld [vmem:[%s9353 + $0x28] sm:$0xf]
          %v9365 = vld [vmem:[%s9353 + $0x2c] sm:$0xf]
          %v9366 = vld [vmem:[%s9353 + $0x30] sm:$0xf]
          %v9367 = vld [vmem:[%s9353 + $0x34] sm:$0xf]
          %v9368 = vld [vmem:[%s9353 + $0x38] sm:$0xf]
          %v9369 = vld [vmem:[%s9353 + $0x3c] sm:$0xf]
          %v9370 = vld [vmem:[%s9353 + $0x40] sm:$0xf]
          %v9371 = vld [vmem:[%s9353 + $0x44] sm:$0xf]
          %v9372 = vld [vmem:[%s9353 + $0x48] sm:$0xf]
          %v9373 = vld [vmem:[%s9353 + $0x4c] sm:$0xf]
          %v9374 = vld [vmem:[%s9353 + $0x50] sm:$0xf]
          %v9375 = vld [vmem:[%s9353 + $0x54] sm:$0xf]
          %v9376 = vld [vmem:[%s9353 + $0x58] sm:$0xf]
          %v9377 = vld [vmem:[%s9353 + $0x5c] sm:$0xf]
          %v9378 = vld [vmem:[%s9353 + $0x60] sm:$0xf]
          %v9379 = vld [vmem:[%s9353 + $0x64] sm:$0xf]
          %v9380 = vld [vmem:[%s9353 + $0x68] sm:$0xf]
          %v9381 = vld [vmem:[%s9353 + $0x6c] sm:$0xf]
          %v9382 = vld [vmem:[%s9353 + $0x70] sm:$0xf]
          %v9383 = vld [vmem:[%s9353 + $0x74] sm:$0xf]
          %v9384 = vld [vmem:[%s9353 + $0x78] sm:$0xf]
          %v9385 = vld [vmem:[%s9353 + $0x7c] sm:$0xf]
          %v9386 = vld [vmem:[%s9353 + $0x80] sm:$0xf]
          %v9387 = vld [vmem:[%s9353 + $0x84] sm:$0xf]
          %v9388 = vld [vmem:[%s9353 + $0x88] sm:$0xf]
          %v9389 = vld [vmem:[%s9353 + $0x8c] sm:$0xf]
          %v9390 = vld [vmem:[%s9353 + $0x90] sm:$0xf]
          %v9391 = vld [vmem:[%s9353 + $0x94] sm:$0xf]
          %v9392 = vld [vmem:[%s9353 + $0x98] sm:$0xf]
          %v9393 = vld [vmem:[%s9353 + $0x9c] sm:$0xf]
          %v9394 = vld [vmem:[%s9353 + $0xa0] sm:$0xf]
          %v9395 = vld [vmem:[%s9353 + $0xa4] sm:$0xf]
          %v9396 = vld [vmem:[%s9353 + $0xa8] sm:$0xf]
          %v9397 = vld [vmem:[%s9353 + $0xac] sm:$0xf]
          %v9398 = vld [vmem:[%s9353 + $0xb0] sm:$0xf]
          %v9399 = vld [vmem:[%s9353 + $0xb4] sm:$0xf]
          %v9400 = vld [vmem:[%s9353 + $0xb8] sm:$0xf]
          %v9401 = vld [vmem:[%s9353 + $0xbc] sm:$0xf]
          %v9450 = vunpack.c.l.b16 %v9354
          %v9451 = vunpack.c.l.b16 %v9355
          %v9452 = vunpack.c.l.b16 %v9356
          %v9453 = vunpack.c.l.b16 %v9357
          %v9454 = vunpack.c.l.b16 %v9358
          %v9455 = vunpack.c.l.b16 %v9359
          %v9456 = vunpack.c.l.b16 %v9360
          %v9457 = vunpack.c.l.b16 %v9361
          %v9458 = vunpack.c.l.b16 %v9362
          %v9459 = vunpack.c.l.b16 %v9363
          %v9460 = vunpack.c.l.b16 %v9364
          %v9461 = vunpack.c.l.b16 %v9365
          %v9462 = vunpack.c.l.b16 %v9366
          %v9463 = vunpack.c.l.b16 %v9367
          %v9464 = vunpack.c.l.b16 %v9368
          %v9465 = vunpack.c.l.b16 %v9369
          %v9466 = vunpack.c.l.b16 %v9370
          %v9467 = vunpack.c.l.b16 %v9371
          %v9468 = vunpack.c.l.b16 %v9372
          %v9469 = vunpack.c.l.b16 %v9373
          %v9470 = vunpack.c.l.b16 %v9374
          %v9471 = vunpack.c.l.b16 %v9375
          %v9472 = vunpack.c.l.b16 %v9376
          %v9473 = vunpack.c.l.b16 %v9377
          %v9474 = vunpack.c.l.b16 %v9378
          %v9475 = vunpack.c.l.b16 %v9379
          %v9476 = vunpack.c.l.b16 %v9380
          %v9477 = vunpack.c.l.b16 %v9381
          %v9478 = vunpack.c.l.b16 %v9382
          %v9479 = vunpack.c.l.b16 %v9383
          %v9480 = vunpack.c.l.b16 %v9384
          %v9481 = vunpack.c.l.b16 %v9385
          %v9482 = vunpack.c.l.b16 %v9386
          %v9483 = vunpack.c.l.b16 %v9387
          %v9484 = vunpack.c.l.b16 %v9388
          %v9485 = vunpack.c.l.b16 %v9389
          %v9486 = vunpack.c.l.b16 %v9390
          %v9487 = vunpack.c.l.b16 %v9391
          %v9488 = vunpack.c.l.b16 %v9392
          %v9489 = vunpack.c.l.b16 %v9393
          %v9490 = vunpack.c.l.b16 %v9394
          %v9491 = vunpack.c.l.b16 %v9395
          %v9492 = vunpack.c.l.b16 %v9396
          %v9493 = vunpack.c.l.b16 %v9397
          %v9494 = vunpack.c.l.b16 %v9398
          %v9495 = vunpack.c.l.b16 %v9399
          %v9496 = vunpack.c.l.b16 %v9400
          %v9497 = vunpack.c.l.b16 %v9401
          %v9498 = vpack.c.b16 %v9451, %v9450
          %v9499 = vpack.c.b16 %v9453, %v9452
          %v9500 = vpack.c.b16 %v9455, %v9454
          %v9501 = vpack.c.b16 %v9457, %v9456
          %v9502 = vpack.c.b16 %v9459, %v9458
          %v9503 = vpack.c.b16 %v9461, %v9460
          %v9504 = vpack.c.b16 %v9463, %v9462
          %v9505 = vpack.c.b16 %v9465, %v9464
          %v9506 = vpack.c.b16 %v9467, %v9466
          %v9507 = vpack.c.b16 %v9469, %v9468
          %v9508 = vpack.c.b16 %v9471, %v9470
          %v9509 = vpack.c.b16 %v9473, %v9472
          %v9510 = vpack.c.b16 %v9475, %v9474
          %v9511 = vpack.c.b16 %v9477, %v9476
          %v9512 = vpack.c.b16 %v9479, %v9478
          %v9513 = vpack.c.b16 %v9481, %v9480
          %v9514 = vpack.c.b16 %v9483, %v9482
          %v9515 = vpack.c.b16 %v9485, %v9484
          %v9516 = vpack.c.b16 %v9487, %v9486
          %v9517 = vpack.c.b16 %v9489, %v9488
          %v9518 = vpack.c.b16 %v9491, %v9490
          %v9519 = vpack.c.b16 %v9493, %v9492
          %v9520 = vpack.c.b16 %v9495, %v9494
          %v9521 = vpack.c.b16 %v9497, %v9496
          %9546 = vmatprep.subr.bf16.mxu0 0
          %9547 = vmatpush1.bf16.msra.mxu0 %v9498
          %9548 = vmatprep.subr.bf16.mxu0 0
          %9549 = vmatpush1.bf16.msra.mxu0 %v9499
          %9550 = vmatprep.subr.bf16.mxu0 0
          %9551 = vmatpush1.bf16.msra.mxu0 %v9500
          %9552 = vmatprep.subr.bf16.mxu0 0
          %9553 = vmatpush1.bf16.msra.mxu0 %v9501
          %9554 = vmatprep.subr.bf16.mxu0 0
          %9555 = vmatpush1.bf16.msra.mxu0 %v9502
          %9556 = vmatprep.subr.bf16.mxu0 0
          %9557 = vmatpush1.bf16.msra.mxu0 %v9503
          %9558 = vmatprep.subr.bf16.mxu0 0
          %9559 = vmatpush1.bf16.msra.mxu0 %v9504
          %9560 = vmatprep.subr.bf16.mxu0 0
          %9561 = vmatpush1.bf16.msra.mxu0 %v9505
          %9562 = vmatprep.subr.bf16.mxu0 0
          %9563 = vmatpush1.bf16.msra.mxu0 %v9506
          %9564 = vmatprep.subr.bf16.mxu0 0
          %9565 = vmatpush1.bf16.msra.mxu0 %v9507
          %9566 = vmatprep.subr.bf16.mxu0 0
          %9567 = vmatpush1.bf16.msra.mxu0 %v9508
          %9568 = vmatprep.subr.bf16.mxu0 0
          %9569 = vmatpush1.bf16.msra.mxu0 %v9509
          %9570 = vmatprep.subr.bf16.mxu0 0
          %9571 = vmatpush1.bf16.msra.mxu0 %v9510
          %9572 = vmatprep.subr.bf16.mxu0 0
          %9573 = vmatpush1.bf16.msra.mxu0 %v9511
          %9574 = vmatprep.subr.bf16.mxu0 0
          %9575 = vmatpush1.bf16.msra.mxu0 %v9512
          %9576 = vmatprep.subr.bf16.mxu0 0
          %9577 = vmatpush1.bf16.msra.mxu0 %v9513
          %9578 = vmatprep.mubr.bf16.mxu0 %v9274
          %9579 = vmatmul.mubr.bf16.gmra.mrb[0].mxu0 %v9273
          %v9580 = vpop.f32.mrb[0].mxu0
          %v9581 = vadd.f32 0.0, %v9580
          %v9582 = vpop.f32.mrb[0].mxu0
          %v9583 = vpop.f32.mrb[0].mxu0
          %v9584 = vadd.f32 0.0, %v9583
          %v9585 = vpop.f32.mrb[0].mxu0
          %9586 = vmatprep.mubr.bf16.mxu0 %v9277
          %9587 = vmatmul.mubr.bf16.gmra.mrb[0].mxu0 %v9276
          %v9588 = vpop.f32.mrb[0].mxu0
          %v9589 = vadd.f32 0.0, %v9588
          %v9590 = vpop.f32.mrb[0].mxu0
          %v9591 = vpop.f32.mrb[0].mxu0
          %v9592 = vadd.f32 0.0, %v9591
          %v9593 = vpop.f32.mrb[0].mxu0
          %9594 = vmatprep.mubr.bf16.mxu0 %v9280
          %9595 = vmatmul.mubr.bf16.gmra.mrb[0].mxu0 %v9279
          %v9596 = vpop.f32.mrb[0].mxu0
          %v9597 = vadd.f32 0.0, %v9596
          %v9598 = vpop.f32.mrb[0].mxu0
          %v9599 = vpop.f32.mrb[0].mxu0
          %v9600 = vadd.f32 0.0, %v9599
          %v9601 = vpop.f32.mrb[0].mxu0
          %9602 = vmatprep.mubr.bf16.mxu0 %v9283
          %9603 = vmatmul.mubr.bf16.gmra.mrb[0].mxu0 %v9282
          %v9604 = vpop.f32.mrb[0].mxu0
          %v9605 = vadd.f32 0.0, %v9604
          %v9606 = vpop.f32.mrb[0].mxu0
          %v9607 = vpop.f32.mrb[0].mxu0
          %v9608 = vadd.f32 0.0, %v9607
          %v9609 = vpop.f32.mrb[0].mxu0
          %9610 = vmatprep.mubr.bf16.mxu0 %v9286
          %9611 = vmatmul.mubr.bf16.gmra.mrb[0].mxu0 %v9285
          %v9612 = vpop.f32.mrb[0].mxu0
          %v9613 = vadd.f32 0.0, %v9612
          %v9614 = vpop.f32.mrb[0].mxu0
          %v9615 = vpop.f32.mrb[0].mxu0
          %v9616 = vadd.f32 0.0, %v9615
          %v9617 = vpop.f32.mrb[0].mxu0
          %9618 = vmatprep.mubr.bf16.mxu0 %v9289
          %9619 = vmatmul.mubr.bf16.gmra.mrb[0].mxu0 %v9288
          %v9620 = vpop.f32.mrb[0].mxu0
          %v9621 = vadd.f32 0.0, %v9620
          %v9622 = vpop.f32.mrb[0].mxu0
          %v9623 = vpop.f32.mrb[0].mxu0
          %v9624 = vadd.f32 0.0, %v9623
          %v9625 = vpop.f32.mrb[0].mxu0
          %9626 = vmatprep.mubr.bf16.mxu0 %v9292
          %9627 = vmatmul.mubr.bf16.gmra.mrb[0].mxu0 %v9291
          %v9628 = vpop.f32.mrb[0].mxu0
          %v9629 = vadd.f32 0.0, %v9628
          %v9630 = vpop.f32.mrb[0].mxu0
          %v9631 = vpop.f32.mrb[0].mxu0
          %v9632 = vadd.f32 0.0, %v9631
          %v9633 = vpop.f32.mrb[0].mxu0
          %9634 = vmatprep.mubr.bf16.mxu0 %v9295
          %9635 = vmatmul.mubr.bf16.gmra.mrb[0].mxu0 %v9294
          %v9636 = vpop.f32.mrb[0].mxu0
          %v9637 = vadd.f32 0.0, %v9636
          %v9638 = vpop.f32.mrb[0].mxu0
          %v9639 = vpop.f32.mrb[0].mxu0
          %v9640 = vadd.f32 0.0, %v9639
          %v9641 = vpop.f32.mrb[0].mxu0
          %9642 = vmatprep.mubr.bf16.mxu0 %v9298
          %9643 = vmatmul.mubr.bf16.gmra.mrb[0].mxu0 %v9297
          %v9644 = vpop.f32.mrb[0].mxu0
          %v9645 = vadd.f32 0.0, %v9644
          %v9646 = vpop.f32.mrb[0].mxu0
          %v9647 = vpop.f32.mrb[0].mxu0
          %v9648 = vadd.f32 0.0, %v9647
          %v9649 = vpop.f32.mrb[0].mxu0
          %9650 = vmatprep.mubr.bf16.mxu0 %v9301
          %9651 = vmatmul.mubr.bf16.gmra.mrb[0].mxu0 %v9300
          %v9652 = vpop.f32.mrb[0].mxu0
          %v9653 = vadd.f32 0.0, %v9652
          %v9654 = vpop.f32.mrb[0].mxu0
          %v9655 = vpop.f32.mrb[0].mxu0
          %v9656 = vadd.f32 0.0, %v9655
          %v9657 = vpop.f32.mrb[0].mxu0
          %9658 = vmatprep.mubr.bf16.mxu0 %v9304
          %9659 = vmatmul.mubr.bf16.gmra.mrb[0].mxu0 %v9303
          %v9660 = vpop.f32.mrb[0].mxu0
          %v9661 = vadd.f32 0.0, %v9660
          %v9662 = vpop.f32.mrb[0].mxu0
          %v9663 = vpop.f32.mrb[0].mxu0
          %v9664 = vadd.f32 0.0, %v9663
          %v9665 = vpop.f32.mrb[0].mxu0
          %9666 = vmatprep.mubr.bf16.mxu0 %v9307
          %9667 = vmatmul.mubr.bf16.gmra.mrb[0].mxu0 %v9306
          %v9668 = vpop.f32.mrb[0].mxu0
          %v9669 = vadd.f32 0.0, %v9668
          %v9670 = vpop.f32.mrb[0].mxu0
          %v9671 = vpop.f32.mrb[0].mxu0
          %v9672 = vadd.f32 0.0, %v9671
          %v9673 = vpop.f32.mrb[0].mxu0
          %9674 = vmatprep.mubr.bf16.mxu0 %v9310
          %9675 = vmatmul.mubr.bf16.gmra.mrb[0].mxu0 %v9309
          %v9676 = vpop.f32.mrb[0].mxu0
          %v9677 = vadd.f32 0.0, %v9676
          %v9678 = vpop.f32.mrb[0].mxu0
          %v9679 = vpop.f32.mrb[0].mxu0
          %v9680 = vadd.f32 0.0, %v9679
          %v9681 = vpop.f32.mrb[0].mxu0
          %9682 = vmatprep.mubr.bf16.mxu0 %v9313
          %9683 = vmatmul.mubr.bf16.gmra.mrb[0].mxu0 %v9312
          %v9684 = vpop.f32.mrb[0].mxu0
          %v9685 = vadd.f32 0.0, %v9684
          %v9686 = vpop.f32.mrb[0].mxu0
          %v9687 = vpop.f32.mrb[0].mxu0
          %v9688 = vadd.f32 0.0, %v9687
          %v9689 = vpop.f32.mrb[0].mxu0
          %9690 = vmatprep.mubr.bf16.mxu0 %v9316
          %9691 = vmatmul.mubr.bf16.gmra.mrb[0].mxu0 %v9315
          %v9692 = vpop.f32.mrb[0].mxu0
          %v9693 = vadd.f32 0.0, %v9692
          %v9694 = vpop.f32.mrb[0].mxu0
          %v9695 = vpop.f32.mrb[0].mxu0
          %v9696 = vadd.f32 0.0, %v9695
          %v9697 = vpop.f32.mrb[0].mxu0
          %9698 = vmatprep.mubr.bf16.mxu0 %v9319
          %9699 = vmatmul.mubr.bf16.gmra.mrb[0].mxu0 %v9318
          %v9700 = vpop.f32.mrb[0].mxu0
          %v9701 = vadd.f32 0.0, %v9700
          %v9702 = vpop.f32.mrb[0].mxu0
          %v9703 = vpop.f32.mrb[0].mxu0
          %v9704 = vadd.f32 0.0, %v9703
          %v9705 = vpop.f32.mrb[0].mxu0
          %9706 = vdwg.mxu0
          %9707 = vmatprep.subr.bf16.mxu0 0
          %9708 = vmatpush1.bf16.msra.mxu0 %v9514
          %9709 = vmatprep.subr.bf16.mxu0 0
          %9710 = vmatpush1.bf16.msra.mxu0 %v9515
          %9711 = vmatprep.subr.bf16.mxu0 0
          %9712 = vmatpush1.bf16.msra.mxu0 %v9516
          %9713 = vmatprep.subr.bf16.mxu0 0
          %9714 = vmatpush1.bf16.msra.mxu0 %v9517
          %9715 = vmatprep.subr.bf16.mxu0 0
          %9716 = vmatpush1.bf16.msra.mxu0 %v9518
          %9717 = vmatprep.subr.bf16.mxu0 0
          %9718 = vmatpush1.bf16.msra.mxu0 %v9519
          %9719 = vmatprep.subr.bf16.mxu0 0
          %9720 = vmatpush1.bf16.msra.mxu0 %v9520
          %9721 = vmatprep.subr.bf16.mxu0 0
          %9722 = vmatpush1.bf16.msra.mxu0 %v9521
          %9723 = vmatprep.subr.bf16.mxu0 0
          %9724 = vmatpush1.bf16.msra.mxu0 0
          %9725 = vmatprep.subr.bf16.mxu0 0
          %9726 = vmatpush1.bf16.msra.mxu0 0
          %9727 = vmatprep.subr.bf16.mxu0 0
          %9728 = vmatpush1.bf16.msra.mxu0 0
          %9729 = vmatprep.subr.bf16.mxu0 0
          %9730 = vmatpush1.bf16.msra.mxu0 0
          %9731 = vmatprep.subr.bf16.mxu0 0
          %9732 = vmatpush1.bf16.msra.mxu0 0
          %9733 = vmatprep.subr.bf16.mxu0 0
          %9734 = vmatpush1.bf16.msra.mxu0 0
          %9735 = vmatprep.subr.bf16.mxu0 0
          %9736 = vmatpush1.bf16.msra.mxu0 0
          %9737 = vmatprep.subr.bf16.mxu0 0
          %9738 = vmatpush1.bf16.msra.mxu0 0
          %9739 = vmatprep.mubr.bf16.mxu0 0
          %9740 = vmatmul.mubr.bf16.gmra.mrb[0].mxu0 %v9275
          %v9741 = vpop.f32.mrb[0].mxu0
          %v9742 = vadd.f32 %v9581, %v9741
          %v9743 = vpop.f32.mrb[0].mxu0
          %v9744 = vpop.f32.mrb[0].mxu0
          %v9745 = vadd.f32 %v9584, %v9744
          %v9746 = vpop.f32.mrb[0].mxu0
          %9747 = vmatprep.mubr.bf16.mxu0 0
          %9748 = vmatmul.mubr.bf16.gmra.mrb[0].mxu0 %v9278
          %v9749 = vpop.f32.mrb[0].mxu0
          %v9750 = vadd.f32 %v9589, %v9749
          %v9751 = vpop.f32.mrb[0].mxu0
          %v9752 = vpop.f32.mrb[0].mxu0
          %v9753 = vadd.f32 %v9592, %v9752
          %v9754 = vpop.f32.mrb[0].mxu0
          %9755 = vmatprep.mubr.bf16.mxu0 0
          %9756 = vmatmul.mubr.bf16.gmra.mrb[0].mxu0 %v9281
          %v9757 = vpop.f32.mrb[0].mxu0
          %v9758 = vadd.f32 %v9597, %v9757
          %v9759 = vpop.f32.mrb[0].mxu0
          %v9760 = vpop.f32.mrb[0].mxu0
          %v9761 = vadd.f32 %v9600, %v9760
          %v9762 = vpop.f32.mrb[0].mxu0
          %9763 = vmatprep.mubr.bf16.mxu0 0
          %9764 = vmatmul.mubr.bf16.gmra.mrb[0].mxu0 %v9284
          %v9765 = vpop.f32.mrb[0].mxu0
          %v9766 = vadd.f32 %v9605, %v9765
          %v9767 = vpop.f32.mrb[0].mxu0
          %v9768 = vpop.f32.mrb[0].mxu0
          %v9769 = vadd.f32 %v9608, %v9768
          %v9770 = vpop.f32.mrb[0].mxu0
          %9771 = vmatprep.mubr.bf16.mxu0 0
          %9772 = vmatmul.mubr.bf16.gmra.mrb[0].mxu0 %v9287
          %v9773 = vpop.f32.mrb[0].mxu0
          %v9774 = vadd.f32 %v9613, %v9773
          %v9775 = vpop.f32.mrb[0].mxu0
          %v9776 = vpop.f32.mrb[0].mxu0
          %v9777 = vadd.f32 %v9616, %v9776
          %v9778 = vpop.f32.mrb[0].mxu0
          %9779 = vmatprep.mubr.bf16.mxu0 0
          %9780 = vmatmul.mubr.bf16.gmra.mrb[0].mxu0 %v9290
          %v9781 = vpop.f32.mrb[0].mxu0
          %v9782 = vadd.f32 %v9621, %v9781
          %v9783 = vpop.f32.mrb[0].mxu0
          %v9784 = vpop.f32.mrb[0].mxu0
          %v9785 = vadd.f32 %v9624, %v9784
          %v9786 = vpop.f32.mrb[0].mxu0
          %9787 = vmatprep.mubr.bf16.mxu0 0
          %9788 = vmatmul.mubr.bf16.gmra.mrb[0].mxu0 %v9293
          %v9789 = vpop.f32.mrb[0].mxu0
          %v9790 = vadd.f32 %v9629, %v9789
          %v9791 = vpop.f32.mrb[0].mxu0
          %v9792 = vpop.f32.mrb[0].mxu0
          %v9793 = vadd.f32 %v9632, %v9792
          %v9794 = vpop.f32.mrb[0].mxu0
          %9795 = vmatprep.mubr.bf16.mxu0 0
          %9796 = vmatmul.mubr.bf16.gmra.mrb[0].mxu0 %v9296
          %v9797 = vpop.f32.mrb[0].mxu0
          %v9798 = vadd.f32 %v9637, %v9797
          %v9799 = vpop.f32.mrb[0].mxu0
          %v9800 = vpop.f32.mrb[0].mxu0
          %v9801 = vadd.f32 %v9640, %v9800
          %v9802 = vpop.f32.mrb[0].mxu0
          %9803 = vmatprep.mubr.bf16.mxu0 0
          %9804 = vmatmul.mubr.bf16.gmra.mrb[0].mxu0 %v9299
          %v9805 = vpop.f32.mrb[0].mxu0
          %v9806 = vadd.f32 %v9645, %v9805
          %v9807 = vpop.f32.mrb[0].mxu0
          %v9808 = vpop.f32.mrb[0].mxu0
          %v9809 = vadd.f32 %v9648, %v9808
          %v9810 = vpop.f32.mrb[0].mxu0
          %9811 = vmatprep.mubr.bf16.mxu0 0
          %9812 = vmatmul.mubr.bf16.gmra.mrb[0].mxu0 %v9302
          %v9813 = vpop.f32.mrb[0].mxu0
          %v9814 = vadd.f32 %v9653, %v9813
          %v9815 = vpop.f32.mrb[0].mxu0
          %v9816 = vpop.f32.mrb[0].mxu0
          %v9817 = vadd.f32 %v9656, %v9816
          %v9818 = vpop.f32.mrb[0].mxu0
          %9819 = vmatprep.mubr.bf16.mxu0 0
          %9820 = vmatmul.mubr.bf16.gmra.mrb[0].mxu0 %v9305
          %v9821 = vpop.f32.mrb[0].mxu0
          %v9822 = vadd.f32 %v9661, %v9821
          %v9823 = vpop.f32.mrb[0].mxu0
          %v9824 = vpop.f32.mrb[0].mxu0
          %v9825 = vadd.f32 %v9664, %v9824
          %v9826 = vpop.f32.mrb[0].mxu0
          %9827 = vmatprep.mubr.bf16.mxu0 0
          %9828 = vmatmul.mubr.bf16.gmra.mrb[0].mxu0 %v9308
          %v9829 = vpop.f32.mrb[0].mxu0
          %v9830 = vadd.f32 %v9669, %v9829
          %v9831 = vpop.f32.mrb[0].mxu0
          %v9832 = vpop.f32.mrb[0].mxu0
          %v9833 = vadd.f32 %v9672, %v9832
          %v9834 = vpop.f32.mrb[0].mxu0
          %9835 = vmatprep.mubr.bf16.mxu0 0
          %9836 = vmatmul.mubr.bf16.gmra.mrb[0].mxu0 %v9311
          %v9837 = vpop.f32.mrb[0].mxu0
          %v9838 = vadd.f32 %v9677, %v9837
          %v9839 = vpop.f32.mrb[0].mxu0
          %v9840 = vpop.f32.mrb[0].mxu0
          %v9841 = vadd.f32 %v9680, %v9840
          %v9842 = vpop.f32.mrb[0].mxu0
          %9843 = vmatprep.mubr.bf16.mxu0 0
          %9844 = vmatmul.mubr.bf16.gmra.mrb[0].mxu0 %v9314
          %v9845 = vpop.f32.mrb[0].mxu0
          %v9846 = vadd.f32 %v9685, %v9845
          %v9847 = vpop.f32.mrb[0].mxu0
          %v9848 = vpop.f32.mrb[0].mxu0
          %v9849 = vadd.f32 %v9688, %v9848
          %v9850 = vpop.f32.mrb[0].mxu0
          %9851 = vmatprep.mubr.bf16.mxu0 0
          %9852 = vmatmul.mubr.bf16.gmra.mrb[0].mxu0 %v9317
          %v9853 = vpop.f32.mrb[0].mxu0
          %v9854 = vadd.f32 %v9693, %v9853
          %v9855 = vpop.f32.mrb[0].mxu0
          %v9856 = vpop.f32.mrb[0].mxu0
          %v9857 = vadd.f32 %v9696, %v9856
          %v9858 = vpop.f32.mrb[0].mxu0
          %9859 = vmatprep.mubr.bf16.mxu0 0
          %9860 = vmatmul.mubr.bf16.gmra.mrb[0].mxu0 %v9320
          %v9861 = vpop.f32.mrb[0].mxu0
          %v9862 = vadd.f32 %v9701, %v9861
          %v9863 = vpop.f32.mrb[0].mxu0
          %v9864 = vpop.f32.mrb[0].mxu0
          %v9865 = vadd.f32 %v9704, %v9864
          %v9866 = vpop.f32.mrb[0].mxu0
          %9867 = vdwg.mxu0
          %v9868 = vadd.f32 %v9321, %v9742
          %v9869 = vadd.f32 %v9322, %v9745
          %v9870 = vadd.f32 %v9323, %v9750
          %v9871 = vadd.f32 %v9324, %v9753
          %v9872 = vadd.f32 %v9325, %v9758
          %v9873 = vadd.f32 %v9326, %v9761
          %v9874 = vadd.f32 %v9327, %v9766
          %v9875 = vadd.f32 %v9328, %v9769
          %v9876 = vadd.f32 %v9329, %v9774
          %v9877 = vadd.f32 %v9330, %v9777
          %v9878 = vadd.f32 %v9331, %v9782
          %v9879 = vadd.f32 %v9332, %v9785
          %v9880 = vadd.f32 %v9333, %v9790
          %v9881 = vadd.f32 %v9334, %v9793
          %v9882 = vadd.f32 %v9335, %v9798
          %v9883 = vadd.f32 %v9336, %v9801
          %v9884 = vadd.f32 %v9337, %v9806
          %v9885 = vadd.f32 %v9338, %v9809
          %v9886 = vadd.f32 %v9339, %v9814
          %v9887 = vadd.f32 %v9340, %v9817
          %v9888 = vadd.f32 %v9341, %v9822
          %v9889 = vadd.f32 %v9342, %v9825
          %v9890 = vadd.f32 %v9343, %v9830
          %v9891 = vadd.f32 %v9344, %v9833
          %v9892 = vadd.f32 %v9345, %v9838
          %v9893 = vadd.f32 %v9346, %v9841
          %v9894 = vadd.f32 %v9347, %v9846
          %v9895 = vadd.f32 %v9348, %v9849
          %v9896 = vadd.f32 %v9349, %v9854
          %v9897 = vadd.f32 %v9350, %v9857
          %v9898 = vadd.f32 %v9351, %v9862
          %v9899 = vadd.f32 %v9352, %v9865
          %9900 = vst [vmem:[#allocation2] sm:$0xff] %v9868
          %9901 = vst [vmem:[#allocation2 + $0x8] sm:$0xff] %v9869
          %9902 = vst [vmem:[#allocation2 + $0x10] sm:$0xff] %v9870
          %9903 = vst [vmem:[#allocation2 + $0x18] sm:$0xff] %v9871
          %9904 = vst [vmem:[#allocation2 + $0x20] sm:$0xff] %v9872
          %9905 = vst [vmem:[#allocation2 + $0x28] sm:$0xff] %v9873
          %9906 = vst [vmem:[#allocation2 + $0x30] sm:$0xff] %v9874
          %9907 = vst [vmem:[#allocation2 + $0x38] sm:$0xff] %v9875
          %9908 = vst [vmem:[#allocation2 + $0x40] sm:$0xff] %v9876
          %9909 = vst [vmem:[#allocation2 + $0x48] sm:$0xff] %v9877
          %9910 = vst [vmem:[#allocation2 + $0x50] sm:$0xff] %v9878
          %9911 = vst [vmem:[#allocation2 + $0x58] sm:$0xff] %v9879
          %9912 = vst [vmem:[#allocation2 + $0x60] sm:$0xff] %v9880
          %9913 = vst [vmem:[#allocation2 + $0x68] sm:$0xff] %v9881
          %9914 = vst [vmem:[#allocation2 + $0x70] sm:$0xff] %v9882
          %9915 = vst [vmem:[#allocation2 + $0x78] sm:$0xff] %v9883
          %9916 = vst [vmem:[#allocation2 + $0x80] sm:$0xff] %v9884
          %9917 = vst [vmem:[#allocation2 + $0x88] sm:$0xff] %v9885
          %9918 = vst [vmem:[#allocation2 + $0x90] sm:$0xff] %v9886
          %9919 = vst [vmem:[#allocation2 + $0x98] sm:$0xff] %v9887
          %9920 = vst [vmem:[#allocation2 + $0xa0] sm:$0xff] %v9888
          %9921 = vst [vmem:[#allocation2 + $0xa8] sm:$0xff] %v9889
          %9922 = vst [vmem:[#allocation2 + $0xb0] sm:$0xff] %v9890
          %9923 = vst [vmem:[#allocation2 + $0xb8] sm:$0xff] %v9891
          %9924 = vst [vmem:[#allocation2 + $0xc0] sm:$0xff] %v9892
          %9925 = vst [vmem:[#allocation2 + $0xc8] sm:$0xff] %v9893
          %9926 = vst [vmem:[#allocation2 + $0xd0] sm:$0xff] %v9894
          %9927 = vst [vmem:[#allocation2 + $0xd8] sm:$0xff] %v9895
          %9928 = vst [vmem:[#allocation2 + $0xe0] sm:$0xff] %v9896
          %9929 = vst [vmem:[#allocation2 + $0xe8] sm:$0xff] %v9897
          %9930 = vst [vmem:[#allocation2 + $0xf0] sm:$0xff] %v9898
          %9931 = vst [vmem:[#allocation2 + $0xf8] sm:$0xff] %v9899
          %s9932 = scalar_lea.vmem [#allocation3], 288
          %v9933 = vld [vmem:[%s9932] sm:$0xff]
          %v9934 = vld [vmem:[%s9932 + $0x8] sm:$0xff]
          %v9935 = vld [vmem:[%s9932 + $0x10] sm:$0xff]
          %v9936 = vld [vmem:[%s9932 + $0x18] sm:$0xff]
          %v9937 = vld [vmem:[%s9932 + $0x20] sm:$0xff]
          %v9938 = vld [vmem:[%s9932 + $0x28] sm:$0xff]
          %v9939 = vld [vmem:[%s9932 + $0x30] sm:$0xff]
          %v9940 = vld [vmem:[%s9932 + $0x38] sm:$0xff]
          %v9941 = vld [vmem:[%s9932 + $0x40] sm:$0xff]
          %v9942 = vld [vmem:[%s9932 + $0x48] sm:$0xff]
          %v9943 = vld [vmem:[%s9932 + $0x50] sm:$0xff]
          %v9944 = vld [vmem:[%s9932 + $0x58] sm:$0xff]
          %v9945 = vld [vmem:[%s9932 + $0x60] sm:$0xff]
          %v9946 = vld [vmem:[%s9932 + $0x68] sm:$0xff]
          %v9947 = vld [vmem:[%s9932 + $0x70] sm:$0xff]
          %v9948 = vld [vmem:[%s9932 + $0x78] sm:$0xff]
          %v9949 = vld [vmem:[%s9932 + $0x80] sm:$0xff]
          %v9950 = vld [vmem:[%s9932 + $0x88] sm:$0xff]
          %v9951 = vld [vmem:[%s9932 + $0x90] sm:$0xff]
          %v9952 = vld [vmem:[%s9932 + $0x98] sm:$0xff]
          %v9953 = vld [vmem:[%s9932 + $0xa0] sm:$0xff]
          %v9954 = vld [vmem:[%s9932 + $0xa8] sm:$0xff]
          %v9955 = vld [vmem:[%s9932 + $0xb0] sm:$0xff]
          %v9956 = vld [vmem:[%s9932 + $0xb8] sm:$0xff]
          %v9957 = vld [vmem:[%s9932 + $0xc0] sm:$0xff]
          %v9958 = vld [vmem:[%s9932 + $0xc8] sm:$0xff]
          %v9959 = vld [vmem:[%s9932 + $0xd0] sm:$0xff]
          %v9960 = vld [vmem:[%s9932 + $0xd8] sm:$0xff]
          %v9961 = vld [vmem:[%s9932 + $0xe0] sm:$0xff]
          %v9962 = vld [vmem:[%s9932 + $0xe8] sm:$0xff]
          %v9963 = vld [vmem:[%s9932 + $0xf0] sm:$0xff]
          %v9964 = vld [vmem:[%s9932 + $0xf8] sm:$0xff]
          %v9965 = vld [vmem:[%s9932 + $0x100] sm:$0xff]
          %v9966 = vld [vmem:[%s9932 + $0x108] sm:$0xff]
          %v9967 = vld [vmem:[%s9932 + $0x110] sm:$0xff]
          %v9968 = vld [vmem:[%s9932 + $0x118] sm:$0xff]
          %v9969 = vld [vmem:[%s9932 + $0x120] sm:$0xff]
          %v9970 = vld [vmem:[%s9932 + $0x128] sm:$0xff]
          %v9971 = vld [vmem:[%s9932 + $0x130] sm:$0xff]
          %v9972 = vld [vmem:[%s9932 + $0x138] sm:$0xff]
          %v9973 = vld [vmem:[%s9932 + $0x140] sm:$0xff]
          %v9974 = vld [vmem:[%s9932 + $0x148] sm:$0xff]
          %v9975 = vld [vmem:[%s9932 + $0x150] sm:$0xff]
          %v9976 = vld [vmem:[%s9932 + $0x158] sm:$0xff]
          %v9977 = vld [vmem:[%s9932 + $0x160] sm:$0xff]
          %v9978 = vld [vmem:[%s9932 + $0x168] sm:$0xff]
          %v9979 = vld [vmem:[%s9932 + $0x170] sm:$0xff]
          %v9980 = vld [vmem:[%s9932 + $0x178] sm:$0xff]
          %v9981 = vld [vmem:[#allocation2] sm:$0xff]
          %v9982 = vld [vmem:[#allocation2 + $0x8] sm:$0xff]
          %v9983 = vld [vmem:[#allocation2 + $0x10] sm:$0xff]
          %v9984 = vld [vmem:[#allocation2 + $0x18] sm:$0xff]
          %v9985 = vld [vmem:[#allocation2 + $0x20] sm:$0xff]
          %v9986 = vld [vmem:[#allocation2 + $0x28] sm:$0xff]
          %v9987 = vld [vmem:[#allocation2 + $0x30] sm:$0xff]
          %v9988 = vld [vmem:[#allocation2 + $0x38] sm:$0xff]
          %v9989 = vld [vmem:[#allocation2 + $0x40] sm:$0xff]
          %v9990 = vld [vmem:[#allocation2 + $0x48] sm:$0xff]
          %v9991 = vld [vmem:[#allocation2 + $0x50] sm:$0xff]
          %v9992 = vld [vmem:[#allocation2 + $0x58] sm:$0xff]
          %v9993 = vld [vmem:[#allocation2 + $0x60] sm:$0xff]
          %v9994 = vld [vmem:[#allocation2 + $0x68] sm:$0xff]
          %v9995 = vld [vmem:[#allocation2 + $0x70] sm:$0xff]
          %v9996 = vld [vmem:[#allocation2 + $0x78] sm:$0xff]
          %v9997 = vld [vmem:[#allocation2 + $0x80] sm:$0xff]
          %v9998 = vld [vmem:[#allocation2 + $0x88] sm:$0xff]
          %v9999 = vld [vmem:[#allocation2 + $0x90] sm:$0xff]
          %v10000 = vld [vmem:[#allocation2 + $0x98] sm:$0xff]
          %v10001 = vld [vmem:[#allocation2 + $0xa0] sm:$0xff]
          %v10002 = vld [vmem:[#allocation2 + $0xa8] sm:$0xff]
          %v10003 = vld [vmem:[#allocation2 + $0xb0] sm:$0xff]
          %v10004 = vld [vmem:[#allocation2 + $0xb8] sm:$0xff]
          %v10005 = vld [vmem:[#allocation2 + $0xc0] sm:$0xff]
          %v10006 = vld [vmem:[#allocation2 + $0xc8] sm:$0xff]
          %v10007 = vld [vmem:[#allocation2 + $0xd0] sm:$0xff]
          %v10008 = vld [vmem:[#allocation2 + $0xd8] sm:$0xff]
          %v10009 = vld [vmem:[#allocation2 + $0xe0] sm:$0xff]
          %v10010 = vld [vmem:[#allocation2 + $0xe8] sm:$0xff]
          %v10011 = vld [vmem:[#allocation2 + $0xf0] sm:$0xff]
          %v10012 = vld [vmem:[#allocation2 + $0xf8] sm:$0xff]
          %s10013 = scalar_lea.vmem %s291, 384 [#allocation4]
          %v10014 = vld [vmem:[%s10013] sm:$0xf]
          %v10015 = vld [vmem:[%s10013 + $0x4] sm:$0xf]
          %v10016 = vld [vmem:[%s10013 + $0x8] sm:$0xf]
          %v10017 = vld [vmem:[%s10013 + $0xc] sm:$0xf]
          %v10018 = vld [vmem:[%s10013 + $0x10] sm:$0xf]
          %v10019 = vld [vmem:[%s10013 + $0x14] sm:$0xf]
          %v10020 = vld [vmem:[%s10013 + $0x18] sm:$0xf]
          %v10021 = vld [vmem:[%s10013 + $0x1c] sm:$0xf]
          %v10022 = vld [vmem:[%s10013 + $0x20] sm:$0xf]
          %v10023 = vld [vmem:[%s10013 + $0x24] sm:$0xf]
          %v10024 = vld [vmem:[%s10013 + $0x28] sm:$0xf]
          %v10025 = vld [vmem:[%s10013 + $0x2c] sm:$0xf]
          %v10026 = vld [vmem:[%s10013 + $0x30] sm:$0xf]
          %v10027 = vld [vmem:[%s10013 + $0x34] sm:$0xf]
          %v10028 = vld [vmem:[%s10013 + $0x38] sm:$0xf]
          %v10029 = vld [vmem:[%s10013 + $0x3c] sm:$0xf]
          %v10030 = vld [vmem:[%s10013 + $0x40] sm:$0xf]
          %v10031 = vld [vmem:[%s10013 + $0x44] sm:$0xf]
          %v10032 = vld [vmem:[%s10013 + $0x48] sm:$0xf]
          %v10033 = vld [vmem:[%s10013 + $0x4c] sm:$0xf]
          %v10034 = vld [vmem:[%s10013 + $0x50] sm:$0xf]
          %v10035 = vld [vmem:[%s10013 + $0x54] sm:$0xf]
          %v10036 = vld [vmem:[%s10013 + $0x58] sm:$0xf]
          %v10037 = vld [vmem:[%s10013 + $0x5c] sm:$0xf]
          %v10038 = vld [vmem:[%s10013 + $0x60] sm:$0xf]
          %v10039 = vld [vmem:[%s10013 + $0x64] sm:$0xf]
          %v10040 = vld [vmem:[%s10013 + $0x68] sm:$0xf]
          %v10041 = vld [vmem:[%s10013 + $0x6c] sm:$0xf]
          %v10042 = vld [vmem:[%s10013 + $0x70] sm:$0xf]
          %v10043 = vld [vmem:[%s10013 + $0x74] sm:$0xf]
          %v10044 = vld [vmem:[%s10013 + $0x78] sm:$0xf]
          %v10045 = vld [vmem:[%s10013 + $0x7c] sm:$0xf]
          %v10046 = vld [vmem:[%s10013 + $0x80] sm:$0xf]
          %v10047 = vld [vmem:[%s10013 + $0x84] sm:$0xf]
          %v10048 = vld [vmem:[%s10013 + $0x88] sm:$0xf]
          %v10049 = vld [vmem:[%s10013 + $0x8c] sm:$0xf]
          %v10050 = vld [vmem:[%s10013 + $0x90] sm:$0xf]
          %v10051 = vld [vmem:[%s10013 + $0x94] sm:$0xf]
          %v10052 = vld [vmem:[%s10013 + $0x98] sm:$0xf]
          %v10053 = vld [vmem:[%s10013 + $0x9c] sm:$0xf]
          %v10054 = vld [vmem:[%s10013 + $0xa0] sm:$0xf]
          %v10055 = vld [vmem:[%s10013 + $0xa4] sm:$0xf]
          %v10056 = vld [vmem:[%s10013 + $0xa8] sm:$0xf]
          %v10057 = vld [vmem:[%s10013 + $0xac] sm:$0xf]
          %v10058 = vld [vmem:[%s10013 + $0xb0] sm:$0xf]
          %v10059 = vld [vmem:[%s10013 + $0xb4] sm:$0xf]
          %v10060 = vld [vmem:[%s10013 + $0xb8] sm:$0xf]
          %v10061 = vld [vmem:[%s10013 + $0xbc] sm:$0xf]
          %v10110 = vunpack.c.l.b16 %v10014
          %v10111 = vunpack.c.l.b16 %v10015
          %v10112 = vunpack.c.l.b16 %v10016
          %v10113 = vunpack.c.l.b16 %v10017
          %v10114 = vunpack.c.l.b16 %v10018
          %v10115 = vunpack.c.l.b16 %v10019
          %v10116 = vunpack.c.l.b16 %v10020
          %v10117 = vunpack.c.l.b16 %v10021
          %v10118 = vunpack.c.l.b16 %v10022
          %v10119 = vunpack.c.l.b16 %v10023
          %v10120 = vunpack.c.l.b16 %v10024
          %v10121 = vunpack.c.l.b16 %v10025
          %v10122 = vunpack.c.l.b16 %v10026
          %v10123 = vunpack.c.l.b16 %v10027
          %v10124 = vunpack.c.l.b16 %v10028
          %v10125 = vunpack.c.l.b16 %v10029
          %v10126 = vunpack.c.l.b16 %v10030
          %v10127 = vunpack.c.l.b16 %v10031
          %v10128 = vunpack.c.l.b16 %v10032
          %v10129 = vunpack.c.l.b16 %v10033
          %v10130 = vunpack.c.l.b16 %v10034
          %v10131 = vunpack.c.l.b16 %v10035
          %v10132 = vunpack.c.l.b16 %v10036
          %v10133 = vunpack.c.l.b16 %v10037
          %v10134 = vunpack.c.l.b16 %v10038
          %v10135 = vunpack.c.l.b16 %v10039
          %v10136 = vunpack.c.l.b16 %v10040
          %v10137 = vunpack.c.l.b16 %v10041
          %v10138 = vunpack.c.l.b16 %v10042
          %v10139 = vunpack.c.l.b16 %v10043
          %v10140 = vunpack.c.l.b16 %v10044
          %v10141 = vunpack.c.l.b16 %v10045
          %v10142 = vunpack.c.l.b16 %v10046
          %v10143 = vunpack.c.l.b16 %v10047
          %v10144 = vunpack.c.l.b16 %v10048
          %v10145 = vunpack.c.l.b16 %v10049
          %v10146 = vunpack.c.l.b16 %v10050
          %v10147 = vunpack.c.l.b16 %v10051
          %v10148 = vunpack.c.l.b16 %v10052
          %v10149 = vunpack.c.l.b16 %v10053
          %v10150 = vunpack.c.l.b16 %v10054
          %v10151 = vunpack.c.l.b16 %v10055
          %v10152 = vunpack.c.l.b16 %v10056
          %v10153 = vunpack.c.l.b16 %v10057
          %v10154 = vunpack.c.l.b16 %v10058
          %v10155 = vunpack.c.l.b16 %v10059
          %v10156 = vunpack.c.l.b16 %v10060
          %v10157 = vunpack.c.l.b16 %v10061
          %v10158 = vpack.c.b16 %v10111, %v10110
          %v10159 = vpack.c.b16 %v10113, %v10112
          %v10160 = vpack.c.b16 %v10115, %v10114
          %v10161 = vpack.c.b16 %v10117, %v10116
          %v10162 = vpack.c.b16 %v10119, %v10118
          %v10163 = vpack.c.b16 %v10121, %v10120
          %v10164 = vpack.c.b16 %v10123, %v10122
          %v10165 = vpack.c.b16 %v10125, %v10124
          %v10166 = vpack.c.b16 %v10127, %v10126
          %v10167 = vpack.c.b16 %v10129, %v10128
          %v10168 = vpack.c.b16 %v10131, %v10130
          %v10169 = vpack.c.b16 %v10133, %v10132
          %v10170 = vpack.c.b16 %v10135, %v10134
          %v10171 = vpack.c.b16 %v10137, %v10136
          %v10172 = vpack.c.b16 %v10139, %v10138
          %v10173 = vpack.c.b16 %v10141, %v10140
          %v10174 = vpack.c.b16 %v10143, %v10142
          %v10175 = vpack.c.b16 %v10145, %v10144
          %v10176 = vpack.c.b16 %v10147, %v10146
          %v10177 = vpack.c.b16 %v10149, %v10148
          %v10178 = vpack.c.b16 %v10151, %v10150
          %v10179 = vpack.c.b16 %v10153, %v10152
          %v10180 = vpack.c.b16 %v10155, %v10154
          %v10181 = vpack.c.b16 %v10157, %v10156
          %10206 = vmatprep.subr.bf16.mxu0 0
          %10207 = vmatpush1.bf16.msra.mxu0 %v10158
          %10208 = vmatprep.subr.bf16.mxu0 0
          %10209 = vmatpush1.bf16.msra.mxu0 %v10159
          %10210 = vmatprep.subr.bf16.mxu0 0
          %10211 = vmatpush1.bf16.msra.mxu0 %v10160
          %10212 = vmatprep.subr.bf16.mxu0 0
          %10213 = vmatpush1.bf16.msra.mxu0 %v10161
          %10214 = vmatprep.subr.bf16.mxu0 0
          %10215 = vmatpush1.bf16.msra.mxu0 %v10162
          %10216 = vmatprep.subr.bf16.mxu0 0
          %10217 = vmatpush1.bf16.msra.mxu0 %v10163
          %10218 = vmatprep.subr.bf16.mxu0 0
          %10219 = vmatpush1.bf16.msra.mxu0 %v10164
          %10220 = vmatprep.subr.bf16.mxu0 0
          %10221 = vmatpush1.bf16.msra.mxu0 %v10165
          %10222 = vmatprep.subr.bf16.mxu0 0
          %10223 = vmatpush1.bf16.msra.mxu0 %v10166
          %10224 = vmatprep.subr.bf16.mxu0 0
          %10225 = vmatpush1.bf16.msra.mxu0 %v10167
          %10226 = vmatprep.subr.bf16.mxu0 0
          %10227 = vmatpush1.bf16.msra.mxu0 %v10168
          %10228 = vmatprep.subr.bf16.mxu0 0
          %10229 = vmatpush1.bf16.msra.mxu0 %v10169
          %10230 = vmatprep.subr.bf16.mxu0 0
          %10231 = vmatpush1.bf16.msra.mxu0 %v10170
          %10232 = vmatprep.subr.bf16.mxu0 0
          %10233 = vmatpush1.bf16.msra.mxu0 %v10171
          %10234 = vmatprep.subr.bf16.mxu0 0
          %10235 = vmatpush1.bf16.msra.mxu0 %v10172
          %10236 = vmatprep.subr.bf16.mxu0 0
          %10237 = vmatpush1.bf16.msra.mxu0 %v10173
          %10238 = vmatprep.mubr.bf16.mxu0 %v9934
          %10239 = vmatmul.mubr.bf16.gmra.mrb[0].mxu0 %v9933
          %v10240 = vpop.f32.mrb[0].mxu0
          %v10241 = vadd.f32 0.0, %v10240
          %v10242 = vpop.f32.mrb[0].mxu0
          %v10243 = vpop.f32.mrb[0].mxu0
          %v10244 = vadd.f32 0.0, %v10243
          %v10245 = vpop.f32.mrb[0].mxu0
          %10246 = vmatprep.mubr.bf16.mxu0 %v9937
          %10247 = vmatmul.mubr.bf16.gmra.mrb[0].mxu0 %v9936
          %v10248 = vpop.f32.mrb[0].mxu0
          %v10249 = vadd.f32 0.0, %v10248
          %v10250 = vpop.f32.mrb[0].mxu0
          %v10251 = vpop.f32.mrb[0].mxu0
          %v10252 = vadd.f32 0.0, %v10251
          %v10253 = vpop.f32.mrb[0].mxu0
          %10254 = vmatprep.mubr.bf16.mxu0 %v9940
          %10255 = vmatmul.mubr.bf16.gmra.mrb[0].mxu0 %v9939
          %v10256 = vpop.f32.mrb[0].mxu0
          %v10257 = vadd.f32 0.0, %v10256
          %v10258 = vpop.f32.mrb[0].mxu0
          %v10259 = vpop.f32.mrb[0].mxu0
          %v10260 = vadd.f32 0.0, %v10259
          %v10261 = vpop.f32.mrb[0].mxu0
          %10262 = vmatprep.mubr.bf16.mxu0 %v9943
          %10263 = vmatmul.mubr.bf16.gmra.mrb[0].mxu0 %v9942
          %v10264 = vpop.f32.mrb[0].mxu0
          %v10265 = vadd.f32 0.0, %v10264
          %v10266 = vpop.f32.mrb[0].mxu0
          %v10267 = vpop.f32.mrb[0].mxu0
          %v10268 = vadd.f32 0.0, %v10267
          %v10269 = vpop.f32.mrb[0].mxu0
          %10270 = vmatprep.mubr.bf16.mxu0 %v9946
          %10271 = vmatmul.mubr.bf16.gmra.mrb[0].mxu0 %v9945
          %v10272 = vpop.f32.mrb[0].mxu0
          %v10273 = vadd.f32 0.0, %v10272
          %v10274 = vpop.f32.mrb[0].mxu0
          %v10275 = vpop.f32.mrb[0].mxu0
          %v10276 = vadd.f32 0.0, %v10275
          %v10277 = vpop.f32.mrb[0].mxu0
          %10278 = vmatprep.mubr.bf16.mxu0 %v9949
          %10279 = vmatmul.mubr.bf16.gmra.mrb[0].mxu0 %v9948
          %v10280 = vpop.f32.mrb[0].mxu0
          %v10281 = vadd.f32 0.0, %v10280
          %v10282 = vpop.f32.mrb[0].mxu0
          %v10283 = vpop.f32.mrb[0].mxu0
          %v10284 = vadd.f32 0.0, %v10283
          %v10285 = vpop.f32.mrb[0].mxu0
          %10286 = vmatprep.mubr.bf16.mxu0 %v9952
          %10287 = vmatmul.mubr.bf16.gmra.mrb[0].mxu0 %v9951
          %v10288 = vpop.f32.mrb[0].mxu0
          %v10289 = vadd.f32 0.0, %v10288
          %v10290 = vpop.f32.mrb[0].mxu0
          %v10291 = vpop.f32.mrb[0].mxu0
          %v10292 = vadd.f32 0.0, %v10291
          %v10293 = vpop.f32.mrb[0].mxu0
          %10294 = vmatprep.mubr.bf16.mxu0 %v9955
          %10295 = vmatmul.mubr.bf16.gmra.mrb[0].mxu0 %v9954
          %v10296 = vpop.f32.mrb[0].mxu0
          %v10297 = vadd.f32 0.0, %v10296
          %v10298 = vpop.f32.mrb[0].mxu0
          %v10299 = vpop.f32.mrb[0].mxu0
          %v10300 = vadd.f32 0.0, %v10299
          %v10301 = vpop.f32.mrb[0].mxu0
          %10302 = vmatprep.mubr.bf16.mxu0 %v9958
          %10303 = vmatmul.mubr.bf16.gmra.mrb[0].mxu0 %v9957
          %v10304 = vpop.f32.mrb[0].mxu0
          %v10305 = vadd.f32 0.0, %v10304
          %v10306 = vpop.f32.mrb[0].mxu0
          %v10307 = vpop.f32.mrb[0].mxu0
          %v10308 = vadd.f32 0.0, %v10307
          %v10309 = vpop.f32.mrb[0].mxu0
          %10310 = vmatprep.mubr.bf16.mxu0 %v9961
          %10311 = vmatmul.mubr.bf16.gmra.mrb[0].mxu0 %v9960
          %v10312 = vpop.f32.mrb[0].mxu0
          %v10313 = vadd.f32 0.0, %v10312
          %v10314 = vpop.f32.mrb[0].mxu0
          %v10315 = vpop.f32.mrb[0].mxu0
          %v10316 = vadd.f32 0.0, %v10315
          %v10317 = vpop.f32.mrb[0].mxu0
          %10318 = vmatprep.mubr.bf16.mxu0 %v9964
          %10319 = vmatmul.mubr.bf16.gmra.mrb[0].mxu0 %v9963
          %v10320 = vpop.f32.mrb[0].mxu0
          %v10321 = vadd.f32 0.0, %v10320
          %v10322 = vpop.f32.mrb[0].mxu0
          %v10323 = vpop.f32.mrb[0].mxu0
          %v10324 = vadd.f32 0.0, %v10323
          %v10325 = vpop.f32.mrb[0].mxu0
          %10326 = vmatprep.mubr.bf16.mxu0 %v9967
          %10327 = vmatmul.mubr.bf16.gmra.mrb[0].mxu0 %v9966
          %v10328 = vpop.f32.mrb[0].mxu0
          %v10329 = vadd.f32 0.0, %v10328
          %v10330 = vpop.f32.mrb[0].mxu0
          %v10331 = vpop.f32.mrb[0].mxu0
          %v10332 = vadd.f32 0.0, %v10331
          %v10333 = vpop.f32.mrb[0].mxu0
          %10334 = vmatprep.mubr.bf16.mxu0 %v9970
          %10335 = vmatmul.mubr.bf16.gmra.mrb[0].mxu0 %v9969
          %v10336 = vpop.f32.mrb[0].mxu0
          %v10337 = vadd.f32 0.0, %v10336
          %v10338 = vpop.f32.mrb[0].mxu0
          %v10339 = vpop.f32.mrb[0].mxu0
          %v10340 = vadd.f32 0.0, %v10339
          %v10341 = vpop.f32.mrb[0].mxu0
          %10342 = vmatprep.mubr.bf16.mxu0 %v9973
          %10343 = vmatmul.mubr.bf16.gmra.mrb[0].mxu0 %v9972
          %v10344 = vpop.f32.mrb[0].mxu0
          %v10345 = vadd.f32 0.0, %v10344
          %v10346 = vpop.f32.mrb[0].mxu0
          %v10347 = vpop.f32.mrb[0].mxu0
          %v10348 = vadd.f32 0.0, %v10347
          %v10349 = vpop.f32.mrb[0].mxu0
          %10350 = vmatprep.mubr.bf16.mxu0 %v9976
          %10351 = vmatmul.mubr.bf16.gmra.mrb[0].mxu0 %v9975
          %v10352 = vpop.f32.mrb[0].mxu0
          %v10353 = vadd.f32 0.0, %v10352
          %v10354 = vpop.f32.mrb[0].mxu0
          %v10355 = vpop.f32.mrb[0].mxu0
          %v10356 = vadd.f32 0.0, %v10355
          %v10357 = vpop.f32.mrb[0].mxu0
          %10358 = vmatprep.mubr.bf16.mxu0 %v9979
          %10359 = vmatmul.mubr.bf16.gmra.mrb[0].mxu0 %v9978
          %v10360 = vpop.f32.mrb[0].mxu0
          %v10361 = vadd.f32 0.0, %v10360
          %v10362 = vpop.f32.mrb[0].mxu0
          %v10363 = vpop.f32.mrb[0].mxu0
          %v10364 = vadd.f32 0.0, %v10363
          %v10365 = vpop.f32.mrb[0].mxu0
          %10366 = vdwg.mxu0
          %10367 = vmatprep.subr.bf16.mxu0 0
          %10368 = vmatpush1.bf16.msra.mxu0 %v10174
          %10369 = vmatprep.subr.bf16.mxu0 0
          %10370 = vmatpush1.bf16.msra.mxu0 %v10175
          %10371 = vmatprep.subr.bf16.mxu0 0
          %10372 = vmatpush1.bf16.msra.mxu0 %v10176
          %10373 = vmatprep.subr.bf16.mxu0 0
          %10374 = vmatpush1.bf16.msra.mxu0 %v10177
          %10375 = vmatprep.subr.bf16.mxu0 0
          %10376 = vmatpush1.bf16.msra.mxu0 %v10178
          %10377 = vmatprep.subr.bf16.mxu0 0
          %10378 = vmatpush1.bf16.msra.mxu0 %v10179
          %10379 = vmatprep.subr.bf16.mxu0 0
          %10380 = vmatpush1.bf16.msra.mxu0 %v10180
          %10381 = vmatprep.subr.bf16.mxu0 0
          %10382 = vmatpush1.bf16.msra.mxu0 %v10181
          %10383 = vmatprep.subr.bf16.mxu0 0
          %10384 = vmatpush1.bf16.msra.mxu0 0
          %10385 = vmatprep.subr.bf16.mxu0 0
          %10386 = vmatpush1.bf16.msra.mxu0 0
          %10387 = vmatprep.subr.bf16.mxu0 0
          %10388 = vmatpush1.bf16.msra.mxu0 0
          %10389 = vmatprep.subr.bf16.mxu0 0
          %10390 = vmatpush1.bf16.msra.mxu0 0
          %10391 = vmatprep.subr.bf16.mxu0 0
          %10392 = vmatpush1.bf16.msra.mxu0 0
          %10393 = vmatprep.subr.bf16.mxu0 0
          %10394 = vmatpush1.bf16.msra.mxu0 0
          %10395 = vmatprep.subr.bf16.mxu0 0
          %10396 = vmatpush1.bf16.msra.mxu0 0
          %10397 = vmatprep.subr.bf16.mxu0 0
          %10398 = vmatpush1.bf16.msra.mxu0 0
          %10399 = vmatprep.mubr.bf16.mxu0 0
          %10400 = vmatmul.mubr.bf16.gmra.mrb[0].mxu0 %v9935
          %v10401 = vpop.f32.mrb[0].mxu0
          %v10402 = vadd.f32 %v10241, %v10401
          %v10403 = vpop.f32.mrb[0].mxu0
          %v10404 = vpop.f32.mrb[0].mxu0
          %v10405 = vadd.f32 %v10244, %v10404
          %v10406 = vpop.f32.mrb[0].mxu0
          %10407 = vmatprep.mubr.bf16.mxu0 0
          %10408 = vmatmul.mubr.bf16.gmra.mrb[0].mxu0 %v9938
          %v10409 = vpop.f32.mrb[0].mxu0
          %v10410 = vadd.f32 %v10249, %v10409
          %v10411 = vpop.f32.mrb[0].mxu0
          %v10412 = vpop.f32.mrb[0].mxu0
          %v10413 = vadd.f32 %v10252, %v10412
          %v10414 = vpop.f32.mrb[0].mxu0
          %10415 = vmatprep.mubr.bf16.mxu0 0
          %10416 = vmatmul.mubr.bf16.gmra.mrb[0].mxu0 %v9941
          %v10417 = vpop.f32.mrb[0].mxu0
          %v10418 = vadd.f32 %v10257, %v10417
          %v10419 = vpop.f32.mrb[0].mxu0
          %v10420 = vpop.f32.mrb[0].mxu0
          %v10421 = vadd.f32 %v10260, %v10420
          %v10422 = vpop.f32.mrb[0].mxu0
          %10423 = vmatprep.mubr.bf16.mxu0 0
          %10424 = vmatmul.mubr.bf16.gmra.mrb[0].mxu0 %v9944
          %v10425 = vpop.f32.mrb[0].mxu0
          %v10426 = vadd.f32 %v10265, %v10425
          %v10427 = vpop.f32.mrb[0].mxu0
          %v10428 = vpop.f32.mrb[0].mxu0
          %v10429 = vadd.f32 %v10268, %v10428
          %v10430 = vpop.f32.mrb[0].mxu0
          %10431 = vmatprep.mubr.bf16.mxu0 0
          %10432 = vmatmul.mubr.bf16.gmra.mrb[0].mxu0 %v9947
          %v10433 = vpop.f32.mrb[0].mxu0
          %v10434 = vadd.f32 %v10273, %v10433
          %v10435 = vpop.f32.mrb[0].mxu0
          %v10436 = vpop.f32.mrb[0].mxu0
          %v10437 = vadd.f32 %v10276, %v10436
          %v10438 = vpop.f32.mrb[0].mxu0
          %10439 = vmatprep.mubr.bf16.mxu0 0
          %10440 = vmatmul.mubr.bf16.gmra.mrb[0].mxu0 %v9950
          %v10441 = vpop.f32.mrb[0].mxu0
          %v10442 = vadd.f32 %v10281, %v10441
          %v10443 = vpop.f32.mrb[0].mxu0
          %v10444 = vpop.f32.mrb[0].mxu0
          %v10445 = vadd.f32 %v10284, %v10444
          %v10446 = vpop.f32.mrb[0].mxu0
          %10447 = vmatprep.mubr.bf16.mxu0 0
          %10448 = vmatmul.mubr.bf16.gmra.mrb[0].mxu0 %v9953
          %v10449 = vpop.f32.mrb[0].mxu0
          %v10450 = vadd.f32 %v10289, %v10449
          %v10451 = vpop.f32.mrb[0].mxu0
          %v10452 = vpop.f32.mrb[0].mxu0
          %v10453 = vadd.f32 %v10292, %v10452
          %v10454 = vpop.f32.mrb[0].mxu0
          %10455 = vmatprep.mubr.bf16.mxu0 0
          %10456 = vmatmul.mubr.bf16.gmra.mrb[0].mxu0 %v9956
          %v10457 = vpop.f32.mrb[0].mxu0
          %v10458 = vadd.f32 %v10297, %v10457
          %v10459 = vpop.f32.mrb[0].mxu0
          %v10460 = vpop.f32.mrb[0].mxu0
          %v10461 = vadd.f32 %v10300, %v10460
          %v10462 = vpop.f32.mrb[0].mxu0
          %10463 = vmatprep.mubr.bf16.mxu0 0
          %10464 = vmatmul.mubr.bf16.gmra.mrb[0].mxu0 %v9959
          %v10465 = vpop.f32.mrb[0].mxu0
          %v10466 = vadd.f32 %v10305, %v10465
          %v10467 = vpop.f32.mrb[0].mxu0
          %v10468 = vpop.f32.mrb[0].mxu0
          %v10469 = vadd.f32 %v10308, %v10468
          %v10470 = vpop.f32.mrb[0].mxu0
          %10471 = vmatprep.mubr.bf16.mxu0 0
          %10472 = vmatmul.mubr.bf16.gmra.mrb[0].mxu0 %v9962
          %v10473 = vpop.f32.mrb[0].mxu0
          %v10474 = vadd.f32 %v10313, %v10473
          %v10475 = vpop.f32.mrb[0].mxu0
          %v10476 = vpop.f32.mrb[0].mxu0
          %v10477 = vadd.f32 %v10316, %v10476
          %v10478 = vpop.f32.mrb[0].mxu0
          %10479 = vmatprep.mubr.bf16.mxu0 0
          %10480 = vmatmul.mubr.bf16.gmra.mrb[0].mxu0 %v9965
          %v10481 = vpop.f32.mrb[0].mxu0
          %v10482 = vadd.f32 %v10321, %v10481
          %v10483 = vpop.f32.mrb[0].mxu0
          %v10484 = vpop.f32.mrb[0].mxu0
          %v10485 = vadd.f32 %v10324, %v10484
          %v10486 = vpop.f32.mrb[0].mxu0
          %10487 = vmatprep.mubr.bf16.mxu0 0
          %10488 = vmatmul.mubr.bf16.gmra.mrb[0].mxu0 %v9968
          %v10489 = vpop.f32.mrb[0].mxu0
          %v10490 = vadd.f32 %v10329, %v10489
          %v10491 = vpop.f32.mrb[0].mxu0
          %v10492 = vpop.f32.mrb[0].mxu0
          %v10493 = vadd.f32 %v10332, %v10492
          %v10494 = vpop.f32.mrb[0].mxu0
          %10495 = vmatprep.mubr.bf16.mxu0 0
          %10496 = vmatmul.mubr.bf16.gmra.mrb[0].mxu0 %v9971
          %v10497 = vpop.f32.mrb[0].mxu0
          %v10498 = vadd.f32 %v10337, %v10497
          %v10499 = vpop.f32.mrb[0].mxu0
          %v10500 = vpop.f32.mrb[0].mxu0
          %v10501 = vadd.f32 %v10340, %v10500
          %v10502 = vpop.f32.mrb[0].mxu0
          %10503 = vmatprep.mubr.bf16.mxu0 0
          %10504 = vmatmul.mubr.bf16.gmra.mrb[0].mxu0 %v9974
          %v10505 = vpop.f32.mrb[0].mxu0
          %v10506 = vadd.f32 %v10345, %v10505
          %v10507 = vpop.f32.mrb[0].mxu0
          %v10508 = vpop.f32.mrb[0].mxu0
          %v10509 = vadd.f32 %v10348, %v10508
          %v10510 = vpop.f32.mrb[0].mxu0
          %10511 = vmatprep.mubr.bf16.mxu0 0
          %10512 = vmatmul.mubr.bf16.gmra.mrb[0].mxu0 %v9977
          %v10513 = vpop.f32.mrb[0].mxu0
          %v10514 = vadd.f32 %v10353, %v10513
          %v10515 = vpop.f32.mrb[0].mxu0
          %v10516 = vpop.f32.mrb[0].mxu0
          %v10517 = vadd.f32 %v10356, %v10516
          %v10518 = vpop.f32.mrb[0].mxu0
          %10519 = vmatprep.mubr.bf16.mxu0 0
          %10520 = vmatmul.mubr.bf16.gmra.mrb[0].mxu0 %v9980
          %v10521 = vpop.f32.mrb[0].mxu0
          %v10522 = vadd.f32 %v10361, %v10521
          %v10523 = vpop.f32.mrb[0].mxu0
          %v10524 = vpop.f32.mrb[0].mxu0
          %v10525 = vadd.f32 %v10364, %v10524
          %v10526 = vpop.f32.mrb[0].mxu0
          %10527 = vdwg.mxu0
          %v10528 = vadd.f32 %v9981, %v10402
          %v10529 = vadd.f32 %v9982, %v10405
          %v10530 = vadd.f32 %v9983, %v10410
          %v10531 = vadd.f32 %v9984, %v10413
          %v10532 = vadd.f32 %v9985, %v10418
          %v10533 = vadd.f32 %v9986, %v10421
          %v10534 = vadd.f32 %v9987, %v10426
          %v10535 = vadd.f32 %v9988, %v10429
          %v10536 = vadd.f32 %v9989, %v10434
          %v10537 = vadd.f32 %v9990, %v10437
          %v10538 = vadd.f32 %v9991, %v10442
          %v10539 = vadd.f32 %v9992, %v10445
          %v10540 = vadd.f32 %v9993, %v10450
          %v10541 = vadd.f32 %v9994, %v10453
          %v10542 = vadd.f32 %v9995, %v10458
          %v10543 = vadd.f32 %v9996, %v10461
          %v10544 = vadd.f32 %v9997, %v10466
          %v10545 = vadd.f32 %v9998, %v10469
          %v10546 = vadd.f32 %v9999, %v10474
          %v10547 = vadd.f32 %v10000, %v10477
          %v10548 = vadd.f32 %v10001, %v10482
          %v10549 = vadd.f32 %v10002, %v10485
          %v10550 = vadd.f32 %v10003, %v10490
          %v10551 = vadd.f32 %v10004, %v10493
          %v10552 = vadd.f32 %v10005, %v10498
          %v10553 = vadd.f32 %v10006, %v10501
          %v10554 = vadd.f32 %v10007, %v10506
          %v10555 = vadd.f32 %v10008, %v10509
          %v10556 = vadd.f32 %v10009, %v10514
          %v10557 = vadd.f32 %v10010, %v10517
          %v10558 = vadd.f32 %v10011, %v10522
          %v10559 = vadd.f32 %v10012, %v10525
          %10560 = vst [vmem:[#allocation2] sm:$0xff] %v10528
          %10561 = vst [vmem:[#allocation2 + $0x8] sm:$0xff] %v10529
          %10562 = vst [vmem:[#allocation2 + $0x10] sm:$0xff] %v10530
          %10563 = vst [vmem:[#allocation2 + $0x18] sm:$0xff] %v10531
          %10564 = vst [vmem:[#allocation2 + $0x20] sm:$0xff] %v10532
          %10565 = vst [vmem:[#allocation2 + $0x28] sm:$0xff] %v10533
          %10566 = vst [vmem:[#allocation2 + $0x30] sm:$0xff] %v10534
          %10567 = vst [vmem:[#allocation2 + $0x38] sm:$0xff] %v10535
          %10568 = vst [vmem:[#allocation2 + $0x40] sm:$0xff] %v10536
          %10569 = vst [vmem:[#allocation2 + $0x48] sm:$0xff] %v10537
          %10570 = vst [vmem:[#allocation2 + $0x50] sm:$0xff] %v10538
          %10571 = vst [vmem:[#allocation2 + $0x58] sm:$0xff] %v10539
          %10572 = vst [vmem:[#allocation2 + $0x60] sm:$0xff] %v10540
          %10573 = vst [vmem:[#allocation2 + $0x68] sm:$0xff] %v10541
          %10574 = vst [vmem:[#allocation2 + $0x70] sm:$0xff] %v10542
          %10575 = vst [vmem:[#allocation2 + $0x78] sm:$0xff] %v10543
          %10576 = vst [vmem:[#allocation2 + $0x80] sm:$0xff] %v10544
          %10577 = vst [vmem:[#allocation2 + $0x88] sm:$0xff] %v10545
          %10578 = vst [vmem:[#allocation2 + $0x90] sm:$0xff] %v10546
          %10579 = vst [vmem:[#allocation2 + $0x98] sm:$0xff] %v10547
          %10580 = vst [vmem:[#allocation2 + $0xa0] sm:$0xff] %v10548
          %10581 = vst [vmem:[#allocation2 + $0xa8] sm:$0xff] %v10549
          %10582 = vst [vmem:[#allocation2 + $0xb0] sm:$0xff] %v10550
          %10583 = vst [vmem:[#allocation2 + $0xb8] sm:$0xff] %v10551
          %10584 = vst [vmem:[#allocation2 + $0xc0] sm:$0xff] %v10552
          %10585 = vst [vmem:[#allocation2 + $0xc8] sm:$0xff] %v10553
          %10586 = vst [vmem:[#allocation2 + $0xd0] sm:$0xff] %v10554
          %10587 = vst [vmem:[#allocation2 + $0xd8] sm:$0xff] %v10555
          %10588 = vst [vmem:[#allocation2 + $0xe0] sm:$0xff] %v10556
          %10589 = vst [vmem:[#allocation2 + $0xe8] sm:$0xff] %v10557
          %10590 = vst [vmem:[#allocation2 + $0xf0] sm:$0xff] %v10558
          %10591 = vst [vmem:[#allocation2 + $0xf8] sm:$0xff] %v10559
        $region68: #{fused_aspp_convs.1} parent=35 // pred_fallthru
          _
        // Predicated region
        $region69: #{fused_aspp_convs.1} parent=35 // pred_check
          %p10592 = pneg %p360
        $region70: #{fused_aspp_convs.1} parent=35 // pred_check_branch
          %10594 = sbr.rel (%p10592) target = $region72
        $region71: #{fused_aspp_convs.1} parent=35 // pred_region
          %v10595 = vld [vmem:[#allocation2] sm:$0xff]
          %v10596 = vld [vmem:[#allocation2 + $0x8] sm:$0xff]
          %v10597 = vld [vmem:[#allocation2 + $0x10] sm:$0xff]
          %v10598 = vld [vmem:[#allocation2 + $0x18] sm:$0xff]
          %v10599 = vld [vmem:[#allocation2 + $0x20] sm:$0xff]
          %v10600 = vld [vmem:[#allocation2 + $0x28] sm:$0xff]
          %v10601 = vld [vmem:[#allocation2 + $0x30] sm:$0xff]
          %v10602 = vld [vmem:[#allocation2 + $0x38] sm:$0xff]
          %v10603 = vld [vmem:[#allocation2 + $0x40] sm:$0xff]
          %v10604 = vld [vmem:[#allocation2 + $0x48] sm:$0xff]
          %v10605 = vld [vmem:[#allocation2 + $0x50] sm:$0xff]
          %v10606 = vld [vmem:[#allocation2 + $0x58] sm:$0xff]
          %v10607 = vld [vmem:[#allocation2 + $0x60] sm:$0xff]
          %v10608 = vld [vmem:[#allocation2 + $0x68] sm:$0xff]
          %v10609 = vld [vmem:[#allocation2 + $0x70] sm:$0xff]
          %v10610 = vld [vmem:[#allocation2 + $0x78] sm:$0xff]
          %v10611 = vld [vmem:[#allocation2 + $0x80] sm:$0xff]
          %v10612 = vld [vmem:[#allocation2 + $0x88] sm:$0xff]
          %v10613 = vld [vmem:[#allocation2 + $0x90] sm:$0xff]
          %v10614 = vld [vmem:[#allocation2 + $0x98] sm:$0xff]
          %v10615 = vld [vmem:[#allocation2 + $0xa0] sm:$0xff]
          %v10616 = vld [vmem:[#allocation2 + $0xa8] sm:$0xff]
          %v10617 = vld [vmem:[#allocation2 + $0xb0] sm:$0xff]
          %v10618 = vld [vmem:[#allocation2 + $0xb8] sm:$0xff]
          %v10619 = vld [vmem:[#allocation2 + $0xc0] sm:$0xff]
          %v10620 = vld [vmem:[#allocation2 + $0xc8] sm:$0xff]
          %v10621 = vld [vmem:[#allocation2 + $0xd0] sm:$0xff]
          %v10622 = vld [vmem:[#allocation2 + $0xd8] sm:$0xff]
          %v10623 = vld [vmem:[#allocation2 + $0xe0] sm:$0xff]
          %v10624 = vld [vmem:[#allocation2 + $0xe8] sm:$0xff]
          %v10625 = vld [vmem:[#allocation2 + $0xf0] sm:$0xff]
          %v10626 = vld [vmem:[#allocation2 + $0xf8] sm:$0xff]
          %v10627 = vld [vmem:[%s299] sm:$0x1]
          %v10629 = vlaneseq
          %v10630 = vshrl.u32 %v10629, 7
          %v10631 = vsub.s32 0, %v10630
          %v10632 = vrot.slane %v10627, %v10631
          %v10634 = vmul.f32 %v10595, %v10632
          %v10635 = vmul.f32 %v10596, %v10632
          %v10636 = vmul.f32 %v10597, %v10632
          %v10637 = vmul.f32 %v10598, %v10632
          %v10638 = vmul.f32 %v10599, %v10632
          %v10639 = vmul.f32 %v10600, %v10632
          %v10640 = vmul.f32 %v10601, %v10632
          %v10641 = vmul.f32 %v10602, %v10632
          %v10642 = vmul.f32 %v10603, %v10632
          %v10643 = vmul.f32 %v10604, %v10632
          %v10644 = vmul.f32 %v10605, %v10632
          %v10645 = vmul.f32 %v10606, %v10632
          %v10646 = vmul.f32 %v10607, %v10632
          %v10647 = vmul.f32 %v10608, %v10632
          %v10648 = vmul.f32 %v10609, %v10632
          %v10649 = vmul.f32 %v10610, %v10632
          %v10650 = vmul.f32 %v10611, %v10632
          %v10651 = vmul.f32 %v10612, %v10632
          %v10652 = vmul.f32 %v10613, %v10632
          %v10653 = vmul.f32 %v10614, %v10632
          %v10654 = vmul.f32 %v10615, %v10632
          %v10655 = vmul.f32 %v10616, %v10632
          %v10656 = vmul.f32 %v10617, %v10632
          %v10657 = vmul.f32 %v10618, %v10632
          %v10658 = vmul.f32 %v10619, %v10632
          %v10659 = vmul.f32 %v10620, %v10632
          %v10660 = vmul.f32 %v10621, %v10632
          %v10661 = vmul.f32 %v10622, %v10632
          %v10662 = vmul.f32 %v10623, %v10632
          %v10663 = vmul.f32 %v10624, %v10632
          %v10664 = vmul.f32 %v10625, %v10632
          %v10665 = vmul.f32 %v10626, %v10632
          %v10666 = vld [vmem:[%s307] sm:$0x1]
          %v10668 = vlaneseq
          %v10669 = vshrl.u32 %v10668, 7
          %v10670 = vsub.s32 0, %v10669
          %v10671 = vrot.slane %v10666, %v10670
          %v10673 = vadd.f32 %v10634, %v10671
          %v10674 = vadd.f32 %v10635, %v10671
          %v10675 = vadd.f32 %v10636, %v10671
          %v10676 = vadd.f32 %v10637, %v10671
          %v10677 = vadd.f32 %v10638, %v10671
          %v10678 = vadd.f32 %v10639, %v10671
          %v10679 = vadd.f32 %v10640, %v10671
          %v10680 = vadd.f32 %v10641, %v10671
          %v10681 = vadd.f32 %v10642, %v10671
          %v10682 = vadd.f32 %v10643, %v10671
          %v10683 = vadd.f32 %v10644, %v10671
          %v10684 = vadd.f32 %v10645, %v10671
          %v10685 = vadd.f32 %v10646, %v10671
          %v10686 = vadd.f32 %v10647, %v10671
          %v10687 = vadd.f32 %v10648, %v10671
          %v10688 = vadd.f32 %v10649, %v10671
          %v10689 = vadd.f32 %v10650, %v10671
          %v10690 = vadd.f32 %v10651, %v10671
          %v10691 = vadd.f32 %v10652, %v10671
          %v10692 = vadd.f32 %v10653, %v10671
          %v10693 = vadd.f32 %v10654, %v10671
          %v10694 = vadd.f32 %v10655, %v10671
          %v10695 = vadd.f32 %v10656, %v10671
          %v10696 = vadd.f32 %v10657, %v10671
          %v10697 = vadd.f32 %v10658, %v10671
          %v10698 = vadd.f32 %v10659, %v10671
          %v10699 = vadd.f32 %v10660, %v10671
          %v10700 = vadd.f32 %v10661, %v10671
          %v10701 = vadd.f32 %v10662, %v10671
          %v10702 = vadd.f32 %v10663, %v10671
          %v10703 = vadd.f32 %v10664, %v10671
          %v10704 = vadd.f32 %v10665, %v10671
          %v10705 = vmax.f32 %v10673, 0.0
          %v10706 = vmax.f32 %v10674, 0.0
          %v10707 = vmax.f32 %v10675, 0.0
          %v10708 = vmax.f32 %v10676, 0.0
          %v10709 = vmax.f32 %v10677, 0.0
          %v10710 = vmax.f32 %v10678, 0.0
          %v10711 = vmax.f32 %v10679, 0.0
          %v10712 = vmax.f32 %v10680, 0.0
          %v10713 = vmax.f32 %v10681, 0.0
          %v10714 = vmax.f32 %v10682, 0.0
          %v10715 = vmax.f32 %v10683, 0.0
          %v10716 = vmax.f32 %v10684, 0.0
          %v10717 = vmax.f32 %v10685, 0.0
          %v10718 = vmax.f32 %v10686, 0.0
          %v10719 = vmax.f32 %v10687, 0.0
          %v10720 = vmax.f32 %v10688, 0.0
          %v10721 = vmax.f32 %v10689, 0.0
          %v10722 = vmax.f32 %v10690, 0.0
          %v10723 = vmax.f32 %v10691, 0.0
          %v10724 = vmax.f32 %v10692, 0.0
          %v10725 = vmax.f32 %v10693, 0.0
          %v10726 = vmax.f32 %v10694, 0.0
          %v10727 = vmax.f32 %v10695, 0.0
          %v10728 = vmax.f32 %v10696, 0.0
          %v10729 = vmax.f32 %v10697, 0.0
          %v10730 = vmax.f32 %v10698, 0.0
          %v10731 = vmax.f32 %v10699, 0.0
          %v10732 = vmax.f32 %v10700, 0.0
          %v10733 = vmax.f32 %v10701, 0.0
          %v10734 = vmax.f32 %v10702, 0.0
          %v10735 = vmax.f32 %v10703, 0.0
          %v10736 = vmax.f32 %v10704, 0.0
          %v10737 = vpack.c.bf16 %v10706, %v10705
          %v10738 = vpack.c.bf16 %v10708, %v10707
          %v10739 = vpack.c.bf16 %v10710, %v10709
          %v10740 = vpack.c.bf16 %v10712, %v10711
          %v10741 = vpack.c.bf16 %v10714, %v10713
          %v10742 = vpack.c.bf16 %v10716, %v10715
          %v10743 = vpack.c.bf16 %v10718, %v10717
          %v10744 = vpack.c.bf16 %v10720, %v10719
          %v10745 = vpack.c.bf16 %v10722, %v10721
          %v10746 = vpack.c.bf16 %v10724, %v10723
          %v10747 = vpack.c.bf16 %v10726, %v10725
          %v10748 = vpack.c.bf16 %v10728, %v10727
          %v10749 = vpack.c.bf16 %v10730, %v10729
          %v10750 = vpack.c.bf16 %v10732, %v10731
          %v10751 = vpack.c.bf16 %v10734, %v10733
          %v10752 = vpack.c.bf16 %v10736, %v10735
          %v10769 = vunpack.c.l.b16 %v10737
          %v10770 = vunpack.c.h.b16 %v10737
          %v10771 = vunpack.c.l.b16 %v10738
          %v10772 = vunpack.c.h.b16 %v10738
          %v10773 = vunpack.c.l.b16 %v10739
          %v10774 = vunpack.c.h.b16 %v10739
          %v10775 = vunpack.c.l.b16 %v10740
          %v10776 = vunpack.c.h.b16 %v10740
          %v10777 = vunpack.c.l.b16 %v10741
          %v10778 = vunpack.c.h.b16 %v10741
          %v10779 = vunpack.c.l.b16 %v10742
          %v10780 = vunpack.c.h.b16 %v10742
          %v10781 = vunpack.c.l.b16 %v10743
          %v10782 = vunpack.c.h.b16 %v10743
          %v10783 = vunpack.c.l.b16 %v10744
          %v10784 = vunpack.c.h.b16 %v10744
          %v10785 = vunpack.c.l.b16 %v10745
          %v10786 = vunpack.c.h.b16 %v10745
          %v10787 = vunpack.c.l.b16 %v10746
          %v10788 = vunpack.c.h.b16 %v10746
          %v10789 = vunpack.c.l.b16 %v10747
          %v10790 = vunpack.c.h.b16 %v10747
          %v10791 = vunpack.c.l.b16 %v10748
          %v10792 = vunpack.c.h.b16 %v10748
          %v10793 = vunpack.c.l.b16 %v10749
          %v10794 = vunpack.c.h.b16 %v10749
          %v10795 = vunpack.c.l.b16 %v10750
          %v10796 = vunpack.c.h.b16 %v10750
          %v10797 = vunpack.c.l.b16 %v10751
          %v10798 = vunpack.c.h.b16 %v10751
          %v10799 = vunpack.c.l.b16 %v10752
          %v10800 = vunpack.c.h.b16 %v10752
          %v10801 = vpack.c.b16 %v10769, %v10769
          %v10802 = vpack.c.b16 %v10770, %v10770
          %v10803 = vpack.c.b16 %v10771, %v10771
          %v10804 = vpack.c.b16 %v10772, %v10772
          %v10805 = vpack.c.b16 %v10773, %v10773
          %v10806 = vpack.c.b16 %v10774, %v10774
          %v10807 = vpack.c.b16 %v10775, %v10775
          %v10808 = vpack.c.b16 %v10776, %v10776
          %v10809 = vpack.c.b16 %v10777, %v10777
          %v10810 = vpack.c.b16 %v10778, %v10778
          %v10811 = vpack.c.b16 %v10779, %v10779
          %v10812 = vpack.c.b16 %v10780, %v10780
          %v10813 = vpack.c.b16 %v10781, %v10781
          %v10814 = vpack.c.b16 %v10782, %v10782
          %v10815 = vpack.c.b16 %v10783, %v10783
          %v10816 = vpack.c.b16 %v10784, %v10784
          %v10817 = vpack.c.b16 %v10785, %v10785
          %v10818 = vpack.c.b16 %v10786, %v10786
          %v10819 = vpack.c.b16 %v10787, %v10787
          %v10820 = vpack.c.b16 %v10788, %v10788
          %v10821 = vpack.c.b16 %v10789, %v10789
          %v10822 = vpack.c.b16 %v10790, %v10790
          %v10823 = vpack.c.b16 %v10791, %v10791
          %v10824 = vpack.c.b16 %v10792, %v10792
          %v10825 = vpack.c.b16 %v10793, %v10793
          %v10826 = vpack.c.b16 %v10794, %v10794
          %v10827 = vpack.c.b16 %v10795, %v10795
          %v10828 = vpack.c.b16 %v10796, %v10796
          %v10829 = vpack.c.b16 %v10797, %v10797
          %v10830 = vpack.c.b16 %v10798, %v10798
          %v10831 = vpack.c.b16 %v10799, %v10799
          %v10832 = vpack.c.b16 %v10800, %v10800
          %10865 = vst [vmem:[%s347] sm:$0xf] %v10801
          %10866 = vst [vmem:[%s347 + $0x4] sm:$0xf] %v10802
          %10867 = vst [vmem:[%s347 + $0x8] sm:$0xf] %v10803
          %10868 = vst [vmem:[%s347 + $0xc] sm:$0xf] %v10804
          %10869 = vst [vmem:[%s347 + $0x10] sm:$0xf] %v10805
          %10870 = vst [vmem:[%s347 + $0x14] sm:$0xf] %v10806
          %10871 = vst [vmem:[%s347 + $0x18] sm:$0xf] %v10807
          %10872 = vst [vmem:[%s347 + $0x1c] sm:$0xf] %v10808
          %10873 = vst [vmem:[%s347 + $0x20] sm:$0xf] %v10809
          %10874 = vst [vmem:[%s347 + $0x24] sm:$0xf] %v10810
          %10875 = vst [vmem:[%s347 + $0x28] sm:$0xf] %v10811
          %10876 = vst [vmem:[%s347 + $0x2c] sm:$0xf] %v10812
          %10877 = vst [vmem:[%s347 + $0x30] sm:$0xf] %v10813
          %10878 = vst [vmem:[%s347 + $0x34] sm:$0xf] %v10814
          %10879 = vst [vmem:[%s347 + $0x38] sm:$0xf] %v10815
          %10880 = vst [vmem:[%s347 + $0x3c] sm:$0xf] %v10816
          %10881 = vst [vmem:[%s347 + $0x40] sm:$0xf] %v10817
          %10882 = vst [vmem:[%s347 + $0x44] sm:$0xf] %v10818
          %10883 = vst [vmem:[%s347 + $0x48] sm:$0xf] %v10819
          %10884 = vst [vmem:[%s347 + $0x4c] sm:$0xf] %v10820
          %10885 = vst [vmem:[%s347 + $0x50] sm:$0xf] %v10821
          %10886 = vst [vmem:[%s347 + $0x54] sm:$0xf] %v10822
          %10887 = vst [vmem:[%s347 + $0x58] sm:$0xf] %v10823
          %10888 = vst [vmem:[%s347 + $0x5c] sm:$0xf] %v10824
          %10889 = vst [vmem:[%s347 + $0x60] sm:$0xf] %v10825
          %10890 = vst [vmem:[%s347 + $0x64] sm:$0xf] %v10826
          %10891 = vst [vmem:[%s347 + $0x68] sm:$0xf] %v10827
          %10892 = vst [vmem:[%s347 + $0x6c] sm:$0xf] %v10828
          %10893 = vst [vmem:[%s347 + $0x70] sm:$0xf] %v10829
          %10894 = vst [vmem:[%s347 + $0x74] sm:$0xf] %v10830
          %10895 = vst [vmem:[%s347 + $0x78] sm:$0xf] %v10831
          %10896 = vst [vmem:[%s347 + $0x7c] sm:$0xf] %v10832
        $region72: #{fused_aspp_convs.1} parent=35 // pred_fallthru
          _
        %s10897 = sand.u32 %s176, 1
        %s10898 = scalar_lea.sflag [#allocation6], %s10897
        %s10899 = sand.u32 %s176, 1
        %s10900 = smul.addr %s10899, 128
        %s10901 = scalar_lea.vmem [#allocation10], %s10900
        // Predicated region
        $region73: #{fused_aspp_convs.1} parent=35 // pred_check
          %p10902 = pneg %p186
        $region74: #{fused_aspp_convs.1} parent=35 // pred_check_branch
          %10904 = sbr.rel (%p10902) target = $region76
        $region75: #{fused_aspp_convs.1} parent=35 // pred_region
          %s10905 = sadd.s32 %s31, %s32
          %s10907 = ssub.s32 2048, 2048
          %10908 = vsyncadd %s10898, %s10907
          %s10909 = smul.addr %s30, 128
          %s10910 = sadd.s32 %s10905, %s10909
          %s10911 = smul.addr %s10910, 64
          %s10912 = scalar_lea.hbm %s4, %s10911
          %s10913 = sshll.u32 %s10901, 4
          %s10914 = int_to_ptr.vmem [resolvable:$true] %s10913
          %10919 = dma.vmem_to_hbm [thread:$0]  %s10914, 2048, %s10912, %s10898, 64, 256, 4
        $region76: #{fused_aspp_convs.1} parent=35 // pred_fallthru
          _
      $region36: #{fused_aspp_convs.1} parent=5 // pred_fallthru
        _
      %p10920 = scmp.le.s32.totalorder 2, %s19
      // Predicated region
      $region77: #{fused_aspp_convs.1} parent=5 // pred_check
        %p10921 = pneg %p10920
      $region78: #{fused_aspp_convs.1} parent=5 // pred_check_branch
        %10923 = sbr.rel (%p10921) target = $region80
      $region79: #{fused_aspp_convs.1} parent=5 // pred_region
        %s10924 = ssub.s32 %s19, 2
        // Predicated region
        $region81: #{fused_aspp_convs.1} parent=79 // pred_check
          %p10925 = pneg %p192
        $region82: #{fused_aspp_convs.1} parent=79 // pred_check_branch
          %10927 = sbr.rel (%p10925) target = $region84
        $region83: #{fused_aspp_convs.1} parent=79 // pred_region
          %s10928 = sand.u32 %s177, 1
          %s10929 = scalar_lea.sflag [#allocation6], %s10928
          %s10930 = sand.u32 %s177, 1
          %s10931 = smul.addr %s10930, 128
          %s10932 = scalar_lea.vmem [#allocation10], %s10931
          %10933 = dma.done %s10929, 2048
        $region84: #{fused_aspp_convs.1} parent=79 // pred_fallthru
          _
      $region80: #{fused_aspp_convs.1} parent=5 // pred_fallthru
        _
    $region6: #{fused_aspp_convs.1} parent=1 // loop_footer
      %s23 = sadd.s32 1, %s19
    $region7: #{fused_aspp_convs.1} parent=1 // loop_footer_branch
      %18 = sbr.rel target = $region3
    $region8: #{fused_aspp_convs.1} parent=1 // loop_exit
      _
    %10934 = vsyncpa [#allocation5], 1
    %s10935 = scalar_lea.sflag [#allocation5], 1
    %10936 = vsyncpa %s10935, 1
    %10937 = vsyncpa [#allocation8], 1
    %s10938 = scalar_lea.sflag [#allocation8], 1
    %10939 = vsyncpa %s10938, 1
    %10940 = vsyncpa [#allocation6], 1
    %s10941 = scalar_lea.sflag [#allocation6], 1
    %10942 = vsyncpa %s10941, 1

</llo_original>
